<compile_context>
chip_gen: v7x
topology: tpu7x:2x2x1
jax: 0.10.0
libtpu: 0.0.40
codegen_flags: <defaults>
</compile_context>

<pallas_src>
import functools
import math

import jax
import jax.numpy as jnp
from jax.experimental import pallas as pl
from jax.experimental.pallas import tpu as pltpu


# -----------------------------------------------------------------------------
# helpers
# -----------------------------------------------------------------------------
def _pick_tile(m, target, multiple):
    """Largest tile <= target that divides m and is a multiple of `multiple`.

    Falls back to the full extent m (full-dim blocks always satisfy the (8,128)
    BlockSpec constraint)."""
    t = min(target, m)
    for cand in range(t, 0, -1):
        if m % cand == 0 and cand % multiple == 0:
            assert m % cand == 0
            return cand
    return m


def _mosaic_params(sems, block_bytes, scratch_bytes=0):
    """Computed VMEM budget: double-buffered block footprint + scratch + headroom,
    clamped so it stays comfortably below v7x's 64 MiB physical VMEM."""
    limit = 2 * int(block_bytes) + int(scratch_bytes) + (4 << 20)
    limit = max(8 << 20, min(limit, 32 << 20))
    return pltpu.CompilerParams(dimension_semantics=sems, vmem_limit_bytes=limit)


def _im2col_3x3_batched(x_nhwc):
    """3x3 same-padding patches, batch kept: [B,H,W,C] -> [B, H*W, 9*C]."""
    B, H, W, C = x_nhwc.shape
    xp = jnp.pad(x_nhwc, ((0, 0), (1, 1), (1, 1), (0, 0)))
    cols = [xp[:, dy:dy + H, dx:dx + W, :] for dy in range(3) for dx in range(3)]
    return jnp.concatenate(cols, axis=-1).reshape(B, H * W, 9 * C)


def _corner_patches_3x3(x_nhwc):
    """Stacked corner-phase im2col: [B,H,W,C] -> [4, B*(H/2)*(W/2), 9*C].

    Phase p=(cy,cx) holds the 3x3 patches of output pixels (2i+cy, 2j+cx); the
    2x2 max-pool after the conv becomes a max over the 4 phase blocks."""
    B, H, W, C = x_nhwc.shape
    xp = jnp.pad(x_nhwc, ((0, 0), (1, 1), (1, 1), (0, 0)))
    phases = []
    for cy in (0, 1):
        for cx in (0, 1):
            cols = [xp[:, cy + dy:cy + dy + H:2, cx + dx:cx + dx + W:2, :]
                    for dy in range(3) for dx in range(3)]
            phases.append(jnp.concatenate(cols, axis=-1)
                          .reshape(B * (H // 2) * (W // 2), 9 * C))
    return jnp.stack(phases, axis=0)


# -----------------------------------------------------------------------------
# Kernel 1: fused Conv3x3 + Bias + ReLU + MaxPool(2) (DSM branch layers)
#   One stacked (4, tmf, Kf) input block, ONE dot, max over the 4 phase blocks.
#   Weight is block-diagonal (kron(I_fold, W)) so the store is 128-lane dense.
# -----------------------------------------------------------------------------
def _conv3x3_pool_kernel(p_ref, w_ref, b_ref, o_ref):
    nph, tmf, kf = p_ref.shape
    p = p_ref[...].reshape(nph * tmf, kf)                       # cheap major-dim merge
    c = jnp.dot(p, w_ref[...], preferred_element_type=jnp.float32)   # (4*tmf, Cf)
    m = jnp.maximum(jnp.maximum(c[0 * tmf:1 * tmf], c[1 * tmf:2 * tmf]),
                    jnp.maximum(c[2 * tmf:3 * tmf], c[3 * tmf:4 * tmf]))
    o_ref[...] = jnp.maximum(m + b_ref[...], 0.0).astype(o_ref.dtype)


def conv3x3_relu_pool(x_nhwc, w_big, b_big, cout):
    """Conv3x3 (pad=1) + ReLU + MaxPool2 -> NHWC bf16 [B, H/2, W/2, cout]."""
    B, H, W, C = x_nhwc.shape
    assert H % 2 == 0 and W % 2 == 0
    Cf = b_big.shape[1]              # fold * cout  (lane-dense, multiple of 128)
    fold = Cf // cout
    Kf = w_big.shape[0]              # fold * 9 * C
    assert Kf == fold * 9 * C
    M = B * (H // 2) * (W // 2)
    assert M % fold == 0, "pooled spatial size must be divisible by the lane fold"
    Mf = M // fold

    phases = _corner_patches_3x3(x_nhwc.astype(jnp.bfloat16))   # (4, M, 9C)
    phases = phases.reshape(4, Mf, Kf)                          # free row-major reshape

    tmf = _pick_tile(Mf, 1024, 8)
    block_bytes = (4 * tmf * Kf * 2) + (Kf * Cf * 2) + (Cf * 4) + (tmf * Cf * 2)
    out = pl.pallas_call(
        _conv3x3_pool_kernel,
        out_shape=jax.ShapeDtypeStruct((Mf, Cf), jnp.bfloat16),
        grid=(Mf // tmf,),
        in_specs=[pl.BlockSpec((4, tmf, Kf), lambda i: (0, i, 0)),
                  pl.BlockSpec((Kf, Cf), lambda i: (0, 0)),
                  pl.BlockSpec((1, Cf), lambda i: (0, 0))],
        out_specs=pl.BlockSpec((tmf, Cf), lambda i: (i, 0)),
        compiler_params=_mosaic_params(("parallel",), block_bytes),
    )(phases, w_big, b_big)
    return out.reshape(B, H // 2, W // 2, cout)


# -----------------------------------------------------------------------------
# Kernel 2: fused rgb surrogate backbone: Conv3x3(3->64)+ReLU -> GAP -> Linear(64->512)
#   grid = (B, spatial row-tiles); GAP kept as an (8, C) partial sum in VMEM,
#   final 8->1 reduce + projection only at the last row-tile.
# -----------------------------------------------------------------------------
def _rgb_stem_kernel(x_ref, ws_ref, bs_ref, wp_ref, bp_ref, o_ref, acc_ref, *, inv_hw):
    r = pl.program_id(1)

    @pl.when(r == 0)
    def _():
        acc_ref[...] = jnp.zeros_like(acc_ref)

    h = jnp.dot(x_ref[0], ws_ref[...], preferred_element_type=jnp.float32)   # (tr, C)
    h = jnp.maximum(h + bs_ref[...], 0.0)
    tr, c = h.shape
    acc_ref[...] += jnp.sum(h.reshape(tr // 8, 8, c), axis=0)                # (8, C)

    @pl.when(r == pl.num_programs(1) - 1)
    def _():
        feat = (jnp.sum(acc_ref[...], axis=0, keepdims=True) * inv_hw).astype(jnp.bfloat16)
        proj = jnp.dot(feat, wp_ref[...], preferred_element_type=jnp.float32) + bp_ref[...]
        o_ref[...] = proj.reshape(o_ref.shape).astype(o_ref.dtype)


def rgb_stem_gap_proj(x_nhwc, w_stem, b_stem, w_proj, b_proj):
    B, H, W, C = x_nhwc.shape
    K = w_stem.shape[0]
    Cout = w_stem.shape[1]
    P = w_proj.shape[1]
    HW = H * W
    assert HW % 8 == 0
    # TODO(synk): im2col stays in XLA here (9x expansion of a 3-channel image);
    # an in-kernel halo'd variant would need manual DMA and was left out for safety.
    patches = _im2col_3x3_batched(x_nhwc.astype(jnp.bfloat16))   # [B, HW, 9C] bf16

    tr = _pick_tile(HW, 8192, 8)
    R = HW // tr
    block_bytes = tr * K * 2 + K * Cout * 2 + Cout * 4 + Cout * P * 2 + P * 4 + P * 2
    out = pl.pallas_call(
        functools.partial(_rgb_stem_kernel, inv_hw=1.0 / float(HW)),
        out_shape=jax.ShapeDtypeStruct((B, 1, P), jnp.bfloat16),
        grid=(B, R),
        in_specs=[
            pl.BlockSpec((1, tr, K), lambda b, r: (b, r, 0)),
            pl.BlockSpec((K, Cout), lambda b, r: (0, 0)),
            pl.BlockSpec((1, Cout), lambda b, r: (0, 0)),
            pl.BlockSpec((Cout, P), lambda b, r: (0, 0)),
            pl.BlockSpec((1, P), lambda b, r: (0, 0)),
        ],
        out_specs=pl.BlockSpec((1, 1, P), lambda b, r: (b, 0, 0)),
        scratch_shapes=[pltpu.VMEM((8, Cout), jnp.float32)],
        compiler_params=_mosaic_params(("parallel", "arbitrary"), block_bytes,
                                       scratch_bytes=8 * Cout * 4),
    )(patches, w_stem, b_stem, w_proj, b_proj)
    return out.reshape(B, P)


# -----------------------------------------------------------------------------
# Kernel 3a: fused fc1 (+ trait_fc) : z1 = relu(fc1(concat(rgb, dsm, trait(extra))))
#   grid = (n1 column tiles [parallel -> both v7x TensorCores], Fd K-tiles [arbitrary])
# -----------------------------------------------------------------------------
def _fc1_kernel(rgb_ref, dsm_ref, ex_ref, wt_ref, bt_ref,
                w1r_ref, w1d_ref, w1e_ref, b1_ref, z1_ref, acc_ref):
    k = pl.program_id(1)

    @pl.when(k == 0)
    def _():
        ef = jnp.dot(ex_ref[...], wt_ref[...], preferred_element_type=jnp.float32)
        ef = jnp.maximum(ef + bt_ref[...], 0.0).astype(jnp.bfloat16)
        base = jnp.dot(rgb_ref[...], w1r_ref[...], preferred_element_type=jnp.float32)
        base = base + jnp.dot(ef, w1e_ref[...], preferred_element_type=jnp.float32)
        acc_ref[...] = base + b1_ref[...]

    acc_ref[...] += jnp.dot(dsm_ref[...], w1d_ref[...], preferred_element_type=jnp.float32)

    @pl.when(k == pl.num_programs(1) - 1)
    def _():
        # TODO(synk): nn.Dropout(0.3) is identity in eval mode; not implemented.
        z1_ref[...] = jnp.maximum(acc_ref[...], 0.0).astype(z1_ref.dtype)


def fc1_fused(rgb_feat, dsm_feat, extra, p):
    B = rgb_feat.shape[0]
    n_rgb = rgb_feat.shape[1]
    Fd = dsm_feat.shape[1]
    n_t = p['trait_b'].shape[1]
    n1 = p['fc1_b'].shape[1]

    tn1 = _pick_tile(n1, 256, 128)
    tk = _pick_tile(Fd, 4096, 128)
    nj, nk = n1 // tn1, Fd // tk

    block_bytes = (B * n_rgb * 2 + B * tk * 2 + B * 2 * 2 + 2 * n_t * 2 + n_t * 4
                   + n_rgb * tn1 * 2 + tk * tn1 * 2 + n_t * tn1 * 2 + tn1 * 4
                   + B * tn1 * 2)
    return pl.pallas_call(
        _fc1_kernel,
        out_shape=jax.ShapeDtypeStruct((B, n1), jnp.bfloat16),
        grid=(nj, nk),
        in_specs=[
            pl.BlockSpec((B, n_rgb), lambda j, k: (0, 0)),     # rgb_feat
            pl.BlockSpec((B, tk), lambda j, k: (0, k)),        # dsm_feat (K-tiled)
            pl.BlockSpec((B, 2), lambda j, k: (0, 0)),         # extra
            pl.BlockSpec((2, n_t), lambda j, k: (0, 0)),       # trait w
            pl.BlockSpec((1, n_t), lambda j, k: (0, 0)),       # trait b
            pl.BlockSpec((n_rgb, tn1), lambda j, k: (0, j)),   # fc1 rgb rows
            pl.BlockSpec((tk, tn1), lambda j, k: (k, j)),      # fc1 dsm rows (K-tiled)
            pl.BlockSpec((n_t, tn1), lambda j, k: (0, j)),     # fc1 extra rows
            pl.BlockSpec((1, tn1), lambda j, k: (0, j)),       # fc1 b
        ],
        out_specs=pl.BlockSpec((B, tn1), lambda j, k: (0, j)),
        scratch_shapes=[pltpu.VMEM((B, tn1), jnp.float32)],
        compiler_params=_mosaic_params(("parallel", "arbitrary"), block_bytes,
                                       scratch_bytes=B * tn1 * 4),
    )(rgb_feat, dsm_feat, extra.astype(jnp.bfloat16),
      p['trait_w'], p['trait_b'],
      p['fc1_w_rgb'], p['fc1_w_dsm'], p['fc1_w_ex'], p['fc1_b'])


# -----------------------------------------------------------------------------
# Kernel 3b: tiny fc2 + ReLU + fc3 epilogue
# -----------------------------------------------------------------------------
def _fc23_kernel(z1_ref, w2_ref, b2_ref, w3_ref, b3_ref, o_ref):
    z2 = jnp.dot(z1_ref[...], w2_ref[...], preferred_element_type=jnp.float32) + b2_ref[...]
    z2 = jnp.maximum(z2, 0.0).astype(jnp.bfloat16)
    out = jnp.dot(z2, w3_ref[...], preferred_element_type=jnp.float32) + b3_ref[...]
    o_ref[...] = out.astype(o_ref.dtype)


def fc23(z1, p):
    B, n1 = z1.shape
    n2 = p['fc2_b'].shape[1]
    n_out = p['fc3_b'].shape[1]
    block_bytes = B * n1 * 2 + n1 * n2 * 2 + n2 * 4 + n2 * n_out * 2 + n_out * 4 + B * n_out * 4
    return pl.pallas_call(
        _fc23_kernel,
        out_shape=jax.ShapeDtypeStruct((B, n_out), jnp.float32),
        grid=(1,),
        in_specs=[pl.BlockSpec((B, n1), lambda i: (0, 0)),
                  pl.BlockSpec((n1, n2), lambda i: (0, 0)),
                  pl.BlockSpec((1, n2), lambda i: (0, 0)),
                  pl.BlockSpec((n2, n_out), lambda i: (0, 0)),
                  pl.BlockSpec((1, n_out), lambda i: (0, 0))],
        out_specs=pl.BlockSpec((B, n_out), lambda i: (0, 0)),
        compiler_params=_mosaic_params(("arbitrary",), block_bytes),
    )(z1, p['fc2_w'], p['fc2_b'], p['fc3_w'], p['fc3_b'])


# -----------------------------------------------------------------------------
# Parameters: reference-layout f32 init + one-time kernel-ready preparation
# -----------------------------------------------------------------------------
def init_params(key, resize_shape=(32, 32)):
    Hr, Wr = resize_shape
    ks = jax.random.split(key, 8)

    def lin(k, fan_in, fan_out):
        kw, kb = jax.random.split(k)
        w = jax.random.normal(kw, (fan_in, fan_out), jnp.float32) / math.sqrt(fan_in)
        b = 0.01 * jax.random.normal(kb, (fan_out,), jnp.float32)
        return w, b

    p = {}
    # rgb surrogate backbone: conv3x3(3->64)+ReLU -> GAP -> linear(64->512)
    p['rgb_stem_w'], p['rgb_stem_b'] = lin(ks[0], 9 * 3, 64)
    p['rgb_proj_w'], p['rgb_proj_b'] = lin(ks[1], 64, 512)
    # dsm_conv: Conv2d(1,16,3,p=1), Conv2d(16,32,3,p=1)  (im2col weights [9*Cin, Cout])
    p['dsm_w1'], p['dsm_b1'] = lin(ks[2], 9 * 1, 16)
    p['dsm_w2'], p['dsm_b2'] = lin(ks[3], 9 * 16, 32)
    # trait_fc: Linear(2, 32)
    p['trait_w'], p['trait_b'] = lin(ks[4], 2, 32)
    # head: Linear(feat,512), Linear(512,256), Linear(256,2); fc1 rows ordered as
    # PyTorch would see them: [rgb(512) | dsm NCHW-flatten (32*H/4*W/4) | extra(32)]
    dsm_flat = 32 * (Hr // 4) * (Wr // 4)
    feat = 512 + dsm_flat + 32
    p['fc1_w'], p['fc1_b'] = lin(ks[5], feat, 512)
    p['fc2_w'], p['fc2_b'] = lin(ks[6], 512, 256)
    p['fc3_w'], p['fc3_b'] = lin(ks[7], 256, 2)
    return p


def prepare_params(p, resize_shape=(32, 32)):
    """One-time, outside-jit conversion to kernel-ready layout/dtypes:
    bf16 weight casts, (1,n) f32 biases, block-diagonal folded conv weights,
    fc1 split into rgb/dsm/extra row blocks with the dsm rows permuted from
    PyTorch NCHW-flatten order to the NHWC-flatten order the kernels produce."""
    Hr, Wr = resize_shape
    H4, W4 = Hr // 4, Wr // 4
    bf, f32 = jnp.bfloat16, jnp.float32
    q = {}

    q['rgb_stem_w'] = p['rgb_stem_w'].astype(bf)
    q['rgb_stem_b'] = p['rgb_stem_b'].reshape(1, -1).astype(f32)
    q['rgb_proj_w'] = p['rgb_proj_w'].astype(bf)
    q['rgb_proj_b'] = p['rgb_proj_b'].reshape(1, -1).astype(f32)

    for i, cout in ((1, 16), (2, 32)):
        w = p[f'dsm_w{i}']
        b = p[f'dsm_b{i}'].reshape(1, -1)
        fold = max(1, 128 // cout)
        q[f'dsm_w{i}_big'] = jnp.kron(jnp.eye(fold, dtype=f32), w).astype(bf)
        q[f'dsm_b{i}_big'] = jnp.tile(b, (1, fold)).astype(f32)

    q['trait_w'] = p['trait_w'].astype(bf)
    q['trait_b'] = p['trait_b'].reshape(1, -1).astype(f32)

    n_rgb, n_t = 512, 32
    Fd = 32 * H4 * W4
    w1 = p['fc1_w']
    q['fc1_w_rgb'] = w1[:n_rgb].astype(bf)
    w1d = w1[n_rgb:n_rgb + Fd]
    q['fc1_w_dsm'] = (w1d.reshape(32, H4, W4, -1).transpose(1, 2, 0, 3)
                      .reshape(Fd, -1).astype(bf))          # (c,h,w) -> (h,w,c) rows
    q['fc1_w_ex'] = w1[n_rgb + Fd:].astype(bf)
    q['fc1_b'] = p['fc1_b'].reshape(1, -1).astype(f32)

    q['fc2_w'] = p['fc2_w'].astype(bf)
    q['fc2_b'] = p['fc2_b'].reshape(1, -1).astype(f32)
    q['fc3_w'] = p['fc3_w'].astype(bf)
    q['fc3_b'] = p['fc3_b'].reshape(1, -1).astype(f32)
    return q


# -----------------------------------------------------------------------------
# Forward pass (mirrors MaxViTConfidenceAddtwoextrainput.forward)
# -----------------------------------------------------------------------------
def forward(params, rgb_nchw, dsm_nchw, extra_input, resize_shape=(32, 32)):
    B = rgb_nchw.shape[0]
    Hr, Wr = resize_shape

    # F.interpolate(..., mode='bilinear', align_corners=False, antialias=False)
    rgb = jax.image.resize(rgb_nchw.astype(jnp.float32), (B, 3, Hr, Wr),
                           method='bilinear', antialias=False)
    dsm = jax.image.resize(dsm_nchw.astype(jnp.float32), (B, 1, Hr, Wr),
                           method='bilinear', antialias=False)

    # NCHW (PyTorch) -> NHWC (kernel layout)
    rgb_nhwc = jnp.transpose(rgb, (0, 2, 3, 1))
    dsm_nhwc = jnp.transpose(dsm, (0, 2, 3, 1))

    # ---- RGB branch (surrogate backbone, fully fused conv+GAP+projection) ----
    # TODO(synk): pretrained timm 'maxvit_tiny_tf_224.in1k' backbone not reproduced;
    # surrogate emits the same 512-dim pooled feature the timm model exposes.
    rgb_feat = rgb_stem_gap_proj(rgb_nhwc,
                                 params['rgb_stem_w'], params['rgb_stem_b'],
                                 params['rgb_proj_w'], params['rgb_proj_b'])   # [B,512] bf16

    # ---- DSM branch (conv+relu+pool fused, lane-dense stores) ----
    h1 = conv3x3_relu_pool(dsm_nhwc, params['dsm_w1_big'], params['dsm_b1_big'],
                           cout=16)                                  # [B,Hr/2,Wr/2,16]
    h2 = conv3x3_relu_pool(h1, params['dsm_w2_big'], params['dsm_b2_big'],
                           cout=32)                                  # [B,Hr/4,Wr/4,32]
    # NHWC flatten; fc1 dsm weight rows were permuted to this order at prep time.
    dsm_feat = h2.reshape(B, -1)                                     # [B, Fd] bf16

    # ---- fused head (trait_fc + fc1 in one kernel, tiny fc2/fc3 epilogue) ----
    z1 = fc1_fused(rgb_feat, dsm_feat, extra_input, params)          # [B, 512] bf16
    return fc23(z1, params)                                          # [B, 2]  f32


# -----------------------------------------------------------------------------
if __name__ == "__main__":
    resize_shape = (32, 32)        # small stand-in for the default (224, 224)
    key = jax.random.PRNGKey(0)
    k1, k2, k3 = jax.random.split(key, 3)

    rgb = jax.random.normal(k1, (2, 3, 48, 48), jnp.float32)    # NCHW
    dsm = jax.random.normal(k2, (2, 1, 40, 40), jnp.float32)    # NCHW
    extra = jax.random.normal(k3, (2, 2), jnp.float32)

    raw_params = init_params(jax.random.PRNGKey(42), resize_shape=resize_shape)
    params = prepare_params(raw_params, resize_shape=resize_shape)   # one-time prep

    fwd = jax.jit(functools.partial(forward, resize_shape=resize_shape))
    out = fwd(params, rgb, dsm, extra)
    out = jax.block_until_ready(out)

    assert out.shape == (2, 2), out.shape
    assert bool(jnp.all(jnp.isfinite(out)))
    print("KERNEL_OK")
</pallas_src>

<mosaic_0001>
module attributes {stable_mosaic.version = 11 : i64} {
  func.func @_rgb_stem_kernel(%arg0: i32, %arg1: i32, %arg2: memref<1x1024x27xbf16, #tpu.memory_space<vmem>>, %arg3: memref<27x64xbf16, #tpu.memory_space<vmem>>, %arg4: memref<1x64xf32, #tpu.memory_space<vmem>>, %arg5: memref<64x512xbf16, #tpu.memory_space<vmem>>, %arg6: memref<1x512xf32, #tpu.memory_space<vmem>>, %arg7: memref<1x1x512xbf16, #tpu.memory_space<vmem>>, %arg8: memref<8x64xf32, #tpu.memory_space<vmem>>) attributes {dimension_semantics = [#tpu.dimension_semantics<parallel>, #tpu.dimension_semantics<arbitrary>], iteration_bounds = array<i64: 2, 1>, scalar_prefetch = 0 : i64, scratch_operands = 1 : i64, tpu.core_type = #tpu.core_type<tc>, window_params = [{transform_indices = @transform_0, window_bounds = array<i64: 1, 1024, 27>}, {pipeline_mode = #tpu.pipeline_mode<synchronous>, transform_indices = @transform_1, window_bounds = array<i64: 27, 64>}, {pipeline_mode = #tpu.pipeline_mode<synchronous>, transform_indices = @transform_2, window_bounds = array<i64: 1, 64>}, {pipeline_mode = #tpu.pipeline_mode<synchronous>, transform_indices = @transform_3, window_bounds = array<i64: 64, 512>}, {pipeline_mode = #tpu.pipeline_mode<synchronous>, transform_indices = @transform_4, window_bounds = array<i64: 1, 512>}, {transform_indices = @transform_5, window_bounds = array<i64: 1, 1, 512>}]} {
    %c0_i32 = arith.constant 0 : i32
    %0 = arith.cmpi eq, %arg1, %c0_i32 : i32
    %1 = arith.extui %0 : i1 to i32
    %c0_i32_0 = arith.constant 0 : i32
    %2 = arith.cmpi ne, %1, %c0_i32_0 : i32
    scf.if %2 {
      %cst_15 = arith.constant 0.000000e+00 : f32
      %20 = vector.broadcast %cst_15 : f32 to vector<8x64xf32>
      %c0_16 = arith.constant 0 : index
      %c0_17 = arith.constant 0 : index
      %21 = vector.load %arg8[%c0_16, %c0_17] : memref<8x64xf32, #tpu.memory_space<vmem>>, vector<8x64xf32>
      tpu.vector_store %arg8[%c0_16, %c0_17], %20 {strides = array<i32>} : memref<8x64xf32, #tpu.memory_space<vmem>>, vector<8x64xf32>,
    } else {
    }
    %c0 = arith.constant 0 : index
    %c0_1 = arith.constant 0 : index
    %c0_2 = arith.constant 0 : index
    %3 = vector.load %arg2[%c0, %c0_1, %c0_2] : memref<1x1024x27xbf16, #tpu.memory_space<vmem>>, vector<1x1024x27xbf16>
    %4 = vector.shape_cast %3 : vector<1x1024x27xbf16> to vector<1024x27xbf16>
    %c0_3 = arith.constant 0 : index
    %c0_4 = arith.constant 0 : index
    %5 = vector.load %arg3[%c0_3, %c0_4] : memref<27x64xbf16, #tpu.memory_space<vmem>>, vector<27x64xbf16>
    %cst = arith.constant dense<0.000000e+00> : vector<1024x64xf32>
    %6 = tpu.matmul %4, %5, %cst {dimension_numbers = #tpu.dot_dimension_numbers<[1], [0], [0], [1], [0, 0, 1, 1], [], []>} : vector<1024x27xbf16>, vector<27x64xbf16>, vector<1024x64xf32> -> vector<1024x64xf32>
    %c0_5 = arith.constant 0 : index
    %c0_6 = arith.constant 0 : index
    %7 = vector.load %arg4[%c0_5, %c0_6] : memref<1x64xf32, #tpu.memory_space<vmem>>, vector<1x64xf32>
    %8 = vector.broadcast %7 : vector<1x64xf32> to vector<1024x64xf32>
    %9 = arith.addf %6, %8 : vector<1024x64xf32>
    %cst_7 = arith.constant 0.000000e+00 : f32
    %10 = vector.broadcast %cst_7 : f32 to vector<1024x64xf32>
    %11 = arith.maximumf %9, %10 : vector<1024x64xf32>
    %c0_8 = arith.constant 0 : index
    %c0_9 = arith.constant 0 : index
    %12 = vector.load %arg8[%c0_8, %c0_9] : memref<8x64xf32, #tpu.memory_space<vmem>>, vector<8x64xf32>
    %13 = vector.shape_cast %11 : vector<1024x64xf32> to vector<128x8x64xf32>
    %cst_10 = arith.constant dense<0.000000e+00> : vector<8x64xf32>
    %14 = vector.multi_reduction <add>, %13, %cst_10 [0] : vector<128x8x64xf32> to vector<8x64xf32>
    %15 = arith.addf %12, %14 : vector<8x64xf32>
    %c0_11 = arith.constant 0 : index
    %c0_12 = arith.constant 0 : index
    %16 = vector.load %arg8[%c0_11, %c0_12] : memref<8x64xf32, #tpu.memory_space<vmem>>, vector<8x64xf32>
    tpu.vector_store %arg8[%c0_11, %c0_12], %15 {strides = array<i32>} : memref<8x64xf32, #tpu.memory_space<vmem>>, vector<8x64xf32>,
    %c0_i32_13 = arith.constant 0 : i32
    %17 = arith.cmpi eq, %arg1, %c0_i32_13 : i32
    %18 = arith.extui %17 : i1 to i32
    %c0_i32_14 = arith.constant 0 : i32
    %19 = arith.cmpi ne, %18, %c0_i32_14 : i32
    scf.if %19 {
      %c0_15 = arith.constant 0 : index
      %c0_16 = arith.constant 0 : index
      %20 = vector.load %arg8[%c0_15, %c0_16] : memref<8x64xf32, #tpu.memory_space<vmem>>, vector<8x64xf32>
      %cst_17 = arith.constant dense<0.000000e+00> : vector<64xf32>
      %21 = vector.multi_reduction <add>, %20, %cst_17 [0] : vector<8x64xf32> to vector<64xf32>
      %22 = vector.shape_cast %21 : vector<64xf32> to vector<1x64xf32>
      %cst_18 = arith.constant 9.765625E-4 : f32
      %23 = vector.broadcast %cst_18 : f32 to vector<1x64xf32>
      %24 = arith.mulf %22, %23 : vector<1x64xf32>
      %25 = arith.truncf %24 : vector<1x64xf32> to vector<1x64xbf16>
      %c0_19 = arith.constant 0 : index
      %c0_20 = arith.constant 0 : index
      %26 = vector.load %arg5[%c0_19, %c0_20] : memref<64x512xbf16, #tpu.memory_space<vmem>>, vector<64x512xbf16>
      %cst_21 = arith.constant dense<0.000000e+00> : vector<1x512xf32>
      %27 = tpu.matmul %25, %26, %cst_21 {dimension_numbers = #tpu.dot_dimension_numbers<[1], [0], [0], [1], [0, 0, 1, 1], [], []>} : vector<1x64xbf16>, vector<64x512xbf16>, vector<1x512xf32> -> vector<1x512xf32>
      %c0_22 = arith.constant 0 : index
      %c0_23 = arith.constant 0 : index
      %28 = vector.load %arg6[%c0_22, %c0_23] : memref<1x512xf32, #tpu.memory_space<vmem>>, vector<1x512xf32>
      %29 = arith.addf %27, %28 : vector<1x512xf32>
      %30 = vector.shape_cast %29 : vector<1x512xf32> to vector<1x1x512xf32>
      %31 = arith.truncf %30 : vector<1x1x512xf32> to vector<1x1x512xbf16>
      %c0_24 = arith.constant 0 : index
      %c0_25 = arith.constant 0 : index
      %c0_26 = arith.constant 0 : index
      %32 = vector.load %arg7[%c0_24, %c0_25, %c0_26] : memref<1x1x512xbf16, #tpu.memory_space<vmem>>, vector<1x1x512xbf16>
      tpu.vector_store %arg7[%c0_24, %c0_25, %c0_26], %31 {strides = array<i32>} : memref<1x1x512xbf16, #tpu.memory_space<vmem>>, vector<1x1x512xbf16>,
    } else {
    }
    return
  }
  func.func @transform_0(%arg0: i32, %arg1: i32) -> (i32, i32, i32) {
    %c0_i32 = arith.constant 0 : i32
    %c0_i32_0 = arith.constant 0 : i32
    return %arg0, %arg1, %c0_i32 : i32, i32, i32
  }
  func.func @transform_1(%arg0: i32, %arg1: i32) -> (i32, i32) {
    %c0_i32 = arith.constant 0 : i32
    %c0_i32_0 = arith.constant 0 : i32
    %c0_i32_1 = arith.constant 0 : i32
    return %c0_i32, %c0_i32_0 : i32, i32
  }
  func.func @transform_2(%arg0: i32, %arg1: i32) -> (i32, i32) {
    %c0_i32 = arith.constant 0 : i32
    %c0_i32_0 = arith.constant 0 : i32
    %c0_i32_1 = arith.constant 0 : i32
    return %c0_i32, %c0_i32_0 : i32, i32
  }
  func.func @transform_3(%arg0: i32, %arg1: i32) -> (i32, i32) {
    %c0_i32 = arith.constant 0 : i32
    %c0_i32_0 = arith.constant 0 : i32
    %c0_i32_1 = arith.constant 0 : i32
    return %c0_i32, %c0_i32_0 : i32, i32
  }
  func.func @transform_4(%arg0: i32, %arg1: i32) -> (i32, i32) {
    %c0_i32 = arith.constant 0 : i32
    %c0_i32_0 = arith.constant 0 : i32
    %c0_i32_1 = arith.constant 0 : i32
    return %c0_i32, %c0_i32_0 : i32, i32
  }
  func.func @transform_5(%arg0: i32, %arg1: i32) -> (i32, i32, i32) {
    %c0_i32 = arith.constant 0 : i32
    %c0_i32_0 = arith.constant 0 : i32
    %c0_i32_1 = arith.constant 0 : i32
    return %arg0, %c0_i32, %c0_i32_0 : i32, i32, i32
  }
}

module attributes {stable_mosaic.version = 11 : i64} {
  func.func @_conv3x3_pool_kernel(%arg0: i32, %arg1: memref<4x64x72xbf16, #tpu.memory_space<vmem>>, %arg2: memref<72x128xbf16, #tpu.memory_space<vmem>>, %arg3: memref<1x128xf32, #tpu.memory_space<vmem>>, %arg4: memref<64x128xbf16, #tpu.memory_space<vmem>>) attributes {dimension_semantics = [#tpu.dimension_semantics<parallel>], iteration_bounds = array<i64: 1>, scalar_prefetch = 0 : i64, scratch_operands = 0 : i64, tpu.core_type = #tpu.core_type<tc>, window_params = [{transform_indices = @transform_0, window_bounds = array<i64: 4, 64, 72>}, {pipeline_mode = #tpu.pipeline_mode<synchronous>, transform_indices = @transform_1, window_bounds = array<i64: 72, 128>}, {pipeline_mode = #tpu.pipeline_mode<synchronous>, transform_indices = @transform_2, window_bounds = array<i64: 1, 128>}, {transform_indices = @transform_3, window_bounds = array<i64: 64, 128>}]} {
    %c0 = arith.constant 0 : index
    %c0_0 = arith.constant 0 : index
    %c0_1 = arith.constant 0 : index
    %0 = vector.load %arg1[%c0, %c0_0, %c0_1] : memref<4x64x72xbf16, #tpu.memory_space<vmem>>, vector<4x64x72xbf16>
    %1 = vector.shape_cast %0 : vector<4x64x72xbf16> to vector<256x72xbf16>
    %c0_2 = arith.constant 0 : index
    %c0_3 = arith.constant 0 : index
    %2 = vector.load %arg2[%c0_2, %c0_3] : memref<72x128xbf16, #tpu.memory_space<vmem>>, vector<72x128xbf16>
    %cst = arith.constant dense<0.000000e+00> : vector<256x128xf32>
    %3 = tpu.matmul %1, %2, %cst {dimension_numbers = #tpu.dot_dimension_numbers<[1], [0], [0], [1], [0, 0, 1, 1], [], []>} : vector<256x72xbf16>, vector<72x128xbf16>, vector<256x128xf32> -> vector<256x128xf32>
    %4 = vector.extract_strided_slice %3 {offsets = [0, 0], sizes = [64, 128], strides = [1, 1]} : vector<256x128xf32> to vector<64x128xf32>
    %5 = vector.extract_strided_slice %3 {offsets = [64, 0], sizes = [64, 128], strides = [1, 1]} : vector<256x128xf32> to vector<64x128xf32>
    %6 = arith.maximumf %4, %5 : vector<64x128xf32>
    %7 = vector.extract_strided_slice %3 {offsets = [128, 0], sizes = [64, 128], strides = [1, 1]} : vector<256x128xf32> to vector<64x128xf32>
    %8 = vector.extract_strided_slice %3 {offsets = [192, 0], sizes = [64, 128], strides = [1, 1]} : vector<256x128xf32> to vector<64x128xf32>
    %9 = arith.maximumf %7, %8 : vector<64x128xf32>
    %10 = arith.maximumf %6, %9 : vector<64x128xf32>
    %c0_4 = arith.constant 0 : index
    %c0_5 = arith.constant 0 : index
    %11 = vector.load %arg3[%c0_4, %c0_5] : memref<1x128xf32, #tpu.memory_space<vmem>>, vector<1x128xf32>
    %12 = vector.broadcast %11 : vector<1x128xf32> to vector<64x128xf32>
    %13 = arith.addf %10, %12 : vector<64x128xf32>
    %cst_6 = arith.constant 0.000000e+00 : f32
    %14 = vector.broadcast %cst_6 : f32 to vector<64x128xf32>
    %15 = arith.maximumf %13, %14 : vector<64x128xf32>
    %16 = arith.truncf %15 : vector<64x128xf32> to vector<64x128xbf16>
    %c0_7 = arith.constant 0 : index
    %c0_8 = arith.constant 0 : index
    %17 = vector.load %arg4[%c0_7, %c0_8] : memref<64x128xbf16, #tpu.memory_space<vmem>>, vector<64x128xbf16>
    tpu.vector_store %arg4[%c0_7, %c0_8], %16 {strides = array<i32>} : memref<64x128xbf16, #tpu.memory_space<vmem>>, vector<64x128xbf16>,
    return
  }
  func.func @transform_0(%arg0: i32) -> (i32, i32, i32) {
    %c0_i32 = arith.constant 0 : i32
    %c0_i32_0 = arith.constant 0 : i32
    %c0_i32_1 = arith.constant 0 : i32
    return %c0_i32, %arg0, %c0_i32_0 : i32, i32, i32
  }
  func.func @transform_1(%arg0: i32) -> (i32, i32) {
    %c0_i32 = arith.constant 0 : i32
    %c0_i32_0 = arith.constant 0 : i32
    %c0_i32_1 = arith.constant 0 : i32
    return %c0_i32, %c0_i32_0 : i32, i32
  }
  func.func @transform_2(%arg0: i32) -> (i32, i32) {
    %c0_i32 = arith.constant 0 : i32
    %c0_i32_0 = arith.constant 0 : i32
    %c0_i32_1 = arith.constant 0 : i32
    return %c0_i32, %c0_i32_0 : i32, i32
  }
  func.func @transform_3(%arg0: i32) -> (i32, i32) {
    %c0_i32 = arith.constant 0 : i32
    %c0_i32_0 = arith.constant 0 : i32
    return %arg0, %c0_i32 : i32, i32
  }
}

module attributes {stable_mosaic.version = 11 : i64} {
  func.func @_conv3x3_pool_kernel(%arg0: i32, %arg1: memref<4x32x576xbf16, #tpu.memory_space<vmem>>, %arg2: memref<576x128xbf16, #tpu.memory_space<vmem>>, %arg3: memref<1x128xf32, #tpu.memory_space<vmem>>, %arg4: memref<32x128xbf16, #tpu.memory_space<vmem>>) attributes {dimension_semantics = [#tpu.dimension_semantics<parallel>], iteration_bounds = array<i64: 1>, scalar_prefetch = 0 : i64, scratch_operands = 0 : i64, tpu.core_type = #tpu.core_type<tc>, window_params = [{transform_indices = @transform_0, window_bounds = array<i64: 4, 32, 576>}, {pipeline_mode = #tpu.pipeline_mode<synchronous>, transform_indices = @transform_1, window_bounds = array<i64: 576, 128>}, {pipeline_mode = #tpu.pipeline_mode<synchronous>, transform_indices = @transform_2, window_bounds = array<i64: 1, 128>}, {transform_indices = @transform_3, window_bounds = array<i64: 32, 128>}]} {
    %c0 = arith.constant 0 : index
    %c0_0 = arith.constant 0 : index
    %c0_1 = arith.constant 0 : index
    %0 = vector.load %arg1[%c0, %c0_0, %c0_1] : memref<4x32x576xbf16, #tpu.memory_space<vmem>>, vector<4x32x576xbf16>
    %1 = vector.shape_cast %0 : vector<4x32x576xbf16> to vector<128x576xbf16>
    %c0_2 = arith.constant 0 : index
    %c0_3 = arith.constant 0 : index
    %2 = vector.load %arg2[%c0_2, %c0_3] : memref<576x128xbf16, #tpu.memory_space<vmem>>, vector<576x128xbf16>
    %cst = arith.constant dense<0.000000e+00> : vector<128x128xf32>
    %3 = tpu.matmul %1, %2, %cst {dimension_numbers = #tpu.dot_dimension_numbers<[1], [0], [0], [1], [0, 0, 1, 1], [], []>} : vector<128x576xbf16>, vector<576x128xbf16>, vector<128x128xf32> -> vector<128x128xf32>
    %4 = vector.extract_strided_slice %3 {offsets = [0, 0], sizes = [32, 128], strides = [1, 1]} : vector<128x128xf32> to vector<32x128xf32>
    %5 = vector.extract_strided_slice %3 {offsets = [32, 0], sizes = [32, 128], strides = [1, 1]} : vector<128x128xf32> to vector<32x128xf32>
    %6 = arith.maximumf %4, %5 : vector<32x128xf32>
    %7 = vector.extract_strided_slice %3 {offsets = [64, 0], sizes = [32, 128], strides = [1, 1]} : vector<128x128xf32> to vector<32x128xf32>
    %8 = vector.extract_strided_slice %3 {offsets = [96, 0], sizes = [32, 128], strides = [1, 1]} : vector<128x128xf32> to vector<32x128xf32>
    %9 = arith.maximumf %7, %8 : vector<32x128xf32>
    %10 = arith.maximumf %6, %9 : vector<32x128xf32>
    %c0_4 = arith.constant 0 : index
    %c0_5 = arith.constant 0 : index
    %11 = vector.load %arg3[%c0_4, %c0_5] : memref<1x128xf32, #tpu.memory_space<vmem>>, vector<1x128xf32>
    %12 = vector.broadcast %11 : vector<1x128xf32> to vector<32x128xf32>
    %13 = arith.addf %10, %12 : vector<32x128xf32>
    %cst_6 = arith.constant 0.000000e+00 : f32
    %14 = vector.broadcast %cst_6 : f32 to vector<32x128xf32>
    %15 = arith.maximumf %13, %14 : vector<32x128xf32>
    %16 = arith.truncf %15 : vector<32x128xf32> to vector<32x128xbf16>
    %c0_7 = arith.constant 0 : index
    %c0_8 = arith.constant 0 : index
    %17 = vector.load %arg4[%c0_7, %c0_8] : memref<32x128xbf16, #tpu.memory_space<vmem>>, vector<32x128xbf16>
    tpu.vector_store %arg4[%c0_7, %c0_8], %16 {strides = array<i32>} : memref<32x128xbf16, #tpu.memory_space<vmem>>, vector<32x128xbf16>,
    return
  }
  func.func @transform_0(%arg0: i32) -> (i32, i32, i32) {
    %c0_i32 = arith.constant 0 : i32
    %c0_i32_0 = arith.constant 0 : i32
    %c0_i32_1 = arith.constant 0 : i32
    return %c0_i32, %arg0, %c0_i32_0 : i32, i32, i32
  }
  func.func @transform_1(%arg0: i32) -> (i32, i32) {
    %c0_i32 = arith.constant 0 : i32
    %c0_i32_0 = arith.constant 0 : i32
    %c0_i32_1 = arith.constant 0 : i32
    return %c0_i32, %c0_i32_0 : i32, i32
  }
  func.func @transform_2(%arg0: i32) -> (i32, i32) {
    %c0_i32 = arith.constant 0 : i32
    %c0_i32_0 = arith.constant 0 : i32
    %c0_i32_1 = arith.constant 0 : i32
    return %c0_i32, %c0_i32_0 : i32, i32
  }
  func.func @transform_3(%arg0: i32) -> (i32, i32) {
    %c0_i32 = arith.constant 0 : i32
    %c0_i32_0 = arith.constant 0 : i32
    return %arg0, %c0_i32 : i32, i32
  }
}

module attributes {stable_mosaic.version = 11 : i64} {
  func.func @_fc23_kernel(%arg0: i32, %arg1: memref<2x512xbf16, #tpu.memory_space<vmem>>, %arg2: memref<512x256xbf16, #tpu.memory_space<vmem>>, %arg3: memref<1x256xf32, #tpu.memory_space<vmem>>, %arg4: memref<256x2xbf16, #tpu.memory_space<vmem>>, %arg5: memref<1x2xf32, #tpu.memory_space<vmem>>, %arg6: memref<2x2xf32, #tpu.memory_space<vmem>>) attributes {dimension_semantics = [#tpu.dimension_semantics<arbitrary>], iteration_bounds = array<i64: 1>, scalar_prefetch = 0 : i64, scratch_operands = 0 : i64, tpu.core_type = #tpu.core_type<tc>, window_params = [{pipeline_mode = #tpu.pipeline_mode<synchronous>, transform_indices = @transform_0, window_bounds = array<i64: 2, 512>}, {pipeline_mode = #tpu.pipeline_mode<synchronous>, transform_indices = @transform_1, window_bounds = array<i64: 512, 256>}, {pipeline_mode = #tpu.pipeline_mode<synchronous>, transform_indices = @transform_2, window_bounds = array<i64: 1, 256>}, {pipeline_mode = #tpu.pipeline_mode<synchronous>, transform_indices = @transform_3, window_bounds = array<i64: 256, 2>}, {pipeline_mode = #tpu.pipeline_mode<synchronous>, transform_indices = @transform_4, window_bounds = array<i64: 1, 2>}, {pipeline_mode = #tpu.pipeline_mode<synchronous>, transform_indices = @transform_5, window_bounds = array<i64: 2, 2>}]} {
    %c0 = arith.constant 0 : index
    %c0_0 = arith.constant 0 : index
    %0 = vector.load %arg1[%c0, %c0_0] : memref<2x512xbf16, #tpu.memory_space<vmem>>, vector<2x512xbf16>
    %c0_1 = arith.constant 0 : index
    %c0_2 = arith.constant 0 : index
    %1 = vector.load %arg2[%c0_1, %c0_2] : memref<512x256xbf16, #tpu.memory_space<vmem>>, vector<512x256xbf16>
    %cst = arith.constant dense<0.000000e+00> : vector<2x256xf32>
    %2 = tpu.matmul %0, %1, %cst {dimension_numbers = #tpu.dot_dimension_numbers<[1], [0], [0], [1], [0, 0, 1, 1], [], []>} : vector<2x512xbf16>, vector<512x256xbf16>, vector<2x256xf32> -> vector<2x256xf32>
    %c0_3 = arith.constant 0 : index
    %c0_4 = arith.constant 0 : index
    %3 = vector.load %arg3[%c0_3, %c0_4] : memref<1x256xf32, #tpu.memory_space<vmem>>, vector<1x256xf32>
    %4 = vector.broadcast %3 : vector<1x256xf32> to vector<2x256xf32>
    %5 = arith.addf %2, %4 : vector<2x256xf32>
    %cst_5 = arith.constant 0.000000e+00 : f32
    %6 = vector.broadcast %cst_5 : f32 to vector<2x256xf32>
    %7 = arith.maximumf %5, %6 : vector<2x256xf32>
    %8 = arith.truncf %7 : vector<2x256xf32> to vector<2x256xbf16>
    %c0_6 = arith.constant 0 : index
    %c0_7 = arith.constant 0 : index
    %9 = vector.load %arg4[%c0_6, %c0_7] : memref<256x2xbf16, #tpu.memory_space<vmem>>, vector<256x2xbf16>
    %cst_8 = arith.constant dense<0.000000e+00> : vector<2x2xf32>
    %10 = tpu.matmul %8, %9, %cst_8 {dimension_numbers = #tpu.dot_dimension_numbers<[1], [0], [0], [1], [0, 0, 1, 1], [], []>} : vector<2x256xbf16>, vector<256x2xbf16>, vector<2x2xf32> -> vector<2x2xf32>
    %c0_9 = arith.constant 0 : index
    %c0_10 = arith.constant 0 : index
    %11 = vector.load %arg5[%c0_9, %c0_10] : memref<1x2xf32, #tpu.memory_space<vmem>>, vector<1x2xf32>
    %12 = vector.broadcast %11 : vector<1x2xf32> to vector<2x2xf32>
    %13 = arith.addf %10, %12 : vector<2x2xf32>
    %c0_11 = arith.constant 0 : index
    %c0_12 = arith.constant 0 : index
    %14 = vector.load %arg6[%c0_11, %c0_12] : memref<2x2xf32, #tpu.memory_space<vmem>>, vector<2x2xf32>
    tpu.vector_store %arg6[%c0_11, %c0_12], %13 {strides = array<i32>} : memref<2x2xf32, #tpu.memory_space<vmem>>, vector<2x2xf32>,
    return
  }
  func.func @transform_0(%arg0: i32) -> (i32, i32) {
    %c0_i32 = arith.constant 0 : i32
    %c0_i32_0 = arith.constant 0 : i32
    %c0_i32_1 = arith.constant 0 : i32
    return %c0_i32, %c0_i32_0 : i32, i32
  }
  func.func @transform_1(%arg0: i32) -> (i32, i32) {
    %c0_i32 = arith.constant 0 : i32
    %c0_i32_0 = arith.constant 0 : i32
    %c0_i32_1 = arith.constant 0 : i32
    return %c0_i32, %c0_i32_0 : i32, i32
  }
  func.func @transform_2(%arg0: i32) -> (i32, i32) {
    %c0_i32 = arith.constant 0 : i32
    %c0_i32_0 = arith.constant 0 : i32
    %c0_i32_1 = arith.constant 0 : i32
    return %c0_i32, %c0_i32_0 : i32, i32
  }
  func.func @transform_3(%arg0: i32) -> (i32, i32) {
    %c0_i32 = arith.constant 0 : i32
    %c0_i32_0 = arith.constant 0 : i32
    %c0_i32_1 = arith.constant 0 : i32
    return %c0_i32, %c0_i32_0 : i32, i32
  }
  func.func @transform_4(%arg0: i32) -> (i32, i32) {
    %c0_i32 = arith.constant 0 : i32
    %c0_i32_0 = arith.constant 0 : i32
    %c0_i32_1 = arith.constant 0 : i32
    return %c0_i32, %c0_i32_0 : i32, i32
  }
  func.func @transform_5(%arg0: i32) -> (i32, i32) {
    %c0_i32 = arith.constant 0 : i32
    %c0_i32_0 = arith.constant 0 : i32
    %c0_i32_1 = arith.constant 0 : i32
    return %c0_i32, %c0_i32_0 : i32, i32
  }
}

module attributes {stable_mosaic.version = 11 : i64} {
  func.func @_fc1_kernel(%arg0: i32, %arg1: i32, %arg2: memref<2x512xbf16, #tpu.memory_space<vmem>>, %arg3: memref<2x2048xbf16, #tpu.memory_space<vmem>>, %arg4: memref<2x2xbf16, #tpu.memory_space<vmem>>, %arg5: memref<2x32xbf16, #tpu.memory_space<vmem>>, %arg6: memref<1x32xf32, #tpu.memory_space<vmem>>, %arg7: memref<512x256xbf16, #tpu.memory_space<vmem>>, %arg8: memref<2048x256xbf16, #tpu.memory_space<vmem>>, %arg9: memref<32x256xbf16, #tpu.memory_space<vmem>>, %arg10: memref<1x256xf32, #tpu.memory_space<vmem>>, %arg11: memref<2x256xbf16, #tpu.memory_space<vmem>>, %arg12: memref<2x256xf32, #tpu.memory_space<vmem>>) attributes {dimension_semantics = [#tpu.dimension_semantics<parallel>, #tpu.dimension_semantics<arbitrary>], iteration_bounds = array<i64: 2, 1>, scalar_prefetch = 0 : i64, scratch_operands = 1 : i64, tpu.core_type = #tpu.core_type<tc>, window_params = [{pipeline_mode = #tpu.pipeline_mode<synchronous>, transform_indices = @transform_0, window_bounds = array<i64: 2, 512>}, {transform_indices = @transform_1, window_bounds = array<i64: 2, 2048>}, {pipeline_mode = #tpu.pipeline_mode<synchronous>, transform_indices = @transform_2, window_bounds = array<i64: 2, 2>}, {pipeline_mode = #tpu.pipeline_mode<synchronous>, transform_indices = @transform_3, window_bounds = array<i64: 2, 32>}, {pipeline_mode = #tpu.pipeline_mode<synchronous>, transform_indices = @transform_4, window_bounds = array<i64: 1, 32>}, {transform_indices = @transform_5, window_bounds = array<i64: 512, 256>}, {transform_indices = @transform_6, window_bounds = array<i64: 2048, 256>}, {transform_indices = @transform_7, window_bounds = array<i64: 32, 256>}, {transform_indices = @transform_8, window_bounds = array<i64: 1, 256>}, {transform_indices = @transform_9, window_bounds = array<i64: 2, 256>}]} {
    %c0_i32 = arith.constant 0 : i32
    %0 = arith.cmpi eq, %arg1, %c0_i32 : i32
    %1 = arith.extui %0 : i1 to i32
    %c0_i32_0 = arith.constant 0 : i32
    %2 = arith.cmpi ne, %1, %c0_i32_0 : i32
    scf.if %2 {
      %c0_10 = arith.constant 0 : index
      %c0_11 = arith.constant 0 : index
      %12 = vector.load %arg4[%c0_10, %c0_11] : memref<2x2xbf16, #tpu.memory_space<vmem>>, vector<2x2xbf16>
      %c0_12 = arith.constant 0 : index
      %c0_13 = arith.constant 0 : index
      %13 = vector.load %arg5[%c0_12, %c0_13] : memref<2x32xbf16, #tpu.memory_space<vmem>>, vector<2x32xbf16>
      %cst_14 = arith.constant dense<0.000000e+00> : vector<2x32xf32>
      %14 = tpu.matmul %12, %13, %cst_14 {dimension_numbers = #tpu.dot_dimension_numbers<[1], [0], [0], [1], [0, 0, 1, 1], [], []>} : vector<2x2xbf16>, vector<2x32xbf16>, vector<2x32xf32> -> vector<2x32xf32>
      %c0_15 = arith.constant 0 : index
      %c0_16 = arith.constant 0 : index
      %15 = vector.load %arg6[%c0_15, %c0_16] : memref<1x32xf32, #tpu.memory_space<vmem>>, vector<1x32xf32>
      %16 = vector.broadcast %15 : vector<1x32xf32> to vector<2x32xf32>
      %17 = arith.addf %14, %16 : vector<2x32xf32>
      %cst_17 = arith.constant 0.000000e+00 : f32
      %18 = vector.broadcast %cst_17 : f32 to vector<2x32xf32>
      %19 = arith.maximumf %17, %18 : vector<2x32xf32>
      %20 = arith.truncf %19 : vector<2x32xf32> to vector<2x32xbf16>
      %c0_18 = arith.constant 0 : index
      %c0_19 = arith.constant 0 : index
      %21 = vector.load %arg2[%c0_18, %c0_19] : memref<2x512xbf16, #tpu.memory_space<vmem>>, vector<2x512xbf16>
      %c0_20 = arith.constant 0 : index
      %c0_21 = arith.constant 0 : index
      %22 = vector.load %arg7[%c0_20, %c0_21] : memref<512x256xbf16, #tpu.memory_space<vmem>>, vector<512x256xbf16>
      %cst_22 = arith.constant dense<0.000000e+00> : vector<2x256xf32>
      %23 = tpu.matmul %21, %22, %cst_22 {dimension_numbers = #tpu.dot_dimension_numbers<[1], [0], [0], [1], [0, 0, 1, 1], [], []>} : vector<2x512xbf16>, vector<512x256xbf16>, vector<2x256xf32> -> vector<2x256xf32>
      %c0_23 = arith.constant 0 : index
      %c0_24 = arith.constant 0 : index
      %24 = vector.load %arg9[%c0_23, %c0_24] : memref<32x256xbf16, #tpu.memory_space<vmem>>, vector<32x256xbf16>
      %cst_25 = arith.constant dense<0.000000e+00> : vector<2x256xf32>
      %25 = tpu.matmul %20, %24, %cst_25 {dimension_numbers = #tpu.dot_dimension_numbers<[1], [0], [0], [1], [0, 0, 1, 1], [], []>} : vector<2x32xbf16>, vector<32x256xbf16>, vector<2x256xf32> -> vector<2x256xf32>
      %26 = arith.addf %23, %25 : vector<2x256xf32>
      %c0_26 = arith.constant 0 : index
      %c0_27 = arith.constant 0 : index
      %27 = vector.load %arg10[%c0_26, %c0_27] : memref<1x256xf32, #tpu.memory_space<vmem>>, vector<1x256xf32>
      %28 = vector.broadcast %27 : vector<1x256xf32> to vector<2x256xf32>
      %29 = arith.addf %26, %28 : vector<2x256xf32>
      %c0_28 = arith.constant 0 : index
      %c0_29 = arith.constant 0 : index
      %30 = vector.load %arg12[%c0_28, %c0_29] : memref<2x256xf32, #tpu.memory_space<vmem>>, vector<2x256xf32>
      tpu.vector_store %arg12[%c0_28, %c0_29], %29 {strides = array<i32>} : memref<2x256xf32, #tpu.memory_space<vmem>>, vector<2x256xf32>,
    } else {
    }
    %c0 = arith.constant 0 : index
    %c0_1 = arith.constant 0 : index
    %3 = vector.load %arg12[%c0, %c0_1] : memref<2x256xf32, #tpu.memory_space<vmem>>, vector<2x256xf32>
    %c0_2 = arith.constant 0 : index
    %c0_3 = arith.constant 0 : index
    %4 = vector.load %arg3[%c0_2, %c0_3] : memref<2x2048xbf16, #tpu.memory_space<vmem>>, vector<2x2048xbf16>
    %c0_4 = arith.constant 0 : index
    %c0_5 = arith.constant 0 : index
    %5 = vector.load %arg8[%c0_4, %c0_5] : memref<2048x256xbf16, #tpu.memory_space<vmem>>, vector<2048x256xbf16>
    %cst = arith.constant dense<0.000000e+00> : vector<2x256xf32>
    %6 = tpu.matmul %4, %5, %cst {dimension_numbers = #tpu.dot_dimension_numbers<[1], [0], [0], [1], [0, 0, 1, 1], [], []>} : vector<2x2048xbf16>, vector<2048x256xbf16>, vector<2x256xf32> -> vector<2x256xf32>
    %7 = arith.addf %3, %6 : vector<2x256xf32>
    %c0_6 = arith.constant 0 : index
    %c0_7 = arith.constant 0 : index
    %8 = vector.load %arg12[%c0_6, %c0_7] : memref<2x256xf32, #tpu.memory_space<vmem>>, vector<2x256xf32>
    tpu.vector_store %arg12[%c0_6, %c0_7], %7 {strides = array<i32>} : memref<2x256xf32, #tpu.memory_space<vmem>>, vector<2x256xf32>,
    %c0_i32_8 = arith.constant 0 : i32
    %9 = arith.cmpi eq, %arg1, %c0_i32_8 : i32
    %10 = arith.extui %9 : i1 to i32
    %c0_i32_9 = arith.constant 0 : i32
    %11 = arith.cmpi ne, %10, %c0_i32_9 : i32
    scf.if %11 {
      %c0_10 = arith.constant 0 : index
      %c0_11 = arith.constant 0 : index
      %12 = vector.load %arg12[%c0_10, %c0_11] : memref<2x256xf32, #tpu.memory_space<vmem>>, vector<2x256xf32>
      %cst_12 = arith.constant 0.000000e+00 : f32
      %13 = vector.broadcast %cst_12 : f32 to vector<2x256xf32>
      %14 = arith.maximumf %12, %13 : vector<2x256xf32>
      %15 = arith.truncf %14 : vector<2x256xf32> to vector<2x256xbf16>
      %c0_13 = arith.constant 0 : index
      %c0_14 = arith.constant 0 : index
      %16 = vector.load %arg11[%c0_13, %c0_14] : memref<2x256xbf16, #tpu.memory_space<vmem>>, vector<2x256xbf16>
      tpu.vector_store %arg11[%c0_13, %c0_14], %15 {strides = array<i32>} : memref<2x256xbf16, #tpu.memory_space<vmem>>, vector<2x256xbf16>,
    } else {
    }
    return
  }
  func.func @transform_0(%arg0: i32, %arg1: i32) -> (i32, i32) {
    %c0_i32 = arith.constant 0 : i32
    %c0_i32_0 = arith.constant 0 : i32
    %c0_i32_1 = arith.constant 0 : i32
    return %c0_i32, %c0_i32_0 : i32, i32
  }
  func.func @transform_1(%arg0: i32, %arg1: i32) -> (i32, i32) {
    %c0_i32 = arith.constant 0 : i32
    %c0_i32_0 = arith.constant 0 : i32
    return %c0_i32, %arg1 : i32, i32
  }
  func.func @transform_2(%arg0: i32, %arg1: i32) -> (i32, i32) {
    %c0_i32 = arith.constant 0 : i32
    %c0_i32_0 = arith.constant 0 : i32
    %c0_i32_1 = arith.constant 0 : i32
    return %c0_i32, %c0_i32_0 : i32, i32
  }
  func.func @transform_3(%arg0: i32, %arg1: i32) -> (i32, i32) {
    %c0_i32 = arith.constant 0 : i32
    %c0_i32_0 = arith.constant 0 : i32
    %c0_i32_1 = arith.constant 0 : i32
    return %c0_i32, %c0_i32_0 : i32, i32
  }
  func.func @transform_4(%arg0: i32, %arg1: i32) -> (i32, i32) {
    %c0_i32 = arith.constant 0 : i32
    %c0_i32_0 = arith.constant 0 : i32
    %c0_i32_1 = arith.constant 0 : i32
    return %c0_i32, %c0_i32_0 : i32, i32
  }
  func.func @transform_5(%arg0: i32, %arg1: i32) -> (i32, i32) {
    %c0_i32 = arith.constant 0 : i32
    %c0_i32_0 = arith.constant 0 : i32
    return %c0_i32, %arg0 : i32, i32
  }
  func.func @transform_6(%arg0: i32, %arg1: i32) -> (i32, i32) {
    %c0_i32 = arith.constant 0 : i32
    return %arg1, %arg0 : i32, i32
  }
  func.func @transform_7(%arg0: i32, %arg1: i32) -> (i32, i32) {
    %c0_i32 = arith.constant 0 : i32
    %c0_i32_0 = arith.constant 0 : i32
    return %c0_i32, %arg0 : i32, i32
  }
  func.func @transform_8(%arg0: i32, %arg1: i32) -> (i32, i32) {
    %c0_i32 = arith.constant 0 : i32
    %c0_i32_0 = arith.constant 0 : i32
    return %c0_i32, %arg0 : i32, i32
  }
  func.func @transform_9(%arg0: i32, %arg1: i32) -> (i32, i32) {
    %c0_i32 = arith.constant 0 : i32
    %c0_i32_0 = arith.constant 0 : i32
    return %c0_i32, %arg0 : i32, i32
  }
}

</mosaic_0001>

<llo_original>
// kernel: forward.5
$region0: #{forward.5}
  #allocation0 [shape = 'u32[]', space=smem, size = 0x4, offset = 0x4, fixed_abs, tag = 'smem constant byte address 0x4 - core index']
  #allocation1 [shape = 'u32[144,128]{1,0:T(1,128)}', space=vmem, size = 0x12000, scoped, tag = 'internal scratch']
  #allocation2 [shape = 'f32[8,64]{1,0:T(8,128)}', space=vmem, size = 0x1000, scoped, tag = 'scratch operand']
  %s0 = inlined_call_operand.vmem [shape: bf16[2,1024,27], index: 0, kind: input, shape index: {}]
  %s1 = inlined_call_operand.vmem [shape: bf16[27,64], index: 1, kind: input, shape index: {}]
  %s2 = inlined_call_operand.vmem [shape: f32[1,64], index: 2, kind: input, shape index: {}]
  %s3 = inlined_call_operand.vmem [shape: bf16[64,512], index: 3, kind: input, shape index: {}]
  %s4 = inlined_call_operand.vmem [shape: f32[1,512], index: 4, kind: input, shape index: {}]
  %s5 = inlined_call_operand.vmem [shape: bf16[2,1,512], index: 5, kind: output, shape index: {}]
  %s6 = sld [smem:[#allocation0]]
  $region61: #{forward.5} parent=0
    _
  %s8 = ssub.s32 1, %s6
  %s9 = scalar_select 0, %s8, %s6
  loop: start=0, step=1, limit=4
  $region2: #{forward.5} parent=0 // loop_pre_header
    _
  $region3: #{forward.5} parent=0 // loop_header
    %s11 = sphi 0, %s15
    %p12 = scmp.ge.s32.totalorder %s11, 4
    %s18 = sphi 0, %s30
    %s19 = sphi 0, %s26
    %s20 = sphi 0, %s18
    %s21 = sphi 0, %s19
    %s22 = sphi 0, %s20
    %s23 = sphi 0, %s21
    %s35 = sphi 0, %s37
    %s38 = sphi 0, %s35
    %s39 = sphi 0, %s38
    %s55 = sphi 0, %s39
    %s59 = sphi 0, %s59
    %s61 = sphi 0, %s59
    %s62 = sphi 0, %s61
    %s76 = sphi 0, %s62
    %s80 = sphi 0, %s80
    %s82 = sphi 0, %s80
    %s83 = sphi 0, %s82
    %s97 = sphi 0, %s83
    %s101 = sphi 0, %s101
    %s103 = sphi 0, %s101
    %s104 = sphi 0, %s103
    %s118 = sphi 0, %s104
    %s122 = sphi 0, %s122
    %s124 = sphi 0, %s122
    %s125 = sphi 0, %s124
    %s139 = sphi 0, %s125
    %s145 = sphi 0, %s147
    %s148 = sphi 0, %s145
    %s149 = sphi 0, %s148
    %s165 = sphi 0, %s149
  $region4: #{forward.5} parent=0 // loop_header_branch
    %14 = sbr.rel (%p12) target = $region8
  $region5: #{forward.5} parent=0 // loop_body
    %s16 = ssub.s32 %s11, 1
    %s17 = ssub.s32 %s11, 2
    %s24 = sadd.s32 1, %s19
    %p25 = scmp.ge.s32.totalorder %s24, 1
    %s26 = scalar_select %p25, 0, %s24
    %s27 = sadd.s32 1, %s18
    %s28 = scalar_select %p25, %s27, %s18
    %p29 = scmp.ge.s32.totalorder %s28, 2
    %s30 = scalar_select %p29, 0, %s28
    %s31 = ssub.s32 %s18, %s30
    %s32 = ssub.s32 %s19, %s26
    %s33 = sor.u32 %s31, %s32
    %p34 = scmp.eq.s32.totalorder %s33, 0
    %s36 = sadd.s32 %s35, 1
    %s37 = scalar_select %p34, %s35, %s36
    %p40 = pneg %p34
    %p41 = scmp.eq.s32.totalorder %s11, 1
    %p42 = por %p40, %p41
    %p43 = scmp.ne.s32.totalorder %s35, %s38
    %p44 = scmp.eq.s32.totalorder %s11, 0
    %p45 = por %p43, %p44
    %p46 = scmp.ne.s32.totalorder %s35, %s38
    %p47 = scmp.eq.s32.totalorder %s16, 1
    %p48 = por %p46, %p47
    %p49 = scmp.ne.s32.totalorder %s38, %s39
    %p50 = scmp.eq.s32.totalorder %s16, 0
    %p51 = por %p49, %p50
    %p52 = scmp.ne.s32.totalorder %s38, %s39
    %p53 = scmp.eq.s32.totalorder %s17, 1
    %p54 = por %p52, %p53
    %p56 = scmp.ne.s32.totalorder %s39, %s55
    %p57 = scmp.eq.s32.totalorder %s17, 0
    %p58 = por %p56, %p57
    %s60 = sadd.s32 %s59, 1
    %p63 = scmp.eq.s32.totalorder %s11, 1
    %p64 = scmp.ne.s32.totalorder %s59, %s61
    %p65 = scmp.eq.s32.totalorder %s11, 0
    %p66 = por %p64, %p65
    %p67 = scmp.ne.s32.totalorder %s59, %s61
    %p68 = scmp.eq.s32.totalorder %s16, 1
    %p69 = por %p67, %p68
    %p70 = scmp.ne.s32.totalorder %s61, %s62
    %p71 = scmp.eq.s32.totalorder %s16, 0
    %p72 = por %p70, %p71
    %p73 = scmp.ne.s32.totalorder %s61, %s62
    %p74 = scmp.eq.s32.totalorder %s17, 1
    %p75 = por %p73, %p74
    %p77 = scmp.ne.s32.totalorder %s62, %s76
    %p78 = scmp.eq.s32.totalorder %s17, 0
    %p79 = por %p77, %p78
    %s81 = sadd.s32 %s80, 1
    %p84 = scmp.eq.s32.totalorder %s11, 1
    %p85 = scmp.ne.s32.totalorder %s80, %s82
    %p86 = scmp.eq.s32.totalorder %s11, 0
    %p87 = por %p85, %p86
    %p88 = scmp.ne.s32.totalorder %s80, %s82
    %p89 = scmp.eq.s32.totalorder %s16, 1
    %p90 = por %p88, %p89
    %p91 = scmp.ne.s32.totalorder %s82, %s83
    %p92 = scmp.eq.s32.totalorder %s16, 0
    %p93 = por %p91, %p92
    %p94 = scmp.ne.s32.totalorder %s82, %s83
    %p95 = scmp.eq.s32.totalorder %s17, 1
    %p96 = por %p94, %p95
    %p98 = scmp.ne.s32.totalorder %s83, %s97
    %p99 = scmp.eq.s32.totalorder %s17, 0
    %p100 = por %p98, %p99
    %s102 = sadd.s32 %s101, 1
    %p105 = scmp.eq.s32.totalorder %s11, 1
    %p106 = scmp.ne.s32.totalorder %s101, %s103
    %p107 = scmp.eq.s32.totalorder %s11, 0
    %p108 = por %p106, %p107
    %p109 = scmp.ne.s32.totalorder %s101, %s103
    %p110 = scmp.eq.s32.totalorder %s16, 1
    %p111 = por %p109, %p110
    %p112 = scmp.ne.s32.totalorder %s103, %s104
    %p113 = scmp.eq.s32.totalorder %s16, 0
    %p114 = por %p112, %p113
    %p115 = scmp.ne.s32.totalorder %s103, %s104
    %p116 = scmp.eq.s32.totalorder %s17, 1
    %p117 = por %p115, %p116
    %p119 = scmp.ne.s32.totalorder %s104, %s118
    %p120 = scmp.eq.s32.totalorder %s17, 0
    %p121 = por %p119, %p120
    %s123 = sadd.s32 %s122, 1
    %p126 = scmp.eq.s32.totalorder %s11, 1
    %p127 = scmp.ne.s32.totalorder %s122, %s124
    %p128 = scmp.eq.s32.totalorder %s11, 0
    %p129 = por %p127, %p128
    %p130 = scmp.ne.s32.totalorder %s122, %s124
    %p131 = scmp.eq.s32.totalorder %s16, 1
    %p132 = por %p130, %p131
    %p133 = scmp.ne.s32.totalorder %s124, %s125
    %p134 = scmp.eq.s32.totalorder %s16, 0
    %p135 = por %p133, %p134
    %p136 = scmp.ne.s32.totalorder %s124, %s125
    %p137 = scmp.eq.s32.totalorder %s17, 1
    %p138 = por %p136, %p137
    %p140 = scmp.ne.s32.totalorder %s125, %s139
    %p141 = scmp.eq.s32.totalorder %s17, 0
    %p142 = por %p140, %p141
    %s143 = ssub.s32 %s18, %s30
    %p144 = scmp.eq.s32.totalorder %s143, 0
    %s146 = sadd.s32 %s145, 1
    %s147 = scalar_select %p144, %s145, %s146
    %p150 = pneg %p144
    %p151 = scmp.eq.s32.totalorder %s11, 1
    %p152 = por %p150, %p151
    %p153 = scmp.ne.s32.totalorder %s145, %s148
    %p154 = scmp.eq.s32.totalorder %s11, 0
    %p155 = por %p153, %p154
    %p156 = scmp.ne.s32.totalorder %s145, %s148
    %p157 = scmp.eq.s32.totalorder %s16, 1
    %p158 = por %p156, %p157
    %p159 = scmp.ne.s32.totalorder %s148, %s149
    %p160 = scmp.eq.s32.totalorder %s16, 0
    %p161 = por %p159, %p160
    %p162 = scmp.ne.s32.totalorder %s148, %s149
    %p163 = scmp.eq.s32.totalorder %s17, 1
    %p164 = por %p162, %p163
    %p166 = scmp.ne.s32.totalorder %s149, %s165
    %p167 = scmp.eq.s32.totalorder %s17, 0
    %p168 = por %p166, %p167
    %p169 = scmp.le.s32.totalorder 1, %s11
    %p170 = scmp.lt.s32.totalorder %s11, 3
    %p171 = pnand %p169, %p170
    %p172 = pneg %p171
    // Predicated region
    $region9: #{forward.5} parent=5 // pred_check
      _
    $region10: #{forward.5} parent=5 // pred_check_branch
      %174 = sbr.rel (%p171) target = $region12
    $region11: #{forward.5} parent=5 // pred_region
      %s175 = ssub.s32 %s11, 1
      // Predicated region
      $region13: #{forward.5} parent=11 // pred_check
        %p176 = pneg %p72
      $region14: #{forward.5} parent=11 // pred_check_branch
        %178 = sbr.rel (%p176) target = $region16
      $region15: #{forward.5} parent=11 // pred_region
        _
      $region16: #{forward.5} parent=11 // pred_fallthru
        _
      // Predicated region
      $region17: #{forward.5} parent=11 // pred_check
        %p179 = pneg %p93
      $region18: #{forward.5} parent=11 // pred_check_branch
        %181 = sbr.rel (%p179) target = $region20
      $region19: #{forward.5} parent=11 // pred_region
        _
      $region20: #{forward.5} parent=11 // pred_fallthru
        _
      // Predicated region
      $region21: #{forward.5} parent=11 // pred_check
        %p182 = pneg %p114
      $region22: #{forward.5} parent=11 // pred_check_branch
        %184 = sbr.rel (%p182) target = $region24
      $region23: #{forward.5} parent=11 // pred_region
        _
      $region24: #{forward.5} parent=11 // pred_fallthru
        _
      // Predicated region
      $region25: #{forward.5} parent=11 // pred_check
        %p185 = pneg %p135
      $region26: #{forward.5} parent=11 // pred_check_branch
        %187 = sbr.rel (%p185) target = $region28
      $region27: #{forward.5} parent=11 // pred_region
        _
      $region28: #{forward.5} parent=11 // pred_fallthru
        _
    $region12: #{forward.5} parent=5 // pred_fallthru
      _
    %p188 = scmp.lt.s32.totalorder %s11, 2
    // Predicated region
    $region29: #{forward.5} parent=5 // pred_check
      %p189 = pneg %p188
    $region30: #{forward.5} parent=5 // pred_check_branch
      %191 = sbr.rel (%p189) target = $region32
    $region31: #{forward.5} parent=5 // pred_region
      // Predicated region
      $region33: #{forward.5} parent=31 // pred_check
        %p192 = pneg %p45
      $region34: #{forward.5} parent=31 // pred_check_branch
        %194 = sbr.rel (%p192) target = $region36
      $region35: #{forward.5} parent=31 // pred_region
        %s195 = smul.u32 128, %s19
        %p196 = scmp.lt.s32.totalorder %s18, 1
        %s197 = scalar_select %p196, %s18, 1
        %p198 = scmp.lt.s32.totalorder %s195, 127
        %s199 = scalar_select %p198, %s195, 127
        %s200 = smul.addr %s197, 128
        %s201 = sadd.s32 %s199, %s200
        %s202 = smul.addr %s201, 4
        %s203 = scalar_lea.vmem %s0, %s202
        %s204 = smul.u32 128, %s19
      $region36: #{forward.5} parent=31 // pred_fallthru
        _
    $region32: #{forward.5} parent=5 // pred_fallthru
      _
    %p205 = scmp.le.s32.totalorder 1, %s11
    %p206 = scmp.lt.s32.totalorder %s11, 3
    %p207 = pnand %p205, %p206
    %p208 = pneg %p207
    // Predicated region
    $region37: #{forward.5} parent=5 // pred_check
      _
    $region38: #{forward.5} parent=5 // pred_check_branch
      %210 = sbr.rel (%p207) target = $region40
    $region39: #{forward.5} parent=5 // pred_region
      %s211 = ssub.s32 %s11, 1
      %s212 = smul.u32 128, %s21
      %p213 = scmp.lt.s32.totalorder %s20, 1
      %s214 = scalar_select %p213, %s20, 1
      %p215 = scmp.lt.s32.totalorder %s212, 127
      %s216 = scalar_select %p215, %s212, 127
      %s217 = smul.addr %s214, 128
      %s218 = sadd.s32 %s216, %s217
      %s219 = smul.addr %s218, 4
      %s220 = scalar_lea.vmem %s0, %s219
      %p221 = pneg %p51
      %p222 = pneg %p48
      %p223 = pneg %p72
      %p224 = pneg %p69
      %p225 = pneg %p93
      %p226 = pneg %p90
      %p227 = pneg %p114
      %p228 = pneg %p111
      %p229 = pneg %p135
      %p230 = pneg %p132
      %p231 = pneg %p161
      %p232 = pneg %p158
      %p233 = scmp.lt.s32.totalorder %s20, 1
      %s234 = scalar_select %p233, %s20, 1
      %s235 = smul.addr %s234, 4
      %s236 = scalar_lea.vmem %s5, %s235
      %s237 = smul.u32 128, %s21
      %p238 = scmp.lt.s32.totalorder %s20, 1
      %s239 = scalar_select %p238, %s20, 1
      %p240 = scmp.lt.s32.totalorder %s237, 127
      %s241 = scalar_select %p240, %s237, 127
      %s242 = smul.addr %s239, 128
      %s243 = sadd.s32 %s241, %s242
      %s244 = smul.addr %s243, 4
      %s245 = scalar_lea.vmem %s0, %s244
      %s246 = smul.u32 128, %s21
      %p247 = scmp.lt.s32.totalorder %s20, 1
      %s248 = scalar_select %p247, %s20, 1
      %s249 = smul.addr %s248, 4
      %s250 = scalar_lea.vmem %s5, %s249
      %p252 = scmp.eq.s32.totalorder %s21, 0
      // Predicated region
      $region41: #{forward.5} parent=39 // pred_check
        %p253 = pneg %p252
      $region42: #{forward.5} parent=39 // pred_check_branch
        %255 = sbr.rel (%p253) target = $region44
      $region43: #{forward.5} parent=39 // pred_region
        %vm256 = vcmask 523264
        %257 = vst.msk [vmem:[#allocation2] sm:$0xff] %vm256, 0.0
      $region44: #{forward.5} parent=39 // pred_fallthru
        _
      %v258 = vld [vmem:[%s245] sm:$0xf]
      %v259 = vld [vmem:[%s245 + $0x4] sm:$0xf]
      %v260 = vld [vmem:[%s245 + $0x8] sm:$0xf]
      %v261 = vld [vmem:[%s245 + $0xc] sm:$0xf]
      %v262 = vld [vmem:[%s245 + $0x10] sm:$0xf]
      %v263 = vld [vmem:[%s245 + $0x14] sm:$0xf]
      %v264 = vld [vmem:[%s245 + $0x18] sm:$0xf]
      %v265 = vld [vmem:[%s245 + $0x1c] sm:$0xf]
      %v266 = vld [vmem:[%s245 + $0x20] sm:$0xf]
      %v267 = vld [vmem:[%s245 + $0x24] sm:$0xf]
      %v268 = vld [vmem:[%s245 + $0x28] sm:$0xf]
      %v269 = vld [vmem:[%s245 + $0x2c] sm:$0xf]
      %v270 = vld [vmem:[%s245 + $0x30] sm:$0xf]
      %v271 = vld [vmem:[%s245 + $0x34] sm:$0xf]
      %v272 = vld [vmem:[%s245 + $0x38] sm:$0xf]
      %v273 = vld [vmem:[%s245 + $0x3c] sm:$0xf]
      %v274 = vld [vmem:[%s245 + $0x40] sm:$0xf]
      %v275 = vld [vmem:[%s245 + $0x44] sm:$0xf]
      %v276 = vld [vmem:[%s245 + $0x48] sm:$0xf]
      %v277 = vld [vmem:[%s245 + $0x4c] sm:$0xf]
      %v278 = vld [vmem:[%s245 + $0x50] sm:$0xf]
      %v279 = vld [vmem:[%s245 + $0x54] sm:$0xf]
      %v280 = vld [vmem:[%s245 + $0x58] sm:$0xf]
      %v281 = vld [vmem:[%s245 + $0x5c] sm:$0xf]
      %v282 = vld [vmem:[%s245 + $0x60] sm:$0xf]
      %v283 = vld [vmem:[%s245 + $0x64] sm:$0xf]
      %v284 = vld [vmem:[%s245 + $0x68] sm:$0xf]
      %v285 = vld [vmem:[%s245 + $0x6c] sm:$0xf]
      %v286 = vld [vmem:[%s245 + $0x70] sm:$0xf]
      %v287 = vld [vmem:[%s245 + $0x74] sm:$0xf]
      %v288 = vld [vmem:[%s245 + $0x78] sm:$0xf]
      %v289 = vld [vmem:[%s245 + $0x7c] sm:$0xf]
      %v290 = vld [vmem:[%s245 + $0x80] sm:$0xf]
      %v291 = vld [vmem:[%s245 + $0x84] sm:$0xf]
      %v292 = vld [vmem:[%s245 + $0x88] sm:$0xf]
      %v293 = vld [vmem:[%s245 + $0x8c] sm:$0xf]
      %v294 = vld [vmem:[%s245 + $0x90] sm:$0xf]
      %v295 = vld [vmem:[%s245 + $0x94] sm:$0xf]
      %v296 = vld [vmem:[%s245 + $0x98] sm:$0xf]
      %v297 = vld [vmem:[%s245 + $0x9c] sm:$0xf]
      %v298 = vld [vmem:[%s245 + $0xa0] sm:$0xf]
      %v299 = vld [vmem:[%s245 + $0xa4] sm:$0xf]
      %v300 = vld [vmem:[%s245 + $0xa8] sm:$0xf]
      %v301 = vld [vmem:[%s245 + $0xac] sm:$0xf]
      %v302 = vld [vmem:[%s245 + $0xb0] sm:$0xf]
      %v303 = vld [vmem:[%s245 + $0xb4] sm:$0xf]
      %v304 = vld [vmem:[%s245 + $0xb8] sm:$0xf]
      %v305 = vld [vmem:[%s245 + $0xbc] sm:$0xf]
      %v306 = vld [vmem:[%s245 + $0xc0] sm:$0xf]
      %v307 = vld [vmem:[%s245 + $0xc4] sm:$0xf]
      %v308 = vld [vmem:[%s245 + $0xc8] sm:$0xf]
      %v309 = vld [vmem:[%s245 + $0xcc] sm:$0xf]
      %v310 = vld [vmem:[%s245 + $0xd0] sm:$0xf]
      %v311 = vld [vmem:[%s245 + $0xd4] sm:$0xf]
      %v312 = vld [vmem:[%s245 + $0xd8] sm:$0xf]
      %v313 = vld [vmem:[%s245 + $0xdc] sm:$0xf]
      %v314 = vld [vmem:[%s245 + $0xe0] sm:$0xf]
      %v315 = vld [vmem:[%s245 + $0xe4] sm:$0xf]
      %v316 = vld [vmem:[%s245 + $0xe8] sm:$0xf]
      %v317 = vld [vmem:[%s245 + $0xec] sm:$0xf]
      %v318 = vld [vmem:[%s245 + $0xf0] sm:$0xf]
      %v319 = vld [vmem:[%s245 + $0xf4] sm:$0xf]
      %v320 = vld [vmem:[%s245 + $0xf8] sm:$0xf]
      %v321 = vld [vmem:[%s245 + $0xfc] sm:$0xf]
      %v322 = vld [vmem:[%s245 + $0x100] sm:$0xf]
      %v323 = vld [vmem:[%s245 + $0x104] sm:$0xf]
      %v324 = vld [vmem:[%s245 + $0x108] sm:$0xf]
      %v325 = vld [vmem:[%s245 + $0x10c] sm:$0xf]
      %v326 = vld [vmem:[%s245 + $0x110] sm:$0xf]
      %v327 = vld [vmem:[%s245 + $0x114] sm:$0xf]
      %v328 = vld [vmem:[%s245 + $0x118] sm:$0xf]
      %v329 = vld [vmem:[%s245 + $0x11c] sm:$0xf]
      %v330 = vld [vmem:[%s245 + $0x120] sm:$0xf]
      %v331 = vld [vmem:[%s245 + $0x124] sm:$0xf]
      %v332 = vld [vmem:[%s245 + $0x128] sm:$0xf]
      %v333 = vld [vmem:[%s245 + $0x12c] sm:$0xf]
      %v334 = vld [vmem:[%s245 + $0x130] sm:$0xf]
      %v335 = vld [vmem:[%s245 + $0x134] sm:$0xf]
      %v336 = vld [vmem:[%s245 + $0x138] sm:$0xf]
      %v337 = vld [vmem:[%s245 + $0x13c] sm:$0xf]
      %v338 = vld [vmem:[%s245 + $0x140] sm:$0xf]
      %v339 = vld [vmem:[%s245 + $0x144] sm:$0xf]
      %v340 = vld [vmem:[%s245 + $0x148] sm:$0xf]
      %v341 = vld [vmem:[%s245 + $0x14c] sm:$0xf]
      %v342 = vld [vmem:[%s245 + $0x150] sm:$0xf]
      %v343 = vld [vmem:[%s245 + $0x154] sm:$0xf]
      %v344 = vld [vmem:[%s245 + $0x158] sm:$0xf]
      %v345 = vld [vmem:[%s245 + $0x15c] sm:$0xf]
      %v346 = vld [vmem:[%s245 + $0x160] sm:$0xf]
      %v347 = vld [vmem:[%s245 + $0x164] sm:$0xf]
      %v348 = vld [vmem:[%s245 + $0x168] sm:$0xf]
      %v349 = vld [vmem:[%s245 + $0x16c] sm:$0xf]
      %v350 = vld [vmem:[%s245 + $0x170] sm:$0xf]
      %v351 = vld [vmem:[%s245 + $0x174] sm:$0xf]
      %v352 = vld [vmem:[%s245 + $0x178] sm:$0xf]
      %v353 = vld [vmem:[%s245 + $0x17c] sm:$0xf]
      %v354 = vld [vmem:[%s245 + $0x180] sm:$0xf]
      %v355 = vld [vmem:[%s245 + $0x184] sm:$0xf]
      %v356 = vld [vmem:[%s245 + $0x188] sm:$0xf]
      %v357 = vld [vmem:[%s245 + $0x18c] sm:$0xf]
      %v358 = vld [vmem:[%s245 + $0x190] sm:$0xf]
      %v359 = vld [vmem:[%s245 + $0x194] sm:$0xf]
      %v360 = vld [vmem:[%s245 + $0x198] sm:$0xf]
      %v361 = vld [vmem:[%s245 + $0x19c] sm:$0xf]
      %v362 = vld [vmem:[%s245 + $0x1a0] sm:$0xf]
      %v363 = vld [vmem:[%s245 + $0x1a4] sm:$0xf]
      %v364 = vld [vmem:[%s245 + $0x1a8] sm:$0xf]
      %v365 = vld [vmem:[%s245 + $0x1ac] sm:$0xf]
      %v366 = vld [vmem:[%s245 + $0x1b0] sm:$0xf]
      %v367 = vld [vmem:[%s245 + $0x1b4] sm:$0xf]
      %v368 = vld [vmem:[%s245 + $0x1b8] sm:$0xf]
      %v369 = vld [vmem:[%s245 + $0x1bc] sm:$0xf]
      %v370 = vld [vmem:[%s245 + $0x1c0] sm:$0xf]
      %v371 = vld [vmem:[%s245 + $0x1c4] sm:$0xf]
      %v372 = vld [vmem:[%s245 + $0x1c8] sm:$0xf]
      %v373 = vld [vmem:[%s245 + $0x1cc] sm:$0xf]
      %v374 = vld [vmem:[%s245 + $0x1d0] sm:$0xf]
      %v375 = vld [vmem:[%s245 + $0x1d4] sm:$0xf]
      %v376 = vld [vmem:[%s245 + $0x1d8] sm:$0xf]
      %v377 = vld [vmem:[%s245 + $0x1dc] sm:$0xf]
      %v378 = vld [vmem:[%s245 + $0x1e0] sm:$0xf]
      %v379 = vld [vmem:[%s245 + $0x1e4] sm:$0xf]
      %v380 = vld [vmem:[%s245 + $0x1e8] sm:$0xf]
      %v381 = vld [vmem:[%s245 + $0x1ec] sm:$0xf]
      %v382 = vld [vmem:[%s245 + $0x1f0] sm:$0xf]
      %v383 = vld [vmem:[%s245 + $0x1f4] sm:$0xf]
      %v384 = vld [vmem:[%s245 + $0x1f8] sm:$0xf]
      %v385 = vld [vmem:[%s245 + $0x1fc] sm:$0xf]
      %v386 = vld [vmem:[%s1] sm:$0xf]
      %v387 = vld [vmem:[%s1 + $0x4] sm:$0xf]
      %v388 = vld [vmem:[%s1 + $0x8] sm:$0xf]
      %v389 = vld [vmem:[%s1 + $0xc] sm:$0x3]
      %v390 = vld [vmem:[%s2] sm:$0x1]
      %v392 = vlaneseq
      %v393 = vshrl.u32 %v392, 7
      %v394 = vsub.s32 0, %v393
      %v395 = vrot.slane %v390, %v394
      %v525 = vunpack.c.l.b16 %v258
      %v526 = vunpack.c.l.b16 %v259
      %v527 = vunpack.c.l.b16 %v260
      %v528 = vunpack.c.l.b16 %v261
      %v529 = vunpack.c.l.b16 %v262
      %v530 = vunpack.c.l.b16 %v263
      %v531 = vunpack.c.l.b16 %v264
      %v532 = vunpack.c.l.b16 %v265
      %v533 = vunpack.c.l.b16 %v266
      %v534 = vunpack.c.l.b16 %v267
      %v535 = vunpack.c.l.b16 %v268
      %v536 = vunpack.c.l.b16 %v269
      %v537 = vunpack.c.l.b16 %v270
      %v538 = vunpack.c.l.b16 %v271
      %v539 = vunpack.c.l.b16 %v272
      %v540 = vunpack.c.l.b16 %v273
      %v541 = vunpack.c.l.b16 %v274
      %v542 = vunpack.c.l.b16 %v275
      %v543 = vunpack.c.l.b16 %v276
      %v544 = vunpack.c.l.b16 %v277
      %v545 = vunpack.c.l.b16 %v278
      %v546 = vunpack.c.l.b16 %v279
      %v547 = vunpack.c.l.b16 %v280
      %v548 = vunpack.c.l.b16 %v281
      %v549 = vunpack.c.l.b16 %v282
      %v550 = vunpack.c.l.b16 %v283
      %v551 = vunpack.c.l.b16 %v284
      %v552 = vunpack.c.l.b16 %v285
      %v553 = vunpack.c.l.b16 %v286
      %v554 = vunpack.c.l.b16 %v287
      %v555 = vunpack.c.l.b16 %v288
      %v556 = vunpack.c.l.b16 %v289
      %v557 = vunpack.c.l.b16 %v290
      %v558 = vunpack.c.l.b16 %v291
      %v559 = vunpack.c.l.b16 %v292
      %v560 = vunpack.c.l.b16 %v293
      %v561 = vunpack.c.l.b16 %v294
      %v562 = vunpack.c.l.b16 %v295
      %v563 = vunpack.c.l.b16 %v296
      %v564 = vunpack.c.l.b16 %v297
      %v565 = vunpack.c.l.b16 %v298
      %v566 = vunpack.c.l.b16 %v299
      %v567 = vunpack.c.l.b16 %v300
      %v568 = vunpack.c.l.b16 %v301
      %v569 = vunpack.c.l.b16 %v302
      %v570 = vunpack.c.l.b16 %v303
      %v571 = vunpack.c.l.b16 %v304
      %v572 = vunpack.c.l.b16 %v305
      %v573 = vunpack.c.l.b16 %v306
      %v574 = vunpack.c.l.b16 %v307
      %v575 = vunpack.c.l.b16 %v308
      %v576 = vunpack.c.l.b16 %v309
      %v577 = vunpack.c.l.b16 %v310
      %v578 = vunpack.c.l.b16 %v311
      %v579 = vunpack.c.l.b16 %v312
      %v580 = vunpack.c.l.b16 %v313
      %v581 = vunpack.c.l.b16 %v314
      %v582 = vunpack.c.l.b16 %v315
      %v583 = vunpack.c.l.b16 %v316
      %v584 = vunpack.c.l.b16 %v317
      %v585 = vunpack.c.l.b16 %v318
      %v586 = vunpack.c.l.b16 %v319
      %v587 = vunpack.c.l.b16 %v320
      %v588 = vunpack.c.l.b16 %v321
      %v589 = vunpack.c.l.b16 %v322
      %v590 = vunpack.c.l.b16 %v323
      %v591 = vunpack.c.l.b16 %v324
      %v592 = vunpack.c.l.b16 %v325
      %v593 = vunpack.c.l.b16 %v326
      %v594 = vunpack.c.l.b16 %v327
      %v595 = vunpack.c.l.b16 %v328
      %v596 = vunpack.c.l.b16 %v329
      %v597 = vunpack.c.l.b16 %v330
      %v598 = vunpack.c.l.b16 %v331
      %v599 = vunpack.c.l.b16 %v332
      %v600 = vunpack.c.l.b16 %v333
      %v601 = vunpack.c.l.b16 %v334
      %v602 = vunpack.c.l.b16 %v335
      %v603 = vunpack.c.l.b16 %v336
      %v604 = vunpack.c.l.b16 %v337
      %v605 = vunpack.c.l.b16 %v338
      %v606 = vunpack.c.l.b16 %v339
      %v607 = vunpack.c.l.b16 %v340
      %v608 = vunpack.c.l.b16 %v341
      %v609 = vunpack.c.l.b16 %v342
      %v610 = vunpack.c.l.b16 %v343
      %v611 = vunpack.c.l.b16 %v344
      %v612 = vunpack.c.l.b16 %v345
      %v613 = vunpack.c.l.b16 %v346
      %v614 = vunpack.c.l.b16 %v347
      %v615 = vunpack.c.l.b16 %v348
      %v616 = vunpack.c.l.b16 %v349
      %v617 = vunpack.c.l.b16 %v350
      %v618 = vunpack.c.l.b16 %v351
      %v619 = vunpack.c.l.b16 %v352
      %v620 = vunpack.c.l.b16 %v353
      %v621 = vunpack.c.l.b16 %v354
      %v622 = vunpack.c.l.b16 %v355
      %v623 = vunpack.c.l.b16 %v356
      %v624 = vunpack.c.l.b16 %v357
      %v625 = vunpack.c.l.b16 %v358
      %v626 = vunpack.c.l.b16 %v359
      %v627 = vunpack.c.l.b16 %v360
      %v628 = vunpack.c.l.b16 %v361
      %v629 = vunpack.c.l.b16 %v362
      %v630 = vunpack.c.l.b16 %v363
      %v631 = vunpack.c.l.b16 %v364
      %v632 = vunpack.c.l.b16 %v365
      %v633 = vunpack.c.l.b16 %v366
      %v634 = vunpack.c.l.b16 %v367
      %v635 = vunpack.c.l.b16 %v368
      %v636 = vunpack.c.l.b16 %v369
      %v637 = vunpack.c.l.b16 %v370
      %v638 = vunpack.c.l.b16 %v371
      %v639 = vunpack.c.l.b16 %v372
      %v640 = vunpack.c.l.b16 %v373
      %v641 = vunpack.c.l.b16 %v374
      %v642 = vunpack.c.l.b16 %v375
      %v643 = vunpack.c.l.b16 %v376
      %v644 = vunpack.c.l.b16 %v377
      %v645 = vunpack.c.l.b16 %v378
      %v646 = vunpack.c.l.b16 %v379
      %v647 = vunpack.c.l.b16 %v380
      %v648 = vunpack.c.l.b16 %v381
      %v649 = vunpack.c.l.b16 %v382
      %v650 = vunpack.c.l.b16 %v383
      %v651 = vunpack.c.l.b16 %v384
      %v652 = vunpack.c.l.b16 %v385
      %v653 = vpack.c.b16 %v526, %v525
      %v654 = vpack.c.b16 %v528, %v527
      %v655 = vpack.c.b16 %v530, %v529
      %v656 = vpack.c.b16 %v532, %v531
      %v657 = vpack.c.b16 %v534, %v533
      %v658 = vpack.c.b16 %v536, %v535
      %v659 = vpack.c.b16 %v538, %v537
      %v660 = vpack.c.b16 %v540, %v539
      %v661 = vpack.c.b16 %v542, %v541
      %v662 = vpack.c.b16 %v544, %v543
      %v663 = vpack.c.b16 %v546, %v545
      %v664 = vpack.c.b16 %v548, %v547
      %v665 = vpack.c.b16 %v550, %v549
      %v666 = vpack.c.b16 %v552, %v551
      %v667 = vpack.c.b16 %v554, %v553
      %v668 = vpack.c.b16 %v556, %v555
      %v669 = vpack.c.b16 %v558, %v557
      %v670 = vpack.c.b16 %v560, %v559
      %v671 = vpack.c.b16 %v562, %v561
      %v672 = vpack.c.b16 %v564, %v563
      %v673 = vpack.c.b16 %v566, %v565
      %v674 = vpack.c.b16 %v568, %v567
      %v675 = vpack.c.b16 %v570, %v569
      %v676 = vpack.c.b16 %v572, %v571
      %v677 = vpack.c.b16 %v574, %v573
      %v678 = vpack.c.b16 %v576, %v575
      %v679 = vpack.c.b16 %v578, %v577
      %v680 = vpack.c.b16 %v580, %v579
      %v681 = vpack.c.b16 %v582, %v581
      %v682 = vpack.c.b16 %v584, %v583
      %v683 = vpack.c.b16 %v586, %v585
      %v684 = vpack.c.b16 %v588, %v587
      %v685 = vpack.c.b16 %v590, %v589
      %v686 = vpack.c.b16 %v592, %v591
      %v687 = vpack.c.b16 %v594, %v593
      %v688 = vpack.c.b16 %v596, %v595
      %v689 = vpack.c.b16 %v598, %v597
      %v690 = vpack.c.b16 %v600, %v599
      %v691 = vpack.c.b16 %v602, %v601
      %v692 = vpack.c.b16 %v604, %v603
      %v693 = vpack.c.b16 %v606, %v605
      %v694 = vpack.c.b16 %v608, %v607
      %v695 = vpack.c.b16 %v610, %v609
      %v696 = vpack.c.b16 %v612, %v611
      %v697 = vpack.c.b16 %v614, %v613
      %v698 = vpack.c.b16 %v616, %v615
      %v699 = vpack.c.b16 %v618, %v617
      %v700 = vpack.c.b16 %v620, %v619
      %v701 = vpack.c.b16 %v622, %v621
      %v702 = vpack.c.b16 %v624, %v623
      %v703 = vpack.c.b16 %v626, %v625
      %v704 = vpack.c.b16 %v628, %v627
      %v705 = vpack.c.b16 %v630, %v629
      %v706 = vpack.c.b16 %v632, %v631
      %v707 = vpack.c.b16 %v634, %v633
      %v708 = vpack.c.b16 %v636, %v635
      %v709 = vpack.c.b16 %v638, %v637
      %v710 = vpack.c.b16 %v640, %v639
      %v711 = vpack.c.b16 %v642, %v641
      %v712 = vpack.c.b16 %v644, %v643
      %v713 = vpack.c.b16 %v646, %v645
      %v714 = vpack.c.b16 %v648, %v647
      %v715 = vpack.c.b16 %v650, %v649
      %v716 = vpack.c.b16 %v652, %v651
      %v721 = vunpack.c.l.b16 %v386
      %v722 = vunpack.c.l.b16 %v387
      %v723 = vunpack.c.l.b16 %v388
      %v724 = vunpack.c.l.b16 %v389
      %v725 = vpack.c.b16 %v722, %v721
      %v726 = vpack.c.b16 %v724, %v723
      %vm728 = vcmask 220160
      %v730 = vsel %vm728, %v653, 0
      %v733 = vsel %vm728, %v654, 0
      %v736 = vsel %vm728, %v655, 0
      %v739 = vsel %vm728, %v656, 0
      %v742 = vsel %vm728, %v657, 0
      %v745 = vsel %vm728, %v658, 0
      %v748 = vsel %vm728, %v659, 0
      %v751 = vsel %vm728, %v660, 0
      %v754 = vsel %vm728, %v661, 0
      %v757 = vsel %vm728, %v662, 0
      %v760 = vsel %vm728, %v663, 0
      %v763 = vsel %vm728, %v664, 0
      %v766 = vsel %vm728, %v665, 0
      %v769 = vsel %vm728, %v666, 0
      %v772 = vsel %vm728, %v667, 0
      %v775 = vsel %vm728, %v668, 0
      %v778 = vsel %vm728, %v669, 0
      %v781 = vsel %vm728, %v670, 0
      %v784 = vsel %vm728, %v671, 0
      %v787 = vsel %vm728, %v672, 0
      %v790 = vsel %vm728, %v673, 0
      %v793 = vsel %vm728, %v674, 0
      %v796 = vsel %vm728, %v675, 0
      %v799 = vsel %vm728, %v676, 0
      %v802 = vsel %vm728, %v677, 0
      %v805 = vsel %vm728, %v678, 0
      %v808 = vsel %vm728, %v679, 0
      %v811 = vsel %vm728, %v680, 0
      %v814 = vsel %vm728, %v681, 0
      %v817 = vsel %vm728, %v682, 0
      %v820 = vsel %vm728, %v683, 0
      %v823 = vsel %vm728, %v684, 0
      %v826 = vsel %vm728, %v685, 0
      %v829 = vsel %vm728, %v686, 0
      %v832 = vsel %vm728, %v687, 0
      %v835 = vsel %vm728, %v688, 0
      %v838 = vsel %vm728, %v689, 0
      %v841 = vsel %vm728, %v690, 0
      %v844 = vsel %vm728, %v691, 0
      %v847 = vsel %vm728, %v692, 0
      %v850 = vsel %vm728, %v693, 0
      %v853 = vsel %vm728, %v694, 0
      %v856 = vsel %vm728, %v695, 0
      %v859 = vsel %vm728, %v696, 0
      %v862 = vsel %vm728, %v697, 0
      %v865 = vsel %vm728, %v698, 0
      %v868 = vsel %vm728, %v699, 0
      %v871 = vsel %vm728, %v700, 0
      %v874 = vsel %vm728, %v701, 0
      %v877 = vsel %vm728, %v702, 0
      %v880 = vsel %vm728, %v703, 0
      %v883 = vsel %vm728, %v704, 0
      %v886 = vsel %vm728, %v705, 0
      %v889 = vsel %vm728, %v706, 0
      %v892 = vsel %vm728, %v707, 0
      %v895 = vsel %vm728, %v708, 0
      %v898 = vsel %vm728, %v709, 0
      %v901 = vsel %vm728, %v710, 0
      %v904 = vsel %vm728, %v711, 0
      %v907 = vsel %vm728, %v712, 0
      %v910 = vsel %vm728, %v713, 0
      %v913 = vsel %vm728, %v714, 0
      %v916 = vsel %vm728, %v715, 0
      %v919 = vsel %vm728, %v716, 0
      %vm921 = vcmask 1044480
      %vm922 = vcmask 1045504
      %v923 = vsel %vm921, 4294967295, 65535
      %v924 = vsel %vm922, %v923, 0
      %v926 = vand.u32 %v726, %v924
      %928 = vmatprep.subr.bf16.mxu0 0
      %929 = vmatpush1.bf16.msra.mxu0 %v725
      %930 = vmatprep.subr.bf16.mxu0 0
      %931 = vmatpush1.bf16.msra.mxu0 %v926
      %932 = vmatprep.subr.bf16.mxu0 0
      %933 = vmatpush1.bf16.msra.mxu0 0
      %934 = vmatprep.subr.bf16.mxu0 0
      %935 = vmatpush1.bf16.msra.mxu0 0
      %936 = vmatprep.subr.bf16.mxu0 0
      %937 = vmatpush1.bf16.msra.mxu0 0
      %938 = vmatprep.subr.bf16.mxu0 0
      %939 = vmatpush1.bf16.msra.mxu0 0
      %940 = vmatprep.subr.bf16.mxu0 0
      %941 = vmatpush1.bf16.msra.mxu0 0
      %942 = vmatprep.subr.bf16.mxu0 0
      %943 = vmatpush1.bf16.msra.mxu0 0
      %944 = vmatprep.subr.bf16.mxu0 0
      %945 = vmatpush1.bf16.msra.mxu0 0
      %946 = vmatprep.subr.bf16.mxu0 0
      %947 = vmatpush1.bf16.msra.mxu0 0
      %948 = vmatprep.subr.bf16.mxu0 0
      %949 = vmatpush1.bf16.msra.mxu0 0
      %950 = vmatprep.subr.bf16.mxu0 0
      %951 = vmatpush1.bf16.msra.mxu0 0
      %952 = vmatprep.subr.bf16.mxu0 0
      %953 = vmatpush1.bf16.msra.mxu0 0
      %954 = vmatprep.subr.bf16.mxu0 0
      %955 = vmatpush1.bf16.msra.mxu0 0
      %956 = vmatprep.subr.bf16.mxu0 0
      %957 = vmatpush1.bf16.msra.mxu0 0
      %958 = vmatprep.subr.bf16.mxu0 0
      %959 = vmatpush1.bf16.msra.mxu0 0
      %960 = vmatprep.mubr.bf16.mxu0 0
      %961 = vmatmul.mubr.bf16.gmra.mrb[0].mxu0 %v730
      %v962 = vpop.f32.mrb[0].mxu0
      %v963 = vadd.f32 %v395, %v962
      %v964 = vpop.f32.mrb[0].mxu0
      %v965 = vpop.f32.mrb[0].mxu0
      %v966 = vadd.f32 %v395, %v965
      %v967 = vpop.f32.mrb[0].mxu0
      %968 = vmatprep.mubr.bf16.mxu0 0
      %969 = vmatmul.mubr.bf16.gmra.mrb[0].mxu0 %v733
      %v970 = vpop.f32.mrb[0].mxu0
      %v971 = vadd.f32 %v395, %v970
      %v972 = vpop.f32.mrb[0].mxu0
      %v973 = vpop.f32.mrb[0].mxu0
      %v974 = vadd.f32 %v395, %v973
      %v975 = vpop.f32.mrb[0].mxu0
      %976 = vmatprep.mubr.bf16.mxu0 0
      %977 = vmatmul.mubr.bf16.gmra.mrb[0].mxu0 %v736
      %v978 = vpop.f32.mrb[0].mxu0
      %v979 = vadd.f32 %v395, %v978
      %v980 = vpop.f32.mrb[0].mxu0
      %v981 = vpop.f32.mrb[0].mxu0
      %v982 = vadd.f32 %v395, %v981
      %v983 = vpop.f32.mrb[0].mxu0
      %984 = vmatprep.mubr.bf16.mxu0 0
      %985 = vmatmul.mubr.bf16.gmra.mrb[0].mxu0 %v739
      %v986 = vpop.f32.mrb[0].mxu0
      %v987 = vadd.f32 %v395, %v986
      %v988 = vpop.f32.mrb[0].mxu0
      %v989 = vpop.f32.mrb[0].mxu0
      %v990 = vadd.f32 %v395, %v989
      %v991 = vpop.f32.mrb[0].mxu0
      %992 = vmatprep.mubr.bf16.mxu0 0
      %993 = vmatmul.mubr.bf16.gmra.mrb[0].mxu0 %v742
      %v994 = vpop.f32.mrb[0].mxu0
      %v995 = vadd.f32 %v395, %v994
      %v996 = vpop.f32.mrb[0].mxu0
      %v997 = vpop.f32.mrb[0].mxu0
      %v998 = vadd.f32 %v395, %v997
      %v999 = vpop.f32.mrb[0].mxu0
      %1000 = vmatprep.mubr.bf16.mxu0 0
      %1001 = vmatmul.mubr.bf16.gmra.mrb[0].mxu0 %v745
      %v1002 = vpop.f32.mrb[0].mxu0
      %v1003 = vadd.f32 %v395, %v1002
      %v1004 = vpop.f32.mrb[0].mxu0
      %v1005 = vpop.f32.mrb[0].mxu0
      %v1006 = vadd.f32 %v395, %v1005
      %v1007 = vpop.f32.mrb[0].mxu0
      %1008 = vmatprep.mubr.bf16.mxu0 0
      %1009 = vmatmul.mubr.bf16.gmra.mrb[0].mxu0 %v748
      %v1010 = vpop.f32.mrb[0].mxu0
      %v1011 = vadd.f32 %v395, %v1010
      %v1012 = vpop.f32.mrb[0].mxu0
      %v1013 = vpop.f32.mrb[0].mxu0
      %v1014 = vadd.f32 %v395, %v1013
      %v1015 = vpop.f32.mrb[0].mxu0
      %1016 = vmatprep.mubr.bf16.mxu0 0
      %1017 = vmatmul.mubr.bf16.gmra.mrb[0].mxu0 %v751
      %v1018 = vpop.f32.mrb[0].mxu0
      %v1019 = vadd.f32 %v395, %v1018
      %v1020 = vpop.f32.mrb[0].mxu0
      %v1021 = vpop.f32.mrb[0].mxu0
      %v1022 = vadd.f32 %v395, %v1021
      %v1023 = vpop.f32.mrb[0].mxu0
      %1024 = vmatprep.mubr.bf16.mxu0 0
      %1025 = vmatmul.mubr.bf16.gmra.mrb[0].mxu0 %v754
      %v1026 = vpop.f32.mrb[0].mxu0
      %v1027 = vadd.f32 %v395, %v1026
      %v1028 = vpop.f32.mrb[0].mxu0
      %v1029 = vpop.f32.mrb[0].mxu0
      %v1030 = vadd.f32 %v395, %v1029
      %v1031 = vpop.f32.mrb[0].mxu0
      %1032 = vmatprep.mubr.bf16.mxu0 0
      %1033 = vmatmul.mubr.bf16.gmra.mrb[0].mxu0 %v757
      %v1034 = vpop.f32.mrb[0].mxu0
      %v1035 = vadd.f32 %v395, %v1034
      %v1036 = vpop.f32.mrb[0].mxu0
      %v1037 = vpop.f32.mrb[0].mxu0
      %v1038 = vadd.f32 %v395, %v1037
      %v1039 = vpop.f32.mrb[0].mxu0
      %1040 = vmatprep.mubr.bf16.mxu0 0
      %1041 = vmatmul.mubr.bf16.gmra.mrb[0].mxu0 %v760
      %v1042 = vpop.f32.mrb[0].mxu0
      %v1043 = vadd.f32 %v395, %v1042
      %v1044 = vpop.f32.mrb[0].mxu0
      %v1045 = vpop.f32.mrb[0].mxu0
      %v1046 = vadd.f32 %v395, %v1045
      %v1047 = vpop.f32.mrb[0].mxu0
      %1048 = vmatprep.mubr.bf16.mxu0 0
      %1049 = vmatmul.mubr.bf16.gmra.mrb[0].mxu0 %v763
      %v1050 = vpop.f32.mrb[0].mxu0
      %v1051 = vadd.f32 %v395, %v1050
      %v1052 = vpop.f32.mrb[0].mxu0
      %v1053 = vpop.f32.mrb[0].mxu0
      %v1054 = vadd.f32 %v395, %v1053
      %v1055 = vpop.f32.mrb[0].mxu0
      %1056 = vmatprep.mubr.bf16.mxu0 0
      %1057 = vmatmul.mubr.bf16.gmra.mrb[0].mxu0 %v766
      %v1058 = vpop.f32.mrb[0].mxu0
      %v1059 = vadd.f32 %v395, %v1058
      %v1060 = vpop.f32.mrb[0].mxu0
      %v1061 = vpop.f32.mrb[0].mxu0
      %v1062 = vadd.f32 %v395, %v1061
      %v1063 = vpop.f32.mrb[0].mxu0
      %1064 = vmatprep.mubr.bf16.mxu0 0
      %1065 = vmatmul.mubr.bf16.gmra.mrb[0].mxu0 %v769
      %v1066 = vpop.f32.mrb[0].mxu0
      %v1067 = vadd.f32 %v395, %v1066
      %v1068 = vpop.f32.mrb[0].mxu0
      %v1069 = vpop.f32.mrb[0].mxu0
      %v1070 = vadd.f32 %v395, %v1069
      %v1071 = vpop.f32.mrb[0].mxu0
      %1072 = vmatprep.mubr.bf16.mxu0 0
      %1073 = vmatmul.mubr.bf16.gmra.mrb[0].mxu0 %v772
      %v1074 = vpop.f32.mrb[0].mxu0
      %v1075 = vadd.f32 %v395, %v1074
      %v1076 = vpop.f32.mrb[0].mxu0
      %v1077 = vpop.f32.mrb[0].mxu0
      %v1078 = vadd.f32 %v395, %v1077
      %v1079 = vpop.f32.mrb[0].mxu0
      %1080 = vmatprep.mubr.bf16.mxu0 0
      %1081 = vmatmul.mubr.bf16.gmra.mrb[0].mxu0 %v775
      %v1082 = vpop.f32.mrb[0].mxu0
      %v1083 = vadd.f32 %v395, %v1082
      %v1084 = vpop.f32.mrb[0].mxu0
      %v1085 = vpop.f32.mrb[0].mxu0
      %v1086 = vadd.f32 %v395, %v1085
      %v1087 = vpop.f32.mrb[0].mxu0
      %1088 = vmatprep.mubr.bf16.mxu0 0
      %1089 = vmatmul.mubr.bf16.gmra.mrb[0].mxu0 %v778
      %v1090 = vpop.f32.mrb[0].mxu0
      %v1091 = vadd.f32 %v395, %v1090
      %v1092 = vpop.f32.mrb[0].mxu0
      %v1093 = vpop.f32.mrb[0].mxu0
      %v1094 = vadd.f32 %v395, %v1093
      %v1095 = vpop.f32.mrb[0].mxu0
      %1096 = vmatprep.mubr.bf16.mxu0 0
      %1097 = vmatmul.mubr.bf16.gmra.mrb[0].mxu0 %v781
      %v1098 = vpop.f32.mrb[0].mxu0
      %v1099 = vadd.f32 %v395, %v1098
      %v1100 = vpop.f32.mrb[0].mxu0
      %v1101 = vpop.f32.mrb[0].mxu0
      %v1102 = vadd.f32 %v395, %v1101
      %v1103 = vpop.f32.mrb[0].mxu0
      %1104 = vmatprep.mubr.bf16.mxu0 0
      %1105 = vmatmul.mubr.bf16.gmra.mrb[0].mxu0 %v784
      %v1106 = vpop.f32.mrb[0].mxu0
      %v1107 = vadd.f32 %v395, %v1106
      %v1108 = vpop.f32.mrb[0].mxu0
      %v1109 = vpop.f32.mrb[0].mxu0
      %v1110 = vadd.f32 %v395, %v1109
      %v1111 = vpop.f32.mrb[0].mxu0
      %1112 = vmatprep.mubr.bf16.mxu0 0
      %1113 = vmatmul.mubr.bf16.gmra.mrb[0].mxu0 %v787
      %v1114 = vpop.f32.mrb[0].mxu0
      %v1115 = vadd.f32 %v395, %v1114
      %v1116 = vpop.f32.mrb[0].mxu0
      %v1117 = vpop.f32.mrb[0].mxu0
      %v1118 = vadd.f32 %v395, %v1117
      %v1119 = vpop.f32.mrb[0].mxu0
      %1120 = vmatprep.mubr.bf16.mxu0 0
      %1121 = vmatmul.mubr.bf16.gmra.mrb[0].mxu0 %v790
      %v1122 = vpop.f32.mrb[0].mxu0
      %v1123 = vadd.f32 %v395, %v1122
      %v1124 = vpop.f32.mrb[0].mxu0
      %v1125 = vpop.f32.mrb[0].mxu0
      %v1126 = vadd.f32 %v395, %v1125
      %v1127 = vpop.f32.mrb[0].mxu0
      %1128 = vmatprep.mubr.bf16.mxu0 0
      %1129 = vmatmul.mubr.bf16.gmra.mrb[0].mxu0 %v793
      %v1130 = vpop.f32.mrb[0].mxu0
      %v1131 = vadd.f32 %v395, %v1130
      %v1132 = vpop.f32.mrb[0].mxu0
      %v1133 = vpop.f32.mrb[0].mxu0
      %v1134 = vadd.f32 %v395, %v1133
      %v1135 = vpop.f32.mrb[0].mxu0
      %1136 = vmatprep.mubr.bf16.mxu0 0
      %1137 = vmatmul.mubr.bf16.gmra.mrb[0].mxu0 %v796
      %v1138 = vpop.f32.mrb[0].mxu0
      %v1139 = vadd.f32 %v395, %v1138
      %v1140 = vpop.f32.mrb[0].mxu0
      %v1141 = vpop.f32.mrb[0].mxu0
      %v1142 = vadd.f32 %v395, %v1141
      %v1143 = vpop.f32.mrb[0].mxu0
      %1144 = vmatprep.mubr.bf16.mxu0 0
      %1145 = vmatmul.mubr.bf16.gmra.mrb[0].mxu0 %v799
      %v1146 = vpop.f32.mrb[0].mxu0
      %v1147 = vadd.f32 %v395, %v1146
      %v1148 = vpop.f32.mrb[0].mxu0
      %v1149 = vpop.f32.mrb[0].mxu0
      %v1150 = vadd.f32 %v395, %v1149
      %v1151 = vpop.f32.mrb[0].mxu0
      %1152 = vmatprep.mubr.bf16.mxu0 0
      %1153 = vmatmul.mubr.bf16.gmra.mrb[0].mxu0 %v802
      %v1154 = vpop.f32.mrb[0].mxu0
      %v1155 = vadd.f32 %v395, %v1154
      %v1156 = vpop.f32.mrb[0].mxu0
      %v1157 = vpop.f32.mrb[0].mxu0
      %v1158 = vadd.f32 %v395, %v1157
      %v1159 = vpop.f32.mrb[0].mxu0
      %1160 = vmatprep.mubr.bf16.mxu0 0
      %1161 = vmatmul.mubr.bf16.gmra.mrb[0].mxu0 %v805
      %v1162 = vpop.f32.mrb[0].mxu0
      %v1163 = vadd.f32 %v395, %v1162
      %v1164 = vpop.f32.mrb[0].mxu0
      %v1165 = vpop.f32.mrb[0].mxu0
      %v1166 = vadd.f32 %v395, %v1165
      %v1167 = vpop.f32.mrb[0].mxu0
      %1168 = vmatprep.mubr.bf16.mxu0 0
      %1169 = vmatmul.mubr.bf16.gmra.mrb[0].mxu0 %v808
      %v1170 = vpop.f32.mrb[0].mxu0
      %v1171 = vadd.f32 %v395, %v1170
      %v1172 = vpop.f32.mrb[0].mxu0
      %v1173 = vpop.f32.mrb[0].mxu0
      %v1174 = vadd.f32 %v395, %v1173
      %v1175 = vpop.f32.mrb[0].mxu0
      %1176 = vmatprep.mubr.bf16.mxu0 0
      %1177 = vmatmul.mubr.bf16.gmra.mrb[0].mxu0 %v811
      %v1178 = vpop.f32.mrb[0].mxu0
      %v1179 = vadd.f32 %v395, %v1178
      %v1180 = vpop.f32.mrb[0].mxu0
      %v1181 = vpop.f32.mrb[0].mxu0
      %v1182 = vadd.f32 %v395, %v1181
      %v1183 = vpop.f32.mrb[0].mxu0
      %1184 = vmatprep.mubr.bf16.mxu0 0
      %1185 = vmatmul.mubr.bf16.gmra.mrb[0].mxu0 %v814
      %v1186 = vpop.f32.mrb[0].mxu0
      %v1187 = vadd.f32 %v395, %v1186
      %v1188 = vpop.f32.mrb[0].mxu0
      %v1189 = vpop.f32.mrb[0].mxu0
      %v1190 = vadd.f32 %v395, %v1189
      %v1191 = vpop.f32.mrb[0].mxu0
      %1192 = vmatprep.mubr.bf16.mxu0 0
      %1193 = vmatmul.mubr.bf16.gmra.mrb[0].mxu0 %v817
      %v1194 = vpop.f32.mrb[0].mxu0
      %v1195 = vadd.f32 %v395, %v1194
      %v1196 = vpop.f32.mrb[0].mxu0
      %v1197 = vpop.f32.mrb[0].mxu0
      %v1198 = vadd.f32 %v395, %v1197
      %v1199 = vpop.f32.mrb[0].mxu0
      %1200 = vmatprep.mubr.bf16.mxu0 0
      %1201 = vmatmul.mubr.bf16.gmra.mrb[0].mxu0 %v820
      %v1202 = vpop.f32.mrb[0].mxu0
      %v1203 = vadd.f32 %v395, %v1202
      %v1204 = vpop.f32.mrb[0].mxu0
      %v1205 = vpop.f32.mrb[0].mxu0
      %v1206 = vadd.f32 %v395, %v1205
      %v1207 = vpop.f32.mrb[0].mxu0
      %1208 = vmatprep.mubr.bf16.mxu0 0
      %1209 = vmatmul.mubr.bf16.gmra.mrb[0].mxu0 %v823
      %v1210 = vpop.f32.mrb[0].mxu0
      %v1211 = vadd.f32 %v395, %v1210
      %v1212 = vpop.f32.mrb[0].mxu0
      %v1213 = vpop.f32.mrb[0].mxu0
      %v1214 = vadd.f32 %v395, %v1213
      %v1215 = vpop.f32.mrb[0].mxu0
      %1216 = vmatprep.mubr.bf16.mxu0 0
      %1217 = vmatmul.mubr.bf16.gmra.mrb[0].mxu0 %v826
      %v1218 = vpop.f32.mrb[0].mxu0
      %v1219 = vadd.f32 %v395, %v1218
      %v1220 = vpop.f32.mrb[0].mxu0
      %v1221 = vpop.f32.mrb[0].mxu0
      %v1222 = vadd.f32 %v395, %v1221
      %v1223 = vpop.f32.mrb[0].mxu0
      %1224 = vmatprep.mubr.bf16.mxu0 0
      %1225 = vmatmul.mubr.bf16.gmra.mrb[0].mxu0 %v829
      %v1226 = vpop.f32.mrb[0].mxu0
      %v1227 = vadd.f32 %v395, %v1226
      %v1228 = vpop.f32.mrb[0].mxu0
      %v1229 = vpop.f32.mrb[0].mxu0
      %v1230 = vadd.f32 %v395, %v1229
      %v1231 = vpop.f32.mrb[0].mxu0
      %1232 = vmatprep.mubr.bf16.mxu0 0
      %1233 = vmatmul.mubr.bf16.gmra.mrb[0].mxu0 %v832
      %v1234 = vpop.f32.mrb[0].mxu0
      %v1235 = vadd.f32 %v395, %v1234
      %v1236 = vpop.f32.mrb[0].mxu0
      %v1237 = vpop.f32.mrb[0].mxu0
      %v1238 = vadd.f32 %v395, %v1237
      %v1239 = vpop.f32.mrb[0].mxu0
      %1240 = vmatprep.mubr.bf16.mxu0 0
      %1241 = vmatmul.mubr.bf16.gmra.mrb[0].mxu0 %v835
      %v1242 = vpop.f32.mrb[0].mxu0
      %v1243 = vadd.f32 %v395, %v1242
      %v1244 = vpop.f32.mrb[0].mxu0
      %v1245 = vpop.f32.mrb[0].mxu0
      %v1246 = vadd.f32 %v395, %v1245
      %v1247 = vpop.f32.mrb[0].mxu0
      %1248 = vmatprep.mubr.bf16.mxu0 0
      %1249 = vmatmul.mubr.bf16.gmra.mrb[0].mxu0 %v838
      %v1250 = vpop.f32.mrb[0].mxu0
      %v1251 = vadd.f32 %v395, %v1250
      %v1252 = vpop.f32.mrb[0].mxu0
      %v1253 = vpop.f32.mrb[0].mxu0
      %v1254 = vadd.f32 %v395, %v1253
      %v1255 = vpop.f32.mrb[0].mxu0
      %1256 = vmatprep.mubr.bf16.mxu0 0
      %1257 = vmatmul.mubr.bf16.gmra.mrb[0].mxu0 %v841
      %v1258 = vpop.f32.mrb[0].mxu0
      %v1259 = vadd.f32 %v395, %v1258
      %v1260 = vpop.f32.mrb[0].mxu0
      %v1261 = vpop.f32.mrb[0].mxu0
      %v1262 = vadd.f32 %v395, %v1261
      %v1263 = vpop.f32.mrb[0].mxu0
      %1264 = vmatprep.mubr.bf16.mxu0 0
      %1265 = vmatmul.mubr.bf16.gmra.mrb[0].mxu0 %v844
      %v1266 = vpop.f32.mrb[0].mxu0
      %v1267 = vadd.f32 %v395, %v1266
      %v1268 = vpop.f32.mrb[0].mxu0
      %v1269 = vpop.f32.mrb[0].mxu0
      %v1270 = vadd.f32 %v395, %v1269
      %v1271 = vpop.f32.mrb[0].mxu0
      %1272 = vmatprep.mubr.bf16.mxu0 0
      %1273 = vmatmul.mubr.bf16.gmra.mrb[0].mxu0 %v847
      %v1274 = vpop.f32.mrb[0].mxu0
      %v1275 = vadd.f32 %v395, %v1274
      %v1276 = vpop.f32.mrb[0].mxu0
      %v1277 = vpop.f32.mrb[0].mxu0
      %v1278 = vadd.f32 %v395, %v1277
      %v1279 = vpop.f32.mrb[0].mxu0
      %1280 = vmatprep.mubr.bf16.mxu0 0
      %1281 = vmatmul.mubr.bf16.gmra.mrb[0].mxu0 %v850
      %v1282 = vpop.f32.mrb[0].mxu0
      %v1283 = vadd.f32 %v395, %v1282
      %v1284 = vpop.f32.mrb[0].mxu0
      %v1285 = vpop.f32.mrb[0].mxu0
      %v1286 = vadd.f32 %v395, %v1285
      %v1287 = vpop.f32.mrb[0].mxu0
      %1288 = vmatprep.mubr.bf16.mxu0 0
      %1289 = vmatmul.mubr.bf16.gmra.mrb[0].mxu0 %v853
      %v1290 = vpop.f32.mrb[0].mxu0
      %v1291 = vadd.f32 %v395, %v1290
      %v1292 = vpop.f32.mrb[0].mxu0
      %v1293 = vpop.f32.mrb[0].mxu0
      %v1294 = vadd.f32 %v395, %v1293
      %v1295 = vpop.f32.mrb[0].mxu0
      %1296 = vmatprep.mubr.bf16.mxu0 0
      %1297 = vmatmul.mubr.bf16.gmra.mrb[0].mxu0 %v856
      %v1298 = vpop.f32.mrb[0].mxu0
      %v1299 = vadd.f32 %v395, %v1298
      %v1300 = vpop.f32.mrb[0].mxu0
      %v1301 = vpop.f32.mrb[0].mxu0
      %v1302 = vadd.f32 %v395, %v1301
      %v1303 = vpop.f32.mrb[0].mxu0
      %1304 = vmatprep.mubr.bf16.mxu0 0
      %1305 = vmatmul.mubr.bf16.gmra.mrb[0].mxu0 %v859
      %v1306 = vpop.f32.mrb[0].mxu0
      %v1307 = vadd.f32 %v395, %v1306
      %v1308 = vpop.f32.mrb[0].mxu0
      %v1309 = vpop.f32.mrb[0].mxu0
      %v1310 = vadd.f32 %v395, %v1309
      %v1311 = vpop.f32.mrb[0].mxu0
      %1312 = vmatprep.mubr.bf16.mxu0 0
      %1313 = vmatmul.mubr.bf16.gmra.mrb[0].mxu0 %v862
      %v1314 = vpop.f32.mrb[0].mxu0
      %v1315 = vadd.f32 %v395, %v1314
      %v1316 = vpop.f32.mrb[0].mxu0
      %v1317 = vpop.f32.mrb[0].mxu0
      %v1318 = vadd.f32 %v395, %v1317
      %v1319 = vpop.f32.mrb[0].mxu0
      %1320 = vmatprep.mubr.bf16.mxu0 0
      %1321 = vmatmul.mubr.bf16.gmra.mrb[0].mxu0 %v865
      %v1322 = vpop.f32.mrb[0].mxu0
      %v1323 = vadd.f32 %v395, %v1322
      %v1324 = vpop.f32.mrb[0].mxu0
      %v1325 = vpop.f32.mrb[0].mxu0
      %v1326 = vadd.f32 %v395, %v1325
      %v1327 = vpop.f32.mrb[0].mxu0
      %1328 = vmatprep.mubr.bf16.mxu0 0
      %1329 = vmatmul.mubr.bf16.gmra.mrb[0].mxu0 %v868
      %v1330 = vpop.f32.mrb[0].mxu0
      %v1331 = vadd.f32 %v395, %v1330
      %v1332 = vpop.f32.mrb[0].mxu0
      %v1333 = vpop.f32.mrb[0].mxu0
      %v1334 = vadd.f32 %v395, %v1333
      %v1335 = vpop.f32.mrb[0].mxu0
      %1336 = vmatprep.mubr.bf16.mxu0 0
      %1337 = vmatmul.mubr.bf16.gmra.mrb[0].mxu0 %v871
      %v1338 = vpop.f32.mrb[0].mxu0
      %v1339 = vadd.f32 %v395, %v1338
      %v1340 = vpop.f32.mrb[0].mxu0
      %v1341 = vpop.f32.mrb[0].mxu0
      %v1342 = vadd.f32 %v395, %v1341
      %v1343 = vpop.f32.mrb[0].mxu0
      %1344 = vmatprep.mubr.bf16.mxu0 0
      %1345 = vmatmul.mubr.bf16.gmra.mrb[0].mxu0 %v874
      %v1346 = vpop.f32.mrb[0].mxu0
      %v1347 = vadd.f32 %v395, %v1346
      %v1348 = vpop.f32.mrb[0].mxu0
      %v1349 = vpop.f32.mrb[0].mxu0
      %v1350 = vadd.f32 %v395, %v1349
      %v1351 = vpop.f32.mrb[0].mxu0
      %1352 = vmatprep.mubr.bf16.mxu0 0
      %1353 = vmatmul.mubr.bf16.gmra.mrb[0].mxu0 %v877
      %v1354 = vpop.f32.mrb[0].mxu0
      %v1355 = vadd.f32 %v395, %v1354
      %v1356 = vpop.f32.mrb[0].mxu0
      %v1357 = vpop.f32.mrb[0].mxu0
      %v1358 = vadd.f32 %v395, %v1357
      %v1359 = vpop.f32.mrb[0].mxu0
      %1360 = vmatprep.mubr.bf16.mxu0 0
      %1361 = vmatmul.mubr.bf16.gmra.mrb[0].mxu0 %v880
      %v1362 = vpop.f32.mrb[0].mxu0
      %v1363 = vadd.f32 %v395, %v1362
      %v1364 = vpop.f32.mrb[0].mxu0
      %v1365 = vpop.f32.mrb[0].mxu0
      %v1366 = vadd.f32 %v395, %v1365
      %v1367 = vpop.f32.mrb[0].mxu0
      %1368 = vmatprep.mubr.bf16.mxu0 0
      %1369 = vmatmul.mubr.bf16.gmra.mrb[0].mxu0 %v883
      %v1370 = vpop.f32.mrb[0].mxu0
      %v1371 = vadd.f32 %v395, %v1370
      %v1372 = vpop.f32.mrb[0].mxu0
      %v1373 = vpop.f32.mrb[0].mxu0
      %v1374 = vadd.f32 %v395, %v1373
      %v1375 = vpop.f32.mrb[0].mxu0
      %1376 = vmatprep.mubr.bf16.mxu0 0
      %1377 = vmatmul.mubr.bf16.gmra.mrb[0].mxu0 %v886
      %v1378 = vpop.f32.mrb[0].mxu0
      %v1379 = vadd.f32 %v395, %v1378
      %v1380 = vpop.f32.mrb[0].mxu0
      %v1381 = vpop.f32.mrb[0].mxu0
      %v1382 = vadd.f32 %v395, %v1381
      %v1383 = vpop.f32.mrb[0].mxu0
      %1384 = vmatprep.mubr.bf16.mxu0 0
      %1385 = vmatmul.mubr.bf16.gmra.mrb[0].mxu0 %v889
      %v1386 = vpop.f32.mrb[0].mxu0
      %v1387 = vadd.f32 %v395, %v1386
      %v1388 = vpop.f32.mrb[0].mxu0
      %v1389 = vpop.f32.mrb[0].mxu0
      %v1390 = vadd.f32 %v395, %v1389
      %v1391 = vpop.f32.mrb[0].mxu0
      %1392 = vmatprep.mubr.bf16.mxu0 0
      %1393 = vmatmul.mubr.bf16.gmra.mrb[0].mxu0 %v892
      %v1394 = vpop.f32.mrb[0].mxu0
      %v1395 = vadd.f32 %v395, %v1394
      %v1396 = vpop.f32.mrb[0].mxu0
      %v1397 = vpop.f32.mrb[0].mxu0
      %v1398 = vadd.f32 %v395, %v1397
      %v1399 = vpop.f32.mrb[0].mxu0
      %1400 = vmatprep.mubr.bf16.mxu0 0
      %1401 = vmatmul.mubr.bf16.gmra.mrb[0].mxu0 %v895
      %v1402 = vpop.f32.mrb[0].mxu0
      %v1403 = vadd.f32 %v395, %v1402
      %v1404 = vpop.f32.mrb[0].mxu0
      %v1405 = vpop.f32.mrb[0].mxu0
      %v1406 = vadd.f32 %v395, %v1405
      %v1407 = vpop.f32.mrb[0].mxu0
      %1408 = vmatprep.mubr.bf16.mxu0 0
      %1409 = vmatmul.mubr.bf16.gmra.mrb[0].mxu0 %v898
      %v1410 = vpop.f32.mrb[0].mxu0
      %v1411 = vadd.f32 %v395, %v1410
      %v1412 = vpop.f32.mrb[0].mxu0
      %v1413 = vpop.f32.mrb[0].mxu0
      %v1414 = vadd.f32 %v395, %v1413
      %v1415 = vpop.f32.mrb[0].mxu0
      %1416 = vmatprep.mubr.bf16.mxu0 0
      %1417 = vmatmul.mubr.bf16.gmra.mrb[0].mxu0 %v901
      %v1418 = vpop.f32.mrb[0].mxu0
      %v1419 = vadd.f32 %v395, %v1418
      %v1420 = vpop.f32.mrb[0].mxu0
      %v1421 = vpop.f32.mrb[0].mxu0
      %v1422 = vadd.f32 %v395, %v1421
      %v1423 = vpop.f32.mrb[0].mxu0
      %1424 = vmatprep.mubr.bf16.mxu0 0
      %1425 = vmatmul.mubr.bf16.gmra.mrb[0].mxu0 %v904
      %v1426 = vpop.f32.mrb[0].mxu0
      %v1427 = vadd.f32 %v395, %v1426
      %v1428 = vpop.f32.mrb[0].mxu0
      %v1429 = vpop.f32.mrb[0].mxu0
      %v1430 = vadd.f32 %v395, %v1429
      %v1431 = vpop.f32.mrb[0].mxu0
      %1432 = vmatprep.mubr.bf16.mxu0 0
      %1433 = vmatmul.mubr.bf16.gmra.mrb[0].mxu0 %v907
      %v1434 = vpop.f32.mrb[0].mxu0
      %v1435 = vadd.f32 %v395, %v1434
      %v1436 = vpop.f32.mrb[0].mxu0
      %v1437 = vpop.f32.mrb[0].mxu0
      %v1438 = vadd.f32 %v395, %v1437
      %v1439 = vpop.f32.mrb[0].mxu0
      %1440 = vmatprep.mubr.bf16.mxu0 0
      %1441 = vmatmul.mubr.bf16.gmra.mrb[0].mxu0 %v910
      %v1442 = vpop.f32.mrb[0].mxu0
      %v1443 = vadd.f32 %v395, %v1442
      %v1444 = vpop.f32.mrb[0].mxu0
      %v1445 = vpop.f32.mrb[0].mxu0
      %v1446 = vadd.f32 %v395, %v1445
      %v1447 = vpop.f32.mrb[0].mxu0
      %1448 = vmatprep.mubr.bf16.mxu0 0
      %1449 = vmatmul.mubr.bf16.gmra.mrb[0].mxu0 %v913
      %v1450 = vpop.f32.mrb[0].mxu0
      %v1451 = vadd.f32 %v395, %v1450
      %v1452 = vpop.f32.mrb[0].mxu0
      %v1453 = vpop.f32.mrb[0].mxu0
      %v1454 = vadd.f32 %v395, %v1453
      %v1455 = vpop.f32.mrb[0].mxu0
      %1456 = vmatprep.mubr.bf16.mxu0 0
      %1457 = vmatmul.mubr.bf16.gmra.mrb[0].mxu0 %v916
      %v1458 = vpop.f32.mrb[0].mxu0
      %v1459 = vadd.f32 %v395, %v1458
      %v1460 = vpop.f32.mrb[0].mxu0
      %v1461 = vpop.f32.mrb[0].mxu0
      %v1462 = vadd.f32 %v395, %v1461
      %v1463 = vpop.f32.mrb[0].mxu0
      %1464 = vmatprep.mubr.bf16.mxu0 0
      %1465 = vmatmul.mubr.bf16.gmra.mrb[0].mxu0 %v919
      %v1466 = vpop.f32.mrb[0].mxu0
      %v1467 = vadd.f32 %v395, %v1466
      %v1468 = vpop.f32.mrb[0].mxu0
      %v1469 = vpop.f32.mrb[0].mxu0
      %v1470 = vadd.f32 %v395, %v1469
      %v1471 = vpop.f32.mrb[0].mxu0
      %1472 = vdwg.mxu0
      %v1473 = vmax.f32 %v963, 0.0
      %v1474 = vmax.f32 %v966, 0.0
      %v1475 = vmax.f32 %v971, 0.0
      %v1476 = vmax.f32 %v974, 0.0
      %v1477 = vmax.f32 %v979, 0.0
      %v1478 = vmax.f32 %v982, 0.0
      %v1479 = vmax.f32 %v987, 0.0
      %v1480 = vmax.f32 %v990, 0.0
      %v1481 = vmax.f32 %v995, 0.0
      %v1482 = vmax.f32 %v998, 0.0
      %v1483 = vmax.f32 %v1003, 0.0
      %v1484 = vmax.f32 %v1006, 0.0
      %v1485 = vmax.f32 %v1011, 0.0
      %v1486 = vmax.f32 %v1014, 0.0
      %v1487 = vmax.f32 %v1019, 0.0
      %v1488 = vmax.f32 %v1022, 0.0
      %v1489 = vmax.f32 %v1027, 0.0
      %v1490 = vmax.f32 %v1030, 0.0
      %v1491 = vmax.f32 %v1035, 0.0
      %v1492 = vmax.f32 %v1038, 0.0
      %v1493 = vmax.f32 %v1043, 0.0
      %v1494 = vmax.f32 %v1046, 0.0
      %v1495 = vmax.f32 %v1051, 0.0
      %v1496 = vmax.f32 %v1054, 0.0
      %v1497 = vmax.f32 %v1059, 0.0
      %v1498 = vmax.f32 %v1062, 0.0
      %v1499 = vmax.f32 %v1067, 0.0
      %v1500 = vmax.f32 %v1070, 0.0
      %v1501 = vmax.f32 %v1075, 0.0
      %v1502 = vmax.f32 %v1078, 0.0
      %v1503 = vmax.f32 %v1083, 0.0
      %v1504 = vmax.f32 %v1086, 0.0
      %v1505 = vmax.f32 %v1091, 0.0
      %v1506 = vmax.f32 %v1094, 0.0
      %v1507 = vmax.f32 %v1099, 0.0
      %v1508 = vmax.f32 %v1102, 0.0
      %v1509 = vmax.f32 %v1107, 0.0
      %v1510 = vmax.f32 %v1110, 0.0
      %v1511 = vmax.f32 %v1115, 0.0
      %v1512 = vmax.f32 %v1118, 0.0
      %v1513 = vmax.f32 %v1123, 0.0
      %v1514 = vmax.f32 %v1126, 0.0
      %v1515 = vmax.f32 %v1131, 0.0
      %v1516 = vmax.f32 %v1134, 0.0
      %v1517 = vmax.f32 %v1139, 0.0
      %v1518 = vmax.f32 %v1142, 0.0
      %v1519 = vmax.f32 %v1147, 0.0
      %v1520 = vmax.f32 %v1150, 0.0
      %v1521 = vmax.f32 %v1155, 0.0
      %v1522 = vmax.f32 %v1158, 0.0
      %v1523 = vmax.f32 %v1163, 0.0
      %v1524 = vmax.f32 %v1166, 0.0
      %v1525 = vmax.f32 %v1171, 0.0
      %v1526 = vmax.f32 %v1174, 0.0
      %v1527 = vmax.f32 %v1179, 0.0
      %v1528 = vmax.f32 %v1182, 0.0
      %v1529 = vmax.f32 %v1187, 0.0
      %v1530 = vmax.f32 %v1190, 0.0
      %v1531 = vmax.f32 %v1195, 0.0
      %v1532 = vmax.f32 %v1198, 0.0
      %v1533 = vmax.f32 %v1203, 0.0
      %v1534 = vmax.f32 %v1206, 0.0
      %v1535 = vmax.f32 %v1211, 0.0
      %v1536 = vmax.f32 %v1214, 0.0
      %v1537 = vmax.f32 %v1219, 0.0
      %v1538 = vmax.f32 %v1222, 0.0
      %v1539 = vmax.f32 %v1227, 0.0
      %v1540 = vmax.f32 %v1230, 0.0
      %v1541 = vmax.f32 %v1235, 0.0
      %v1542 = vmax.f32 %v1238, 0.0
      %v1543 = vmax.f32 %v1243, 0.0
      %v1544 = vmax.f32 %v1246, 0.0
      %v1545 = vmax.f32 %v1251, 0.0
      %v1546 = vmax.f32 %v1254, 0.0
      %v1547 = vmax.f32 %v1259, 0.0
      %v1548 = vmax.f32 %v1262, 0.0
      %v1549 = vmax.f32 %v1267, 0.0
      %v1550 = vmax.f32 %v1270, 0.0
      %v1551 = vmax.f32 %v1275, 0.0
      %v1552 = vmax.f32 %v1278, 0.0
      %v1553 = vmax.f32 %v1283, 0.0
      %v1554 = vmax.f32 %v1286, 0.0
      %v1555 = vmax.f32 %v1291, 0.0
      %v1556 = vmax.f32 %v1294, 0.0
      %v1557 = vmax.f32 %v1299, 0.0
      %v1558 = vmax.f32 %v1302, 0.0
      %v1559 = vmax.f32 %v1307, 0.0
      %v1560 = vmax.f32 %v1310, 0.0
      %v1561 = vmax.f32 %v1315, 0.0
      %v1562 = vmax.f32 %v1318, 0.0
      %v1563 = vmax.f32 %v1323, 0.0
      %v1564 = vmax.f32 %v1326, 0.0
      %v1565 = vmax.f32 %v1331, 0.0
      %v1566 = vmax.f32 %v1334, 0.0
      %v1567 = vmax.f32 %v1339, 0.0
      %v1568 = vmax.f32 %v1342, 0.0
      %v1569 = vmax.f32 %v1347, 0.0
      %v1570 = vmax.f32 %v1350, 0.0
      %v1571 = vmax.f32 %v1355, 0.0
      %v1572 = vmax.f32 %v1358, 0.0
      %v1573 = vmax.f32 %v1363, 0.0
      %v1574 = vmax.f32 %v1366, 0.0
      %v1575 = vmax.f32 %v1371, 0.0
      %v1576 = vmax.f32 %v1374, 0.0
      %v1577 = vmax.f32 %v1379, 0.0
      %v1578 = vmax.f32 %v1382, 0.0
      %v1579 = vmax.f32 %v1387, 0.0
      %v1580 = vmax.f32 %v1390, 0.0
      %v1581 = vmax.f32 %v1395, 0.0
      %v1582 = vmax.f32 %v1398, 0.0
      %v1583 = vmax.f32 %v1403, 0.0
      %v1584 = vmax.f32 %v1406, 0.0
      %v1585 = vmax.f32 %v1411, 0.0
      %v1586 = vmax.f32 %v1414, 0.0
      %v1587 = vmax.f32 %v1419, 0.0
      %v1588 = vmax.f32 %v1422, 0.0
      %v1589 = vmax.f32 %v1427, 0.0
      %v1590 = vmax.f32 %v1430, 0.0
      %v1591 = vmax.f32 %v1435, 0.0
      %v1592 = vmax.f32 %v1438, 0.0
      %v1593 = vmax.f32 %v1443, 0.0
      %v1594 = vmax.f32 %v1446, 0.0
      %v1595 = vmax.f32 %v1451, 0.0
      %v1596 = vmax.f32 %v1454, 0.0
      %v1597 = vmax.f32 %v1459, 0.0
      %v1598 = vmax.f32 %v1462, 0.0
      %v1599 = vmax.f32 %v1467, 0.0
      %v1600 = vmax.f32 %v1470, 0.0
      %v1601 = vld [vmem:[#allocation2] sm:$0xff]
      %vm1602 = vcmask 523264
      %v1603 = vsel %vm1602, %v1473, 0.0
      %v1604 = vsel %vm1602, %v1474, 0.0
      %v1605 = vadd.f32 %v1603, %v1604
      %v1606 = vsel %vm1602, %v1475, 0.0
      %v1607 = vadd.f32 %v1605, %v1606
      %v1608 = vsel %vm1602, %v1476, 0.0
      %v1609 = vadd.f32 %v1607, %v1608
      %v1610 = vsel %vm1602, %v1477, 0.0
      %v1611 = vadd.f32 %v1609, %v1610
      %v1612 = vsel %vm1602, %v1478, 0.0
      %v1613 = vadd.f32 %v1611, %v1612
      %v1614 = vsel %vm1602, %v1479, 0.0
      %v1615 = vadd.f32 %v1613, %v1614
      %v1616 = vsel %vm1602, %v1480, 0.0
      %v1617 = vadd.f32 %v1615, %v1616
      %v1618 = vsel %vm1602, %v1481, 0.0
      %v1619 = vadd.f32 %v1617, %v1618
      %v1620 = vsel %vm1602, %v1482, 0.0
      %v1621 = vadd.f32 %v1619, %v1620
      %v1622 = vsel %vm1602, %v1483, 0.0
      %v1623 = vadd.f32 %v1621, %v1622
      %v1624 = vsel %vm1602, %v1484, 0.0
      %v1625 = vadd.f32 %v1623, %v1624
      %v1626 = vsel %vm1602, %v1485, 0.0
      %v1627 = vadd.f32 %v1625, %v1626
      %v1628 = vsel %vm1602, %v1486, 0.0
      %v1629 = vadd.f32 %v1627, %v1628
      %v1630 = vsel %vm1602, %v1487, 0.0
      %v1631 = vadd.f32 %v1629, %v1630
      %v1632 = vsel %vm1602, %v1488, 0.0
      %v1633 = vadd.f32 %v1631, %v1632
      %v1634 = vsel %vm1602, %v1489, 0.0
      %v1635 = vadd.f32 %v1633, %v1634
      %v1636 = vsel %vm1602, %v1490, 0.0
      %v1637 = vadd.f32 %v1635, %v1636
      %v1638 = vsel %vm1602, %v1491, 0.0
      %v1639 = vadd.f32 %v1637, %v1638
      %v1640 = vsel %vm1602, %v1492, 0.0
      %v1641 = vadd.f32 %v1639, %v1640
      %v1642 = vsel %vm1602, %v1493, 0.0
      %v1643 = vadd.f32 %v1641, %v1642
      %v1644 = vsel %vm1602, %v1494, 0.0
      %v1645 = vadd.f32 %v1643, %v1644
      %v1646 = vsel %vm1602, %v1495, 0.0
      %v1647 = vadd.f32 %v1645, %v1646
      %v1648 = vsel %vm1602, %v1496, 0.0
      %v1649 = vadd.f32 %v1647, %v1648
      %v1650 = vsel %vm1602, %v1497, 0.0
      %v1651 = vadd.f32 %v1649, %v1650
      %v1652 = vsel %vm1602, %v1498, 0.0
      %v1653 = vadd.f32 %v1651, %v1652
      %v1654 = vsel %vm1602, %v1499, 0.0
      %v1655 = vadd.f32 %v1653, %v1654
      %v1656 = vsel %vm1602, %v1500, 0.0
      %v1657 = vadd.f32 %v1655, %v1656
      %v1658 = vsel %vm1602, %v1501, 0.0
      %v1659 = vadd.f32 %v1657, %v1658
      %v1660 = vsel %vm1602, %v1502, 0.0
      %v1661 = vadd.f32 %v1659, %v1660
      %v1662 = vsel %vm1602, %v1503, 0.0
      %v1663 = vadd.f32 %v1661, %v1662
      %v1664 = vsel %vm1602, %v1504, 0.0
      %v1665 = vadd.f32 %v1663, %v1664
      %v1666 = vsel %vm1602, %v1505, 0.0
      %v1667 = vadd.f32 %v1665, %v1666
      %v1668 = vsel %vm1602, %v1506, 0.0
      %v1669 = vadd.f32 %v1667, %v1668
      %v1670 = vsel %vm1602, %v1507, 0.0
      %v1671 = vadd.f32 %v1669, %v1670
      %v1672 = vsel %vm1602, %v1508, 0.0
      %v1673 = vadd.f32 %v1671, %v1672
      %v1674 = vsel %vm1602, %v1509, 0.0
      %v1675 = vadd.f32 %v1673, %v1674
      %v1676 = vsel %vm1602, %v1510, 0.0
      %v1677 = vadd.f32 %v1675, %v1676
      %v1678 = vsel %vm1602, %v1511, 0.0
      %v1679 = vadd.f32 %v1677, %v1678
      %v1680 = vsel %vm1602, %v1512, 0.0
      %v1681 = vadd.f32 %v1679, %v1680
      %v1682 = vsel %vm1602, %v1513, 0.0
      %v1683 = vadd.f32 %v1681, %v1682
      %v1684 = vsel %vm1602, %v1514, 0.0
      %v1685 = vadd.f32 %v1683, %v1684
      %v1686 = vsel %vm1602, %v1515, 0.0
      %v1687 = vadd.f32 %v1685, %v1686
      %v1688 = vsel %vm1602, %v1516, 0.0
      %v1689 = vadd.f32 %v1687, %v1688
      %v1690 = vsel %vm1602, %v1517, 0.0
      %v1691 = vadd.f32 %v1689, %v1690
      %v1692 = vsel %vm1602, %v1518, 0.0
      %v1693 = vadd.f32 %v1691, %v1692
      %v1694 = vsel %vm1602, %v1519, 0.0
      %v1695 = vadd.f32 %v1693, %v1694
      %v1696 = vsel %vm1602, %v1520, 0.0
      %v1697 = vadd.f32 %v1695, %v1696
      %v1698 = vsel %vm1602, %v1521, 0.0
      %v1699 = vadd.f32 %v1697, %v1698
      %v1700 = vsel %vm1602, %v1522, 0.0
      %v1701 = vadd.f32 %v1699, %v1700
      %v1702 = vsel %vm1602, %v1523, 0.0
      %v1703 = vadd.f32 %v1701, %v1702
      %v1704 = vsel %vm1602, %v1524, 0.0
      %v1705 = vadd.f32 %v1703, %v1704
      %v1706 = vsel %vm1602, %v1525, 0.0
      %v1707 = vadd.f32 %v1705, %v1706
      %v1708 = vsel %vm1602, %v1526, 0.0
      %v1709 = vadd.f32 %v1707, %v1708
      %v1710 = vsel %vm1602, %v1527, 0.0
      %v1711 = vadd.f32 %v1709, %v1710
      %v1712 = vsel %vm1602, %v1528, 0.0
      %v1713 = vadd.f32 %v1711, %v1712
      %v1714 = vsel %vm1602, %v1529, 0.0
      %v1715 = vadd.f32 %v1713, %v1714
      %v1716 = vsel %vm1602, %v1530, 0.0
      %v1717 = vadd.f32 %v1715, %v1716
      %v1718 = vsel %vm1602, %v1531, 0.0
      %v1719 = vadd.f32 %v1717, %v1718
      %v1720 = vsel %vm1602, %v1532, 0.0
      %v1721 = vadd.f32 %v1719, %v1720
      %v1722 = vsel %vm1602, %v1533, 0.0
      %v1723 = vadd.f32 %v1721, %v1722
      %v1724 = vsel %vm1602, %v1534, 0.0
      %v1725 = vadd.f32 %v1723, %v1724
      %v1726 = vsel %vm1602, %v1535, 0.0
      %v1727 = vadd.f32 %v1725, %v1726
      %v1728 = vsel %vm1602, %v1536, 0.0
      %v1729 = vadd.f32 %v1727, %v1728
      %v1730 = vsel %vm1602, %v1537, 0.0
      %v1731 = vadd.f32 %v1729, %v1730
      %v1732 = vsel %vm1602, %v1538, 0.0
      %v1733 = vadd.f32 %v1731, %v1732
      %v1734 = vsel %vm1602, %v1539, 0.0
      %v1735 = vadd.f32 %v1733, %v1734
      %v1736 = vsel %vm1602, %v1540, 0.0
      %v1737 = vadd.f32 %v1735, %v1736
      %v1738 = vsel %vm1602, %v1541, 0.0
      %v1739 = vadd.f32 %v1737, %v1738
      %v1740 = vsel %vm1602, %v1542, 0.0
      %v1741 = vadd.f32 %v1739, %v1740
      %v1742 = vsel %vm1602, %v1543, 0.0
      %v1743 = vadd.f32 %v1741, %v1742
      %v1744 = vsel %vm1602, %v1544, 0.0
      %v1745 = vadd.f32 %v1743, %v1744
      %v1746 = vsel %vm1602, %v1545, 0.0
      %v1747 = vadd.f32 %v1745, %v1746
      %v1748 = vsel %vm1602, %v1546, 0.0
      %v1749 = vadd.f32 %v1747, %v1748
      %v1750 = vsel %vm1602, %v1547, 0.0
      %v1751 = vadd.f32 %v1749, %v1750
      %v1752 = vsel %vm1602, %v1548, 0.0
      %v1753 = vadd.f32 %v1751, %v1752
      %v1754 = vsel %vm1602, %v1549, 0.0
      %v1755 = vadd.f32 %v1753, %v1754
      %v1756 = vsel %vm1602, %v1550, 0.0
      %v1757 = vadd.f32 %v1755, %v1756
      %v1758 = vsel %vm1602, %v1551, 0.0
      %v1759 = vadd.f32 %v1757, %v1758
      %v1760 = vsel %vm1602, %v1552, 0.0
      %v1761 = vadd.f32 %v1759, %v1760
      %v1762 = vsel %vm1602, %v1553, 0.0
      %v1763 = vadd.f32 %v1761, %v1762
      %v1764 = vsel %vm1602, %v1554, 0.0
      %v1765 = vadd.f32 %v1763, %v1764
      %v1766 = vsel %vm1602, %v1555, 0.0
      %v1767 = vadd.f32 %v1765, %v1766
      %v1768 = vsel %vm1602, %v1556, 0.0
      %v1769 = vadd.f32 %v1767, %v1768
      %v1770 = vsel %vm1602, %v1557, 0.0
      %v1771 = vadd.f32 %v1769, %v1770
      %v1772 = vsel %vm1602, %v1558, 0.0
      %v1773 = vadd.f32 %v1771, %v1772
      %v1774 = vsel %vm1602, %v1559, 0.0
      %v1775 = vadd.f32 %v1773, %v1774
      %v1776 = vsel %vm1602, %v1560, 0.0
      %v1777 = vadd.f32 %v1775, %v1776
      %v1778 = vsel %vm1602, %v1561, 0.0
      %v1779 = vadd.f32 %v1777, %v1778
      %v1780 = vsel %vm1602, %v1562, 0.0
      %v1781 = vadd.f32 %v1779, %v1780
      %v1782 = vsel %vm1602, %v1563, 0.0
      %v1783 = vadd.f32 %v1781, %v1782
      %v1784 = vsel %vm1602, %v1564, 0.0
      %v1785 = vadd.f32 %v1783, %v1784
      %v1786 = vsel %vm1602, %v1565, 0.0
      %v1787 = vadd.f32 %v1785, %v1786
      %v1788 = vsel %vm1602, %v1566, 0.0
      %v1789 = vadd.f32 %v1787, %v1788
      %v1790 = vsel %vm1602, %v1567, 0.0
      %v1791 = vadd.f32 %v1789, %v1790
      %v1792 = vsel %vm1602, %v1568, 0.0
      %v1793 = vadd.f32 %v1791, %v1792
      %v1794 = vsel %vm1602, %v1569, 0.0
      %v1795 = vadd.f32 %v1793, %v1794
      %v1796 = vsel %vm1602, %v1570, 0.0
      %v1797 = vadd.f32 %v1795, %v1796
      %v1798 = vsel %vm1602, %v1571, 0.0
      %v1799 = vadd.f32 %v1797, %v1798
      %v1800 = vsel %vm1602, %v1572, 0.0
      %v1801 = vadd.f32 %v1799, %v1800
      %v1802 = vsel %vm1602, %v1573, 0.0
      %v1803 = vadd.f32 %v1801, %v1802
      %v1804 = vsel %vm1602, %v1574, 0.0
      %v1805 = vadd.f32 %v1803, %v1804
      %v1806 = vsel %vm1602, %v1575, 0.0
      %v1807 = vadd.f32 %v1805, %v1806
      %v1808 = vsel %vm1602, %v1576, 0.0
      %v1809 = vadd.f32 %v1807, %v1808
      %v1810 = vsel %vm1602, %v1577, 0.0
      %v1811 = vadd.f32 %v1809, %v1810
      %v1812 = vsel %vm1602, %v1578, 0.0
      %v1813 = vadd.f32 %v1811, %v1812
      %v1814 = vsel %vm1602, %v1579, 0.0
      %v1815 = vadd.f32 %v1813, %v1814
      %v1816 = vsel %vm1602, %v1580, 0.0
      %v1817 = vadd.f32 %v1815, %v1816
      %v1818 = vsel %vm1602, %v1581, 0.0
      %v1819 = vadd.f32 %v1817, %v1818
      %v1820 = vsel %vm1602, %v1582, 0.0
      %v1821 = vadd.f32 %v1819, %v1820
      %v1822 = vsel %vm1602, %v1583, 0.0
      %v1823 = vadd.f32 %v1821, %v1822
      %v1824 = vsel %vm1602, %v1584, 0.0
      %v1825 = vadd.f32 %v1823, %v1824
      %v1826 = vsel %vm1602, %v1585, 0.0
      %v1827 = vadd.f32 %v1825, %v1826
      %v1828 = vsel %vm1602, %v1586, 0.0
      %v1829 = vadd.f32 %v1827, %v1828
      %v1830 = vsel %vm1602, %v1587, 0.0
      %v1831 = vadd.f32 %v1829, %v1830
      %v1832 = vsel %vm1602, %v1588, 0.0
      %v1833 = vadd.f32 %v1831, %v1832
      %v1834 = vsel %vm1602, %v1589, 0.0
      %v1835 = vadd.f32 %v1833, %v1834
      %v1836 = vsel %vm1602, %v1590, 0.0
      %v1837 = vadd.f32 %v1835, %v1836
      %v1838 = vsel %vm1602, %v1591, 0.0
      %v1839 = vadd.f32 %v1837, %v1838
      %v1840 = vsel %vm1602, %v1592, 0.0
      %v1841 = vadd.f32 %v1839, %v1840
      %v1842 = vsel %vm1602, %v1593, 0.0
      %v1843 = vadd.f32 %v1841, %v1842
      %v1844 = vsel %vm1602, %v1594, 0.0
      %v1845 = vadd.f32 %v1843, %v1844
      %v1846 = vsel %vm1602, %v1595, 0.0
      %v1847 = vadd.f32 %v1845, %v1846
      %v1848 = vsel %vm1602, %v1596, 0.0
      %v1849 = vadd.f32 %v1847, %v1848
      %v1850 = vsel %vm1602, %v1597, 0.0
      %v1851 = vadd.f32 %v1849, %v1850
      %v1852 = vsel %vm1602, %v1598, 0.0
      %v1853 = vadd.f32 %v1851, %v1852
      %v1854 = vsel %vm1602, %v1599, 0.0
      %v1855 = vadd.f32 %v1853, %v1854
      %v1856 = vsel %vm1602, %v1600, 0.0
      %v1857 = vadd.f32 %v1855, %v1856
      %v1858 = vadd.f32 %v1601, %v1857
      %1859 = vst.msk [vmem:[#allocation2] sm:$0xff] %vm1602, %v1858
      // Predicated region
      $region45: #{forward.5} parent=39 // pred_check
        %p1860 = pneg %p252
      $region46: #{forward.5} parent=39 // pred_check_branch
        %1862 = sbr.rel (%p1860) target = $region48
      $region47: #{forward.5} parent=39 // pred_region
        %v1863 = vld [vmem:[#allocation2] sm:$0xff]
        %v1864 = vsel %vm1602, %v1863, 0.0
        %v1865 = vrot.slane %v1864, 4
        %v1866 = vadd.f32 %v1864, %v1865
        %v1867 = vrot.slane %v1866, 2
        %v1868 = vadd.f32 %v1866, %v1867
        %v1869 = vrot.slane %v1868, 1
        %v1870 = vadd.f32 %v1868, %v1869
        %v1871 = vmul.f32 %v1870, 0.0009765625
        %v1872 = vpack.c.bf16 %v1871, %v1871
        %v1873 = vld [vmem:[%s3] sm:$0xff]
        %v1874 = vld [vmem:[%s3 + $0x8] sm:$0xff]
        %v1875 = vld [vmem:[%s3 + $0x10] sm:$0xff]
        %v1876 = vld [vmem:[%s3 + $0x18] sm:$0xff]
        %v1877 = vld [vmem:[%s3 + $0x20] sm:$0xff]
        %v1878 = vld [vmem:[%s3 + $0x28] sm:$0xff]
        %v1879 = vld [vmem:[%s3 + $0x30] sm:$0xff]
        %v1880 = vld [vmem:[%s3 + $0x38] sm:$0xff]
        %v1881 = vld [vmem:[%s3 + $0x40] sm:$0xff]
        %v1882 = vld [vmem:[%s3 + $0x48] sm:$0xff]
        %v1883 = vld [vmem:[%s3 + $0x50] sm:$0xff]
        %v1884 = vld [vmem:[%s3 + $0x58] sm:$0xff]
        %v1885 = vld [vmem:[%s3 + $0x60] sm:$0xff]
        %v1886 = vld [vmem:[%s3 + $0x68] sm:$0xff]
        %v1887 = vld [vmem:[%s3 + $0x70] sm:$0xff]
        %v1888 = vld [vmem:[%s3 + $0x78] sm:$0xff]
        %v1889 = vld [vmem:[%s4] sm:$0xf]
        %v1906 = vunpack.c.l.b16 %v1873
        %v1907 = vunpack.c.h.b16 %v1873
        %v1908 = vunpack.c.l.b16 %v1874
        %v1909 = vunpack.c.h.b16 %v1874
        %v1910 = vunpack.c.l.b16 %v1875
        %v1911 = vunpack.c.h.b16 %v1875
        %v1912 = vunpack.c.l.b16 %v1876
        %v1913 = vunpack.c.h.b16 %v1876
        %v1914 = vunpack.c.l.b16 %v1877
        %v1915 = vunpack.c.h.b16 %v1877
        %v1916 = vunpack.c.l.b16 %v1878
        %v1917 = vunpack.c.h.b16 %v1878
        %v1918 = vunpack.c.l.b16 %v1879
        %v1919 = vunpack.c.h.b16 %v1879
        %v1920 = vunpack.c.l.b16 %v1880
        %v1921 = vunpack.c.h.b16 %v1880
        %v1922 = vunpack.c.l.b16 %v1881
        %v1923 = vunpack.c.h.b16 %v1881
        %v1924 = vunpack.c.l.b16 %v1882
        %v1925 = vunpack.c.h.b16 %v1882
        %v1926 = vunpack.c.l.b16 %v1883
        %v1927 = vunpack.c.h.b16 %v1883
        %v1928 = vunpack.c.l.b16 %v1884
        %v1929 = vunpack.c.h.b16 %v1884
        %v1930 = vunpack.c.l.b16 %v1885
        %v1931 = vunpack.c.h.b16 %v1885
        %v1932 = vunpack.c.l.b16 %v1886
        %v1933 = vunpack.c.h.b16 %v1886
        %v1934 = vunpack.c.l.b16 %v1887
        %v1935 = vunpack.c.h.b16 %v1887
        %v1936 = vunpack.c.l.b16 %v1888
        %v1937 = vunpack.c.h.b16 %v1888
        %v1938 = vpack.c.b16 %v1910, %v1906
        %v1939 = vpack.c.b16 %v1911, %v1907
        %v1940 = vpack.c.b16 %v1912, %v1908
        %v1941 = vpack.c.b16 %v1913, %v1909
        %v1942 = vpack.c.b16 %v1918, %v1914
        %v1943 = vpack.c.b16 %v1919, %v1915
        %v1944 = vpack.c.b16 %v1920, %v1916
        %v1945 = vpack.c.b16 %v1921, %v1917
        %v1946 = vpack.c.b16 %v1926, %v1922
        %v1947 = vpack.c.b16 %v1927, %v1923
        %v1948 = vpack.c.b16 %v1928, %v1924
        %v1949 = vpack.c.b16 %v1929, %v1925
        %v1950 = vpack.c.b16 %v1934, %v1930
        %v1951 = vpack.c.b16 %v1935, %v1931
        %v1952 = vpack.c.b16 %v1936, %v1932
        %v1953 = vpack.c.b16 %v1937, %v1933
        %v1971 = vlaneseq
        %v1972 = vshrl.u32 %v1971, 7
        %v1973 = vsub.s32 0, %v1972
        %v1974 = vrot.slane %v1889, %v1973
        %v1975 = vlaneseq
        %v1976 = vshrl.u32 %v1975, 7
        %v1977 = vsub.s32 1, %v1976
        %v1978 = vrot.slane %v1889, %v1977
        %v1979 = vlaneseq
        %v1980 = vshrl.u32 %v1979, 7
        %v1981 = vsub.s32 2, %v1980
        %v1982 = vrot.slane %v1889, %v1981
        %v1983 = vlaneseq
        %v1984 = vshrl.u32 %v1983, 7
        %v1985 = vsub.s32 3, %v1984
        %v1986 = vrot.slane %v1889, %v1985
        %v1992 = vsel %vm1602, %v1872, 0
        %1994 = vmatprep.subr.bf16.mxu0 %v1939
        %1995 = vmatpush1.bf16.msra.mxu0 %v1938
        %1996 = vmatprep.subr.bf16.mxu0 %v1943
        %1997 = vmatpush1.bf16.msra.mxu0 %v1942
        %1998 = vmatprep.subr.bf16.mxu0 %v1947
        %1999 = vmatpush1.bf16.msra.mxu0 %v1946
        %2000 = vmatprep.subr.bf16.mxu0 %v1951
        %2001 = vmatpush1.bf16.msra.mxu0 %v1950
        %2002 = vmatprep.subr.bf16.mxu0 0
        %2003 = vmatpush1.bf16.msra.mxu0 0
        %2004 = vmatprep.subr.bf16.mxu0 0
        %2005 = vmatpush1.bf16.msra.mxu0 0
        %2006 = vmatprep.subr.bf16.mxu0 0
        %2007 = vmatpush1.bf16.msra.mxu0 0
        %2008 = vmatprep.subr.bf16.mxu0 0
        %2009 = vmatpush1.bf16.msra.mxu0 0
        %2010 = vmatprep.subr.bf16.mxu0 0
        %2011 = vmatpush1.bf16.msra.mxu0 0
        %2012 = vmatprep.subr.bf16.mxu0 0
        %2013 = vmatpush1.bf16.msra.mxu0 0
        %2014 = vmatprep.subr.bf16.mxu0 0
        %2015 = vmatpush1.bf16.msra.mxu0 0
        %2016 = vmatprep.subr.bf16.mxu0 0
        %2017 = vmatpush1.bf16.msra.mxu0 0
        %2018 = vmatprep.subr.bf16.mxu0 0
        %2019 = vmatpush1.bf16.msra.mxu0 0
        %2020 = vmatprep.subr.bf16.mxu0 0
        %2021 = vmatpush1.bf16.msra.mxu0 0
        %2022 = vmatprep.subr.bf16.mxu0 0
        %2023 = vmatpush1.bf16.msra.mxu0 0
        %2024 = vmatprep.subr.bf16.mxu0 0
        %2025 = vmatpush1.bf16.msra.mxu0 0
        %2026 = vmatprep.mubr.bf16.mxu0 0
        %2027 = vmatmul.mubr.bf16.gmra.mrb[0].mxu0 %v1992
        %v2028 = vpop.f32.mrb[0].mxu0
        %v2029 = vadd.f32 %v1974, %v2028
        %v2030 = vpop.f32.mrb[0].mxu0
        %v2031 = vadd.f32 %v1978, %v2030
        %v2032 = vpop.f32.mrb[0].mxu0
        %v2033 = vpop.f32.mrb[0].mxu0
        %2034 = vdwg.mxu0
        %2035 = vmatprep.subr.bf16.mxu0 %v1941
        %2036 = vmatpush1.bf16.msra.mxu0 %v1940
        %2037 = vmatprep.subr.bf16.mxu0 %v1945
        %2038 = vmatpush1.bf16.msra.mxu0 %v1944
        %2039 = vmatprep.subr.bf16.mxu0 %v1949
        %2040 = vmatpush1.bf16.msra.mxu0 %v1948
        %2041 = vmatprep.subr.bf16.mxu0 %v1953
        %2042 = vmatpush1.bf16.msra.mxu0 %v1952
        %2043 = vmatprep.subr.bf16.mxu0 0
        %2044 = vmatpush1.bf16.msra.mxu0 0
        %2045 = vmatprep.subr.bf16.mxu0 0
        %2046 = vmatpush1.bf16.msra.mxu0 0
        %2047 = vmatprep.subr.bf16.mxu0 0
        %2048 = vmatpush1.bf16.msra.mxu0 0
        %2049 = vmatprep.subr.bf16.mxu0 0
        %2050 = vmatpush1.bf16.msra.mxu0 0
        %2051 = vmatprep.subr.bf16.mxu0 0
        %2052 = vmatpush1.bf16.msra.mxu0 0
        %2053 = vmatprep.subr.bf16.mxu0 0
        %2054 = vmatpush1.bf16.msra.mxu0 0
        %2055 = vmatprep.subr.bf16.mxu0 0
        %2056 = vmatpush1.bf16.msra.mxu0 0
        %2057 = vmatprep.subr.bf16.mxu0 0
        %2058 = vmatpush1.bf16.msra.mxu0 0
        %2059 = vmatprep.subr.bf16.mxu0 0
        %2060 = vmatpush1.bf16.msra.mxu0 0
        %2061 = vmatprep.subr.bf16.mxu0 0
        %2062 = vmatpush1.bf16.msra.mxu0 0
        %2063 = vmatprep.subr.bf16.mxu0 0
        %2064 = vmatpush1.bf16.msra.mxu0 0
        %2065 = vmatprep.subr.bf16.mxu0 0
        %2066 = vmatpush1.bf16.msra.mxu0 0
        %2067 = vmatprep.mubr.bf16.mxu0 0
        %2068 = vmatmul.mubr.bf16.gmra.mrb[0].mxu0 %v1992
        %v2069 = vpop.f32.mrb[0].mxu0
        %v2070 = vadd.f32 %v1982, %v2069
        %v2071 = vpop.f32.mrb[0].mxu0
        %v2072 = vadd.f32 %v1986, %v2071
        %v2073 = vpop.f32.mrb[0].mxu0
        %v2074 = vpop.f32.mrb[0].mxu0
        %2075 = vdwg.mxu0
        %v2076 = vpack.c.bf16 %v2029, %v2029
        %v2077 = vpack.c.bf16 %v2031, %v2031
        %v2078 = vpack.c.bf16 %v2070, %v2070
        %v2079 = vpack.c.bf16 %v2072, %v2072
        %v2084 = vcombine.low %v2076, %v2077
        %v2085 = vcombine.low %v2078, %v2079
        %v2087 = vunpack.c.l.s4 1966171168
        %v2088 = vunpack.c.0.s8 %v2087
        %v2089 = vlaneseq
        %v2090 = vshrl.u32 %v2089, 7
        %v2091 = vsub.s32 %v2088, %v2090
        %v2092 = vrot.slane %v2084, %v2091
        %v2094 = vunpack.c.l.s4 1966171168
        %v2095 = vunpack.c.0.s8 %v2094
        %v2096 = vlaneseq
        %v2097 = vshrl.u32 %v2096, 7
        %v2098 = vsub.s32 %v2095, %v2097
        %v2099 = vrot.slane %v2085, %v2098
        %v2100 = vcombine.low %v2092, %v2099
        %v2102 = vunpack.c.l.s4 1966171168
        %v2103 = vunpack.c.0.s8 %v2102
        %v2104 = vlaneseq
        %v2105 = vshrl.u32 %v2104, 7
        %v2106 = vsub.s32 %v2103, %v2105
        %v2107 = vrot.slane %v2100, %v2106
        %vm2109 = vcmask 1040384
        %vm2110 = vsmask.f32 256
        %vm2111 = vmand %vm2109, %vm2110
        %vm2112 = vcmask 1041409
        %vm2113 = vsmask.f32 1280
        %vm2114 = vmand %vm2112, %vm2113
        %vm2115 = vmor %vm2114, %vm2111
        %vm2116 = vcmask 1042434
        %vm2117 = vsmask.f32 2304
        %vm2118 = vmand %vm2116, %vm2117
        %vm2119 = vmor %vm2118, %vm2115
        %vm2120 = vcmask 1043459
        %vm2121 = vsmask.f32 3328
        %vm2122 = vmand %vm2120, %vm2121
        %vm2123 = vmor %vm2122, %vm2119
        %v2124 = vld [vmem:[%s250] sm:$0xf]
        %v2125 = vsel %vm2123, %v2107, %v2124
        %2126 = vst [vmem:[%s250] sm:$0xf] %v2125
      $region48: #{forward.5} parent=39 // pred_fallthru
        _
      %p2127 = scmp.lt.s32.totalorder %s20, 1
      %s2128 = scalar_select %p2127, %s20, 1
      %s2129 = smul.addr %s2128, 4
      %s2130 = scalar_lea.vmem %s5, %s2129
      // Predicated region
      $region49: #{forward.5} parent=39 // pred_check
        %p2131 = pneg %p158
      $region50: #{forward.5} parent=39 // pred_check_branch
        %2133 = sbr.rel (%p2131) target = $region52
      $region51: #{forward.5} parent=39 // pred_region
        _
      $region52: #{forward.5} parent=39 // pred_fallthru
        _
    $region40: #{forward.5} parent=5 // pred_fallthru
      _
    %p2134 = scmp.le.s32.totalorder 2, %s11
    // Predicated region
    $region53: #{forward.5} parent=5 // pred_check
      %p2135 = pneg %p2134
    $region54: #{forward.5} parent=5 // pred_check_branch
      %2137 = sbr.rel (%p2135) target = $region56
    $region55: #{forward.5} parent=5 // pred_region
      %s2138 = ssub.s32 %s11, 2
      // Predicated region
      $region57: #{forward.5} parent=55 // pred_check
        %p2139 = pneg %p164
      $region58: #{forward.5} parent=55 // pred_check_branch
        %2141 = sbr.rel (%p2139) target = $region60
      $region59: #{forward.5} parent=55 // pred_region
        %p2142 = scmp.lt.s32.totalorder %s22, 1
        %s2143 = scalar_select %p2142, %s22, 1
        %s2144 = smul.addr %s2143, 4
        %s2145 = scalar_lea.vmem %s5, %s2144
      $region60: #{forward.5} parent=55 // pred_fallthru
        _
    $region56: #{forward.5} parent=5 // pred_fallthru
      _
  $region6: #{forward.5} parent=0 // loop_footer
    %s15 = sadd.s32 1, %s11
  $region7: #{forward.5} parent=0 // loop_footer_branch
    %10 = sbr.rel target = $region3
  $region8: #{forward.5} parent=0 // loop_exit
    _

// kernel: forward.6
$region0: #{forward.6}
  #allocation0 [shape = 'u32[]', space=smem, size = 0x4, offset = 0x4, fixed_abs, tag = 'smem constant byte address 0x4 - core index']
  #allocation1 [shape = 'u32[144,128]{1,0:T(1,128)}', space=vmem, size = 0x12000, scoped, tag = 'internal scratch']
  %s0 = inlined_call_operand.vmem [shape: bf16[4,64,72], index: 0, kind: input, shape index: {}]
  %s1 = inlined_call_operand.vmem [shape: bf16[72,128], index: 1, kind: input, shape index: {}]
  %s2 = inlined_call_operand.vmem [shape: f32[1,128], index: 2, kind: input, shape index: {}]
  %s3 = inlined_call_operand.vmem [shape: bf16[64,128], index: 3, kind: output, shape index: {}]
  %s4 = sld [smem:[#allocation0]]
  $region22: #{forward.6} parent=0
    _
  %s6 = ssub.s32 1, %s4
  %s7 = scalar_select 0, %s6, %s4
  // Predicated region
  $region2: #{forward.6} parent=0 // pred_check
    _
  $region3: #{forward.6} parent=0 // pred_check_branch
    %9 = sbr.rel (0) target = $region5
  $region4: #{forward.6} parent=0 // pred_region
    _
  $region5: #{forward.6} parent=0 // pred_fallthru
    _
  // Predicated region
  $region6: #{forward.6} parent=0 // pred_check
    _
  $region7: #{forward.6} parent=0 // pred_check_branch
    %11 = sbr.rel (0) target = $region9
  $region8: #{forward.6} parent=0 // pred_region
    _
  $region9: #{forward.6} parent=0 // pred_fallthru
    _
  // Predicated region
  $region10: #{forward.6} parent=0 // pred_check
    _
  $region11: #{forward.6} parent=0 // pred_check_branch
    %13 = sbr.rel (0) target = $region13
  $region12: #{forward.6} parent=0 // pred_region
    _
  $region13: #{forward.6} parent=0 // pred_fallthru
    _
  %v15 = vld [vmem:[%s0] sm:$0xf]
  %v16 = vld [vmem:[%s0 + $0x4] sm:$0xf]
  %v17 = vld [vmem:[%s0 + $0x8] sm:$0xf]
  %v18 = vld [vmem:[%s0 + $0xc] sm:$0xf]
  %v19 = vld [vmem:[%s0 + $0x10] sm:$0xf]
  %v20 = vld [vmem:[%s0 + $0x14] sm:$0xf]
  %v21 = vld [vmem:[%s0 + $0x18] sm:$0xf]
  %v22 = vld [vmem:[%s0 + $0x1c] sm:$0xf]
  %v23 = vld [vmem:[%s0 + $0x20] sm:$0xf]
  %v24 = vld [vmem:[%s0 + $0x24] sm:$0xf]
  %v25 = vld [vmem:[%s0 + $0x28] sm:$0xf]
  %v26 = vld [vmem:[%s0 + $0x2c] sm:$0xf]
  %v27 = vld [vmem:[%s0 + $0x30] sm:$0xf]
  %v28 = vld [vmem:[%s0 + $0x34] sm:$0xf]
  %v29 = vld [vmem:[%s0 + $0x38] sm:$0xf]
  %v30 = vld [vmem:[%s0 + $0x3c] sm:$0xf]
  %v31 = vld [vmem:[%s0 + $0x40] sm:$0xf]
  %v32 = vld [vmem:[%s0 + $0x44] sm:$0xf]
  %v33 = vld [vmem:[%s0 + $0x48] sm:$0xf]
  %v34 = vld [vmem:[%s0 + $0x4c] sm:$0xf]
  %v35 = vld [vmem:[%s0 + $0x50] sm:$0xf]
  %v36 = vld [vmem:[%s0 + $0x54] sm:$0xf]
  %v37 = vld [vmem:[%s0 + $0x58] sm:$0xf]
  %v38 = vld [vmem:[%s0 + $0x5c] sm:$0xf]
  %v39 = vld [vmem:[%s0 + $0x60] sm:$0xf]
  %v40 = vld [vmem:[%s0 + $0x64] sm:$0xf]
  %v41 = vld [vmem:[%s0 + $0x68] sm:$0xf]
  %v42 = vld [vmem:[%s0 + $0x6c] sm:$0xf]
  %v43 = vld [vmem:[%s0 + $0x70] sm:$0xf]
  %v44 = vld [vmem:[%s0 + $0x74] sm:$0xf]
  %v45 = vld [vmem:[%s0 + $0x78] sm:$0xf]
  %v46 = vld [vmem:[%s0 + $0x7c] sm:$0xf]
  %v47 = vld [vmem:[%s1] sm:$0xf]
  %v48 = vld [vmem:[%s1 + $0x4] sm:$0xf]
  %v49 = vld [vmem:[%s1 + $0x8] sm:$0xf]
  %v50 = vld [vmem:[%s1 + $0xc] sm:$0xf]
  %v51 = vld [vmem:[%s1 + $0x10] sm:$0xf]
  %v52 = vld [vmem:[%s1 + $0x14] sm:$0xf]
  %v53 = vld [vmem:[%s1 + $0x18] sm:$0xf]
  %v54 = vld [vmem:[%s1 + $0x1c] sm:$0xf]
  %v55 = vld [vmem:[%s1 + $0x20] sm:$0xf]
  %v88 = vunpack.c.l.b16 %v15
  %v89 = vunpack.c.l.b16 %v16
  %v90 = vunpack.c.l.b16 %v17
  %v91 = vunpack.c.l.b16 %v18
  %v92 = vunpack.c.l.b16 %v19
  %v93 = vunpack.c.l.b16 %v20
  %v94 = vunpack.c.l.b16 %v21
  %v95 = vunpack.c.l.b16 %v22
  %v96 = vunpack.c.l.b16 %v23
  %v97 = vunpack.c.l.b16 %v24
  %v98 = vunpack.c.l.b16 %v25
  %v99 = vunpack.c.l.b16 %v26
  %v100 = vunpack.c.l.b16 %v27
  %v101 = vunpack.c.l.b16 %v28
  %v102 = vunpack.c.l.b16 %v29
  %v103 = vunpack.c.l.b16 %v30
  %v104 = vunpack.c.l.b16 %v31
  %v105 = vunpack.c.l.b16 %v32
  %v106 = vunpack.c.l.b16 %v33
  %v107 = vunpack.c.l.b16 %v34
  %v108 = vunpack.c.l.b16 %v35
  %v109 = vunpack.c.l.b16 %v36
  %v110 = vunpack.c.l.b16 %v37
  %v111 = vunpack.c.l.b16 %v38
  %v112 = vunpack.c.l.b16 %v39
  %v113 = vunpack.c.l.b16 %v40
  %v114 = vunpack.c.l.b16 %v41
  %v115 = vunpack.c.l.b16 %v42
  %v116 = vunpack.c.l.b16 %v43
  %v117 = vunpack.c.l.b16 %v44
  %v118 = vunpack.c.l.b16 %v45
  %v119 = vunpack.c.l.b16 %v46
  %v120 = vpack.c.b16 %v89, %v88
  %v121 = vpack.c.b16 %v91, %v90
  %v122 = vpack.c.b16 %v93, %v92
  %v123 = vpack.c.b16 %v95, %v94
  %v124 = vpack.c.b16 %v97, %v96
  %v125 = vpack.c.b16 %v99, %v98
  %v126 = vpack.c.b16 %v101, %v100
  %v127 = vpack.c.b16 %v103, %v102
  %v128 = vpack.c.b16 %v105, %v104
  %v129 = vpack.c.b16 %v107, %v106
  %v130 = vpack.c.b16 %v109, %v108
  %v131 = vpack.c.b16 %v111, %v110
  %v132 = vpack.c.b16 %v113, %v112
  %v133 = vpack.c.b16 %v115, %v114
  %v134 = vpack.c.b16 %v117, %v116
  %v135 = vpack.c.b16 %v119, %v118
  %v145 = vunpack.c.l.b16 %v47
  %v146 = vunpack.c.l.b16 %v48
  %v147 = vunpack.c.l.b16 %v49
  %v148 = vunpack.c.l.b16 %v50
  %v149 = vunpack.c.l.b16 %v51
  %v150 = vunpack.c.l.b16 %v52
  %v151 = vunpack.c.l.b16 %v53
  %v152 = vunpack.c.l.b16 %v54
  %v153 = vunpack.c.l.b16 %v55
  %v154 = vpack.c.b16 %v146, %v145
  %v155 = vpack.c.b16 %v148, %v147
  %v156 = vpack.c.b16 %v150, %v149
  %v157 = vpack.c.b16 %v152, %v151
  %v158 = vpack.c.b16 %v153, %v153
  %vm163 = vcmask 588800
  %v165 = vsel %vm163, %v120, 0
  %v168 = vsel %vm163, %v121, 0
  %v171 = vsel %vm163, %v122, 0
  %v174 = vsel %vm163, %v123, 0
  %v177 = vsel %vm163, %v124, 0
  %v180 = vsel %vm163, %v125, 0
  %v183 = vsel %vm163, %v126, 0
  %v186 = vsel %vm163, %v127, 0
  %v189 = vsel %vm163, %v128, 0
  %v192 = vsel %vm163, %v129, 0
  %v195 = vsel %vm163, %v130, 0
  %v198 = vsel %vm163, %v131, 0
  %v201 = vsel %vm163, %v132, 0
  %v204 = vsel %vm163, %v133, 0
  %v207 = vsel %vm163, %v134, 0
  %v210 = vsel %vm163, %v135, 0
  %vm212 = vcmask 1043456
  %v214 = vsel %vm212, %v158, 0
  %216 = vmatprep.subr.bf16.mxu0 0
  %217 = vmatpush1.bf16.msra.mxu0 %v154
  %218 = vmatprep.subr.bf16.mxu0 0
  %219 = vmatpush1.bf16.msra.mxu0 %v155
  %220 = vmatprep.subr.bf16.mxu0 0
  %221 = vmatpush1.bf16.msra.mxu0 %v156
  %222 = vmatprep.subr.bf16.mxu0 0
  %223 = vmatpush1.bf16.msra.mxu0 %v157
  %224 = vmatprep.subr.bf16.mxu0 0
  %225 = vmatpush1.bf16.msra.mxu0 %v214
  %226 = vmatprep.subr.bf16.mxu0 0
  %227 = vmatpush1.bf16.msra.mxu0 0
  %228 = vmatprep.subr.bf16.mxu0 0
  %229 = vmatpush1.bf16.msra.mxu0 0
  %230 = vmatprep.subr.bf16.mxu0 0
  %231 = vmatpush1.bf16.msra.mxu0 0
  %232 = vmatprep.subr.bf16.mxu0 0
  %233 = vmatpush1.bf16.msra.mxu0 0
  %234 = vmatprep.subr.bf16.mxu0 0
  %235 = vmatpush1.bf16.msra.mxu0 0
  %236 = vmatprep.subr.bf16.mxu0 0
  %237 = vmatpush1.bf16.msra.mxu0 0
  %238 = vmatprep.subr.bf16.mxu0 0
  %239 = vmatpush1.bf16.msra.mxu0 0
  %240 = vmatprep.subr.bf16.mxu0 0
  %241 = vmatpush1.bf16.msra.mxu0 0
  %242 = vmatprep.subr.bf16.mxu0 0
  %243 = vmatpush1.bf16.msra.mxu0 0
  %244 = vmatprep.subr.bf16.mxu0 0
  %245 = vmatpush1.bf16.msra.mxu0 0
  %246 = vmatprep.subr.bf16.mxu0 0
  %247 = vmatpush1.bf16.msra.mxu0 0
  %248 = vmatprep.mubr.bf16.mxu0 0
  %249 = vmatmul.mubr.bf16.gmra.mrb[0].mxu0 %v165
  %v250 = vpop.f32.mrb[0].mxu0
  %v251 = vadd.f32 0.0, %v250
  %v252 = vpop.f32.mrb[0].mxu0
  %v253 = vpop.f32.mrb[0].mxu0
  %v254 = vadd.f32 0.0, %v253
  %v255 = vpop.f32.mrb[0].mxu0
  %256 = vmatprep.mubr.bf16.mxu0 0
  %257 = vmatmul.mubr.bf16.gmra.mrb[0].mxu0 %v168
  %v258 = vpop.f32.mrb[0].mxu0
  %v259 = vadd.f32 0.0, %v258
  %v260 = vpop.f32.mrb[0].mxu0
  %v261 = vpop.f32.mrb[0].mxu0
  %v262 = vadd.f32 0.0, %v261
  %v263 = vpop.f32.mrb[0].mxu0
  %264 = vmatprep.mubr.bf16.mxu0 0
  %265 = vmatmul.mubr.bf16.gmra.mrb[0].mxu0 %v171
  %v266 = vpop.f32.mrb[0].mxu0
  %v267 = vadd.f32 0.0, %v266
  %v268 = vpop.f32.mrb[0].mxu0
  %v269 = vpop.f32.mrb[0].mxu0
  %v270 = vadd.f32 0.0, %v269
  %v271 = vpop.f32.mrb[0].mxu0
  %272 = vmatprep.mubr.bf16.mxu0 0
  %273 = vmatmul.mubr.bf16.gmra.mrb[0].mxu0 %v174
  %v274 = vpop.f32.mrb[0].mxu0
  %v275 = vadd.f32 0.0, %v274
  %v276 = vpop.f32.mrb[0].mxu0
  %v277 = vpop.f32.mrb[0].mxu0
  %v278 = vadd.f32 0.0, %v277
  %v279 = vpop.f32.mrb[0].mxu0
  %280 = vmatprep.mubr.bf16.mxu0 0
  %281 = vmatmul.mubr.bf16.gmra.mrb[0].mxu0 %v177
  %v282 = vpop.f32.mrb[0].mxu0
  %v283 = vadd.f32 0.0, %v282
  %v284 = vpop.f32.mrb[0].mxu0
  %v285 = vpop.f32.mrb[0].mxu0
  %v286 = vadd.f32 0.0, %v285
  %v287 = vpop.f32.mrb[0].mxu0
  %288 = vmatprep.mubr.bf16.mxu0 0
  %289 = vmatmul.mubr.bf16.gmra.mrb[0].mxu0 %v180
  %v290 = vpop.f32.mrb[0].mxu0
  %v291 = vadd.f32 0.0, %v290
  %v292 = vpop.f32.mrb[0].mxu0
  %v293 = vpop.f32.mrb[0].mxu0
  %v294 = vadd.f32 0.0, %v293
  %v295 = vpop.f32.mrb[0].mxu0
  %296 = vmatprep.mubr.bf16.mxu0 0
  %297 = vmatmul.mubr.bf16.gmra.mrb[0].mxu0 %v183
  %v298 = vpop.f32.mrb[0].mxu0
  %v299 = vadd.f32 0.0, %v298
  %v300 = vpop.f32.mrb[0].mxu0
  %v301 = vpop.f32.mrb[0].mxu0
  %v302 = vadd.f32 0.0, %v301
  %v303 = vpop.f32.mrb[0].mxu0
  %304 = vmatprep.mubr.bf16.mxu0 0
  %305 = vmatmul.mubr.bf16.gmra.mrb[0].mxu0 %v186
  %v306 = vpop.f32.mrb[0].mxu0
  %v307 = vadd.f32 0.0, %v306
  %v308 = vpop.f32.mrb[0].mxu0
  %v309 = vpop.f32.mrb[0].mxu0
  %v310 = vadd.f32 0.0, %v309
  %v311 = vpop.f32.mrb[0].mxu0
  %312 = vmatprep.mubr.bf16.mxu0 0
  %313 = vmatmul.mubr.bf16.gmra.mrb[0].mxu0 %v189
  %v314 = vpop.f32.mrb[0].mxu0
  %v315 = vadd.f32 0.0, %v314
  %v316 = vpop.f32.mrb[0].mxu0
  %v317 = vpop.f32.mrb[0].mxu0
  %v318 = vadd.f32 0.0, %v317
  %v319 = vpop.f32.mrb[0].mxu0
  %320 = vmatprep.mubr.bf16.mxu0 0
  %321 = vmatmul.mubr.bf16.gmra.mrb[0].mxu0 %v192
  %v322 = vpop.f32.mrb[0].mxu0
  %v323 = vadd.f32 0.0, %v322
  %v324 = vpop.f32.mrb[0].mxu0
  %v325 = vpop.f32.mrb[0].mxu0
  %v326 = vadd.f32 0.0, %v325
  %v327 = vpop.f32.mrb[0].mxu0
  %328 = vmatprep.mubr.bf16.mxu0 0
  %329 = vmatmul.mubr.bf16.gmra.mrb[0].mxu0 %v195
  %v330 = vpop.f32.mrb[0].mxu0
  %v331 = vadd.f32 0.0, %v330
  %v332 = vpop.f32.mrb[0].mxu0
  %v333 = vpop.f32.mrb[0].mxu0
  %v334 = vadd.f32 0.0, %v333
  %v335 = vpop.f32.mrb[0].mxu0
  %336 = vmatprep.mubr.bf16.mxu0 0
  %337 = vmatmul.mubr.bf16.gmra.mrb[0].mxu0 %v198
  %v338 = vpop.f32.mrb[0].mxu0
  %v339 = vadd.f32 0.0, %v338
  %v340 = vpop.f32.mrb[0].mxu0
  %v341 = vpop.f32.mrb[0].mxu0
  %v342 = vadd.f32 0.0, %v341
  %v343 = vpop.f32.mrb[0].mxu0
  %344 = vmatprep.mubr.bf16.mxu0 0
  %345 = vmatmul.mubr.bf16.gmra.mrb[0].mxu0 %v201
  %v346 = vpop.f32.mrb[0].mxu0
  %v347 = vadd.f32 0.0, %v346
  %v348 = vpop.f32.mrb[0].mxu0
  %v349 = vpop.f32.mrb[0].mxu0
  %v350 = vadd.f32 0.0, %v349
  %v351 = vpop.f32.mrb[0].mxu0
  %352 = vmatprep.mubr.bf16.mxu0 0
  %353 = vmatmul.mubr.bf16.gmra.mrb[0].mxu0 %v204
  %v354 = vpop.f32.mrb[0].mxu0
  %v355 = vadd.f32 0.0, %v354
  %v356 = vpop.f32.mrb[0].mxu0
  %v357 = vpop.f32.mrb[0].mxu0
  %v358 = vadd.f32 0.0, %v357
  %v359 = vpop.f32.mrb[0].mxu0
  %360 = vmatprep.mubr.bf16.mxu0 0
  %361 = vmatmul.mubr.bf16.gmra.mrb[0].mxu0 %v207
  %v362 = vpop.f32.mrb[0].mxu0
  %v363 = vadd.f32 0.0, %v362
  %v364 = vpop.f32.mrb[0].mxu0
  %v365 = vpop.f32.mrb[0].mxu0
  %v366 = vadd.f32 0.0, %v365
  %v367 = vpop.f32.mrb[0].mxu0
  %368 = vmatprep.mubr.bf16.mxu0 0
  %369 = vmatmul.mubr.bf16.gmra.mrb[0].mxu0 %v210
  %v370 = vpop.f32.mrb[0].mxu0
  %v371 = vadd.f32 0.0, %v370
  %v372 = vpop.f32.mrb[0].mxu0
  %v373 = vpop.f32.mrb[0].mxu0
  %v374 = vadd.f32 0.0, %v373
  %v375 = vpop.f32.mrb[0].mxu0
  %376 = vdwg.mxu0
  %v377 = vmax.f32 %v251, %v283
  %v378 = vmax.f32 %v254, %v286
  %v379 = vmax.f32 %v259, %v291
  %v380 = vmax.f32 %v262, %v294
  %v381 = vmax.f32 %v267, %v299
  %v382 = vmax.f32 %v270, %v302
  %v383 = vmax.f32 %v275, %v307
  %v384 = vmax.f32 %v278, %v310
  %v385 = vmax.f32 %v315, %v347
  %v386 = vmax.f32 %v318, %v350
  %v387 = vmax.f32 %v323, %v355
  %v388 = vmax.f32 %v326, %v358
  %v389 = vmax.f32 %v331, %v363
  %v390 = vmax.f32 %v334, %v366
  %v391 = vmax.f32 %v339, %v371
  %v392 = vmax.f32 %v342, %v374
  %v393 = vmax.f32 %v377, %v385
  %v394 = vmax.f32 %v378, %v386
  %v395 = vmax.f32 %v379, %v387
  %v396 = vmax.f32 %v380, %v388
  %v397 = vmax.f32 %v381, %v389
  %v398 = vmax.f32 %v382, %v390
  %v399 = vmax.f32 %v383, %v391
  %v400 = vmax.f32 %v384, %v392
  %v401 = vld [vmem:[%s2] sm:$0x1]
  %v403 = vlaneseq
  %v404 = vshrl.u32 %v403, 7
  %v405 = vsub.s32 0, %v404
  %v406 = vrot.slane %v401, %v405
  %v408 = vadd.f32 %v393, %v406
  %v409 = vadd.f32 %v394, %v406
  %v410 = vadd.f32 %v395, %v406
  %v411 = vadd.f32 %v396, %v406
  %v412 = vadd.f32 %v397, %v406
  %v413 = vadd.f32 %v398, %v406
  %v414 = vadd.f32 %v399, %v406
  %v415 = vadd.f32 %v400, %v406
  %v416 = vmax.f32 %v408, 0.0
  %v417 = vmax.f32 %v409, 0.0
  %v418 = vmax.f32 %v410, 0.0
  %v419 = vmax.f32 %v411, 0.0
  %v420 = vmax.f32 %v412, 0.0
  %v421 = vmax.f32 %v413, 0.0
  %v422 = vmax.f32 %v414, 0.0
  %v423 = vmax.f32 %v415, 0.0
  %v424 = vpack.c.bf16 %v417, %v416
  %v425 = vpack.c.bf16 %v419, %v418
  %v426 = vpack.c.bf16 %v421, %v420
  %v427 = vpack.c.bf16 %v423, %v422
  %v432 = vunpack.c.l.b16 %v424
  %v433 = vunpack.c.h.b16 %v424
  %v434 = vunpack.c.l.b16 %v425
  %v435 = vunpack.c.h.b16 %v425
  %v436 = vunpack.c.l.b16 %v426
  %v437 = vunpack.c.h.b16 %v426
  %v438 = vunpack.c.l.b16 %v427
  %v439 = vunpack.c.h.b16 %v427
  %v440 = vpack.c.b16 %v432, %v432
  %v441 = vpack.c.b16 %v433, %v433
  %v442 = vpack.c.b16 %v434, %v434
  %v443 = vpack.c.b16 %v435, %v435
  %v444 = vpack.c.b16 %v436, %v436
  %v445 = vpack.c.b16 %v437, %v437
  %v446 = vpack.c.b16 %v438, %v438
  %v447 = vpack.c.b16 %v439, %v439
  %456 = vst [vmem:[%s3] sm:$0xf] %v440
  %457 = vst [vmem:[%s3 + $0x4] sm:$0xf] %v441
  %458 = vst [vmem:[%s3 + $0x8] sm:$0xf] %v442
  %459 = vst [vmem:[%s3 + $0xc] sm:$0xf] %v443
  %460 = vst [vmem:[%s3 + $0x10] sm:$0xf] %v444
  %461 = vst [vmem:[%s3 + $0x14] sm:$0xf] %v445
  %462 = vst [vmem:[%s3 + $0x18] sm:$0xf] %v446
  %463 = vst [vmem:[%s3 + $0x1c] sm:$0xf] %v447
  // Predicated region
  $region14: #{forward.6} parent=0 // pred_check
    _
  $region15: #{forward.6} parent=0 // pred_check_branch
    %465 = sbr.rel (0) target = $region17
  $region16: #{forward.6} parent=0 // pred_region
    _
  $region17: #{forward.6} parent=0 // pred_fallthru
    _
  // Predicated region
  $region18: #{forward.6} parent=0 // pred_check
    _
  $region19: #{forward.6} parent=0 // pred_check_branch
    %467 = sbr.rel (0) target = $region21
  $region20: #{forward.6} parent=0 // pred_region
    _
  $region21: #{forward.6} parent=0 // pred_fallthru
    _

// kernel: forward.7
$region0: #{forward.7}
  #allocation0 [shape = 'u32[]', space=smem, size = 0x4, offset = 0x4, fixed_abs, tag = 'smem constant byte address 0x4 - core index']
  #allocation1 [shape = 'u32[144,128]{1,0:T(1,128)}', space=vmem, size = 0x12000, scoped, tag = 'internal scratch']
  %s0 = inlined_call_operand.vmem [shape: bf16[4,32,576], index: 0, kind: input, shape index: {}]
  %s1 = inlined_call_operand.vmem [shape: bf16[576,128], index: 1, kind: input, shape index: {}]
  %s2 = inlined_call_operand.vmem [shape: f32[1,128], index: 2, kind: input, shape index: {}]
  %s3 = inlined_call_operand.vmem [shape: bf16[32,128], index: 3, kind: output, shape index: {}]
  %s4 = sld [smem:[#allocation0]]
  $region22: #{forward.7} parent=0
    _
  %s6 = ssub.s32 1, %s4
  %s7 = scalar_select 0, %s6, %s4
  // Predicated region
  $region2: #{forward.7} parent=0 // pred_check
    _
  $region3: #{forward.7} parent=0 // pred_check_branch
    %9 = sbr.rel (0) target = $region5
  $region4: #{forward.7} parent=0 // pred_region
    _
  $region5: #{forward.7} parent=0 // pred_fallthru
    _
  // Predicated region
  $region6: #{forward.7} parent=0 // pred_check
    _
  $region7: #{forward.7} parent=0 // pred_check_branch
    %11 = sbr.rel (0) target = $region9
  $region8: #{forward.7} parent=0 // pred_region
    _
  $region9: #{forward.7} parent=0 // pred_fallthru
    _
  // Predicated region
  $region10: #{forward.7} parent=0 // pred_check
    _
  $region11: #{forward.7} parent=0 // pred_check_branch
    %13 = sbr.rel (0) target = $region13
  $region12: #{forward.7} parent=0 // pred_region
    _
  $region13: #{forward.7} parent=0 // pred_fallthru
    _
  %v15 = vld [vmem:[%s0] sm:$0xff]
  %v16 = vld [vmem:[%s0 + $0x8] sm:$0xff]
  %v17 = vld [vmem:[%s0 + $0x10] sm:$0xf]
  %v18 = vld [vmem:[%s0 + $0x14] sm:$0xff]
  %v19 = vld [vmem:[%s0 + $0x1c] sm:$0xff]
  %v20 = vld [vmem:[%s0 + $0x24] sm:$0xf]
  %v21 = vld [vmem:[%s0 + $0x28] sm:$0xff]
  %v22 = vld [vmem:[%s0 + $0x30] sm:$0xff]
  %v23 = vld [vmem:[%s0 + $0x38] sm:$0xf]
  %v24 = vld [vmem:[%s0 + $0x3c] sm:$0xff]
  %v25 = vld [vmem:[%s0 + $0x44] sm:$0xff]
  %v26 = vld [vmem:[%s0 + $0x4c] sm:$0xf]
  %v27 = vld [vmem:[%s0 + $0x50] sm:$0xff]
  %v28 = vld [vmem:[%s0 + $0x58] sm:$0xff]
  %v29 = vld [vmem:[%s0 + $0x60] sm:$0xf]
  %v30 = vld [vmem:[%s0 + $0x64] sm:$0xff]
  %v31 = vld [vmem:[%s0 + $0x6c] sm:$0xff]
  %v32 = vld [vmem:[%s0 + $0x74] sm:$0xf]
  %v33 = vld [vmem:[%s0 + $0x78] sm:$0xff]
  %v34 = vld [vmem:[%s0 + $0x80] sm:$0xff]
  %v35 = vld [vmem:[%s0 + $0x88] sm:$0xf]
  %v36 = vld [vmem:[%s0 + $0x8c] sm:$0xff]
  %v37 = vld [vmem:[%s0 + $0x94] sm:$0xff]
  %v38 = vld [vmem:[%s0 + $0x9c] sm:$0xf]
  %v39 = vld [vmem:[%s0 + $0xa0] sm:$0xff]
  %v40 = vld [vmem:[%s0 + $0xa8] sm:$0xff]
  %v41 = vld [vmem:[%s0 + $0xb0] sm:$0xf]
  %v42 = vld [vmem:[%s0 + $0xb4] sm:$0xff]
  %v43 = vld [vmem:[%s0 + $0xbc] sm:$0xff]
  %v44 = vld [vmem:[%s0 + $0xc4] sm:$0xf]
  %v45 = vld [vmem:[%s0 + $0xc8] sm:$0xff]
  %v46 = vld [vmem:[%s0 + $0xd0] sm:$0xff]
  %v47 = vld [vmem:[%s0 + $0xd8] sm:$0xf]
  %v48 = vld [vmem:[%s0 + $0xdc] sm:$0xff]
  %v49 = vld [vmem:[%s0 + $0xe4] sm:$0xff]
  %v50 = vld [vmem:[%s0 + $0xec] sm:$0xf]
  %v51 = vld [vmem:[%s0 + $0xf0] sm:$0xff]
  %v52 = vld [vmem:[%s0 + $0xf8] sm:$0xff]
  %v53 = vld [vmem:[%s0 + $0x100] sm:$0xf]
  %v54 = vld [vmem:[%s0 + $0x104] sm:$0xff]
  %v55 = vld [vmem:[%s0 + $0x10c] sm:$0xff]
  %v56 = vld [vmem:[%s0 + $0x114] sm:$0xf]
  %v57 = vld [vmem:[%s0 + $0x118] sm:$0xff]
  %v58 = vld [vmem:[%s0 + $0x120] sm:$0xff]
  %v59 = vld [vmem:[%s0 + $0x128] sm:$0xf]
  %v60 = vld [vmem:[%s0 + $0x12c] sm:$0xff]
  %v61 = vld [vmem:[%s0 + $0x134] sm:$0xff]
  %v62 = vld [vmem:[%s0 + $0x13c] sm:$0xf]
  %v63 = vld [vmem:[%s1] sm:$0xf]
  %v64 = vld [vmem:[%s1 + $0x4] sm:$0xf]
  %v65 = vld [vmem:[%s1 + $0x8] sm:$0xf]
  %v66 = vld [vmem:[%s1 + $0xc] sm:$0xf]
  %v67 = vld [vmem:[%s1 + $0x10] sm:$0xf]
  %v68 = vld [vmem:[%s1 + $0x14] sm:$0xf]
  %v69 = vld [vmem:[%s1 + $0x18] sm:$0xf]
  %v70 = vld [vmem:[%s1 + $0x1c] sm:$0xf]
  %v71 = vld [vmem:[%s1 + $0x20] sm:$0xf]
  %v72 = vld [vmem:[%s1 + $0x24] sm:$0xf]
  %v73 = vld [vmem:[%s1 + $0x28] sm:$0xf]
  %v74 = vld [vmem:[%s1 + $0x2c] sm:$0xf]
  %v75 = vld [vmem:[%s1 + $0x30] sm:$0xf]
  %v76 = vld [vmem:[%s1 + $0x34] sm:$0xf]
  %v77 = vld [vmem:[%s1 + $0x38] sm:$0xf]
  %v78 = vld [vmem:[%s1 + $0x3c] sm:$0xf]
  %v79 = vld [vmem:[%s1 + $0x40] sm:$0xf]
  %v80 = vld [vmem:[%s1 + $0x44] sm:$0xf]
  %v81 = vld [vmem:[%s1 + $0x48] sm:$0xf]
  %v82 = vld [vmem:[%s1 + $0x4c] sm:$0xf]
  %v83 = vld [vmem:[%s1 + $0x50] sm:$0xf]
  %v84 = vld [vmem:[%s1 + $0x54] sm:$0xf]
  %v85 = vld [vmem:[%s1 + $0x58] sm:$0xf]
  %v86 = vld [vmem:[%s1 + $0x5c] sm:$0xf]
  %v87 = vld [vmem:[%s1 + $0x60] sm:$0xf]
  %v88 = vld [vmem:[%s1 + $0x64] sm:$0xf]
  %v89 = vld [vmem:[%s1 + $0x68] sm:$0xf]
  %v90 = vld [vmem:[%s1 + $0x6c] sm:$0xf]
  %v91 = vld [vmem:[%s1 + $0x70] sm:$0xf]
  %v92 = vld [vmem:[%s1 + $0x74] sm:$0xf]
  %v93 = vld [vmem:[%s1 + $0x78] sm:$0xf]
  %v94 = vld [vmem:[%s1 + $0x7c] sm:$0xf]
  %v95 = vld [vmem:[%s1 + $0x80] sm:$0xf]
  %v96 = vld [vmem:[%s1 + $0x84] sm:$0xf]
  %v97 = vld [vmem:[%s1 + $0x88] sm:$0xf]
  %v98 = vld [vmem:[%s1 + $0x8c] sm:$0xf]
  %v99 = vld [vmem:[%s1 + $0x90] sm:$0xf]
  %v100 = vld [vmem:[%s1 + $0x94] sm:$0xf]
  %v101 = vld [vmem:[%s1 + $0x98] sm:$0xf]
  %v102 = vld [vmem:[%s1 + $0x9c] sm:$0xf]
  %v103 = vld [vmem:[%s1 + $0xa0] sm:$0xf]
  %v104 = vld [vmem:[%s1 + $0xa4] sm:$0xf]
  %v105 = vld [vmem:[%s1 + $0xa8] sm:$0xf]
  %v106 = vld [vmem:[%s1 + $0xac] sm:$0xf]
  %v107 = vld [vmem:[%s1 + $0xb0] sm:$0xf]
  %v108 = vld [vmem:[%s1 + $0xb4] sm:$0xf]
  %v109 = vld [vmem:[%s1 + $0xb8] sm:$0xf]
  %v110 = vld [vmem:[%s1 + $0xbc] sm:$0xf]
  %v111 = vld [vmem:[%s1 + $0xc0] sm:$0xf]
  %v112 = vld [vmem:[%s1 + $0xc4] sm:$0xf]
  %v113 = vld [vmem:[%s1 + $0xc8] sm:$0xf]
  %v114 = vld [vmem:[%s1 + $0xcc] sm:$0xf]
  %v115 = vld [vmem:[%s1 + $0xd0] sm:$0xf]
  %v116 = vld [vmem:[%s1 + $0xd4] sm:$0xf]
  %v117 = vld [vmem:[%s1 + $0xd8] sm:$0xf]
  %v118 = vld [vmem:[%s1 + $0xdc] sm:$0xf]
  %v119 = vld [vmem:[%s1 + $0xe0] sm:$0xf]
  %v120 = vld [vmem:[%s1 + $0xe4] sm:$0xf]
  %v121 = vld [vmem:[%s1 + $0xe8] sm:$0xf]
  %v122 = vld [vmem:[%s1 + $0xec] sm:$0xf]
  %v123 = vld [vmem:[%s1 + $0xf0] sm:$0xf]
  %v124 = vld [vmem:[%s1 + $0xf4] sm:$0xf]
  %v125 = vld [vmem:[%s1 + $0xf8] sm:$0xf]
  %v126 = vld [vmem:[%s1 + $0xfc] sm:$0xf]
  %v127 = vld [vmem:[%s1 + $0x100] sm:$0xf]
  %v128 = vld [vmem:[%s1 + $0x104] sm:$0xf]
  %v129 = vld [vmem:[%s1 + $0x108] sm:$0xf]
  %v130 = vld [vmem:[%s1 + $0x10c] sm:$0xf]
  %v131 = vld [vmem:[%s1 + $0x110] sm:$0xf]
  %v132 = vld [vmem:[%s1 + $0x114] sm:$0xf]
  %v133 = vld [vmem:[%s1 + $0x118] sm:$0xf]
  %v134 = vld [vmem:[%s1 + $0x11c] sm:$0xf]
  %v183 = vunpack.c.l.b16 %v15
  %v184 = vunpack.c.h.b16 %v15
  %v185 = vunpack.c.l.b16 %v16
  %v186 = vunpack.c.h.b16 %v16
  %v187 = vunpack.c.l.b16 %v17
  %v188 = vunpack.c.l.b16 %v18
  %v189 = vunpack.c.h.b16 %v18
  %v190 = vunpack.c.l.b16 %v19
  %v191 = vunpack.c.h.b16 %v19
  %v192 = vunpack.c.l.b16 %v20
  %v193 = vunpack.c.l.b16 %v21
  %v194 = vunpack.c.h.b16 %v21
  %v195 = vunpack.c.l.b16 %v22
  %v196 = vunpack.c.h.b16 %v22
  %v197 = vunpack.c.l.b16 %v23
  %v198 = vunpack.c.l.b16 %v24
  %v199 = vunpack.c.h.b16 %v24
  %v200 = vunpack.c.l.b16 %v25
  %v201 = vunpack.c.h.b16 %v25
  %v202 = vunpack.c.l.b16 %v26
  %v203 = vunpack.c.l.b16 %v27
  %v204 = vunpack.c.h.b16 %v27
  %v205 = vunpack.c.l.b16 %v28
  %v206 = vunpack.c.h.b16 %v28
  %v207 = vunpack.c.l.b16 %v29
  %v208 = vunpack.c.l.b16 %v30
  %v209 = vunpack.c.h.b16 %v30
  %v210 = vunpack.c.l.b16 %v31
  %v211 = vunpack.c.h.b16 %v31
  %v212 = vunpack.c.l.b16 %v32
  %v213 = vunpack.c.l.b16 %v33
  %v214 = vunpack.c.h.b16 %v33
  %v215 = vunpack.c.l.b16 %v34
  %v216 = vunpack.c.h.b16 %v34
  %v217 = vunpack.c.l.b16 %v35
  %v218 = vunpack.c.l.b16 %v36
  %v219 = vunpack.c.h.b16 %v36
  %v220 = vunpack.c.l.b16 %v37
  %v221 = vunpack.c.h.b16 %v37
  %v222 = vunpack.c.l.b16 %v38
  %v223 = vunpack.c.l.b16 %v39
  %v224 = vunpack.c.h.b16 %v39
  %v225 = vunpack.c.l.b16 %v40
  %v226 = vunpack.c.h.b16 %v40
  %v227 = vunpack.c.l.b16 %v41
  %v228 = vunpack.c.l.b16 %v42
  %v229 = vunpack.c.h.b16 %v42
  %v230 = vunpack.c.l.b16 %v43
  %v231 = vunpack.c.h.b16 %v43
  %v232 = vunpack.c.l.b16 %v44
  %v233 = vunpack.c.l.b16 %v45
  %v234 = vunpack.c.h.b16 %v45
  %v235 = vunpack.c.l.b16 %v46
  %v236 = vunpack.c.h.b16 %v46
  %v237 = vunpack.c.l.b16 %v47
  %v238 = vunpack.c.l.b16 %v48
  %v239 = vunpack.c.h.b16 %v48
  %v240 = vunpack.c.l.b16 %v49
  %v241 = vunpack.c.h.b16 %v49
  %v242 = vunpack.c.l.b16 %v50
  %v243 = vunpack.c.l.b16 %v51
  %v244 = vunpack.c.h.b16 %v51
  %v245 = vunpack.c.l.b16 %v52
  %v246 = vunpack.c.h.b16 %v52
  %v247 = vunpack.c.l.b16 %v53
  %v248 = vunpack.c.l.b16 %v54
  %v249 = vunpack.c.h.b16 %v54
  %v250 = vunpack.c.l.b16 %v55
  %v251 = vunpack.c.h.b16 %v55
  %v252 = vunpack.c.l.b16 %v56
  %v253 = vunpack.c.l.b16 %v57
  %v254 = vunpack.c.h.b16 %v57
  %v255 = vunpack.c.l.b16 %v58
  %v256 = vunpack.c.h.b16 %v58
  %v257 = vunpack.c.l.b16 %v59
  %v258 = vunpack.c.l.b16 %v60
  %v259 = vunpack.c.h.b16 %v60
  %v260 = vunpack.c.l.b16 %v61
  %v261 = vunpack.c.h.b16 %v61
  %v262 = vunpack.c.l.b16 %v62
  %v263 = vpack.c.b16 %v188, %v183
  %v264 = vpack.c.b16 %v189, %v184
  %v265 = vpack.c.b16 %v190, %v185
  %v266 = vpack.c.b16 %v191, %v186
  %v267 = vpack.c.b16 %v192, %v187
  %v268 = vpack.c.b16 %v198, %v193
  %v269 = vpack.c.b16 %v199, %v194
  %v270 = vpack.c.b16 %v200, %v195
  %v271 = vpack.c.b16 %v201, %v196
  %v272 = vpack.c.b16 %v202, %v197
  %v273 = vpack.c.b16 %v208, %v203
  %v274 = vpack.c.b16 %v209, %v204
  %v275 = vpack.c.b16 %v210, %v205
  %v276 = vpack.c.b16 %v211, %v206
  %v277 = vpack.c.b16 %v212, %v207
  %v278 = vpack.c.b16 %v218, %v213
  %v279 = vpack.c.b16 %v219, %v214
  %v280 = vpack.c.b16 %v220, %v215
  %v281 = vpack.c.b16 %v221, %v216
  %v282 = vpack.c.b16 %v222, %v217
  %v283 = vpack.c.b16 %v228, %v223
  %v284 = vpack.c.b16 %v229, %v224
  %v285 = vpack.c.b16 %v230, %v225
  %v286 = vpack.c.b16 %v231, %v226
  %v287 = vpack.c.b16 %v232, %v227
  %v288 = vpack.c.b16 %v238, %v233
  %v289 = vpack.c.b16 %v239, %v234
  %v290 = vpack.c.b16 %v240, %v235
  %v291 = vpack.c.b16 %v241, %v236
  %v292 = vpack.c.b16 %v242, %v237
  %v293 = vpack.c.b16 %v248, %v243
  %v294 = vpack.c.b16 %v249, %v244
  %v295 = vpack.c.b16 %v250, %v245
  %v296 = vpack.c.b16 %v251, %v246
  %v297 = vpack.c.b16 %v252, %v247
  %v298 = vpack.c.b16 %v258, %v253
  %v299 = vpack.c.b16 %v259, %v254
  %v300 = vpack.c.b16 %v260, %v255
  %v301 = vpack.c.b16 %v261, %v256
  %v302 = vpack.c.b16 %v262, %v257
  %v407 = vunpack.c.l.b16 %v63
  %v408 = vunpack.c.l.b16 %v64
  %v409 = vunpack.c.l.b16 %v65
  %v410 = vunpack.c.l.b16 %v66
  %v411 = vunpack.c.l.b16 %v67
  %v412 = vunpack.c.l.b16 %v68
  %v413 = vunpack.c.l.b16 %v69
  %v414 = vunpack.c.l.b16 %v70
  %v415 = vunpack.c.l.b16 %v71
  %v416 = vunpack.c.l.b16 %v72
  %v417 = vunpack.c.l.b16 %v73
  %v418 = vunpack.c.l.b16 %v74
  %v419 = vunpack.c.l.b16 %v75
  %v420 = vunpack.c.l.b16 %v76
  %v421 = vunpack.c.l.b16 %v77
  %v422 = vunpack.c.l.b16 %v78
  %v423 = vunpack.c.l.b16 %v79
  %v424 = vunpack.c.l.b16 %v80
  %v425 = vunpack.c.l.b16 %v81
  %v426 = vunpack.c.l.b16 %v82
  %v427 = vunpack.c.l.b16 %v83
  %v428 = vunpack.c.l.b16 %v84
  %v429 = vunpack.c.l.b16 %v85
  %v430 = vunpack.c.l.b16 %v86
  %v431 = vunpack.c.l.b16 %v87
  %v432 = vunpack.c.l.b16 %v88
  %v433 = vunpack.c.l.b16 %v89
  %v434 = vunpack.c.l.b16 %v90
  %v435 = vunpack.c.l.b16 %v91
  %v436 = vunpack.c.l.b16 %v92
  %v437 = vunpack.c.l.b16 %v93
  %v438 = vunpack.c.l.b16 %v94
  %v439 = vunpack.c.l.b16 %v95
  %v440 = vunpack.c.l.b16 %v96
  %v441 = vunpack.c.l.b16 %v97
  %v442 = vunpack.c.l.b16 %v98
  %v443 = vunpack.c.l.b16 %v99
  %v444 = vunpack.c.l.b16 %v100
  %v445 = vunpack.c.l.b16 %v101
  %v446 = vunpack.c.l.b16 %v102
  %v447 = vunpack.c.l.b16 %v103
  %v448 = vunpack.c.l.b16 %v104
  %v449 = vunpack.c.l.b16 %v105
  %v450 = vunpack.c.l.b16 %v106
  %v451 = vunpack.c.l.b16 %v107
  %v452 = vunpack.c.l.b16 %v108
  %v453 = vunpack.c.l.b16 %v109
  %v454 = vunpack.c.l.b16 %v110
  %v455 = vunpack.c.l.b16 %v111
  %v456 = vunpack.c.l.b16 %v112
  %v457 = vunpack.c.l.b16 %v113
  %v458 = vunpack.c.l.b16 %v114
  %v459 = vunpack.c.l.b16 %v115
  %v460 = vunpack.c.l.b16 %v116
  %v461 = vunpack.c.l.b16 %v117
  %v462 = vunpack.c.l.b16 %v118
  %v463 = vunpack.c.l.b16 %v119
  %v464 = vunpack.c.l.b16 %v120
  %v465 = vunpack.c.l.b16 %v121
  %v466 = vunpack.c.l.b16 %v122
  %v467 = vunpack.c.l.b16 %v123
  %v468 = vunpack.c.l.b16 %v124
  %v469 = vunpack.c.l.b16 %v125
  %v470 = vunpack.c.l.b16 %v126
  %v471 = vunpack.c.l.b16 %v127
  %v472 = vunpack.c.l.b16 %v128
  %v473 = vunpack.c.l.b16 %v129
  %v474 = vunpack.c.l.b16 %v130
  %v475 = vunpack.c.l.b16 %v131
  %v476 = vunpack.c.l.b16 %v132
  %v477 = vunpack.c.l.b16 %v133
  %v478 = vunpack.c.l.b16 %v134
  %v479 = vpack.c.b16 %v408, %v407
  %v480 = vpack.c.b16 %v410, %v409
  %v481 = vpack.c.b16 %v412, %v411
  %v482 = vpack.c.b16 %v414, %v413
  %v483 = vpack.c.b16 %v416, %v415
  %v484 = vpack.c.b16 %v418, %v417
  %v485 = vpack.c.b16 %v420, %v419
  %v486 = vpack.c.b16 %v422, %v421
  %v487 = vpack.c.b16 %v424, %v423
  %v488 = vpack.c.b16 %v426, %v425
  %v489 = vpack.c.b16 %v428, %v427
  %v490 = vpack.c.b16 %v430, %v429
  %v491 = vpack.c.b16 %v432, %v431
  %v492 = vpack.c.b16 %v434, %v433
  %v493 = vpack.c.b16 %v436, %v435
  %v494 = vpack.c.b16 %v438, %v437
  %v495 = vpack.c.b16 %v440, %v439
  %v496 = vpack.c.b16 %v442, %v441
  %v497 = vpack.c.b16 %v444, %v443
  %v498 = vpack.c.b16 %v446, %v445
  %v499 = vpack.c.b16 %v448, %v447
  %v500 = vpack.c.b16 %v450, %v449
  %v501 = vpack.c.b16 %v452, %v451
  %v502 = vpack.c.b16 %v454, %v453
  %v503 = vpack.c.b16 %v456, %v455
  %v504 = vpack.c.b16 %v458, %v457
  %v505 = vpack.c.b16 %v460, %v459
  %v506 = vpack.c.b16 %v462, %v461
  %v507 = vpack.c.b16 %v464, %v463
  %v508 = vpack.c.b16 %v466, %v465
  %v509 = vpack.c.b16 %v468, %v467
  %v510 = vpack.c.b16 %v470, %v469
  %v511 = vpack.c.b16 %v472, %v471
  %v512 = vpack.c.b16 %v474, %v473
  %v513 = vpack.c.b16 %v476, %v475
  %v514 = vpack.c.b16 %v478, %v477
  %vm551 = vcmask 523264
  %v553 = vsel %vm551, %v267, 0
  %v556 = vsel %vm551, %v272, 0
  %v559 = vsel %vm551, %v277, 0
  %v562 = vsel %vm551, %v282, 0
  %v565 = vsel %vm551, %v287, 0
  %v568 = vsel %vm551, %v292, 0
  %v571 = vsel %vm551, %v297, 0
  %v574 = vsel %vm551, %v302, 0
  %576 = vmatprep.subr.bf16.mxu0 0
  %577 = vmatpush1.bf16.msra.mxu0 %v479
  %578 = vmatprep.subr.bf16.mxu0 0
  %579 = vmatpush1.bf16.msra.mxu0 %v480
  %580 = vmatprep.subr.bf16.mxu0 0
  %581 = vmatpush1.bf16.msra.mxu0 %v481
  %582 = vmatprep.subr.bf16.mxu0 0
  %583 = vmatpush1.bf16.msra.mxu0 %v482
  %584 = vmatprep.subr.bf16.mxu0 0
  %585 = vmatpush1.bf16.msra.mxu0 %v483
  %586 = vmatprep.subr.bf16.mxu0 0
  %587 = vmatpush1.bf16.msra.mxu0 %v484
  %588 = vmatprep.subr.bf16.mxu0 0
  %589 = vmatpush1.bf16.msra.mxu0 %v485
  %590 = vmatprep.subr.bf16.mxu0 0
  %591 = vmatpush1.bf16.msra.mxu0 %v486
  %592 = vmatprep.subr.bf16.mxu0 0
  %593 = vmatpush1.bf16.msra.mxu0 %v487
  %594 = vmatprep.subr.bf16.mxu0 0
  %595 = vmatpush1.bf16.msra.mxu0 %v488
  %596 = vmatprep.subr.bf16.mxu0 0
  %597 = vmatpush1.bf16.msra.mxu0 %v489
  %598 = vmatprep.subr.bf16.mxu0 0
  %599 = vmatpush1.bf16.msra.mxu0 %v490
  %600 = vmatprep.subr.bf16.mxu0 0
  %601 = vmatpush1.bf16.msra.mxu0 %v491
  %602 = vmatprep.subr.bf16.mxu0 0
  %603 = vmatpush1.bf16.msra.mxu0 %v492
  %604 = vmatprep.subr.bf16.mxu0 0
  %605 = vmatpush1.bf16.msra.mxu0 %v493
  %606 = vmatprep.subr.bf16.mxu0 0
  %607 = vmatpush1.bf16.msra.mxu0 %v494
  %608 = vmatprep.mubr.bf16.mxu0 %v264
  %609 = vmatmul.mubr.bf16.gmra.mrb[0].mxu0 %v263
  %v610 = vpop.f32.mrb[0].mxu0
  %v611 = vadd.f32 0.0, %v610
  %v612 = vpop.f32.mrb[0].mxu0
  %v613 = vpop.f32.mrb[0].mxu0
  %v614 = vadd.f32 0.0, %v613
  %v615 = vpop.f32.mrb[0].mxu0
  %616 = vmatprep.mubr.bf16.mxu0 %v269
  %617 = vmatmul.mubr.bf16.gmra.mrb[0].mxu0 %v268
  %v618 = vpop.f32.mrb[0].mxu0
  %v619 = vadd.f32 0.0, %v618
  %v620 = vpop.f32.mrb[0].mxu0
  %v621 = vpop.f32.mrb[0].mxu0
  %v622 = vadd.f32 0.0, %v621
  %v623 = vpop.f32.mrb[0].mxu0
  %624 = vmatprep.mubr.bf16.mxu0 %v274
  %625 = vmatmul.mubr.bf16.gmra.mrb[0].mxu0 %v273
  %v626 = vpop.f32.mrb[0].mxu0
  %v627 = vadd.f32 0.0, %v626
  %v628 = vpop.f32.mrb[0].mxu0
  %v629 = vpop.f32.mrb[0].mxu0
  %v630 = vadd.f32 0.0, %v629
  %v631 = vpop.f32.mrb[0].mxu0
  %632 = vmatprep.mubr.bf16.mxu0 %v279
  %633 = vmatmul.mubr.bf16.gmra.mrb[0].mxu0 %v278
  %v634 = vpop.f32.mrb[0].mxu0
  %v635 = vadd.f32 0.0, %v634
  %v636 = vpop.f32.mrb[0].mxu0
  %v637 = vpop.f32.mrb[0].mxu0
  %v638 = vadd.f32 0.0, %v637
  %v639 = vpop.f32.mrb[0].mxu0
  %640 = vmatprep.mubr.bf16.mxu0 %v284
  %641 = vmatmul.mubr.bf16.gmra.mrb[0].mxu0 %v283
  %v642 = vpop.f32.mrb[0].mxu0
  %v643 = vadd.f32 0.0, %v642
  %v644 = vpop.f32.mrb[0].mxu0
  %v645 = vpop.f32.mrb[0].mxu0
  %v646 = vadd.f32 0.0, %v645
  %v647 = vpop.f32.mrb[0].mxu0
  %648 = vmatprep.mubr.bf16.mxu0 %v289
  %649 = vmatmul.mubr.bf16.gmra.mrb[0].mxu0 %v288
  %v650 = vpop.f32.mrb[0].mxu0
  %v651 = vadd.f32 0.0, %v650
  %v652 = vpop.f32.mrb[0].mxu0
  %v653 = vpop.f32.mrb[0].mxu0
  %v654 = vadd.f32 0.0, %v653
  %v655 = vpop.f32.mrb[0].mxu0
  %656 = vmatprep.mubr.bf16.mxu0 %v294
  %657 = vmatmul.mubr.bf16.gmra.mrb[0].mxu0 %v293
  %v658 = vpop.f32.mrb[0].mxu0
  %v659 = vadd.f32 0.0, %v658
  %v660 = vpop.f32.mrb[0].mxu0
  %v661 = vpop.f32.mrb[0].mxu0
  %v662 = vadd.f32 0.0, %v661
  %v663 = vpop.f32.mrb[0].mxu0
  %664 = vmatprep.mubr.bf16.mxu0 %v299
  %665 = vmatmul.mubr.bf16.gmra.mrb[0].mxu0 %v298
  %v666 = vpop.f32.mrb[0].mxu0
  %v667 = vadd.f32 0.0, %v666
  %v668 = vpop.f32.mrb[0].mxu0
  %v669 = vpop.f32.mrb[0].mxu0
  %v670 = vadd.f32 0.0, %v669
  %v671 = vpop.f32.mrb[0].mxu0
  %672 = vdwg.mxu0
  %673 = vmatprep.subr.bf16.mxu0 0
  %674 = vmatpush1.bf16.msra.mxu0 %v495
  %675 = vmatprep.subr.bf16.mxu0 0
  %676 = vmatpush1.bf16.msra.mxu0 %v496
  %677 = vmatprep.subr.bf16.mxu0 0
  %678 = vmatpush1.bf16.msra.mxu0 %v497
  %679 = vmatprep.subr.bf16.mxu0 0
  %680 = vmatpush1.bf16.msra.mxu0 %v498
  %681 = vmatprep.subr.bf16.mxu0 0
  %682 = vmatpush1.bf16.msra.mxu0 %v499
  %683 = vmatprep.subr.bf16.mxu0 0
  %684 = vmatpush1.bf16.msra.mxu0 %v500
  %685 = vmatprep.subr.bf16.mxu0 0
  %686 = vmatpush1.bf16.msra.mxu0 %v501
  %687 = vmatprep.subr.bf16.mxu0 0
  %688 = vmatpush1.bf16.msra.mxu0 %v502
  %689 = vmatprep.subr.bf16.mxu0 0
  %690 = vmatpush1.bf16.msra.mxu0 %v503
  %691 = vmatprep.subr.bf16.mxu0 0
  %692 = vmatpush1.bf16.msra.mxu0 %v504
  %693 = vmatprep.subr.bf16.mxu0 0
  %694 = vmatpush1.bf16.msra.mxu0 %v505
  %695 = vmatprep.subr.bf16.mxu0 0
  %696 = vmatpush1.bf16.msra.mxu0 %v506
  %697 = vmatprep.subr.bf16.mxu0 0
  %698 = vmatpush1.bf16.msra.mxu0 %v507
  %699 = vmatprep.subr.bf16.mxu0 0
  %700 = vmatpush1.bf16.msra.mxu0 %v508
  %701 = vmatprep.subr.bf16.mxu0 0
  %702 = vmatpush1.bf16.msra.mxu0 %v509
  %703 = vmatprep.subr.bf16.mxu0 0
  %704 = vmatpush1.bf16.msra.mxu0 %v510
  %705 = vmatprep.mubr.bf16.mxu0 %v266
  %706 = vmatmul.mubr.bf16.gmra.mrb[0].mxu0 %v265
  %v707 = vpop.f32.mrb[0].mxu0
  %v708 = vadd.f32 %v611, %v707
  %v709 = vpop.f32.mrb[0].mxu0
  %v710 = vpop.f32.mrb[0].mxu0
  %v711 = vadd.f32 %v614, %v710
  %v712 = vpop.f32.mrb[0].mxu0
  %713 = vmatprep.mubr.bf16.mxu0 %v271
  %714 = vmatmul.mubr.bf16.gmra.mrb[0].mxu0 %v270
  %v715 = vpop.f32.mrb[0].mxu0
  %v716 = vadd.f32 %v619, %v715
  %v717 = vpop.f32.mrb[0].mxu0
  %v718 = vpop.f32.mrb[0].mxu0
  %v719 = vadd.f32 %v622, %v718
  %v720 = vpop.f32.mrb[0].mxu0
  %721 = vmatprep.mubr.bf16.mxu0 %v276
  %722 = vmatmul.mubr.bf16.gmra.mrb[0].mxu0 %v275
  %v723 = vpop.f32.mrb[0].mxu0
  %v724 = vadd.f32 %v627, %v723
  %v725 = vpop.f32.mrb[0].mxu0
  %v726 = vpop.f32.mrb[0].mxu0
  %v727 = vadd.f32 %v630, %v726
  %v728 = vpop.f32.mrb[0].mxu0
  %729 = vmatprep.mubr.bf16.mxu0 %v281
  %730 = vmatmul.mubr.bf16.gmra.mrb[0].mxu0 %v280
  %v731 = vpop.f32.mrb[0].mxu0
  %v732 = vadd.f32 %v635, %v731
  %v733 = vpop.f32.mrb[0].mxu0
  %v734 = vpop.f32.mrb[0].mxu0
  %v735 = vadd.f32 %v638, %v734
  %v736 = vpop.f32.mrb[0].mxu0
  %737 = vmatprep.mubr.bf16.mxu0 %v286
  %738 = vmatmul.mubr.bf16.gmra.mrb[0].mxu0 %v285
  %v739 = vpop.f32.mrb[0].mxu0
  %v740 = vadd.f32 %v643, %v739
  %v741 = vpop.f32.mrb[0].mxu0
  %v742 = vpop.f32.mrb[0].mxu0
  %v743 = vadd.f32 %v646, %v742
  %v744 = vpop.f32.mrb[0].mxu0
  %745 = vmatprep.mubr.bf16.mxu0 %v291
  %746 = vmatmul.mubr.bf16.gmra.mrb[0].mxu0 %v290
  %v747 = vpop.f32.mrb[0].mxu0
  %v748 = vadd.f32 %v651, %v747
  %v749 = vpop.f32.mrb[0].mxu0
  %v750 = vpop.f32.mrb[0].mxu0
  %v751 = vadd.f32 %v654, %v750
  %v752 = vpop.f32.mrb[0].mxu0
  %753 = vmatprep.mubr.bf16.mxu0 %v296
  %754 = vmatmul.mubr.bf16.gmra.mrb[0].mxu0 %v295
  %v755 = vpop.f32.mrb[0].mxu0
  %v756 = vadd.f32 %v659, %v755
  %v757 = vpop.f32.mrb[0].mxu0
  %v758 = vpop.f32.mrb[0].mxu0
  %v759 = vadd.f32 %v662, %v758
  %v760 = vpop.f32.mrb[0].mxu0
  %761 = vmatprep.mubr.bf16.mxu0 %v301
  %762 = vmatmul.mubr.bf16.gmra.mrb[0].mxu0 %v300
  %v763 = vpop.f32.mrb[0].mxu0
  %v764 = vadd.f32 %v667, %v763
  %v765 = vpop.f32.mrb[0].mxu0
  %v766 = vpop.f32.mrb[0].mxu0
  %v767 = vadd.f32 %v670, %v766
  %v768 = vpop.f32.mrb[0].mxu0
  %769 = vdwg.mxu0
  %770 = vmatprep.subr.bf16.mxu0 0
  %771 = vmatpush1.bf16.msra.mxu0 %v511
  %772 = vmatprep.subr.bf16.mxu0 0
  %773 = vmatpush1.bf16.msra.mxu0 %v512
  %774 = vmatprep.subr.bf16.mxu0 0
  %775 = vmatpush1.bf16.msra.mxu0 %v513
  %776 = vmatprep.subr.bf16.mxu0 0
  %777 = vmatpush1.bf16.msra.mxu0 %v514
  %778 = vmatprep.subr.bf16.mxu0 0
  %779 = vmatpush1.bf16.msra.mxu0 0
  %780 = vmatprep.subr.bf16.mxu0 0
  %781 = vmatpush1.bf16.msra.mxu0 0
  %782 = vmatprep.subr.bf16.mxu0 0
  %783 = vmatpush1.bf16.msra.mxu0 0
  %784 = vmatprep.subr.bf16.mxu0 0
  %785 = vmatpush1.bf16.msra.mxu0 0
  %786 = vmatprep.subr.bf16.mxu0 0
  %787 = vmatpush1.bf16.msra.mxu0 0
  %788 = vmatprep.subr.bf16.mxu0 0
  %789 = vmatpush1.bf16.msra.mxu0 0
  %790 = vmatprep.subr.bf16.mxu0 0
  %791 = vmatpush1.bf16.msra.mxu0 0
  %792 = vmatprep.subr.bf16.mxu0 0
  %793 = vmatpush1.bf16.msra.mxu0 0
  %794 = vmatprep.subr.bf16.mxu0 0
  %795 = vmatpush1.bf16.msra.mxu0 0
  %796 = vmatprep.subr.bf16.mxu0 0
  %797 = vmatpush1.bf16.msra.mxu0 0
  %798 = vmatprep.subr.bf16.mxu0 0
  %799 = vmatpush1.bf16.msra.mxu0 0
  %800 = vmatprep.subr.bf16.mxu0 0
  %801 = vmatpush1.bf16.msra.mxu0 0
  %802 = vmatprep.mubr.bf16.mxu0 0
  %803 = vmatmul.mubr.bf16.gmra.mrb[0].mxu0 %v553
  %v804 = vpop.f32.mrb[0].mxu0
  %v805 = vadd.f32 %v708, %v804
  %v806 = vpop.f32.mrb[0].mxu0
  %v807 = vpop.f32.mrb[0].mxu0
  %v808 = vadd.f32 %v711, %v807
  %v809 = vpop.f32.mrb[0].mxu0
  %810 = vmatprep.mubr.bf16.mxu0 0
  %811 = vmatmul.mubr.bf16.gmra.mrb[0].mxu0 %v556
  %v812 = vpop.f32.mrb[0].mxu0
  %v813 = vadd.f32 %v716, %v812
  %v814 = vpop.f32.mrb[0].mxu0
  %v815 = vpop.f32.mrb[0].mxu0
  %v816 = vadd.f32 %v719, %v815
  %v817 = vpop.f32.mrb[0].mxu0
  %818 = vmatprep.mubr.bf16.mxu0 0
  %819 = vmatmul.mubr.bf16.gmra.mrb[0].mxu0 %v559
  %v820 = vpop.f32.mrb[0].mxu0
  %v821 = vadd.f32 %v724, %v820
  %v822 = vpop.f32.mrb[0].mxu0
  %v823 = vpop.f32.mrb[0].mxu0
  %v824 = vadd.f32 %v727, %v823
  %v825 = vpop.f32.mrb[0].mxu0
  %826 = vmatprep.mubr.bf16.mxu0 0
  %827 = vmatmul.mubr.bf16.gmra.mrb[0].mxu0 %v562
  %v828 = vpop.f32.mrb[0].mxu0
  %v829 = vadd.f32 %v732, %v828
  %v830 = vpop.f32.mrb[0].mxu0
  %v831 = vpop.f32.mrb[0].mxu0
  %v832 = vadd.f32 %v735, %v831
  %v833 = vpop.f32.mrb[0].mxu0
  %834 = vmatprep.mubr.bf16.mxu0 0
  %835 = vmatmul.mubr.bf16.gmra.mrb[0].mxu0 %v565
  %v836 = vpop.f32.mrb[0].mxu0
  %v837 = vadd.f32 %v740, %v836
  %v838 = vpop.f32.mrb[0].mxu0
  %v839 = vpop.f32.mrb[0].mxu0
  %v840 = vadd.f32 %v743, %v839
  %v841 = vpop.f32.mrb[0].mxu0
  %842 = vmatprep.mubr.bf16.mxu0 0
  %843 = vmatmul.mubr.bf16.gmra.mrb[0].mxu0 %v568
  %v844 = vpop.f32.mrb[0].mxu0
  %v845 = vadd.f32 %v748, %v844
  %v846 = vpop.f32.mrb[0].mxu0
  %v847 = vpop.f32.mrb[0].mxu0
  %v848 = vadd.f32 %v751, %v847
  %v849 = vpop.f32.mrb[0].mxu0
  %850 = vmatprep.mubr.bf16.mxu0 0
  %851 = vmatmul.mubr.bf16.gmra.mrb[0].mxu0 %v571
  %v852 = vpop.f32.mrb[0].mxu0
  %v853 = vadd.f32 %v756, %v852
  %v854 = vpop.f32.mrb[0].mxu0
  %v855 = vpop.f32.mrb[0].mxu0
  %v856 = vadd.f32 %v759, %v855
  %v857 = vpop.f32.mrb[0].mxu0
  %858 = vmatprep.mubr.bf16.mxu0 0
  %859 = vmatmul.mubr.bf16.gmra.mrb[0].mxu0 %v574
  %v860 = vpop.f32.mrb[0].mxu0
  %v861 = vadd.f32 %v764, %v860
  %v862 = vpop.f32.mrb[0].mxu0
  %v863 = vpop.f32.mrb[0].mxu0
  %v864 = vadd.f32 %v767, %v863
  %v865 = vpop.f32.mrb[0].mxu0
  %866 = vdwg.mxu0
  %v867 = vmax.f32 %v805, %v821
  %v868 = vmax.f32 %v808, %v824
  %v869 = vmax.f32 %v813, %v829
  %v870 = vmax.f32 %v816, %v832
  %v871 = vmax.f32 %v837, %v853
  %v872 = vmax.f32 %v840, %v856
  %v873 = vmax.f32 %v845, %v861
  %v874 = vmax.f32 %v848, %v864
  %v875 = vmax.f32 %v867, %v871
  %v876 = vmax.f32 %v868, %v872
  %v877 = vmax.f32 %v869, %v873
  %v878 = vmax.f32 %v870, %v874
  %v879 = vld [vmem:[%s2] sm:$0x1]
  %v881 = vlaneseq
  %v882 = vshrl.u32 %v881, 7
  %v883 = vsub.s32 0, %v882
  %v884 = vrot.slane %v879, %v883
  %v886 = vadd.f32 %v875, %v884
  %v887 = vadd.f32 %v876, %v884
  %v888 = vadd.f32 %v877, %v884
  %v889 = vadd.f32 %v878, %v884
  %v890 = vmax.f32 %v886, 0.0
  %v891 = vmax.f32 %v887, 0.0
  %v892 = vmax.f32 %v888, 0.0
  %v893 = vmax.f32 %v889, 0.0
  %v894 = vpack.c.bf16 %v891, %v890
  %v895 = vpack.c.bf16 %v893, %v892
  %v898 = vunpack.c.l.b16 %v894
  %v899 = vunpack.c.h.b16 %v894
  %v900 = vunpack.c.l.b16 %v895
  %v901 = vunpack.c.h.b16 %v895
  %v902 = vpack.c.b16 %v898, %v898
  %v903 = vpack.c.b16 %v899, %v899
  %v904 = vpack.c.b16 %v900, %v900
  %v905 = vpack.c.b16 %v901, %v901
  %910 = vst [vmem:[%s3] sm:$0xf] %v902
  %911 = vst [vmem:[%s3 + $0x4] sm:$0xf] %v903
  %912 = vst [vmem:[%s3 + $0x8] sm:$0xf] %v904
  %913 = vst [vmem:[%s3 + $0xc] sm:$0xf] %v905
  // Predicated region
  $region14: #{forward.7} parent=0 // pred_check
    _
  $region15: #{forward.7} parent=0 // pred_check_branch
    %915 = sbr.rel (0) target = $region17
  $region16: #{forward.7} parent=0 // pred_region
    _
  $region17: #{forward.7} parent=0 // pred_fallthru
    _
  // Predicated region
  $region18: #{forward.7} parent=0 // pred_check
    _
  $region19: #{forward.7} parent=0 // pred_check_branch
    %917 = sbr.rel (0) target = $region21
  $region20: #{forward.7} parent=0 // pred_region
    _
  $region21: #{forward.7} parent=0 // pred_fallthru
    _

// kernel: forward.9
$region0: #{forward.9}
  #allocation0 [shape = 'u32[]', space=smem, size = 0x4, offset = 0x4, fixed_abs, tag = 'smem constant byte address 0x4 - core index']
  #allocation1 [shape = 'u32[144,128]{1,0:T(1,128)}', space=vmem, size = 0x12000, scoped, tag = 'internal scratch']
  %s0 = inlined_call_operand.vmem [shape: bf16[2,512], index: 0, kind: input, shape index: {}]
  %s1 = inlined_call_operand.vmem [shape: bf16[512,256], index: 1, kind: input, shape index: {}]
  %s2 = inlined_call_operand.vmem [shape: f32[1,256], index: 2, kind: input, shape index: {}]
  %s3 = inlined_call_operand.vmem [shape: bf16[256,2], index: 3, kind: input, shape index: {}]
  %s4 = inlined_call_operand.vmem [shape: f32[1,2], index: 4, kind: input, shape index: {}]
  %s5 = inlined_call_operand.hbm [shape: f32[2,2], index: 5, kind: output, shape index: {}]
  %s6 = sld [smem:[#allocation0]]
  $region30: #{forward.9} parent=0
    _
  %s8 = ssub.s32 1, %s6
  %s9 = scalar_select 0, %s8, %s6
  $region1: #{forward.9} parent=0
    #allocation2 [shape = 'u8[1024]{0}', space=vmem, size = 0x400, scoped, tag = 'output window, operand 0, single buffered']
    #allocation3 [shape = 's32[1]{0}', space=sflag, size = 0x4, scoped, tag = 'scoped memory for forward.9']
    %10 = vsyncpa [#allocation3], 0
    // Predicated region
    $region2: #{forward.9} parent=1 // pred_check
      _
    $region3: #{forward.9} parent=1 // pred_check_branch
      %12 = sbr.rel (0) target = $region5
    $region4: #{forward.9} parent=1 // pred_region
      _
    $region5: #{forward.9} parent=1 // pred_fallthru
      _
    // Predicated region
    $region6: #{forward.9} parent=1 // pred_check
      _
    $region7: #{forward.9} parent=1 // pred_check_branch
      %14 = sbr.rel (0) target = $region9
    $region8: #{forward.9} parent=1 // pred_region
      _
    $region9: #{forward.9} parent=1 // pred_fallthru
      _
    // Predicated region
    $region10: #{forward.9} parent=1 // pred_check
      _
    $region11: #{forward.9} parent=1 // pred_check_branch
      %16 = sbr.rel (0) target = $region13
    $region12: #{forward.9} parent=1 // pred_region
      _
    $region13: #{forward.9} parent=1 // pred_fallthru
      _
    // Predicated region
    $region14: #{forward.9} parent=1 // pred_check
      _
    $region15: #{forward.9} parent=1 // pred_check_branch
      %18 = sbr.rel (0) target = $region17
    $region16: #{forward.9} parent=1 // pred_region
      _
    $region17: #{forward.9} parent=1 // pred_fallthru
      _
    // Predicated region
    $region18: #{forward.9} parent=1 // pred_check
      _
    $region19: #{forward.9} parent=1 // pred_check_branch
      %20 = sbr.rel (0) target = $region21
    $region20: #{forward.9} parent=1 // pred_region
      _
    $region21: #{forward.9} parent=1 // pred_fallthru
      _
    %v22 = vld [vmem:[%s0] sm:$0xf]
    %v23 = vld [vmem:[%s1] sm:$0xff]
    %v24 = vld [vmem:[%s1 + $0x8] sm:$0xff]
    %v25 = vld [vmem:[%s1 + $0x10] sm:$0xff]
    %v26 = vld [vmem:[%s1 + $0x18] sm:$0xff]
    %v27 = vld [vmem:[%s1 + $0x20] sm:$0xff]
    %v28 = vld [vmem:[%s1 + $0x28] sm:$0xff]
    %v29 = vld [vmem:[%s1 + $0x30] sm:$0xff]
    %v30 = vld [vmem:[%s1 + $0x38] sm:$0xff]
    %v31 = vld [vmem:[%s1 + $0x40] sm:$0xff]
    %v32 = vld [vmem:[%s1 + $0x48] sm:$0xff]
    %v33 = vld [vmem:[%s1 + $0x50] sm:$0xff]
    %v34 = vld [vmem:[%s1 + $0x58] sm:$0xff]
    %v35 = vld [vmem:[%s1 + $0x60] sm:$0xff]
    %v36 = vld [vmem:[%s1 + $0x68] sm:$0xff]
    %v37 = vld [vmem:[%s1 + $0x70] sm:$0xff]
    %v38 = vld [vmem:[%s1 + $0x78] sm:$0xff]
    %v39 = vld [vmem:[%s1 + $0x80] sm:$0xff]
    %v40 = vld [vmem:[%s1 + $0x88] sm:$0xff]
    %v41 = vld [vmem:[%s1 + $0x90] sm:$0xff]
    %v42 = vld [vmem:[%s1 + $0x98] sm:$0xff]
    %v43 = vld [vmem:[%s1 + $0xa0] sm:$0xff]
    %v44 = vld [vmem:[%s1 + $0xa8] sm:$0xff]
    %v45 = vld [vmem:[%s1 + $0xb0] sm:$0xff]
    %v46 = vld [vmem:[%s1 + $0xb8] sm:$0xff]
    %v47 = vld [vmem:[%s1 + $0xc0] sm:$0xff]
    %v48 = vld [vmem:[%s1 + $0xc8] sm:$0xff]
    %v49 = vld [vmem:[%s1 + $0xd0] sm:$0xff]
    %v50 = vld [vmem:[%s1 + $0xd8] sm:$0xff]
    %v51 = vld [vmem:[%s1 + $0xe0] sm:$0xff]
    %v52 = vld [vmem:[%s1 + $0xe8] sm:$0xff]
    %v53 = vld [vmem:[%s1 + $0xf0] sm:$0xff]
    %v54 = vld [vmem:[%s1 + $0xf8] sm:$0xff]
    %v55 = vld [vmem:[%s1 + $0x100] sm:$0xff]
    %v56 = vld [vmem:[%s1 + $0x108] sm:$0xff]
    %v57 = vld [vmem:[%s1 + $0x110] sm:$0xff]
    %v58 = vld [vmem:[%s1 + $0x118] sm:$0xff]
    %v59 = vld [vmem:[%s1 + $0x120] sm:$0xff]
    %v60 = vld [vmem:[%s1 + $0x128] sm:$0xff]
    %v61 = vld [vmem:[%s1 + $0x130] sm:$0xff]
    %v62 = vld [vmem:[%s1 + $0x138] sm:$0xff]
    %v63 = vld [vmem:[%s1 + $0x140] sm:$0xff]
    %v64 = vld [vmem:[%s1 + $0x148] sm:$0xff]
    %v65 = vld [vmem:[%s1 + $0x150] sm:$0xff]
    %v66 = vld [vmem:[%s1 + $0x158] sm:$0xff]
    %v67 = vld [vmem:[%s1 + $0x160] sm:$0xff]
    %v68 = vld [vmem:[%s1 + $0x168] sm:$0xff]
    %v69 = vld [vmem:[%s1 + $0x170] sm:$0xff]
    %v70 = vld [vmem:[%s1 + $0x178] sm:$0xff]
    %v71 = vld [vmem:[%s1 + $0x180] sm:$0xff]
    %v72 = vld [vmem:[%s1 + $0x188] sm:$0xff]
    %v73 = vld [vmem:[%s1 + $0x190] sm:$0xff]
    %v74 = vld [vmem:[%s1 + $0x198] sm:$0xff]
    %v75 = vld [vmem:[%s1 + $0x1a0] sm:$0xff]
    %v76 = vld [vmem:[%s1 + $0x1a8] sm:$0xff]
    %v77 = vld [vmem:[%s1 + $0x1b0] sm:$0xff]
    %v78 = vld [vmem:[%s1 + $0x1b8] sm:$0xff]
    %v79 = vld [vmem:[%s1 + $0x1c0] sm:$0xff]
    %v80 = vld [vmem:[%s1 + $0x1c8] sm:$0xff]
    %v81 = vld [vmem:[%s1 + $0x1d0] sm:$0xff]
    %v82 = vld [vmem:[%s1 + $0x1d8] sm:$0xff]
    %v83 = vld [vmem:[%s1 + $0x1e0] sm:$0xff]
    %v84 = vld [vmem:[%s1 + $0x1e8] sm:$0xff]
    %v85 = vld [vmem:[%s1 + $0x1f0] sm:$0xff]
    %v86 = vld [vmem:[%s1 + $0x1f8] sm:$0xff]
    %v87 = vld [vmem:[%s2] sm:$0x3]
    %v89 = vlaneseq
    %v90 = vshrl.u32 %v89, 7
    %v91 = vsub.s32 0, %v90
    %v92 = vrot.slane %v87, %v91
    %v93 = vlaneseq
    %v94 = vshrl.u32 %v93, 7
    %v95 = vsub.s32 1, %v94
    %v96 = vrot.slane %v87, %v95
    %v101 = vunpack.c.l.s4 1966171168
    %v102 = vunpack.c.0.s8 %v101
    %v103 = vlaneseq
    %v104 = vshrl.u32 %v103, 7
    %v105 = vsub.s32 %v102, %v104
    %v106 = vrot.slane %v22, %v105
    %v107 = vcombine.high %v106, %v106
    %v109 = vunpack.c.l.s4 1966171168
    %v110 = vunpack.c.0.s8 %v109
    %v111 = vlaneseq
    %v112 = vshrl.u32 %v111, 7
    %v113 = vsub.s32 %v110, %v112
    %v114 = vrot.slane %v106, %v113
    %v116 = vunpack.c.l.s4 1966171168
    %v117 = vunpack.c.0.s8 %v116
    %v118 = vlaneseq
    %v119 = vshrl.u32 %v118, 7
    %v120 = vsub.s32 %v117, %v119
    %v121 = vrot.slane %v107, %v120
    %v122 = vcombine.high %v114, %v114
    %v123 = vcombine.high %v121, %v121
    %v192 = vunpack.c.l.b16 %v23
    %v193 = vunpack.c.h.b16 %v23
    %v194 = vunpack.c.l.b16 %v24
    %v195 = vunpack.c.h.b16 %v24
    %v196 = vunpack.c.l.b16 %v25
    %v197 = vunpack.c.h.b16 %v25
    %v198 = vunpack.c.l.b16 %v26
    %v199 = vunpack.c.h.b16 %v26
    %v200 = vunpack.c.l.b16 %v27
    %v201 = vunpack.c.h.b16 %v27
    %v202 = vunpack.c.l.b16 %v28
    %v203 = vunpack.c.h.b16 %v28
    %v204 = vunpack.c.l.b16 %v29
    %v205 = vunpack.c.h.b16 %v29
    %v206 = vunpack.c.l.b16 %v30
    %v207 = vunpack.c.h.b16 %v30
    %v208 = vunpack.c.l.b16 %v31
    %v209 = vunpack.c.h.b16 %v31
    %v210 = vunpack.c.l.b16 %v32
    %v211 = vunpack.c.h.b16 %v32
    %v212 = vunpack.c.l.b16 %v33
    %v213 = vunpack.c.h.b16 %v33
    %v214 = vunpack.c.l.b16 %v34
    %v215 = vunpack.c.h.b16 %v34
    %v216 = vunpack.c.l.b16 %v35
    %v217 = vunpack.c.h.b16 %v35
    %v218 = vunpack.c.l.b16 %v36
    %v219 = vunpack.c.h.b16 %v36
    %v220 = vunpack.c.l.b16 %v37
    %v221 = vunpack.c.h.b16 %v37
    %v222 = vunpack.c.l.b16 %v38
    %v223 = vunpack.c.h.b16 %v38
    %v224 = vunpack.c.l.b16 %v39
    %v225 = vunpack.c.h.b16 %v39
    %v226 = vunpack.c.l.b16 %v40
    %v227 = vunpack.c.h.b16 %v40
    %v228 = vunpack.c.l.b16 %v41
    %v229 = vunpack.c.h.b16 %v41
    %v230 = vunpack.c.l.b16 %v42
    %v231 = vunpack.c.h.b16 %v42
    %v232 = vunpack.c.l.b16 %v43
    %v233 = vunpack.c.h.b16 %v43
    %v234 = vunpack.c.l.b16 %v44
    %v235 = vunpack.c.h.b16 %v44
    %v236 = vunpack.c.l.b16 %v45
    %v237 = vunpack.c.h.b16 %v45
    %v238 = vunpack.c.l.b16 %v46
    %v239 = vunpack.c.h.b16 %v46
    %v240 = vunpack.c.l.b16 %v47
    %v241 = vunpack.c.h.b16 %v47
    %v242 = vunpack.c.l.b16 %v48
    %v243 = vunpack.c.h.b16 %v48
    %v244 = vunpack.c.l.b16 %v49
    %v245 = vunpack.c.h.b16 %v49
    %v246 = vunpack.c.l.b16 %v50
    %v247 = vunpack.c.h.b16 %v50
    %v248 = vunpack.c.l.b16 %v51
    %v249 = vunpack.c.h.b16 %v51
    %v250 = vunpack.c.l.b16 %v52
    %v251 = vunpack.c.h.b16 %v52
    %v252 = vunpack.c.l.b16 %v53
    %v253 = vunpack.c.h.b16 %v53
    %v254 = vunpack.c.l.b16 %v54
    %v255 = vunpack.c.h.b16 %v54
    %v256 = vunpack.c.l.b16 %v55
    %v257 = vunpack.c.h.b16 %v55
    %v258 = vunpack.c.l.b16 %v56
    %v259 = vunpack.c.h.b16 %v56
    %v260 = vunpack.c.l.b16 %v57
    %v261 = vunpack.c.h.b16 %v57
    %v262 = vunpack.c.l.b16 %v58
    %v263 = vunpack.c.h.b16 %v58
    %v264 = vunpack.c.l.b16 %v59
    %v265 = vunpack.c.h.b16 %v59
    %v266 = vunpack.c.l.b16 %v60
    %v267 = vunpack.c.h.b16 %v60
    %v268 = vunpack.c.l.b16 %v61
    %v269 = vunpack.c.h.b16 %v61
    %v270 = vunpack.c.l.b16 %v62
    %v271 = vunpack.c.h.b16 %v62
    %v272 = vunpack.c.l.b16 %v63
    %v273 = vunpack.c.h.b16 %v63
    %v274 = vunpack.c.l.b16 %v64
    %v275 = vunpack.c.h.b16 %v64
    %v276 = vunpack.c.l.b16 %v65
    %v277 = vunpack.c.h.b16 %v65
    %v278 = vunpack.c.l.b16 %v66
    %v279 = vunpack.c.h.b16 %v66
    %v280 = vunpack.c.l.b16 %v67
    %v281 = vunpack.c.h.b16 %v67
    %v282 = vunpack.c.l.b16 %v68
    %v283 = vunpack.c.h.b16 %v68
    %v284 = vunpack.c.l.b16 %v69
    %v285 = vunpack.c.h.b16 %v69
    %v286 = vunpack.c.l.b16 %v70
    %v287 = vunpack.c.h.b16 %v70
    %v288 = vunpack.c.l.b16 %v71
    %v289 = vunpack.c.h.b16 %v71
    %v290 = vunpack.c.l.b16 %v72
    %v291 = vunpack.c.h.b16 %v72
    %v292 = vunpack.c.l.b16 %v73
    %v293 = vunpack.c.h.b16 %v73
    %v294 = vunpack.c.l.b16 %v74
    %v295 = vunpack.c.h.b16 %v74
    %v296 = vunpack.c.l.b16 %v75
    %v297 = vunpack.c.h.b16 %v75
    %v298 = vunpack.c.l.b16 %v76
    %v299 = vunpack.c.h.b16 %v76
    %v300 = vunpack.c.l.b16 %v77
    %v301 = vunpack.c.h.b16 %v77
    %v302 = vunpack.c.l.b16 %v78
    %v303 = vunpack.c.h.b16 %v78
    %v304 = vunpack.c.l.b16 %v79
    %v305 = vunpack.c.h.b16 %v79
    %v306 = vunpack.c.l.b16 %v80
    %v307 = vunpack.c.h.b16 %v80
    %v308 = vunpack.c.l.b16 %v81
    %v309 = vunpack.c.h.b16 %v81
    %v310 = vunpack.c.l.b16 %v82
    %v311 = vunpack.c.h.b16 %v82
    %v312 = vunpack.c.l.b16 %v83
    %v313 = vunpack.c.h.b16 %v83
    %v314 = vunpack.c.l.b16 %v84
    %v315 = vunpack.c.h.b16 %v84
    %v316 = vunpack.c.l.b16 %v85
    %v317 = vunpack.c.h.b16 %v85
    %v318 = vunpack.c.l.b16 %v86
    %v319 = vunpack.c.h.b16 %v86
    %v320 = vpack.c.b16 %v194, %v192
    %v321 = vpack.c.b16 %v195, %v193
    %v322 = vpack.c.b16 %v198, %v196
    %v323 = vpack.c.b16 %v199, %v197
    %v324 = vpack.c.b16 %v202, %v200
    %v325 = vpack.c.b16 %v203, %v201
    %v326 = vpack.c.b16 %v206, %v204
    %v327 = vpack.c.b16 %v207, %v205
    %v328 = vpack.c.b16 %v210, %v208
    %v329 = vpack.c.b16 %v211, %v209
    %v330 = vpack.c.b16 %v214, %v212
    %v331 = vpack.c.b16 %v215, %v213
    %v332 = vpack.c.b16 %v218, %v216
    %v333 = vpack.c.b16 %v219, %v217
    %v334 = vpack.c.b16 %v222, %v220
    %v335 = vpack.c.b16 %v223, %v221
    %v336 = vpack.c.b16 %v226, %v224
    %v337 = vpack.c.b16 %v227, %v225
    %v338 = vpack.c.b16 %v230, %v228
    %v339 = vpack.c.b16 %v231, %v229
    %v340 = vpack.c.b16 %v234, %v232
    %v341 = vpack.c.b16 %v235, %v233
    %v342 = vpack.c.b16 %v238, %v236
    %v343 = vpack.c.b16 %v239, %v237
    %v344 = vpack.c.b16 %v242, %v240
    %v345 = vpack.c.b16 %v243, %v241
    %v346 = vpack.c.b16 %v246, %v244
    %v347 = vpack.c.b16 %v247, %v245
    %v348 = vpack.c.b16 %v250, %v248
    %v349 = vpack.c.b16 %v251, %v249
    %v350 = vpack.c.b16 %v254, %v252
    %v351 = vpack.c.b16 %v255, %v253
    %v352 = vpack.c.b16 %v258, %v256
    %v353 = vpack.c.b16 %v259, %v257
    %v354 = vpack.c.b16 %v262, %v260
    %v355 = vpack.c.b16 %v263, %v261
    %v356 = vpack.c.b16 %v266, %v264
    %v357 = vpack.c.b16 %v267, %v265
    %v358 = vpack.c.b16 %v270, %v268
    %v359 = vpack.c.b16 %v271, %v269
    %v360 = vpack.c.b16 %v274, %v272
    %v361 = vpack.c.b16 %v275, %v273
    %v362 = vpack.c.b16 %v278, %v276
    %v363 = vpack.c.b16 %v279, %v277
    %v364 = vpack.c.b16 %v282, %v280
    %v365 = vpack.c.b16 %v283, %v281
    %v366 = vpack.c.b16 %v286, %v284
    %v367 = vpack.c.b16 %v287, %v285
    %v368 = vpack.c.b16 %v290, %v288
    %v369 = vpack.c.b16 %v291, %v289
    %v370 = vpack.c.b16 %v294, %v292
    %v371 = vpack.c.b16 %v295, %v293
    %v372 = vpack.c.b16 %v298, %v296
    %v373 = vpack.c.b16 %v299, %v297
    %v374 = vpack.c.b16 %v302, %v300
    %v375 = vpack.c.b16 %v303, %v301
    %v376 = vpack.c.b16 %v306, %v304
    %v377 = vpack.c.b16 %v307, %v305
    %v378 = vpack.c.b16 %v310, %v308
    %v379 = vpack.c.b16 %v311, %v309
    %v380 = vpack.c.b16 %v314, %v312
    %v381 = vpack.c.b16 %v315, %v313
    %v382 = vpack.c.b16 %v318, %v316
    %v383 = vpack.c.b16 %v319, %v317
    %448 = vmatprep.subr.bf16.mxu0 %v321
    %449 = vmatpush1.bf16.msra.mxu0 %v320
    %450 = vmatprep.subr.bf16.mxu0 %v323
    %451 = vmatpush1.bf16.msra.mxu0 %v322
    %452 = vmatprep.subr.bf16.mxu0 %v325
    %453 = vmatpush1.bf16.msra.mxu0 %v324
    %454 = vmatprep.subr.bf16.mxu0 %v327
    %455 = vmatpush1.bf16.msra.mxu0 %v326
    %456 = vmatprep.subr.bf16.mxu0 %v329
    %457 = vmatpush1.bf16.msra.mxu0 %v328
    %458 = vmatprep.subr.bf16.mxu0 %v331
    %459 = vmatpush1.bf16.msra.mxu0 %v330
    %460 = vmatprep.subr.bf16.mxu0 %v333
    %461 = vmatpush1.bf16.msra.mxu0 %v332
    %462 = vmatprep.subr.bf16.mxu0 %v335
    %463 = vmatpush1.bf16.msra.mxu0 %v334
    %464 = vmatprep.subr.bf16.mxu0 %v337
    %465 = vmatpush1.bf16.msra.mxu0 %v336
    %466 = vmatprep.subr.bf16.mxu0 %v339
    %467 = vmatpush1.bf16.msra.mxu0 %v338
    %468 = vmatprep.subr.bf16.mxu0 %v341
    %469 = vmatpush1.bf16.msra.mxu0 %v340
    %470 = vmatprep.subr.bf16.mxu0 %v343
    %471 = vmatpush1.bf16.msra.mxu0 %v342
    %472 = vmatprep.subr.bf16.mxu0 %v345
    %473 = vmatpush1.bf16.msra.mxu0 %v344
    %474 = vmatprep.subr.bf16.mxu0 %v347
    %475 = vmatpush1.bf16.msra.mxu0 %v346
    %476 = vmatprep.subr.bf16.mxu0 %v349
    %477 = vmatpush1.bf16.msra.mxu0 %v348
    %478 = vmatprep.subr.bf16.mxu0 %v351
    %479 = vmatpush1.bf16.msra.mxu0 %v350
    %480 = vmatprep.mubr.bf16.mxu0 %v121
    %481 = vmatmul.mubr.bf16.gmra.mrb[0].mxu0 %v114
    %v482 = vpop.f32.mrb[0].mxu0
    %v483 = vadd.f32 %v92, %v482
    %v484 = vpop.f32.mrb[0].mxu0
    %v485 = vadd.f32 %v96, %v484
    %v486 = vpop.f32.mrb[0].mxu0
    %v487 = vpop.f32.mrb[0].mxu0
    %488 = vdwg.mxu0
    %489 = vmatprep.subr.bf16.mxu0 %v353
    %490 = vmatpush1.bf16.msra.mxu0 %v352
    %491 = vmatprep.subr.bf16.mxu0 %v355
    %492 = vmatpush1.bf16.msra.mxu0 %v354
    %493 = vmatprep.subr.bf16.mxu0 %v357
    %494 = vmatpush1.bf16.msra.mxu0 %v356
    %495 = vmatprep.subr.bf16.mxu0 %v359
    %496 = vmatpush1.bf16.msra.mxu0 %v358
    %497 = vmatprep.subr.bf16.mxu0 %v361
    %498 = vmatpush1.bf16.msra.mxu0 %v360
    %499 = vmatprep.subr.bf16.mxu0 %v363
    %500 = vmatpush1.bf16.msra.mxu0 %v362
    %501 = vmatprep.subr.bf16.mxu0 %v365
    %502 = vmatpush1.bf16.msra.mxu0 %v364
    %503 = vmatprep.subr.bf16.mxu0 %v367
    %504 = vmatpush1.bf16.msra.mxu0 %v366
    %505 = vmatprep.subr.bf16.mxu0 %v369
    %506 = vmatpush1.bf16.msra.mxu0 %v368
    %507 = vmatprep.subr.bf16.mxu0 %v371
    %508 = vmatpush1.bf16.msra.mxu0 %v370
    %509 = vmatprep.subr.bf16.mxu0 %v373
    %510 = vmatpush1.bf16.msra.mxu0 %v372
    %511 = vmatprep.subr.bf16.mxu0 %v375
    %512 = vmatpush1.bf16.msra.mxu0 %v374
    %513 = vmatprep.subr.bf16.mxu0 %v377
    %514 = vmatpush1.bf16.msra.mxu0 %v376
    %515 = vmatprep.subr.bf16.mxu0 %v379
    %516 = vmatpush1.bf16.msra.mxu0 %v378
    %517 = vmatprep.subr.bf16.mxu0 %v381
    %518 = vmatpush1.bf16.msra.mxu0 %v380
    %519 = vmatprep.subr.bf16.mxu0 %v383
    %520 = vmatpush1.bf16.msra.mxu0 %v382
    %521 = vmatprep.mubr.bf16.mxu0 %v123
    %522 = vmatmul.mubr.bf16.gmra.mrb[0].mxu0 %v122
    %v523 = vpop.f32.mrb[0].mxu0
    %v524 = vadd.f32 %v483, %v523
    %v525 = vpop.f32.mrb[0].mxu0
    %v526 = vadd.f32 %v485, %v525
    %v527 = vpop.f32.mrb[0].mxu0
    %v528 = vpop.f32.mrb[0].mxu0
    %529 = vdwg.mxu0
    %v530 = vmax.f32 %v524, 0.0
    %v531 = vmax.f32 %v526, 0.0
    %v532 = vpack.c.bf16 %v530, %v530
    %v533 = vpack.c.bf16 %v531, %v531
    %v534 = vld [vmem:[%s3] sm:$0xf]
    %v535 = vld [vmem:[%s3 + $0x4] sm:$0xf]
    %v536 = vld [vmem:[%s3 + $0x8] sm:$0xf]
    %v537 = vld [vmem:[%s3 + $0xc] sm:$0xf]
    %v538 = vld [vmem:[%s3 + $0x10] sm:$0xf]
    %v539 = vld [vmem:[%s3 + $0x14] sm:$0xf]
    %v540 = vld [vmem:[%s3 + $0x18] sm:$0xf]
    %v541 = vld [vmem:[%s3 + $0x1c] sm:$0xf]
    %v542 = vld [vmem:[%s3 + $0x20] sm:$0xf]
    %v543 = vld [vmem:[%s3 + $0x24] sm:$0xf]
    %v544 = vld [vmem:[%s3 + $0x28] sm:$0xf]
    %v545 = vld [vmem:[%s3 + $0x2c] sm:$0xf]
    %v546 = vld [vmem:[%s3 + $0x30] sm:$0xf]
    %v547 = vld [vmem:[%s3 + $0x34] sm:$0xf]
    %v548 = vld [vmem:[%s3 + $0x38] sm:$0xf]
    %v549 = vld [vmem:[%s3 + $0x3c] sm:$0xf]
    %v550 = vld [vmem:[%s3 + $0x40] sm:$0xf]
    %v551 = vld [vmem:[%s3 + $0x44] sm:$0xf]
    %v552 = vld [vmem:[%s3 + $0x48] sm:$0xf]
    %v553 = vld [vmem:[%s3 + $0x4c] sm:$0xf]
    %v554 = vld [vmem:[%s3 + $0x50] sm:$0xf]
    %v555 = vld [vmem:[%s3 + $0x54] sm:$0xf]
    %v556 = vld [vmem:[%s3 + $0x58] sm:$0xf]
    %v557 = vld [vmem:[%s3 + $0x5c] sm:$0xf]
    %v558 = vld [vmem:[%s3 + $0x60] sm:$0xf]
    %v559 = vld [vmem:[%s3 + $0x64] sm:$0xf]
    %v560 = vld [vmem:[%s3 + $0x68] sm:$0xf]
    %v561 = vld [vmem:[%s3 + $0x6c] sm:$0xf]
    %v562 = vld [vmem:[%s3 + $0x70] sm:$0xf]
    %v563 = vld [vmem:[%s3 + $0x74] sm:$0xf]
    %v564 = vld [vmem:[%s3 + $0x78] sm:$0xf]
    %v565 = vld [vmem:[%s3 + $0x7c] sm:$0xf]
    %v566 = vld [vmem:[%s4] sm:$0x1]
    %v568 = vlaneseq
    %v569 = vshrl.u32 %v568, 7
    %v570 = vsub.s32 0, %v569
    %v571 = vrot.slane %v566, %v570
    %v605 = vunpack.c.l.b16 %v534
    %v606 = vunpack.c.l.b16 %v535
    %v607 = vunpack.c.l.b16 %v536
    %v608 = vunpack.c.l.b16 %v537
    %v609 = vunpack.c.l.b16 %v538
    %v610 = vunpack.c.l.b16 %v539
    %v611 = vunpack.c.l.b16 %v540
    %v612 = vunpack.c.l.b16 %v541
    %v613 = vunpack.c.l.b16 %v542
    %v614 = vunpack.c.l.b16 %v543
    %v615 = vunpack.c.l.b16 %v544
    %v616 = vunpack.c.l.b16 %v545
    %v617 = vunpack.c.l.b16 %v546
    %v618 = vunpack.c.l.b16 %v547
    %v619 = vunpack.c.l.b16 %v548
    %v620 = vunpack.c.l.b16 %v549
    %v621 = vunpack.c.l.b16 %v550
    %v622 = vunpack.c.l.b16 %v551
    %v623 = vunpack.c.l.b16 %v552
    %v624 = vunpack.c.l.b16 %v553
    %v625 = vunpack.c.l.b16 %v554
    %v626 = vunpack.c.l.b16 %v555
    %v627 = vunpack.c.l.b16 %v556
    %v628 = vunpack.c.l.b16 %v557
    %v629 = vunpack.c.l.b16 %v558
    %v630 = vunpack.c.l.b16 %v559
    %v631 = vunpack.c.l.b16 %v560
    %v632 = vunpack.c.l.b16 %v561
    %v633 = vunpack.c.l.b16 %v562
    %v634 = vunpack.c.l.b16 %v563
    %v635 = vunpack.c.l.b16 %v564
    %v636 = vunpack.c.l.b16 %v565
    %v637 = vpack.c.b16 %v606, %v605
    %v638 = vpack.c.b16 %v608, %v607
    %v639 = vpack.c.b16 %v610, %v609
    %v640 = vpack.c.b16 %v612, %v611
    %v641 = vpack.c.b16 %v614, %v613
    %v642 = vpack.c.b16 %v616, %v615
    %v643 = vpack.c.b16 %v618, %v617
    %v644 = vpack.c.b16 %v620, %v619
    %v645 = vpack.c.b16 %v622, %v621
    %v646 = vpack.c.b16 %v624, %v623
    %v647 = vpack.c.b16 %v626, %v625
    %v648 = vpack.c.b16 %v628, %v627
    %v649 = vpack.c.b16 %v630, %v629
    %v650 = vpack.c.b16 %v632, %v631
    %v651 = vpack.c.b16 %v634, %v633
    %v652 = vpack.c.b16 %v636, %v635
    %669 = vmatprep.subr.bf16.mxu0 0
    %670 = vmatpush1.bf16.msra.mxu0 %v637
    %671 = vmatprep.subr.bf16.mxu0 0
    %672 = vmatpush1.bf16.msra.mxu0 %v638
    %673 = vmatprep.subr.bf16.mxu0 0
    %674 = vmatpush1.bf16.msra.mxu0 %v639
    %675 = vmatprep.subr.bf16.mxu0 0
    %676 = vmatpush1.bf16.msra.mxu0 %v640
    %677 = vmatprep.subr.bf16.mxu0 0
    %678 = vmatpush1.bf16.msra.mxu0 %v641
    %679 = vmatprep.subr.bf16.mxu0 0
    %680 = vmatpush1.bf16.msra.mxu0 %v642
    %681 = vmatprep.subr.bf16.mxu0 0
    %682 = vmatpush1.bf16.msra.mxu0 %v643
    %683 = vmatprep.subr.bf16.mxu0 0
    %684 = vmatpush1.bf16.msra.mxu0 %v644
    %685 = vmatprep.subr.bf16.mxu0 0
    %686 = vmatpush1.bf16.msra.mxu0 %v645
    %687 = vmatprep.subr.bf16.mxu0 0
    %688 = vmatpush1.bf16.msra.mxu0 %v646
    %689 = vmatprep.subr.bf16.mxu0 0
    %690 = vmatpush1.bf16.msra.mxu0 %v647
    %691 = vmatprep.subr.bf16.mxu0 0
    %692 = vmatpush1.bf16.msra.mxu0 %v648
    %693 = vmatprep.subr.bf16.mxu0 0
    %694 = vmatpush1.bf16.msra.mxu0 %v649
    %695 = vmatprep.subr.bf16.mxu0 0
    %696 = vmatpush1.bf16.msra.mxu0 %v650
    %697 = vmatprep.subr.bf16.mxu0 0
    %698 = vmatpush1.bf16.msra.mxu0 %v651
    %699 = vmatprep.subr.bf16.mxu0 0
    %700 = vmatpush1.bf16.msra.mxu0 %v652
    %701 = vmatprep.mubr.bf16.mxu0 %v533
    %702 = vmatmul.mubr.bf16.gmra.mrb[0].mxu0 %v532
    %v703 = vpop.f32.mrb[0].mxu0
    %v704 = vadd.f32 %v571, %v703
    %v705 = vpop.f32.mrb[0].mxu0
    %v706 = vpop.f32.mrb[0].mxu0
    %v707 = vpop.f32.mrb[0].mxu0
    %708 = vdwg.mxu0
    %vm709 = vcmask 9216
    %710 = vst.msk [vmem:[#allocation2] sm:$0x3] %vm709, %v704
    // Predicated region
    $region22: #{forward.9} parent=1 // pred_check
      _
    $region23: #{forward.9} parent=1 // pred_check_branch
      %712 = sbr.rel (0) target = $region25
    $region24: #{forward.9} parent=1 // pred_region
      %s714 = ssub.s32 32, 32
      %715 = vsyncadd [#allocation3], %s714
      %s717 = sshll.u32 [#allocation2], 4
      %s718 = int_to_ptr.vmem [resolvable:$true] %s717
      %720 = dma.vmem_to_hbm [thread:$0]  %s718, 32, %s5, [#allocation3]
    $region25: #{forward.9} parent=1 // pred_fallthru
      _
    // Predicated region
    $region26: #{forward.9} parent=1 // pred_check
      _
    $region27: #{forward.9} parent=1 // pred_check_branch
      %722 = sbr.rel (0) target = $region29
    $region28: #{forward.9} parent=1 // pred_region
      %723 = dma.done [#allocation3], 32
    $region29: #{forward.9} parent=1 // pred_fallthru
      _
    %724 = vsyncpa [#allocation3], 1

// kernel: forward.8
$region0: #{forward.8}
  #allocation0 [shape = 'u32[]', space=smem, size = 0x4, offset = 0x4, fixed_abs, tag = 'smem constant byte address 0x4 - core index']
  #allocation1 [shape = 'u32[144,128]{1,0:T(1,128)}', space=vmem, size = 0x12000, scoped, tag = 'internal scratch']
  #allocation2 [shape = 'f32[2,256]{1,0:T(2,128)}', space=vmem, size = 0x800, scoped, tag = 'scratch operand']
  %s0 = inlined_call_operand.vmem [shape: bf16[2,512], index: 0, kind: input, shape index: {}]
  %s1 = inlined_call_operand.vmem [shape: bf16[2,2048], index: 1, kind: input, shape index: {}]
  %s2 = inlined_call_operand.vmem [shape: bf16[2,2], index: 2, kind: input, shape index: {}]
  %s3 = inlined_call_operand.vmem [shape: bf16[2,32], index: 3, kind: input, shape index: {}]
  %s4 = inlined_call_operand.vmem [shape: f32[1,32], index: 4, kind: input, shape index: {}]
  %s5 = inlined_call_operand.vmem [shape: bf16[512,512], index: 5, kind: input, shape index: {}]
  %s6 = inlined_call_operand.vmem [shape: bf16[2048,512], index: 6, kind: input, shape index: {}]
  %s7 = inlined_call_operand.vmem [shape: bf16[32,512], index: 7, kind: input, shape index: {}]
  %s8 = inlined_call_operand.vmem [shape: f32[1,512], index: 8, kind: input, shape index: {}]
  %s9 = inlined_call_operand.vmem [shape: bf16[2,512], index: 9, kind: output, shape index: {}]
  %s10 = sld [smem:[#allocation0]]
  $region191: #{forward.8} parent=0
    _
  %s12 = ssub.s32 1, %s10
  %s13 = scalar_select 0, %s12, %s10
  $region1: #{forward.8} parent=0
    #allocation3 [shape = 'u8[524288]{0}', space=vmem, size = 0x80000, scoped, tag = 'input window, operand 5']
    #allocation4 [shape = 'u8[2097152]{0}', space=vmem, size = 0x200000, scoped, tag = 'input window, operand 6']
    #allocation5 [shape = 'u8[32768]{0}', space=vmem, size = 0x8000, scoped, tag = 'input window, operand 7']
    loop: start=0, step=1, limit=4
    $region2: #{forward.8} parent=1 // loop_pre_header
      _
    $region3: #{forward.8} parent=1 // loop_header
      %s15 = sphi 0, %s19
      %p16 = scmp.ge.s32.totalorder %s15, 4
      %s22 = sphi 0, %s34
      %s23 = sphi 0, %s30
      %s24 = sphi 0, %s22
      %s25 = sphi 0, %s23
      %s26 = sphi 0, %s24
      %s27 = sphi 0, %s25
      %s35 = sphi 0, %s35
      %s37 = sphi 0, %s35
      %s38 = sphi 0, %s37
      %s52 = sphi 0, %s38
      %s58 = sphi 0, %s60
      %s61 = sphi 0, %s58
      %s62 = sphi 0, %s61
      %s78 = sphi 0, %s62
      %s82 = sphi 0, %s82
      %s84 = sphi 0, %s82
      %s85 = sphi 0, %s84
      %s99 = sphi 0, %s85
      %s103 = sphi 0, %s103
      %s105 = sphi 0, %s103
      %s106 = sphi 0, %s105
      %s120 = sphi 0, %s106
      %s124 = sphi 0, %s124
      %s126 = sphi 0, %s124
      %s127 = sphi 0, %s126
      %s141 = sphi 0, %s127
      %s147 = sphi 0, %s149
      %s150 = sphi 0, %s147
      %s151 = sphi 0, %s150
      %s167 = sphi 0, %s151
      %s175 = sphi 0, %s177
      %s178 = sphi 0, %s175
      %s179 = sphi 0, %s178
      %s195 = sphi 0, %s179
      %s201 = sphi 0, %s203
      %s204 = sphi 0, %s201
      %s205 = sphi 0, %s204
      %s221 = sphi 0, %s205
      %s227 = sphi 0, %s229
      %s230 = sphi 0, %s227
      %s231 = sphi 0, %s230
      %s247 = sphi 0, %s231
      %s253 = sphi 0, %s255
      %s256 = sphi 0, %s253
      %s257 = sphi 0, %s256
      %s273 = sphi 0, %s257
    $region4: #{forward.8} parent=1 // loop_header_branch
      %18 = sbr.rel (%p16) target = $region8
    $region5: #{forward.8} parent=1 // loop_body
      %s20 = ssub.s32 %s15, 1
      %s21 = ssub.s32 %s15, 2
      %s28 = sadd.s32 1, %s23
      %p29 = scmp.ge.s32.totalorder %s28, 1
      %s30 = scalar_select %p29, 0, %s28
      %s31 = sadd.s32 1, %s22
      %s32 = scalar_select %p29, %s31, %s22
      %p33 = scmp.ge.s32.totalorder %s32, 2
      %s34 = scalar_select %p33, 0, %s32
      %s36 = sadd.s32 %s35, 1
      %p39 = scmp.eq.s32.totalorder %s15, 1
      %p40 = scmp.ne.s32.totalorder %s35, %s37
      %p41 = scmp.eq.s32.totalorder %s15, 0
      %p42 = por %p40, %p41
      %p43 = scmp.ne.s32.totalorder %s35, %s37
      %p44 = scmp.eq.s32.totalorder %s20, 1
      %p45 = por %p43, %p44
      %p46 = scmp.ne.s32.totalorder %s37, %s38
      %p47 = scmp.eq.s32.totalorder %s20, 0
      %p48 = por %p46, %p47
      %p49 = scmp.ne.s32.totalorder %s37, %s38
      %p50 = scmp.eq.s32.totalorder %s21, 1
      %p51 = por %p49, %p50
      %p53 = scmp.ne.s32.totalorder %s38, %s52
      %p54 = scmp.eq.s32.totalorder %s21, 0
      %p55 = por %p53, %p54
      %s56 = ssub.s32 %s23, %s30
      %p57 = scmp.eq.s32.totalorder %s56, 0
      %s59 = sadd.s32 %s58, 1
      %s60 = scalar_select %p57, %s58, %s59
      %p63 = pneg %p57
      %p64 = scmp.eq.s32.totalorder %s15, 1
      %p65 = por %p63, %p64
      %p66 = scmp.ne.s32.totalorder %s58, %s61
      %p67 = scmp.eq.s32.totalorder %s15, 0
      %p68 = por %p66, %p67
      %p69 = scmp.ne.s32.totalorder %s58, %s61
      %p70 = scmp.eq.s32.totalorder %s20, 1
      %p71 = por %p69, %p70
      %p72 = scmp.ne.s32.totalorder %s61, %s62
      %p73 = scmp.eq.s32.totalorder %s20, 0
      %p74 = por %p72, %p73
      %p75 = scmp.ne.s32.totalorder %s61, %s62
      %p76 = scmp.eq.s32.totalorder %s21, 1
      %p77 = por %p75, %p76
      %p79 = scmp.ne.s32.totalorder %s62, %s78
      %p80 = scmp.eq.s32.totalorder %s21, 0
      %p81 = por %p79, %p80
      %s83 = sadd.s32 %s82, 1
      %p86 = scmp.eq.s32.totalorder %s15, 1
      %p87 = scmp.ne.s32.totalorder %s82, %s84
      %p88 = scmp.eq.s32.totalorder %s15, 0
      %p89 = por %p87, %p88
      %p90 = scmp.ne.s32.totalorder %s82, %s84
      %p91 = scmp.eq.s32.totalorder %s20, 1
      %p92 = por %p90, %p91
      %p93 = scmp.ne.s32.totalorder %s84, %s85
      %p94 = scmp.eq.s32.totalorder %s20, 0
      %p95 = por %p93, %p94
      %p96 = scmp.ne.s32.totalorder %s84, %s85
      %p97 = scmp.eq.s32.totalorder %s21, 1
      %p98 = por %p96, %p97
      %p100 = scmp.ne.s32.totalorder %s85, %s99
      %p101 = scmp.eq.s32.totalorder %s21, 0
      %p102 = por %p100, %p101
      %s104 = sadd.s32 %s103, 1
      %p107 = scmp.eq.s32.totalorder %s15, 1
      %p108 = scmp.ne.s32.totalorder %s103, %s105
      %p109 = scmp.eq.s32.totalorder %s15, 0
      %p110 = por %p108, %p109
      %p111 = scmp.ne.s32.totalorder %s103, %s105
      %p112 = scmp.eq.s32.totalorder %s20, 1
      %p113 = por %p111, %p112
      %p114 = scmp.ne.s32.totalorder %s105, %s106
      %p115 = scmp.eq.s32.totalorder %s20, 0
      %p116 = por %p114, %p115
      %p117 = scmp.ne.s32.totalorder %s105, %s106
      %p118 = scmp.eq.s32.totalorder %s21, 1
      %p119 = por %p117, %p118
      %p121 = scmp.ne.s32.totalorder %s106, %s120
      %p122 = scmp.eq.s32.totalorder %s21, 0
      %p123 = por %p121, %p122
      %s125 = sadd.s32 %s124, 1
      %p128 = scmp.eq.s32.totalorder %s15, 1
      %p129 = scmp.ne.s32.totalorder %s124, %s126
      %p130 = scmp.eq.s32.totalorder %s15, 0
      %p131 = por %p129, %p130
      %p132 = scmp.ne.s32.totalorder %s124, %s126
      %p133 = scmp.eq.s32.totalorder %s20, 1
      %p134 = por %p132, %p133
      %p135 = scmp.ne.s32.totalorder %s126, %s127
      %p136 = scmp.eq.s32.totalorder %s20, 0
      %p137 = por %p135, %p136
      %p138 = scmp.ne.s32.totalorder %s126, %s127
      %p139 = scmp.eq.s32.totalorder %s21, 1
      %p140 = por %p138, %p139
      %p142 = scmp.ne.s32.totalorder %s127, %s141
      %p143 = scmp.eq.s32.totalorder %s21, 0
      %p144 = por %p142, %p143
      %s145 = ssub.s32 %s22, %s34
      %p146 = scmp.eq.s32.totalorder %s145, 0
      %s148 = sadd.s32 %s147, 1
      %s149 = scalar_select %p146, %s147, %s148
      %p152 = pneg %p146
      %p153 = scmp.eq.s32.totalorder %s15, 1
      %p154 = por %p152, %p153
      %p155 = scmp.ne.s32.totalorder %s147, %s150
      %p156 = scmp.eq.s32.totalorder %s15, 0
      %p157 = por %p155, %p156
      %p158 = scmp.ne.s32.totalorder %s147, %s150
      %p159 = scmp.eq.s32.totalorder %s20, 1
      %p160 = por %p158, %p159
      %p161 = scmp.ne.s32.totalorder %s150, %s151
      %p162 = scmp.eq.s32.totalorder %s20, 0
      %p163 = por %p161, %p162
      %p164 = scmp.ne.s32.totalorder %s150, %s151
      %p165 = scmp.eq.s32.totalorder %s21, 1
      %p166 = por %p164, %p165
      %p168 = scmp.ne.s32.totalorder %s151, %s167
      %p169 = scmp.eq.s32.totalorder %s21, 0
      %p170 = por %p168, %p169
      %s171 = ssub.s32 %s23, %s30
      %s172 = ssub.s32 %s22, %s34
      %s173 = sor.u32 %s171, %s172
      %p174 = scmp.eq.s32.totalorder %s173, 0
      %s176 = sadd.s32 %s175, 1
      %s177 = scalar_select %p174, %s175, %s176
      %p180 = pneg %p174
      %p181 = scmp.eq.s32.totalorder %s15, 1
      %p182 = por %p180, %p181
      %p183 = scmp.ne.s32.totalorder %s175, %s178
      %p184 = scmp.eq.s32.totalorder %s15, 0
      %p185 = por %p183, %p184
      %p186 = scmp.ne.s32.totalorder %s175, %s178
      %p187 = scmp.eq.s32.totalorder %s20, 1
      %p188 = por %p186, %p187
      %p189 = scmp.ne.s32.totalorder %s178, %s179
      %p190 = scmp.eq.s32.totalorder %s20, 0
      %p191 = por %p189, %p190
      %p192 = scmp.ne.s32.totalorder %s178, %s179
      %p193 = scmp.eq.s32.totalorder %s21, 1
      %p194 = por %p192, %p193
      %p196 = scmp.ne.s32.totalorder %s179, %s195
      %p197 = scmp.eq.s32.totalorder %s21, 0
      %p198 = por %p196, %p197
      %s199 = ssub.s32 %s22, %s34
      %p200 = scmp.eq.s32.totalorder %s199, 0
      %s202 = sadd.s32 %s201, 1
      %s203 = scalar_select %p200, %s201, %s202
      %p206 = pneg %p200
      %p207 = scmp.eq.s32.totalorder %s15, 1
      %p208 = por %p206, %p207
      %p209 = scmp.ne.s32.totalorder %s201, %s204
      %p210 = scmp.eq.s32.totalorder %s15, 0
      %p211 = por %p209, %p210
      %p212 = scmp.ne.s32.totalorder %s201, %s204
      %p213 = scmp.eq.s32.totalorder %s20, 1
      %p214 = por %p212, %p213
      %p215 = scmp.ne.s32.totalorder %s204, %s205
      %p216 = scmp.eq.s32.totalorder %s20, 0
      %p217 = por %p215, %p216
      %p218 = scmp.ne.s32.totalorder %s204, %s205
      %p219 = scmp.eq.s32.totalorder %s21, 1
      %p220 = por %p218, %p219
      %p222 = scmp.ne.s32.totalorder %s205, %s221
      %p223 = scmp.eq.s32.totalorder %s21, 0
      %p224 = por %p222, %p223
      %s225 = ssub.s32 %s22, %s34
      %p226 = scmp.eq.s32.totalorder %s225, 0
      %s228 = sadd.s32 %s227, 1
      %s229 = scalar_select %p226, %s227, %s228
      %p232 = pneg %p226
      %p233 = scmp.eq.s32.totalorder %s15, 1
      %p234 = por %p232, %p233
      %p235 = scmp.ne.s32.totalorder %s227, %s230
      %p236 = scmp.eq.s32.totalorder %s15, 0
      %p237 = por %p235, %p236
      %p238 = scmp.ne.s32.totalorder %s227, %s230
      %p239 = scmp.eq.s32.totalorder %s20, 1
      %p240 = por %p238, %p239
      %p241 = scmp.ne.s32.totalorder %s230, %s231
      %p242 = scmp.eq.s32.totalorder %s20, 0
      %p243 = por %p241, %p242
      %p244 = scmp.ne.s32.totalorder %s230, %s231
      %p245 = scmp.eq.s32.totalorder %s21, 1
      %p246 = por %p244, %p245
      %p248 = scmp.ne.s32.totalorder %s231, %s247
      %p249 = scmp.eq.s32.totalorder %s21, 0
      %p250 = por %p248, %p249
      %s251 = ssub.s32 %s22, %s34
      %p252 = scmp.eq.s32.totalorder %s251, 0
      %s254 = sadd.s32 %s253, 1
      %s255 = scalar_select %p252, %s253, %s254
      %p258 = pneg %p252
      %p259 = scmp.eq.s32.totalorder %s15, 1
      %p260 = por %p258, %p259
      %p261 = scmp.ne.s32.totalorder %s253, %s256
      %p262 = scmp.eq.s32.totalorder %s15, 0
      %p263 = por %p261, %p262
      %p264 = scmp.ne.s32.totalorder %s253, %s256
      %p265 = scmp.eq.s32.totalorder %s20, 1
      %p266 = por %p264, %p265
      %p267 = scmp.ne.s32.totalorder %s256, %s257
      %p268 = scmp.eq.s32.totalorder %s20, 0
      %p269 = por %p267, %p268
      %p270 = scmp.ne.s32.totalorder %s256, %s257
      %p271 = scmp.eq.s32.totalorder %s21, 1
      %p272 = por %p270, %p271
      %p274 = scmp.ne.s32.totalorder %s257, %s273
      %p275 = scmp.eq.s32.totalorder %s21, 0
      %p276 = por %p274, %p275
      %p277 = scmp.le.s32.totalorder 1, %s15
      %p278 = scmp.lt.s32.totalorder %s15, 3
      %p279 = pnand %p277, %p278
      %p280 = pneg %p279
      // Predicated region
      $region9: #{forward.8} parent=5 // pred_check
        _
      $region10: #{forward.8} parent=5 // pred_check_branch
        %282 = sbr.rel (%p279) target = $region12
      $region11: #{forward.8} parent=5 // pred_region
        %s283 = ssub.s32 %s15, 1
        // Predicated region
        $region13: #{forward.8} parent=11 // pred_check
          %p284 = pneg %p48
        $region14: #{forward.8} parent=11 // pred_check_branch
          %286 = sbr.rel (%p284) target = $region16
        $region15: #{forward.8} parent=11 // pred_region
          _
        $region16: #{forward.8} parent=11 // pred_fallthru
          _
        // Predicated region
        $region17: #{forward.8} parent=11 // pred_check
          %p287 = pneg %p74
        $region18: #{forward.8} parent=11 // pred_check_branch
          %289 = sbr.rel (%p287) target = $region20
        $region19: #{forward.8} parent=11 // pred_region
          %s290 = smul.u32 16, %s25
          %p291 = scmp.lt.s32.totalorder %s290, 15
          %s292 = scalar_select %p291, %s290, 15
          %s293 = scalar_lea.vmem %s1, %s292
          %s294 = smul.u32 16, %s25
        $region20: #{forward.8} parent=11 // pred_fallthru
          _
        // Predicated region
        $region21: #{forward.8} parent=11 // pred_check
          %p295 = pneg %p95
        $region22: #{forward.8} parent=11 // pred_check_branch
          %297 = sbr.rel (%p295) target = $region24
        $region23: #{forward.8} parent=11 // pred_region
          _
        $region24: #{forward.8} parent=11 // pred_fallthru
          _
        // Predicated region
        $region25: #{forward.8} parent=11 // pred_check
          %p298 = pneg %p116
        $region26: #{forward.8} parent=11 // pred_check_branch
          %300 = sbr.rel (%p298) target = $region28
        $region27: #{forward.8} parent=11 // pred_region
          _
        $region28: #{forward.8} parent=11 // pred_fallthru
          _
        // Predicated region
        $region29: #{forward.8} parent=11 // pred_check
          %p301 = pneg %p137
        $region30: #{forward.8} parent=11 // pred_check_branch
          %303 = sbr.rel (%p301) target = $region32
        $region31: #{forward.8} parent=11 // pred_region
          _
        $region32: #{forward.8} parent=11 // pred_fallthru
          _
      $region12: #{forward.8} parent=5 // pred_fallthru
        _
      %p304 = scmp.lt.s32.totalorder %s15, 2
      // Predicated region
      $region33: #{forward.8} parent=5 // pred_check
        %p305 = pneg %p304
      $region34: #{forward.8} parent=5 // pred_check_branch
        %307 = sbr.rel (%p305) target = $region36
      $region35: #{forward.8} parent=5 // pred_region
        // Predicated region
        $region37: #{forward.8} parent=35 // pred_check
          %p308 = pneg %p157
        $region38: #{forward.8} parent=35 // pred_check_branch
          %310 = sbr.rel (%p308) target = $region40
        $region39: #{forward.8} parent=35 // pred_region
          %s311 = sand.u32 %s147, 1
          %s312 = sand.u32 %s147, 1
          %s313 = smul.addr %s312, 512
          %s314 = scalar_lea.vmem [#allocation3], %s313
          %s315 = smul.u32 2, %s22
          %s316 = smul.addr %s315, 4
          %s317 = scalar_lea.vmem %s5, %s316
          // Predicated region
          $region41: #{forward.8} parent=39 // pred_check
            _
          $region42: #{forward.8} parent=39 // pred_check_branch
            %319 = sbr.rel (0) target = $region44
          $region43: #{forward.8} parent=39 // pred_region
            // Predicated region
            $region45: #{forward.8} parent=43 // pred_check
              _
            $region46: #{forward.8} parent=43 // pred_check_branch
              %321 = sbr.rel (0) target = $region48
            $region47: #{forward.8} parent=43 // pred_region
              // Predicated region
              $region60: #{forward.8} parent=47 // pred_check
                _
              $region61: #{forward.8} parent=47 // pred_check_branch
                %462 = sbr.rel (0) target = $region63
              $region62: #{forward.8} parent=47 // pred_region
                loop: start=0, step=1, limit=1
                $region64: #{forward.8} parent=62 // loop_pre_header
                  _
                $region65: #{forward.8} parent=62 // loop_header
                  %s464 = sphi 0, %s468
                  %p465 = scmp.ge.s32.totalorder %s464, 1
                  %s469 = sphi %s317, %s317
                  %s470 = sphi %s314, %s314
                $region66: #{forward.8} parent=62 // loop_header_branch
                  %467 = sbr.rel (%p465) target = $region70
                $region67: #{forward.8} parent=62 // loop_body
                  %v471 = vld [vmem:[%s469] sm:$0xff]
                  %472 = vst [vmem:[%s470] sm:$0xff] %v471
                  %v473 = vld [vmem:[%s469 + $0x10] sm:$0xff]
                  %474 = vst [vmem:[%s470 + $0x8] sm:$0xff] %v473
                  %v475 = vld [vmem:[%s469 + $0x20] sm:$0xff]
                  %476 = vst [vmem:[%s470 + $0x10] sm:$0xff] %v475
                  %v477 = vld [vmem:[%s469 + $0x30] sm:$0xff]
                  %478 = vst [vmem:[%s470 + $0x18] sm:$0xff] %v477
                  %v479 = vld [vmem:[%s469 + $0x40] sm:$0xff]
                  %480 = vst [vmem:[%s470 + $0x20] sm:$0xff] %v479
                  %v481 = vld [vmem:[%s469 + $0x50] sm:$0xff]
                  %482 = vst [vmem:[%s470 + $0x28] sm:$0xff] %v481
                  %v483 = vld [vmem:[%s469 + $0x60] sm:$0xff]
                  %484 = vst [vmem:[%s470 + $0x30] sm:$0xff] %v483
                  %v485 = vld [vmem:[%s469 + $0x70] sm:$0xff]
                  %486 = vst [vmem:[%s470 + $0x38] sm:$0xff] %v485
                  %v487 = vld [vmem:[%s469 + $0x80] sm:$0xff]
                  %488 = vst [vmem:[%s470 + $0x40] sm:$0xff] %v487
                  %v489 = vld [vmem:[%s469 + $0x90] sm:$0xff]
                  %490 = vst [vmem:[%s470 + $0x48] sm:$0xff] %v489
                  %v491 = vld [vmem:[%s469 + $0xa0] sm:$0xff]
                  %492 = vst [vmem:[%s470 + $0x50] sm:$0xff] %v491
                  %v493 = vld [vmem:[%s469 + $0xb0] sm:$0xff]
                  %494 = vst [vmem:[%s470 + $0x58] sm:$0xff] %v493
                  %v495 = vld [vmem:[%s469 + $0xc0] sm:$0xff]
                  %496 = vst [vmem:[%s470 + $0x60] sm:$0xff] %v495
                  %v497 = vld [vmem:[%s469 + $0xd0] sm:$0xff]
                  %498 = vst [vmem:[%s470 + $0x68] sm:$0xff] %v497
                  %v499 = vld [vmem:[%s469 + $0xe0] sm:$0xff]
                  %500 = vst [vmem:[%s470 + $0x70] sm:$0xff] %v499
                  %v501 = vld [vmem:[%s469 + $0xf0] sm:$0xff]
                  %502 = vst [vmem:[%s470 + $0x78] sm:$0xff] %v501
                  %v503 = vld [vmem:[%s469 + $0x100] sm:$0xff]
                  %504 = vst [vmem:[%s470 + $0x80] sm:$0xff] %v503
                  %v505 = vld [vmem:[%s469 + $0x110] sm:$0xff]
                  %506 = vst [vmem:[%s470 + $0x88] sm:$0xff] %v505
                  %v507 = vld [vmem:[%s469 + $0x120] sm:$0xff]
                  %508 = vst [vmem:[%s470 + $0x90] sm:$0xff] %v507
                  %v509 = vld [vmem:[%s469 + $0x130] sm:$0xff]
                  %510 = vst [vmem:[%s470 + $0x98] sm:$0xff] %v509
                  %v511 = vld [vmem:[%s469 + $0x140] sm:$0xff]
                  %512 = vst [vmem:[%s470 + $0xa0] sm:$0xff] %v511
                  %v513 = vld [vmem:[%s469 + $0x150] sm:$0xff]
                  %514 = vst [vmem:[%s470 + $0xa8] sm:$0xff] %v513
                  %v515 = vld [vmem:[%s469 + $0x160] sm:$0xff]
                  %516 = vst [vmem:[%s470 + $0xb0] sm:$0xff] %v515
                  %v517 = vld [vmem:[%s469 + $0x170] sm:$0xff]
                  %518 = vst [vmem:[%s470 + $0xb8] sm:$0xff] %v517
                  %v519 = vld [vmem:[%s469 + $0x180] sm:$0xff]
                  %520 = vst [vmem:[%s470 + $0xc0] sm:$0xff] %v519
                  %v521 = vld [vmem:[%s469 + $0x190] sm:$0xff]
                  %522 = vst [vmem:[%s470 + $0xc8] sm:$0xff] %v521
                  %v523 = vld [vmem:[%s469 + $0x1a0] sm:$0xff]
                  %524 = vst [vmem:[%s470 + $0xd0] sm:$0xff] %v523
                  %v525 = vld [vmem:[%s469 + $0x1b0] sm:$0xff]
                  %526 = vst [vmem:[%s470 + $0xd8] sm:$0xff] %v525
                  %v527 = vld [vmem:[%s469 + $0x1c0] sm:$0xff]
                  %528 = vst [vmem:[%s470 + $0xe0] sm:$0xff] %v527
                  %v529 = vld [vmem:[%s469 + $0x1d0] sm:$0xff]
                  %530 = vst [vmem:[%s470 + $0xe8] sm:$0xff] %v529
                  %v531 = vld [vmem:[%s469 + $0x1e0] sm:$0xff]
                  %532 = vst [vmem:[%s470 + $0xf0] sm:$0xff] %v531
                  %v533 = vld [vmem:[%s469 + $0x1f0] sm:$0xff]
                  %534 = vst [vmem:[%s470 + $0xf8] sm:$0xff] %v533
                  %v535 = vld [vmem:[%s469 + $0x200] sm:$0xff]
                  %536 = vst [vmem:[%s470 + $0x100] sm:$0xff] %v535
                  %v537 = vld [vmem:[%s469 + $0x210] sm:$0xff]
                  %538 = vst [vmem:[%s470 + $0x108] sm:$0xff] %v537
                  %v539 = vld [vmem:[%s469 + $0x220] sm:$0xff]
                  %540 = vst [vmem:[%s470 + $0x110] sm:$0xff] %v539
                  %v541 = vld [vmem:[%s469 + $0x230] sm:$0xff]
                  %542 = vst [vmem:[%s470 + $0x118] sm:$0xff] %v541
                  %v543 = vld [vmem:[%s469 + $0x240] sm:$0xff]
                  %544 = vst [vmem:[%s470 + $0x120] sm:$0xff] %v543
                  %v545 = vld [vmem:[%s469 + $0x250] sm:$0xff]
                  %546 = vst [vmem:[%s470 + $0x128] sm:$0xff] %v545
                  %v547 = vld [vmem:[%s469 + $0x260] sm:$0xff]
                  %548 = vst [vmem:[%s470 + $0x130] sm:$0xff] %v547
                  %v549 = vld [vmem:[%s469 + $0x270] sm:$0xff]
                  %550 = vst [vmem:[%s470 + $0x138] sm:$0xff] %v549
                  %v551 = vld [vmem:[%s469 + $0x280] sm:$0xff]
                  %552 = vst [vmem:[%s470 + $0x140] sm:$0xff] %v551
                  %v553 = vld [vmem:[%s469 + $0x290] sm:$0xff]
                  %554 = vst [vmem:[%s470 + $0x148] sm:$0xff] %v553
                  %v555 = vld [vmem:[%s469 + $0x2a0] sm:$0xff]
                  %556 = vst [vmem:[%s470 + $0x150] sm:$0xff] %v555
                  %v557 = vld [vmem:[%s469 + $0x2b0] sm:$0xff]
                  %558 = vst [vmem:[%s470 + $0x158] sm:$0xff] %v557
                  %v559 = vld [vmem:[%s469 + $0x2c0] sm:$0xff]
                  %560 = vst [vmem:[%s470 + $0x160] sm:$0xff] %v559
                  %v561 = vld [vmem:[%s469 + $0x2d0] sm:$0xff]
                  %562 = vst [vmem:[%s470 + $0x168] sm:$0xff] %v561
                  %v563 = vld [vmem:[%s469 + $0x2e0] sm:$0xff]
                  %564 = vst [vmem:[%s470 + $0x170] sm:$0xff] %v563
                  %v565 = vld [vmem:[%s469 + $0x2f0] sm:$0xff]
                  %566 = vst [vmem:[%s470 + $0x178] sm:$0xff] %v565
                  %v567 = vld [vmem:[%s469 + $0x300] sm:$0xff]
                  %568 = vst [vmem:[%s470 + $0x180] sm:$0xff] %v567
                  %v569 = vld [vmem:[%s469 + $0x310] sm:$0xff]
                  %570 = vst [vmem:[%s470 + $0x188] sm:$0xff] %v569
                  %v571 = vld [vmem:[%s469 + $0x320] sm:$0xff]
                  %572 = vst [vmem:[%s470 + $0x190] sm:$0xff] %v571
                  %v573 = vld [vmem:[%s469 + $0x330] sm:$0xff]
                  %574 = vst [vmem:[%s470 + $0x198] sm:$0xff] %v573
                  %v575 = vld [vmem:[%s469 + $0x340] sm:$0xff]
                  %576 = vst [vmem:[%s470 + $0x1a0] sm:$0xff] %v575
                  %v577 = vld [vmem:[%s469 + $0x350] sm:$0xff]
                  %578 = vst [vmem:[%s470 + $0x1a8] sm:$0xff] %v577
                  %v579 = vld [vmem:[%s469 + $0x360] sm:$0xff]
                  %580 = vst [vmem:[%s470 + $0x1b0] sm:$0xff] %v579
                  %v581 = vld [vmem:[%s469 + $0x370] sm:$0xff]
                  %582 = vst [vmem:[%s470 + $0x1b8] sm:$0xff] %v581
                  %v583 = vld [vmem:[%s469 + $0x380] sm:$0xff]
                  %584 = vst [vmem:[%s470 + $0x1c0] sm:$0xff] %v583
                  %v585 = vld [vmem:[%s469 + $0x390] sm:$0xff]
                  %586 = vst [vmem:[%s470 + $0x1c8] sm:$0xff] %v585
                  %v587 = vld [vmem:[%s469 + $0x3a0] sm:$0xff]
                  %588 = vst [vmem:[%s470 + $0x1d0] sm:$0xff] %v587
                  %v589 = vld [vmem:[%s469 + $0x3b0] sm:$0xff]
                  %590 = vst [vmem:[%s470 + $0x1d8] sm:$0xff] %v589
                  %v591 = vld [vmem:[%s469 + $0x3c0] sm:$0xff]
                  %592 = vst [vmem:[%s470 + $0x1e0] sm:$0xff] %v591
                  %v593 = vld [vmem:[%s469 + $0x3d0] sm:$0xff]
                  %594 = vst [vmem:[%s470 + $0x1e8] sm:$0xff] %v593
                  %v595 = vld [vmem:[%s469 + $0x3e0] sm:$0xff]
                  %596 = vst [vmem:[%s470 + $0x1f0] sm:$0xff] %v595
                  %v597 = vld [vmem:[%s469 + $0x3f0] sm:$0xff]
                  %598 = vst [vmem:[%s470 + $0x1f8] sm:$0xff] %v597
                $region68: #{forward.8} parent=62 // loop_footer
                  %s468 = sadd.s32 1, %s464
                $region69: #{forward.8} parent=62 // loop_footer_branch
                  %463 = sbr.rel target = $region65
                $region70: #{forward.8} parent=62 // loop_exit
                  _
              $region63: #{forward.8} parent=47 // pred_fallthru
                _
              // Predicated region
              $region71: #{forward.8} parent=47 // pred_check
                _
              $region72: #{forward.8} parent=47 // pred_check_branch
                %600 = sbr.rel target = $region74
              $region73: #{forward.8} parent=47 // pred_region
                _
              $region74: #{forward.8} parent=47 // pred_fallthru
                _
            $region48: #{forward.8} parent=43 // pred_fallthru
              _
            // Predicated region
            $region49: #{forward.8} parent=43 // pred_check
              _
            $region50: #{forward.8} parent=43 // pred_check_branch
              %323 = sbr.rel target = $region52
            $region51: #{forward.8} parent=43 // pred_region
              loop: start=0, step=1, limit=1
              $region53: #{forward.8} parent=51 // loop_pre_header
                _
              $region54: #{forward.8} parent=51 // loop_header
                %s326 = sphi 0, %s330
                %p327 = scmp.ge.s32.totalorder %s326, 1
                %s331 = sphi %s317, %s317
                %s332 = sphi %s314, %s314
              $region55: #{forward.8} parent=51 // loop_header_branch
                %329 = sbr.rel (%p327) target = $region59
              $region56: #{forward.8} parent=51 // loop_body
                %v333 = vld [vmem:[%s331] sm:$0xff]
                %334 = vst [vmem:[%s332] sm:$0xff] %v333
                %v335 = vld [vmem:[%s331 + $0x10] sm:$0xff]
                %336 = vst [vmem:[%s332 + $0x8] sm:$0xff] %v335
                %v337 = vld [vmem:[%s331 + $0x20] sm:$0xff]
                %338 = vst [vmem:[%s332 + $0x10] sm:$0xff] %v337
                %v339 = vld [vmem:[%s331 + $0x30] sm:$0xff]
                %340 = vst [vmem:[%s332 + $0x18] sm:$0xff] %v339
                %v341 = vld [vmem:[%s331 + $0x40] sm:$0xff]
                %342 = vst [vmem:[%s332 + $0x20] sm:$0xff] %v341
                %v343 = vld [vmem:[%s331 + $0x50] sm:$0xff]
                %344 = vst [vmem:[%s332 + $0x28] sm:$0xff] %v343
                %v345 = vld [vmem:[%s331 + $0x60] sm:$0xff]
                %346 = vst [vmem:[%s332 + $0x30] sm:$0xff] %v345
                %v347 = vld [vmem:[%s331 + $0x70] sm:$0xff]
                %348 = vst [vmem:[%s332 + $0x38] sm:$0xff] %v347
                %v349 = vld [vmem:[%s331 + $0x80] sm:$0xff]
                %350 = vst [vmem:[%s332 + $0x40] sm:$0xff] %v349
                %v351 = vld [vmem:[%s331 + $0x90] sm:$0xff]
                %352 = vst [vmem:[%s332 + $0x48] sm:$0xff] %v351
                %v353 = vld [vmem:[%s331 + $0xa0] sm:$0xff]
                %354 = vst [vmem:[%s332 + $0x50] sm:$0xff] %v353
                %v355 = vld [vmem:[%s331 + $0xb0] sm:$0xff]
                %356 = vst [vmem:[%s332 + $0x58] sm:$0xff] %v355
                %v357 = vld [vmem:[%s331 + $0xc0] sm:$0xff]
                %358 = vst [vmem:[%s332 + $0x60] sm:$0xff] %v357
                %v359 = vld [vmem:[%s331 + $0xd0] sm:$0xff]
                %360 = vst [vmem:[%s332 + $0x68] sm:$0xff] %v359
                %v361 = vld [vmem:[%s331 + $0xe0] sm:$0xff]
                %362 = vst [vmem:[%s332 + $0x70] sm:$0xff] %v361
                %v363 = vld [vmem:[%s331 + $0xf0] sm:$0xff]
                %364 = vst [vmem:[%s332 + $0x78] sm:$0xff] %v363
                %v365 = vld [vmem:[%s331 + $0x100] sm:$0xff]
                %366 = vst [vmem:[%s332 + $0x80] sm:$0xff] %v365
                %v367 = vld [vmem:[%s331 + $0x110] sm:$0xff]
                %368 = vst [vmem:[%s332 + $0x88] sm:$0xff] %v367
                %v369 = vld [vmem:[%s331 + $0x120] sm:$0xff]
                %370 = vst [vmem:[%s332 + $0x90] sm:$0xff] %v369
                %v371 = vld [vmem:[%s331 + $0x130] sm:$0xff]
                %372 = vst [vmem:[%s332 + $0x98] sm:$0xff] %v371
                %v373 = vld [vmem:[%s331 + $0x140] sm:$0xff]
                %374 = vst [vmem:[%s332 + $0xa0] sm:$0xff] %v373
                %v375 = vld [vmem:[%s331 + $0x150] sm:$0xff]
                %376 = vst [vmem:[%s332 + $0xa8] sm:$0xff] %v375
                %v377 = vld [vmem:[%s331 + $0x160] sm:$0xff]
                %378 = vst [vmem:[%s332 + $0xb0] sm:$0xff] %v377
                %v379 = vld [vmem:[%s331 + $0x170] sm:$0xff]
                %380 = vst [vmem:[%s332 + $0xb8] sm:$0xff] %v379
                %v381 = vld [vmem:[%s331 + $0x180] sm:$0xff]
                %382 = vst [vmem:[%s332 + $0xc0] sm:$0xff] %v381
                %v383 = vld [vmem:[%s331 + $0x190] sm:$0xff]
                %384 = vst [vmem:[%s332 + $0xc8] sm:$0xff] %v383
                %v385 = vld [vmem:[%s331 + $0x1a0] sm:$0xff]
                %386 = vst [vmem:[%s332 + $0xd0] sm:$0xff] %v385
                %v387 = vld [vmem:[%s331 + $0x1b0] sm:$0xff]
                %388 = vst [vmem:[%s332 + $0xd8] sm:$0xff] %v387
                %v389 = vld [vmem:[%s331 + $0x1c0] sm:$0xff]
                %390 = vst [vmem:[%s332 + $0xe0] sm:$0xff] %v389
                %v391 = vld [vmem:[%s331 + $0x1d0] sm:$0xff]
                %392 = vst [vmem:[%s332 + $0xe8] sm:$0xff] %v391
                %v393 = vld [vmem:[%s331 + $0x1e0] sm:$0xff]
                %394 = vst [vmem:[%s332 + $0xf0] sm:$0xff] %v393
                %v395 = vld [vmem:[%s331 + $0x1f0] sm:$0xff]
                %396 = vst [vmem:[%s332 + $0xf8] sm:$0xff] %v395
                %v397 = vld [vmem:[%s331 + $0x200] sm:$0xff]
                %398 = vst [vmem:[%s332 + $0x100] sm:$0xff] %v397
                %v399 = vld [vmem:[%s331 + $0x210] sm:$0xff]
                %400 = vst [vmem:[%s332 + $0x108] sm:$0xff] %v399
                %v401 = vld [vmem:[%s331 + $0x220] sm:$0xff]
                %402 = vst [vmem:[%s332 + $0x110] sm:$0xff] %v401
                %v403 = vld [vmem:[%s331 + $0x230] sm:$0xff]
                %404 = vst [vmem:[%s332 + $0x118] sm:$0xff] %v403
                %v405 = vld [vmem:[%s331 + $0x240] sm:$0xff]
                %406 = vst [vmem:[%s332 + $0x120] sm:$0xff] %v405
                %v407 = vld [vmem:[%s331 + $0x250] sm:$0xff]
                %408 = vst [vmem:[%s332 + $0x128] sm:$0xff] %v407
                %v409 = vld [vmem:[%s331 + $0x260] sm:$0xff]
                %410 = vst [vmem:[%s332 + $0x130] sm:$0xff] %v409
                %v411 = vld [vmem:[%s331 + $0x270] sm:$0xff]
                %412 = vst [vmem:[%s332 + $0x138] sm:$0xff] %v411
                %v413 = vld [vmem:[%s331 + $0x280] sm:$0xff]
                %414 = vst [vmem:[%s332 + $0x140] sm:$0xff] %v413
                %v415 = vld [vmem:[%s331 + $0x290] sm:$0xff]
                %416 = vst [vmem:[%s332 + $0x148] sm:$0xff] %v415
                %v417 = vld [vmem:[%s331 + $0x2a0] sm:$0xff]
                %418 = vst [vmem:[%s332 + $0x150] sm:$0xff] %v417
                %v419 = vld [vmem:[%s331 + $0x2b0] sm:$0xff]
                %420 = vst [vmem:[%s332 + $0x158] sm:$0xff] %v419
                %v421 = vld [vmem:[%s331 + $0x2c0] sm:$0xff]
                %422 = vst [vmem:[%s332 + $0x160] sm:$0xff] %v421
                %v423 = vld [vmem:[%s331 + $0x2d0] sm:$0xff]
                %424 = vst [vmem:[%s332 + $0x168] sm:$0xff] %v423
                %v425 = vld [vmem:[%s331 + $0x2e0] sm:$0xff]
                %426 = vst [vmem:[%s332 + $0x170] sm:$0xff] %v425
                %v427 = vld [vmem:[%s331 + $0x2f0] sm:$0xff]
                %428 = vst [vmem:[%s332 + $0x178] sm:$0xff] %v427
                %v429 = vld [vmem:[%s331 + $0x300] sm:$0xff]
                %430 = vst [vmem:[%s332 + $0x180] sm:$0xff] %v429
                %v431 = vld [vmem:[%s331 + $0x310] sm:$0xff]
                %432 = vst [vmem:[%s332 + $0x188] sm:$0xff] %v431
                %v433 = vld [vmem:[%s331 + $0x320] sm:$0xff]
                %434 = vst [vmem:[%s332 + $0x190] sm:$0xff] %v433
                %v435 = vld [vmem:[%s331 + $0x330] sm:$0xff]
                %436 = vst [vmem:[%s332 + $0x198] sm:$0xff] %v435
                %v437 = vld [vmem:[%s331 + $0x340] sm:$0xff]
                %438 = vst [vmem:[%s332 + $0x1a0] sm:$0xff] %v437
                %v439 = vld [vmem:[%s331 + $0x350] sm:$0xff]
                %440 = vst [vmem:[%s332 + $0x1a8] sm:$0xff] %v439
                %v441 = vld [vmem:[%s331 + $0x360] sm:$0xff]
                %442 = vst [vmem:[%s332 + $0x1b0] sm:$0xff] %v441
                %v443 = vld [vmem:[%s331 + $0x370] sm:$0xff]
                %444 = vst [vmem:[%s332 + $0x1b8] sm:$0xff] %v443
                %v445 = vld [vmem:[%s331 + $0x380] sm:$0xff]
                %446 = vst [vmem:[%s332 + $0x1c0] sm:$0xff] %v445
                %v447 = vld [vmem:[%s331 + $0x390] sm:$0xff]
                %448 = vst [vmem:[%s332 + $0x1c8] sm:$0xff] %v447
                %v449 = vld [vmem:[%s331 + $0x3a0] sm:$0xff]
                %450 = vst [vmem:[%s332 + $0x1d0] sm:$0xff] %v449
                %v451 = vld [vmem:[%s331 + $0x3b0] sm:$0xff]
                %452 = vst [vmem:[%s332 + $0x1d8] sm:$0xff] %v451
                %v453 = vld [vmem:[%s331 + $0x3c0] sm:$0xff]
                %454 = vst [vmem:[%s332 + $0x1e0] sm:$0xff] %v453
                %v455 = vld [vmem:[%s331 + $0x3d0] sm:$0xff]
                %456 = vst [vmem:[%s332 + $0x1e8] sm:$0xff] %v455
                %v457 = vld [vmem:[%s331 + $0x3e0] sm:$0xff]
                %458 = vst [vmem:[%s332 + $0x1f0] sm:$0xff] %v457
                %v459 = vld [vmem:[%s331 + $0x3f0] sm:$0xff]
                %460 = vst [vmem:[%s332 + $0x1f8] sm:$0xff] %v459
              $region57: #{forward.8} parent=51 // loop_footer
                %s330 = sadd.s32 1, %s326
              $region58: #{forward.8} parent=51 // loop_footer_branch
                %325 = sbr.rel target = $region54
              $region59: #{forward.8} parent=51 // loop_exit
                _
            $region52: #{forward.8} parent=43 // pred_fallthru
              _
          $region44: #{forward.8} parent=39 // pred_fallthru
            _
          %601 = vnop
        $region40: #{forward.8} parent=35 // pred_fallthru
          _
        // Predicated region
        $region75: #{forward.8} parent=35 // pred_check
          %p602 = pneg %p185
        $region76: #{forward.8} parent=35 // pred_check_branch
          %604 = sbr.rel (%p602) target = $region78
        $region77: #{forward.8} parent=35 // pred_region
          %s605 = sand.u32 %s175, 1
          %s606 = sand.u32 %s175, 1
          %s607 = smul.addr %s606, 2048
          %s608 = scalar_lea.vmem [#allocation4], %s607
          %s609 = smul.u32 256, %s23
          %s610 = smul.u32 2, %s22
          %s611 = smul.addr %s609, 4
          %s612 = sadd.s32 %s610, %s611
          %s613 = smul.addr %s612, 4
          %s614 = scalar_lea.vmem %s6, %s613
          // Predicated region
          $region79: #{forward.8} parent=77 // pred_check
            _
          $region80: #{forward.8} parent=77 // pred_check_branch
            %616 = sbr.rel (0) target = $region82
          $region81: #{forward.8} parent=77 // pred_region
            // Predicated region
            $region83: #{forward.8} parent=81 // pred_check
              _
            $region84: #{forward.8} parent=81 // pred_check_branch
              %618 = sbr.rel (0) target = $region86
            $region85: #{forward.8} parent=81 // pred_region
              // Predicated region
              $region98: #{forward.8} parent=85 // pred_check
                _
              $region99: #{forward.8} parent=85 // pred_check_branch
                %1143 = sbr.rel (0) target = $region101
              $region100: #{forward.8} parent=85 // pred_region
                loop: start=0, step=1, limit=1
                $region102: #{forward.8} parent=100 // loop_pre_header
                  _
                $region103: #{forward.8} parent=100 // loop_header
                  %s1145 = sphi 0, %s1149
                  %p1146 = scmp.ge.s32.totalorder %s1145, 1
                  %s1150 = sphi %s614, %s614
                  %s1151 = sphi %s608, %s608
                $region104: #{forward.8} parent=100 // loop_header_branch
                  %1148 = sbr.rel (%p1146) target = $region108
                $region105: #{forward.8} parent=100 // loop_body
                  %v1152 = vld [vmem:[%s1150] sm:$0xff]
                  %1153 = vst [vmem:[%s1151] sm:$0xff] %v1152
                  %v1154 = vld [vmem:[%s1150 + $0x10] sm:$0xff]
                  %1155 = vst [vmem:[%s1151 + $0x8] sm:$0xff] %v1154
                  %v1156 = vld [vmem:[%s1150 + $0x20] sm:$0xff]
                  %1157 = vst [vmem:[%s1151 + $0x10] sm:$0xff] %v1156
                  %v1158 = vld [vmem:[%s1150 + $0x30] sm:$0xff]
                  %1159 = vst [vmem:[%s1151 + $0x18] sm:$0xff] %v1158
                  %v1160 = vld [vmem:[%s1150 + $0x40] sm:$0xff]
                  %1161 = vst [vmem:[%s1151 + $0x20] sm:$0xff] %v1160
                  %v1162 = vld [vmem:[%s1150 + $0x50] sm:$0xff]
                  %1163 = vst [vmem:[%s1151 + $0x28] sm:$0xff] %v1162
                  %v1164 = vld [vmem:[%s1150 + $0x60] sm:$0xff]
                  %1165 = vst [vmem:[%s1151 + $0x30] sm:$0xff] %v1164
                  %v1166 = vld [vmem:[%s1150 + $0x70] sm:$0xff]
                  %1167 = vst [vmem:[%s1151 + $0x38] sm:$0xff] %v1166
                  %v1168 = vld [vmem:[%s1150 + $0x80] sm:$0xff]
                  %1169 = vst [vmem:[%s1151 + $0x40] sm:$0xff] %v1168
                  %v1170 = vld [vmem:[%s1150 + $0x90] sm:$0xff]
                  %1171 = vst [vmem:[%s1151 + $0x48] sm:$0xff] %v1170
                  %v1172 = vld [vmem:[%s1150 + $0xa0] sm:$0xff]
                  %1173 = vst [vmem:[%s1151 + $0x50] sm:$0xff] %v1172
                  %v1174 = vld [vmem:[%s1150 + $0xb0] sm:$0xff]
                  %1175 = vst [vmem:[%s1151 + $0x58] sm:$0xff] %v1174
                  %v1176 = vld [vmem:[%s1150 + $0xc0] sm:$0xff]
                  %1177 = vst [vmem:[%s1151 + $0x60] sm:$0xff] %v1176
                  %v1178 = vld [vmem:[%s1150 + $0xd0] sm:$0xff]
                  %1179 = vst [vmem:[%s1151 + $0x68] sm:$0xff] %v1178
                  %v1180 = vld [vmem:[%s1150 + $0xe0] sm:$0xff]
                  %1181 = vst [vmem:[%s1151 + $0x70] sm:$0xff] %v1180
                  %v1182 = vld [vmem:[%s1150 + $0xf0] sm:$0xff]
                  %1183 = vst [vmem:[%s1151 + $0x78] sm:$0xff] %v1182
                  %v1184 = vld [vmem:[%s1150 + $0x100] sm:$0xff]
                  %1185 = vst [vmem:[%s1151 + $0x80] sm:$0xff] %v1184
                  %v1186 = vld [vmem:[%s1150 + $0x110] sm:$0xff]
                  %1187 = vst [vmem:[%s1151 + $0x88] sm:$0xff] %v1186
                  %v1188 = vld [vmem:[%s1150 + $0x120] sm:$0xff]
                  %1189 = vst [vmem:[%s1151 + $0x90] sm:$0xff] %v1188
                  %v1190 = vld [vmem:[%s1150 + $0x130] sm:$0xff]
                  %1191 = vst [vmem:[%s1151 + $0x98] sm:$0xff] %v1190
                  %v1192 = vld [vmem:[%s1150 + $0x140] sm:$0xff]
                  %1193 = vst [vmem:[%s1151 + $0xa0] sm:$0xff] %v1192
                  %v1194 = vld [vmem:[%s1150 + $0x150] sm:$0xff]
                  %1195 = vst [vmem:[%s1151 + $0xa8] sm:$0xff] %v1194
                  %v1196 = vld [vmem:[%s1150 + $0x160] sm:$0xff]
                  %1197 = vst [vmem:[%s1151 + $0xb0] sm:$0xff] %v1196
                  %v1198 = vld [vmem:[%s1150 + $0x170] sm:$0xff]
                  %1199 = vst [vmem:[%s1151 + $0xb8] sm:$0xff] %v1198
                  %v1200 = vld [vmem:[%s1150 + $0x180] sm:$0xff]
                  %1201 = vst [vmem:[%s1151 + $0xc0] sm:$0xff] %v1200
                  %v1202 = vld [vmem:[%s1150 + $0x190] sm:$0xff]
                  %1203 = vst [vmem:[%s1151 + $0xc8] sm:$0xff] %v1202
                  %v1204 = vld [vmem:[%s1150 + $0x1a0] sm:$0xff]
                  %1205 = vst [vmem:[%s1151 + $0xd0] sm:$0xff] %v1204
                  %v1206 = vld [vmem:[%s1150 + $0x1b0] sm:$0xff]
                  %1207 = vst [vmem:[%s1151 + $0xd8] sm:$0xff] %v1206
                  %v1208 = vld [vmem:[%s1150 + $0x1c0] sm:$0xff]
                  %1209 = vst [vmem:[%s1151 + $0xe0] sm:$0xff] %v1208
                  %v1210 = vld [vmem:[%s1150 + $0x1d0] sm:$0xff]
                  %1211 = vst [vmem:[%s1151 + $0xe8] sm:$0xff] %v1210
                  %v1212 = vld [vmem:[%s1150 + $0x1e0] sm:$0xff]
                  %1213 = vst [vmem:[%s1151 + $0xf0] sm:$0xff] %v1212
                  %v1214 = vld [vmem:[%s1150 + $0x1f0] sm:$0xff]
                  %1215 = vst [vmem:[%s1151 + $0xf8] sm:$0xff] %v1214
                  %v1216 = vld [vmem:[%s1150 + $0x200] sm:$0xff]
                  %1217 = vst [vmem:[%s1151 + $0x100] sm:$0xff] %v1216
                  %v1218 = vld [vmem:[%s1150 + $0x210] sm:$0xff]
                  %1219 = vst [vmem:[%s1151 + $0x108] sm:$0xff] %v1218
                  %v1220 = vld [vmem:[%s1150 + $0x220] sm:$0xff]
                  %1221 = vst [vmem:[%s1151 + $0x110] sm:$0xff] %v1220
                  %v1222 = vld [vmem:[%s1150 + $0x230] sm:$0xff]
                  %1223 = vst [vmem:[%s1151 + $0x118] sm:$0xff] %v1222
                  %v1224 = vld [vmem:[%s1150 + $0x240] sm:$0xff]
                  %1225 = vst [vmem:[%s1151 + $0x120] sm:$0xff] %v1224
                  %v1226 = vld [vmem:[%s1150 + $0x250] sm:$0xff]
                  %1227 = vst [vmem:[%s1151 + $0x128] sm:$0xff] %v1226
                  %v1228 = vld [vmem:[%s1150 + $0x260] sm:$0xff]
                  %1229 = vst [vmem:[%s1151 + $0x130] sm:$0xff] %v1228
                  %v1230 = vld [vmem:[%s1150 + $0x270] sm:$0xff]
                  %1231 = vst [vmem:[%s1151 + $0x138] sm:$0xff] %v1230
                  %v1232 = vld [vmem:[%s1150 + $0x280] sm:$0xff]
                  %1233 = vst [vmem:[%s1151 + $0x140] sm:$0xff] %v1232
                  %v1234 = vld [vmem:[%s1150 + $0x290] sm:$0xff]
                  %1235 = vst [vmem:[%s1151 + $0x148] sm:$0xff] %v1234
                  %v1236 = vld [vmem:[%s1150 + $0x2a0] sm:$0xff]
                  %1237 = vst [vmem:[%s1151 + $0x150] sm:$0xff] %v1236
                  %v1238 = vld [vmem:[%s1150 + $0x2b0] sm:$0xff]
                  %1239 = vst [vmem:[%s1151 + $0x158] sm:$0xff] %v1238
                  %v1240 = vld [vmem:[%s1150 + $0x2c0] sm:$0xff]
                  %1241 = vst [vmem:[%s1151 + $0x160] sm:$0xff] %v1240
                  %v1242 = vld [vmem:[%s1150 + $0x2d0] sm:$0xff]
                  %1243 = vst [vmem:[%s1151 + $0x168] sm:$0xff] %v1242
                  %v1244 = vld [vmem:[%s1150 + $0x2e0] sm:$0xff]
                  %1245 = vst [vmem:[%s1151 + $0x170] sm:$0xff] %v1244
                  %v1246 = vld [vmem:[%s1150 + $0x2f0] sm:$0xff]
                  %1247 = vst [vmem:[%s1151 + $0x178] sm:$0xff] %v1246
                  %v1248 = vld [vmem:[%s1150 + $0x300] sm:$0xff]
                  %1249 = vst [vmem:[%s1151 + $0x180] sm:$0xff] %v1248
                  %v1250 = vld [vmem:[%s1150 + $0x310] sm:$0xff]
                  %1251 = vst [vmem:[%s1151 + $0x188] sm:$0xff] %v1250
                  %v1252 = vld [vmem:[%s1150 + $0x320] sm:$0xff]
                  %1253 = vst [vmem:[%s1151 + $0x190] sm:$0xff] %v1252
                  %v1254 = vld [vmem:[%s1150 + $0x330] sm:$0xff]
                  %1255 = vst [vmem:[%s1151 + $0x198] sm:$0xff] %v1254
                  %v1256 = vld [vmem:[%s1150 + $0x340] sm:$0xff]
                  %1257 = vst [vmem:[%s1151 + $0x1a0] sm:$0xff] %v1256
                  %v1258 = vld [vmem:[%s1150 + $0x350] sm:$0xff]
                  %1259 = vst [vmem:[%s1151 + $0x1a8] sm:$0xff] %v1258
                  %v1260 = vld [vmem:[%s1150 + $0x360] sm:$0xff]
                  %1261 = vst [vmem:[%s1151 + $0x1b0] sm:$0xff] %v1260
                  %v1262 = vld [vmem:[%s1150 + $0x370] sm:$0xff]
                  %1263 = vst [vmem:[%s1151 + $0x1b8] sm:$0xff] %v1262
                  %v1264 = vld [vmem:[%s1150 + $0x380] sm:$0xff]
                  %1265 = vst [vmem:[%s1151 + $0x1c0] sm:$0xff] %v1264
                  %v1266 = vld [vmem:[%s1150 + $0x390] sm:$0xff]
                  %1267 = vst [vmem:[%s1151 + $0x1c8] sm:$0xff] %v1266
                  %v1268 = vld [vmem:[%s1150 + $0x3a0] sm:$0xff]
                  %1269 = vst [vmem:[%s1151 + $0x1d0] sm:$0xff] %v1268
                  %v1270 = vld [vmem:[%s1150 + $0x3b0] sm:$0xff]
                  %1271 = vst [vmem:[%s1151 + $0x1d8] sm:$0xff] %v1270
                  %v1272 = vld [vmem:[%s1150 + $0x3c0] sm:$0xff]
                  %1273 = vst [vmem:[%s1151 + $0x1e0] sm:$0xff] %v1272
                  %v1274 = vld [vmem:[%s1150 + $0x3d0] sm:$0xff]
                  %1275 = vst [vmem:[%s1151 + $0x1e8] sm:$0xff] %v1274
                  %v1276 = vld [vmem:[%s1150 + $0x3e0] sm:$0xff]
                  %1277 = vst [vmem:[%s1151 + $0x1f0] sm:$0xff] %v1276
                  %v1278 = vld [vmem:[%s1150 + $0x3f0] sm:$0xff]
                  %1279 = vst [vmem:[%s1151 + $0x1f8] sm:$0xff] %v1278
                  %v1280 = vld [vmem:[%s1150 + $0x400] sm:$0xff]
                  %1281 = vst [vmem:[%s1151 + $0x200] sm:$0xff] %v1280
                  %v1282 = vld [vmem:[%s1150 + $0x410] sm:$0xff]
                  %1283 = vst [vmem:[%s1151 + $0x208] sm:$0xff] %v1282
                  %v1284 = vld [vmem:[%s1150 + $0x420] sm:$0xff]
                  %1285 = vst [vmem:[%s1151 + $0x210] sm:$0xff] %v1284
                  %v1286 = vld [vmem:[%s1150 + $0x430] sm:$0xff]
                  %1287 = vst [vmem:[%s1151 + $0x218] sm:$0xff] %v1286
                  %v1288 = vld [vmem:[%s1150 + $0x440] sm:$0xff]
                  %1289 = vst [vmem:[%s1151 + $0x220] sm:$0xff] %v1288
                  %v1290 = vld [vmem:[%s1150 + $0x450] sm:$0xff]
                  %1291 = vst [vmem:[%s1151 + $0x228] sm:$0xff] %v1290
                  %v1292 = vld [vmem:[%s1150 + $0x460] sm:$0xff]
                  %1293 = vst [vmem:[%s1151 + $0x230] sm:$0xff] %v1292
                  %v1294 = vld [vmem:[%s1150 + $0x470] sm:$0xff]
                  %1295 = vst [vmem:[%s1151 + $0x238] sm:$0xff] %v1294
                  %v1296 = vld [vmem:[%s1150 + $0x480] sm:$0xff]
                  %1297 = vst [vmem:[%s1151 + $0x240] sm:$0xff] %v1296
                  %v1298 = vld [vmem:[%s1150 + $0x490] sm:$0xff]
                  %1299 = vst [vmem:[%s1151 + $0x248] sm:$0xff] %v1298
                  %v1300 = vld [vmem:[%s1150 + $0x4a0] sm:$0xff]
                  %1301 = vst [vmem:[%s1151 + $0x250] sm:$0xff] %v1300
                  %v1302 = vld [vmem:[%s1150 + $0x4b0] sm:$0xff]
                  %1303 = vst [vmem:[%s1151 + $0x258] sm:$0xff] %v1302
                  %v1304 = vld [vmem:[%s1150 + $0x4c0] sm:$0xff]
                  %1305 = vst [vmem:[%s1151 + $0x260] sm:$0xff] %v1304
                  %v1306 = vld [vmem:[%s1150 + $0x4d0] sm:$0xff]
                  %1307 = vst [vmem:[%s1151 + $0x268] sm:$0xff] %v1306
                  %v1308 = vld [vmem:[%s1150 + $0x4e0] sm:$0xff]
                  %1309 = vst [vmem:[%s1151 + $0x270] sm:$0xff] %v1308
                  %v1310 = vld [vmem:[%s1150 + $0x4f0] sm:$0xff]
                  %1311 = vst [vmem:[%s1151 + $0x278] sm:$0xff] %v1310
                  %v1312 = vld [vmem:[%s1150 + $0x500] sm:$0xff]
                  %1313 = vst [vmem:[%s1151 + $0x280] sm:$0xff] %v1312
                  %v1314 = vld [vmem:[%s1150 + $0x510] sm:$0xff]
                  %1315 = vst [vmem:[%s1151 + $0x288] sm:$0xff] %v1314
                  %v1316 = vld [vmem:[%s1150 + $0x520] sm:$0xff]
                  %1317 = vst [vmem:[%s1151 + $0x290] sm:$0xff] %v1316
                  %v1318 = vld [vmem:[%s1150 + $0x530] sm:$0xff]
                  %1319 = vst [vmem:[%s1151 + $0x298] sm:$0xff] %v1318
                  %v1320 = vld [vmem:[%s1150 + $0x540] sm:$0xff]
                  %1321 = vst [vmem:[%s1151 + $0x2a0] sm:$0xff] %v1320
                  %v1322 = vld [vmem:[%s1150 + $0x550] sm:$0xff]
                  %1323 = vst [vmem:[%s1151 + $0x2a8] sm:$0xff] %v1322
                  %v1324 = vld [vmem:[%s1150 + $0x560] sm:$0xff]
                  %1325 = vst [vmem:[%s1151 + $0x2b0] sm:$0xff] %v1324
                  %v1326 = vld [vmem:[%s1150 + $0x570] sm:$0xff]
                  %1327 = vst [vmem:[%s1151 + $0x2b8] sm:$0xff] %v1326
                  %v1328 = vld [vmem:[%s1150 + $0x580] sm:$0xff]
                  %1329 = vst [vmem:[%s1151 + $0x2c0] sm:$0xff] %v1328
                  %v1330 = vld [vmem:[%s1150 + $0x590] sm:$0xff]
                  %1331 = vst [vmem:[%s1151 + $0x2c8] sm:$0xff] %v1330
                  %v1332 = vld [vmem:[%s1150 + $0x5a0] sm:$0xff]
                  %1333 = vst [vmem:[%s1151 + $0x2d0] sm:$0xff] %v1332
                  %v1334 = vld [vmem:[%s1150 + $0x5b0] sm:$0xff]
                  %1335 = vst [vmem:[%s1151 + $0x2d8] sm:$0xff] %v1334
                  %v1336 = vld [vmem:[%s1150 + $0x5c0] sm:$0xff]
                  %1337 = vst [vmem:[%s1151 + $0x2e0] sm:$0xff] %v1336
                  %v1338 = vld [vmem:[%s1150 + $0x5d0] sm:$0xff]
                  %1339 = vst [vmem:[%s1151 + $0x2e8] sm:$0xff] %v1338
                  %v1340 = vld [vmem:[%s1150 + $0x5e0] sm:$0xff]
                  %1341 = vst [vmem:[%s1151 + $0x2f0] sm:$0xff] %v1340
                  %v1342 = vld [vmem:[%s1150 + $0x5f0] sm:$0xff]
                  %1343 = vst [vmem:[%s1151 + $0x2f8] sm:$0xff] %v1342
                  %v1344 = vld [vmem:[%s1150 + $0x600] sm:$0xff]
                  %1345 = vst [vmem:[%s1151 + $0x300] sm:$0xff] %v1344
                  %v1346 = vld [vmem:[%s1150 + $0x610] sm:$0xff]
                  %1347 = vst [vmem:[%s1151 + $0x308] sm:$0xff] %v1346
                  %v1348 = vld [vmem:[%s1150 + $0x620] sm:$0xff]
                  %1349 = vst [vmem:[%s1151 + $0x310] sm:$0xff] %v1348
                  %v1350 = vld [vmem:[%s1150 + $0x630] sm:$0xff]
                  %1351 = vst [vmem:[%s1151 + $0x318] sm:$0xff] %v1350
                  %v1352 = vld [vmem:[%s1150 + $0x640] sm:$0xff]
                  %1353 = vst [vmem:[%s1151 + $0x320] sm:$0xff] %v1352
                  %v1354 = vld [vmem:[%s1150 + $0x650] sm:$0xff]
                  %1355 = vst [vmem:[%s1151 + $0x328] sm:$0xff] %v1354
                  %v1356 = vld [vmem:[%s1150 + $0x660] sm:$0xff]
                  %1357 = vst [vmem:[%s1151 + $0x330] sm:$0xff] %v1356
                  %v1358 = vld [vmem:[%s1150 + $0x670] sm:$0xff]
                  %1359 = vst [vmem:[%s1151 + $0x338] sm:$0xff] %v1358
                  %v1360 = vld [vmem:[%s1150 + $0x680] sm:$0xff]
                  %1361 = vst [vmem:[%s1151 + $0x340] sm:$0xff] %v1360
                  %v1362 = vld [vmem:[%s1150 + $0x690] sm:$0xff]
                  %1363 = vst [vmem:[%s1151 + $0x348] sm:$0xff] %v1362
                  %v1364 = vld [vmem:[%s1150 + $0x6a0] sm:$0xff]
                  %1365 = vst [vmem:[%s1151 + $0x350] sm:$0xff] %v1364
                  %v1366 = vld [vmem:[%s1150 + $0x6b0] sm:$0xff]
                  %1367 = vst [vmem:[%s1151 + $0x358] sm:$0xff] %v1366
                  %v1368 = vld [vmem:[%s1150 + $0x6c0] sm:$0xff]
                  %1369 = vst [vmem:[%s1151 + $0x360] sm:$0xff] %v1368
                  %v1370 = vld [vmem:[%s1150 + $0x6d0] sm:$0xff]
                  %1371 = vst [vmem:[%s1151 + $0x368] sm:$0xff] %v1370
                  %v1372 = vld [vmem:[%s1150 + $0x6e0] sm:$0xff]
                  %1373 = vst [vmem:[%s1151 + $0x370] sm:$0xff] %v1372
                  %v1374 = vld [vmem:[%s1150 + $0x6f0] sm:$0xff]
                  %1375 = vst [vmem:[%s1151 + $0x378] sm:$0xff] %v1374
                  %v1376 = vld [vmem:[%s1150 + $0x700] sm:$0xff]
                  %1377 = vst [vmem:[%s1151 + $0x380] sm:$0xff] %v1376
                  %v1378 = vld [vmem:[%s1150 + $0x710] sm:$0xff]
                  %1379 = vst [vmem:[%s1151 + $0x388] sm:$0xff] %v1378
                  %v1380 = vld [vmem:[%s1150 + $0x720] sm:$0xff]
                  %1381 = vst [vmem:[%s1151 + $0x390] sm:$0xff] %v1380
                  %v1382 = vld [vmem:[%s1150 + $0x730] sm:$0xff]
                  %1383 = vst [vmem:[%s1151 + $0x398] sm:$0xff] %v1382
                  %v1384 = vld [vmem:[%s1150 + $0x740] sm:$0xff]
                  %1385 = vst [vmem:[%s1151 + $0x3a0] sm:$0xff] %v1384
                  %v1386 = vld [vmem:[%s1150 + $0x750] sm:$0xff]
                  %1387 = vst [vmem:[%s1151 + $0x3a8] sm:$0xff] %v1386
                  %v1388 = vld [vmem:[%s1150 + $0x760] sm:$0xff]
                  %1389 = vst [vmem:[%s1151 + $0x3b0] sm:$0xff] %v1388
                  %v1390 = vld [vmem:[%s1150 + $0x770] sm:$0xff]
                  %1391 = vst [vmem:[%s1151 + $0x3b8] sm:$0xff] %v1390
                  %v1392 = vld [vmem:[%s1150 + $0x780] sm:$0xff]
                  %1393 = vst [vmem:[%s1151 + $0x3c0] sm:$0xff] %v1392
                  %v1394 = vld [vmem:[%s1150 + $0x790] sm:$0xff]
                  %1395 = vst [vmem:[%s1151 + $0x3c8] sm:$0xff] %v1394
                  %v1396 = vld [vmem:[%s1150 + $0x7a0] sm:$0xff]
                  %1397 = vst [vmem:[%s1151 + $0x3d0] sm:$0xff] %v1396
                  %v1398 = vld [vmem:[%s1150 + $0x7b0] sm:$0xff]
                  %1399 = vst [vmem:[%s1151 + $0x3d8] sm:$0xff] %v1398
                  %v1400 = vld [vmem:[%s1150 + $0x7c0] sm:$0xff]
                  %1401 = vst [vmem:[%s1151 + $0x3e0] sm:$0xff] %v1400
                  %v1402 = vld [vmem:[%s1150 + $0x7d0] sm:$0xff]
                  %1403 = vst [vmem:[%s1151 + $0x3e8] sm:$0xff] %v1402
                  %v1404 = vld [vmem:[%s1150 + $0x7e0] sm:$0xff]
                  %1405 = vst [vmem:[%s1151 + $0x3f0] sm:$0xff] %v1404
                  %v1406 = vld [vmem:[%s1150 + $0x7f0] sm:$0xff]
                  %1407 = vst [vmem:[%s1151 + $0x3f8] sm:$0xff] %v1406
                  %v1408 = vld [vmem:[%s1150 + $0x800] sm:$0xff]
                  %1409 = vst [vmem:[%s1151 + $0x400] sm:$0xff] %v1408
                  %v1410 = vld [vmem:[%s1150 + $0x810] sm:$0xff]
                  %1411 = vst [vmem:[%s1151 + $0x408] sm:$0xff] %v1410
                  %v1412 = vld [vmem:[%s1150 + $0x820] sm:$0xff]
                  %1413 = vst [vmem:[%s1151 + $0x410] sm:$0xff] %v1412
                  %v1414 = vld [vmem:[%s1150 + $0x830] sm:$0xff]
                  %1415 = vst [vmem:[%s1151 + $0x418] sm:$0xff] %v1414
                  %v1416 = vld [vmem:[%s1150 + $0x840] sm:$0xff]
                  %1417 = vst [vmem:[%s1151 + $0x420] sm:$0xff] %v1416
                  %v1418 = vld [vmem:[%s1150 + $0x850] sm:$0xff]
                  %1419 = vst [vmem:[%s1151 + $0x428] sm:$0xff] %v1418
                  %v1420 = vld [vmem:[%s1150 + $0x860] sm:$0xff]
                  %1421 = vst [vmem:[%s1151 + $0x430] sm:$0xff] %v1420
                  %v1422 = vld [vmem:[%s1150 + $0x870] sm:$0xff]
                  %1423 = vst [vmem:[%s1151 + $0x438] sm:$0xff] %v1422
                  %v1424 = vld [vmem:[%s1150 + $0x880] sm:$0xff]
                  %1425 = vst [vmem:[%s1151 + $0x440] sm:$0xff] %v1424
                  %v1426 = vld [vmem:[%s1150 + $0x890] sm:$0xff]
                  %1427 = vst [vmem:[%s1151 + $0x448] sm:$0xff] %v1426
                  %v1428 = vld [vmem:[%s1150 + $0x8a0] sm:$0xff]
                  %1429 = vst [vmem:[%s1151 + $0x450] sm:$0xff] %v1428
                  %v1430 = vld [vmem:[%s1150 + $0x8b0] sm:$0xff]
                  %1431 = vst [vmem:[%s1151 + $0x458] sm:$0xff] %v1430
                  %v1432 = vld [vmem:[%s1150 + $0x8c0] sm:$0xff]
                  %1433 = vst [vmem:[%s1151 + $0x460] sm:$0xff] %v1432
                  %v1434 = vld [vmem:[%s1150 + $0x8d0] sm:$0xff]
                  %1435 = vst [vmem:[%s1151 + $0x468] sm:$0xff] %v1434
                  %v1436 = vld [vmem:[%s1150 + $0x8e0] sm:$0xff]
                  %1437 = vst [vmem:[%s1151 + $0x470] sm:$0xff] %v1436
                  %v1438 = vld [vmem:[%s1150 + $0x8f0] sm:$0xff]
                  %1439 = vst [vmem:[%s1151 + $0x478] sm:$0xff] %v1438
                  %v1440 = vld [vmem:[%s1150 + $0x900] sm:$0xff]
                  %1441 = vst [vmem:[%s1151 + $0x480] sm:$0xff] %v1440
                  %v1442 = vld [vmem:[%s1150 + $0x910] sm:$0xff]
                  %1443 = vst [vmem:[%s1151 + $0x488] sm:$0xff] %v1442
                  %v1444 = vld [vmem:[%s1150 + $0x920] sm:$0xff]
                  %1445 = vst [vmem:[%s1151 + $0x490] sm:$0xff] %v1444
                  %v1446 = vld [vmem:[%s1150 + $0x930] sm:$0xff]
                  %1447 = vst [vmem:[%s1151 + $0x498] sm:$0xff] %v1446
                  %v1448 = vld [vmem:[%s1150 + $0x940] sm:$0xff]
                  %1449 = vst [vmem:[%s1151 + $0x4a0] sm:$0xff] %v1448
                  %v1450 = vld [vmem:[%s1150 + $0x950] sm:$0xff]
                  %1451 = vst [vmem:[%s1151 + $0x4a8] sm:$0xff] %v1450
                  %v1452 = vld [vmem:[%s1150 + $0x960] sm:$0xff]
                  %1453 = vst [vmem:[%s1151 + $0x4b0] sm:$0xff] %v1452
                  %v1454 = vld [vmem:[%s1150 + $0x970] sm:$0xff]
                  %1455 = vst [vmem:[%s1151 + $0x4b8] sm:$0xff] %v1454
                  %v1456 = vld [vmem:[%s1150 + $0x980] sm:$0xff]
                  %1457 = vst [vmem:[%s1151 + $0x4c0] sm:$0xff] %v1456
                  %v1458 = vld [vmem:[%s1150 + $0x990] sm:$0xff]
                  %1459 = vst [vmem:[%s1151 + $0x4c8] sm:$0xff] %v1458
                  %v1460 = vld [vmem:[%s1150 + $0x9a0] sm:$0xff]
                  %1461 = vst [vmem:[%s1151 + $0x4d0] sm:$0xff] %v1460
                  %v1462 = vld [vmem:[%s1150 + $0x9b0] sm:$0xff]
                  %1463 = vst [vmem:[%s1151 + $0x4d8] sm:$0xff] %v1462
                  %v1464 = vld [vmem:[%s1150 + $0x9c0] sm:$0xff]
                  %1465 = vst [vmem:[%s1151 + $0x4e0] sm:$0xff] %v1464
                  %v1466 = vld [vmem:[%s1150 + $0x9d0] sm:$0xff]
                  %1467 = vst [vmem:[%s1151 + $0x4e8] sm:$0xff] %v1466
                  %v1468 = vld [vmem:[%s1150 + $0x9e0] sm:$0xff]
                  %1469 = vst [vmem:[%s1151 + $0x4f0] sm:$0xff] %v1468
                  %v1470 = vld [vmem:[%s1150 + $0x9f0] sm:$0xff]
                  %1471 = vst [vmem:[%s1151 + $0x4f8] sm:$0xff] %v1470
                  %v1472 = vld [vmem:[%s1150 + $0xa00] sm:$0xff]
                  %1473 = vst [vmem:[%s1151 + $0x500] sm:$0xff] %v1472
                  %v1474 = vld [vmem:[%s1150 + $0xa10] sm:$0xff]
                  %1475 = vst [vmem:[%s1151 + $0x508] sm:$0xff] %v1474
                  %v1476 = vld [vmem:[%s1150 + $0xa20] sm:$0xff]
                  %1477 = vst [vmem:[%s1151 + $0x510] sm:$0xff] %v1476
                  %v1478 = vld [vmem:[%s1150 + $0xa30] sm:$0xff]
                  %1479 = vst [vmem:[%s1151 + $0x518] sm:$0xff] %v1478
                  %v1480 = vld [vmem:[%s1150 + $0xa40] sm:$0xff]
                  %1481 = vst [vmem:[%s1151 + $0x520] sm:$0xff] %v1480
                  %v1482 = vld [vmem:[%s1150 + $0xa50] sm:$0xff]
                  %1483 = vst [vmem:[%s1151 + $0x528] sm:$0xff] %v1482
                  %v1484 = vld [vmem:[%s1150 + $0xa60] sm:$0xff]
                  %1485 = vst [vmem:[%s1151 + $0x530] sm:$0xff] %v1484
                  %v1486 = vld [vmem:[%s1150 + $0xa70] sm:$0xff]
                  %1487 = vst [vmem:[%s1151 + $0x538] sm:$0xff] %v1486
                  %v1488 = vld [vmem:[%s1150 + $0xa80] sm:$0xff]
                  %1489 = vst [vmem:[%s1151 + $0x540] sm:$0xff] %v1488
                  %v1490 = vld [vmem:[%s1150 + $0xa90] sm:$0xff]
                  %1491 = vst [vmem:[%s1151 + $0x548] sm:$0xff] %v1490
                  %v1492 = vld [vmem:[%s1150 + $0xaa0] sm:$0xff]
                  %1493 = vst [vmem:[%s1151 + $0x550] sm:$0xff] %v1492
                  %v1494 = vld [vmem:[%s1150 + $0xab0] sm:$0xff]
                  %1495 = vst [vmem:[%s1151 + $0x558] sm:$0xff] %v1494
                  %v1496 = vld [vmem:[%s1150 + $0xac0] sm:$0xff]
                  %1497 = vst [vmem:[%s1151 + $0x560] sm:$0xff] %v1496
                  %v1498 = vld [vmem:[%s1150 + $0xad0] sm:$0xff]
                  %1499 = vst [vmem:[%s1151 + $0x568] sm:$0xff] %v1498
                  %v1500 = vld [vmem:[%s1150 + $0xae0] sm:$0xff]
                  %1501 = vst [vmem:[%s1151 + $0x570] sm:$0xff] %v1500
                  %v1502 = vld [vmem:[%s1150 + $0xaf0] sm:$0xff]
                  %1503 = vst [vmem:[%s1151 + $0x578] sm:$0xff] %v1502
                  %v1504 = vld [vmem:[%s1150 + $0xb00] sm:$0xff]
                  %1505 = vst [vmem:[%s1151 + $0x580] sm:$0xff] %v1504
                  %v1506 = vld [vmem:[%s1150 + $0xb10] sm:$0xff]
                  %1507 = vst [vmem:[%s1151 + $0x588] sm:$0xff] %v1506
                  %v1508 = vld [vmem:[%s1150 + $0xb20] sm:$0xff]
                  %1509 = vst [vmem:[%s1151 + $0x590] sm:$0xff] %v1508
                  %v1510 = vld [vmem:[%s1150 + $0xb30] sm:$0xff]
                  %1511 = vst [vmem:[%s1151 + $0x598] sm:$0xff] %v1510
                  %v1512 = vld [vmem:[%s1150 + $0xb40] sm:$0xff]
                  %1513 = vst [vmem:[%s1151 + $0x5a0] sm:$0xff] %v1512
                  %v1514 = vld [vmem:[%s1150 + $0xb50] sm:$0xff]
                  %1515 = vst [vmem:[%s1151 + $0x5a8] sm:$0xff] %v1514
                  %v1516 = vld [vmem:[%s1150 + $0xb60] sm:$0xff]
                  %1517 = vst [vmem:[%s1151 + $0x5b0] sm:$0xff] %v1516
                  %v1518 = vld [vmem:[%s1150 + $0xb70] sm:$0xff]
                  %1519 = vst [vmem:[%s1151 + $0x5b8] sm:$0xff] %v1518
                  %v1520 = vld [vmem:[%s1150 + $0xb80] sm:$0xff]
                  %1521 = vst [vmem:[%s1151 + $0x5c0] sm:$0xff] %v1520
                  %v1522 = vld [vmem:[%s1150 + $0xb90] sm:$0xff]
                  %1523 = vst [vmem:[%s1151 + $0x5c8] sm:$0xff] %v1522
                  %v1524 = vld [vmem:[%s1150 + $0xba0] sm:$0xff]
                  %1525 = vst [vmem:[%s1151 + $0x5d0] sm:$0xff] %v1524
                  %v1526 = vld [vmem:[%s1150 + $0xbb0] sm:$0xff]
                  %1527 = vst [vmem:[%s1151 + $0x5d8] sm:$0xff] %v1526
                  %v1528 = vld [vmem:[%s1150 + $0xbc0] sm:$0xff]
                  %1529 = vst [vmem:[%s1151 + $0x5e0] sm:$0xff] %v1528
                  %v1530 = vld [vmem:[%s1150 + $0xbd0] sm:$0xff]
                  %1531 = vst [vmem:[%s1151 + $0x5e8] sm:$0xff] %v1530
                  %v1532 = vld [vmem:[%s1150 + $0xbe0] sm:$0xff]
                  %1533 = vst [vmem:[%s1151 + $0x5f0] sm:$0xff] %v1532
                  %v1534 = vld [vmem:[%s1150 + $0xbf0] sm:$0xff]
                  %1535 = vst [vmem:[%s1151 + $0x5f8] sm:$0xff] %v1534
                  %v1536 = vld [vmem:[%s1150 + $0xc00] sm:$0xff]
                  %1537 = vst [vmem:[%s1151 + $0x600] sm:$0xff] %v1536
                  %v1538 = vld [vmem:[%s1150 + $0xc10] sm:$0xff]
                  %1539 = vst [vmem:[%s1151 + $0x608] sm:$0xff] %v1538
                  %v1540 = vld [vmem:[%s1150 + $0xc20] sm:$0xff]
                  %1541 = vst [vmem:[%s1151 + $0x610] sm:$0xff] %v1540
                  %v1542 = vld [vmem:[%s1150 + $0xc30] sm:$0xff]
                  %1543 = vst [vmem:[%s1151 + $0x618] sm:$0xff] %v1542
                  %v1544 = vld [vmem:[%s1150 + $0xc40] sm:$0xff]
                  %1545 = vst [vmem:[%s1151 + $0x620] sm:$0xff] %v1544
                  %v1546 = vld [vmem:[%s1150 + $0xc50] sm:$0xff]
                  %1547 = vst [vmem:[%s1151 + $0x628] sm:$0xff] %v1546
                  %v1548 = vld [vmem:[%s1150 + $0xc60] sm:$0xff]
                  %1549 = vst [vmem:[%s1151 + $0x630] sm:$0xff] %v1548
                  %v1550 = vld [vmem:[%s1150 + $0xc70] sm:$0xff]
                  %1551 = vst [vmem:[%s1151 + $0x638] sm:$0xff] %v1550
                  %v1552 = vld [vmem:[%s1150 + $0xc80] sm:$0xff]
                  %1553 = vst [vmem:[%s1151 + $0x640] sm:$0xff] %v1552
                  %v1554 = vld [vmem:[%s1150 + $0xc90] sm:$0xff]
                  %1555 = vst [vmem:[%s1151 + $0x648] sm:$0xff] %v1554
                  %v1556 = vld [vmem:[%s1150 + $0xca0] sm:$0xff]
                  %1557 = vst [vmem:[%s1151 + $0x650] sm:$0xff] %v1556
                  %v1558 = vld [vmem:[%s1150 + $0xcb0] sm:$0xff]
                  %1559 = vst [vmem:[%s1151 + $0x658] sm:$0xff] %v1558
                  %v1560 = vld [vmem:[%s1150 + $0xcc0] sm:$0xff]
                  %1561 = vst [vmem:[%s1151 + $0x660] sm:$0xff] %v1560
                  %v1562 = vld [vmem:[%s1150 + $0xcd0] sm:$0xff]
                  %1563 = vst [vmem:[%s1151 + $0x668] sm:$0xff] %v1562
                  %v1564 = vld [vmem:[%s1150 + $0xce0] sm:$0xff]
                  %1565 = vst [vmem:[%s1151 + $0x670] sm:$0xff] %v1564
                  %v1566 = vld [vmem:[%s1150 + $0xcf0] sm:$0xff]
                  %1567 = vst [vmem:[%s1151 + $0x678] sm:$0xff] %v1566
                  %v1568 = vld [vmem:[%s1150 + $0xd00] sm:$0xff]
                  %1569 = vst [vmem:[%s1151 + $0x680] sm:$0xff] %v1568
                  %v1570 = vld [vmem:[%s1150 + $0xd10] sm:$0xff]
                  %1571 = vst [vmem:[%s1151 + $0x688] sm:$0xff] %v1570
                  %v1572 = vld [vmem:[%s1150 + $0xd20] sm:$0xff]
                  %1573 = vst [vmem:[%s1151 + $0x690] sm:$0xff] %v1572
                  %v1574 = vld [vmem:[%s1150 + $0xd30] sm:$0xff]
                  %1575 = vst [vmem:[%s1151 + $0x698] sm:$0xff] %v1574
                  %v1576 = vld [vmem:[%s1150 + $0xd40] sm:$0xff]
                  %1577 = vst [vmem:[%s1151 + $0x6a0] sm:$0xff] %v1576
                  %v1578 = vld [vmem:[%s1150 + $0xd50] sm:$0xff]
                  %1579 = vst [vmem:[%s1151 + $0x6a8] sm:$0xff] %v1578
                  %v1580 = vld [vmem:[%s1150 + $0xd60] sm:$0xff]
                  %1581 = vst [vmem:[%s1151 + $0x6b0] sm:$0xff] %v1580
                  %v1582 = vld [vmem:[%s1150 + $0xd70] sm:$0xff]
                  %1583 = vst [vmem:[%s1151 + $0x6b8] sm:$0xff] %v1582
                  %v1584 = vld [vmem:[%s1150 + $0xd80] sm:$0xff]
                  %1585 = vst [vmem:[%s1151 + $0x6c0] sm:$0xff] %v1584
                  %v1586 = vld [vmem:[%s1150 + $0xd90] sm:$0xff]
                  %1587 = vst [vmem:[%s1151 + $0x6c8] sm:$0xff] %v1586
                  %v1588 = vld [vmem:[%s1150 + $0xda0] sm:$0xff]
                  %1589 = vst [vmem:[%s1151 + $0x6d0] sm:$0xff] %v1588
                  %v1590 = vld [vmem:[%s1150 + $0xdb0] sm:$0xff]
                  %1591 = vst [vmem:[%s1151 + $0x6d8] sm:$0xff] %v1590
                  %v1592 = vld [vmem:[%s1150 + $0xdc0] sm:$0xff]
                  %1593 = vst [vmem:[%s1151 + $0x6e0] sm:$0xff] %v1592
                  %v1594 = vld [vmem:[%s1150 + $0xdd0] sm:$0xff]
                  %1595 = vst [vmem:[%s1151 + $0x6e8] sm:$0xff] %v1594
                  %v1596 = vld [vmem:[%s1150 + $0xde0] sm:$0xff]
                  %1597 = vst [vmem:[%s1151 + $0x6f0] sm:$0xff] %v1596
                  %v1598 = vld [vmem:[%s1150 + $0xdf0] sm:$0xff]
                  %1599 = vst [vmem:[%s1151 + $0x6f8] sm:$0xff] %v1598
                  %v1600 = vld [vmem:[%s1150 + $0xe00] sm:$0xff]
                  %1601 = vst [vmem:[%s1151 + $0x700] sm:$0xff] %v1600
                  %v1602 = vld [vmem:[%s1150 + $0xe10] sm:$0xff]
                  %1603 = vst [vmem:[%s1151 + $0x708] sm:$0xff] %v1602
                  %v1604 = vld [vmem:[%s1150 + $0xe20] sm:$0xff]
                  %1605 = vst [vmem:[%s1151 + $0x710] sm:$0xff] %v1604
                  %v1606 = vld [vmem:[%s1150 + $0xe30] sm:$0xff]
                  %1607 = vst [vmem:[%s1151 + $0x718] sm:$0xff] %v1606
                  %v1608 = vld [vmem:[%s1150 + $0xe40] sm:$0xff]
                  %1609 = vst [vmem:[%s1151 + $0x720] sm:$0xff] %v1608
                  %v1610 = vld [vmem:[%s1150 + $0xe50] sm:$0xff]
                  %1611 = vst [vmem:[%s1151 + $0x728] sm:$0xff] %v1610
                  %v1612 = vld [vmem:[%s1150 + $0xe60] sm:$0xff]
                  %1613 = vst [vmem:[%s1151 + $0x730] sm:$0xff] %v1612
                  %v1614 = vld [vmem:[%s1150 + $0xe70] sm:$0xff]
                  %1615 = vst [vmem:[%s1151 + $0x738] sm:$0xff] %v1614
                  %v1616 = vld [vmem:[%s1150 + $0xe80] sm:$0xff]
                  %1617 = vst [vmem:[%s1151 + $0x740] sm:$0xff] %v1616
                  %v1618 = vld [vmem:[%s1150 + $0xe90] sm:$0xff]
                  %1619 = vst [vmem:[%s1151 + $0x748] sm:$0xff] %v1618
                  %v1620 = vld [vmem:[%s1150 + $0xea0] sm:$0xff]
                  %1621 = vst [vmem:[%s1151 + $0x750] sm:$0xff] %v1620
                  %v1622 = vld [vmem:[%s1150 + $0xeb0] sm:$0xff]
                  %1623 = vst [vmem:[%s1151 + $0x758] sm:$0xff] %v1622
                  %v1624 = vld [vmem:[%s1150 + $0xec0] sm:$0xff]
                  %1625 = vst [vmem:[%s1151 + $0x760] sm:$0xff] %v1624
                  %v1626 = vld [vmem:[%s1150 + $0xed0] sm:$0xff]
                  %1627 = vst [vmem:[%s1151 + $0x768] sm:$0xff] %v1626
                  %v1628 = vld [vmem:[%s1150 + $0xee0] sm:$0xff]
                  %1629 = vst [vmem:[%s1151 + $0x770] sm:$0xff] %v1628
                  %v1630 = vld [vmem:[%s1150 + $0xef0] sm:$0xff]
                  %1631 = vst [vmem:[%s1151 + $0x778] sm:$0xff] %v1630
                  %v1632 = vld [vmem:[%s1150 + $0xf00] sm:$0xff]
                  %1633 = vst [vmem:[%s1151 + $0x780] sm:$0xff] %v1632
                  %v1634 = vld [vmem:[%s1150 + $0xf10] sm:$0xff]
                  %1635 = vst [vmem:[%s1151 + $0x788] sm:$0xff] %v1634
                  %v1636 = vld [vmem:[%s1150 + $0xf20] sm:$0xff]
                  %1637 = vst [vmem:[%s1151 + $0x790] sm:$0xff] %v1636
                  %v1638 = vld [vmem:[%s1150 + $0xf30] sm:$0xff]
                  %1639 = vst [vmem:[%s1151 + $0x798] sm:$0xff] %v1638
                  %v1640 = vld [vmem:[%s1150 + $0xf40] sm:$0xff]
                  %1641 = vst [vmem:[%s1151 + $0x7a0] sm:$0xff] %v1640
                  %v1642 = vld [vmem:[%s1150 + $0xf50] sm:$0xff]
                  %1643 = vst [vmem:[%s1151 + $0x7a8] sm:$0xff] %v1642
                  %v1644 = vld [vmem:[%s1150 + $0xf60] sm:$0xff]
                  %1645 = vst [vmem:[%s1151 + $0x7b0] sm:$0xff] %v1644
                  %v1646 = vld [vmem:[%s1150 + $0xf70] sm:$0xff]
                  %1647 = vst [vmem:[%s1151 + $0x7b8] sm:$0xff] %v1646
                  %v1648 = vld [vmem:[%s1150 + $0xf80] sm:$0xff]
                  %1649 = vst [vmem:[%s1151 + $0x7c0] sm:$0xff] %v1648
                  %v1650 = vld [vmem:[%s1150 + $0xf90] sm:$0xff]
                  %1651 = vst [vmem:[%s1151 + $0x7c8] sm:$0xff] %v1650
                  %v1652 = vld [vmem:[%s1150 + $0xfa0] sm:$0xff]
                  %1653 = vst [vmem:[%s1151 + $0x7d0] sm:$0xff] %v1652
                  %v1654 = vld [vmem:[%s1150 + $0xfb0] sm:$0xff]
                  %1655 = vst [vmem:[%s1151 + $0x7d8] sm:$0xff] %v1654
                  %v1656 = vld [vmem:[%s1150 + $0xfc0] sm:$0xff]
                  %1657 = vst [vmem:[%s1151 + $0x7e0] sm:$0xff] %v1656
                  %v1658 = vld [vmem:[%s1150 + $0xfd0] sm:$0xff]
                  %1659 = vst [vmem:[%s1151 + $0x7e8] sm:$0xff] %v1658
                  %v1660 = vld [vmem:[%s1150 + $0xfe0] sm:$0xff]
                  %1661 = vst [vmem:[%s1151 + $0x7f0] sm:$0xff] %v1660
                  %v1662 = vld [vmem:[%s1150 + $0xff0] sm:$0xff]
                  %1663 = vst [vmem:[%s1151 + $0x7f8] sm:$0xff] %v1662
                $region106: #{forward.8} parent=100 // loop_footer
                  %s1149 = sadd.s32 1, %s1145
                $region107: #{forward.8} parent=100 // loop_footer_branch
                  %1144 = sbr.rel target = $region103
                $region108: #{forward.8} parent=100 // loop_exit
                  _
              $region101: #{forward.8} parent=85 // pred_fallthru
                _
              // Predicated region
              $region109: #{forward.8} parent=85 // pred_check
                _
              $region110: #{forward.8} parent=85 // pred_check_branch
                %1665 = sbr.rel target = $region112
              $region111: #{forward.8} parent=85 // pred_region
                _
              $region112: #{forward.8} parent=85 // pred_fallthru
                _
            $region86: #{forward.8} parent=81 // pred_fallthru
              _
            // Predicated region
            $region87: #{forward.8} parent=81 // pred_check
              _
            $region88: #{forward.8} parent=81 // pred_check_branch
              %620 = sbr.rel target = $region90
            $region89: #{forward.8} parent=81 // pred_region
              loop: start=0, step=1, limit=1
              $region91: #{forward.8} parent=89 // loop_pre_header
                _
              $region92: #{forward.8} parent=89 // loop_header
                %s623 = sphi 0, %s627
                %p624 = scmp.ge.s32.totalorder %s623, 1
                %s628 = sphi %s614, %s614
                %s629 = sphi %s608, %s608
              $region93: #{forward.8} parent=89 // loop_header_branch
                %626 = sbr.rel (%p624) target = $region97
              $region94: #{forward.8} parent=89 // loop_body
                %v630 = vld [vmem:[%s628] sm:$0xff]
                %631 = vst [vmem:[%s629] sm:$0xff] %v630
                %v632 = vld [vmem:[%s628 + $0x10] sm:$0xff]
                %633 = vst [vmem:[%s629 + $0x8] sm:$0xff] %v632
                %v634 = vld [vmem:[%s628 + $0x20] sm:$0xff]
                %635 = vst [vmem:[%s629 + $0x10] sm:$0xff] %v634
                %v636 = vld [vmem:[%s628 + $0x30] sm:$0xff]
                %637 = vst [vmem:[%s629 + $0x18] sm:$0xff] %v636
                %v638 = vld [vmem:[%s628 + $0x40] sm:$0xff]
                %639 = vst [vmem:[%s629 + $0x20] sm:$0xff] %v638
                %v640 = vld [vmem:[%s628 + $0x50] sm:$0xff]
                %641 = vst [vmem:[%s629 + $0x28] sm:$0xff] %v640
                %v642 = vld [vmem:[%s628 + $0x60] sm:$0xff]
                %643 = vst [vmem:[%s629 + $0x30] sm:$0xff] %v642
                %v644 = vld [vmem:[%s628 + $0x70] sm:$0xff]
                %645 = vst [vmem:[%s629 + $0x38] sm:$0xff] %v644
                %v646 = vld [vmem:[%s628 + $0x80] sm:$0xff]
                %647 = vst [vmem:[%s629 + $0x40] sm:$0xff] %v646
                %v648 = vld [vmem:[%s628 + $0x90] sm:$0xff]
                %649 = vst [vmem:[%s629 + $0x48] sm:$0xff] %v648
                %v650 = vld [vmem:[%s628 + $0xa0] sm:$0xff]
                %651 = vst [vmem:[%s629 + $0x50] sm:$0xff] %v650
                %v652 = vld [vmem:[%s628 + $0xb0] sm:$0xff]
                %653 = vst [vmem:[%s629 + $0x58] sm:$0xff] %v652
                %v654 = vld [vmem:[%s628 + $0xc0] sm:$0xff]
                %655 = vst [vmem:[%s629 + $0x60] sm:$0xff] %v654
                %v656 = vld [vmem:[%s628 + $0xd0] sm:$0xff]
                %657 = vst [vmem:[%s629 + $0x68] sm:$0xff] %v656
                %v658 = vld [vmem:[%s628 + $0xe0] sm:$0xff]
                %659 = vst [vmem:[%s629 + $0x70] sm:$0xff] %v658
                %v660 = vld [vmem:[%s628 + $0xf0] sm:$0xff]
                %661 = vst [vmem:[%s629 + $0x78] sm:$0xff] %v660
                %v662 = vld [vmem:[%s628 + $0x100] sm:$0xff]
                %663 = vst [vmem:[%s629 + $0x80] sm:$0xff] %v662
                %v664 = vld [vmem:[%s628 + $0x110] sm:$0xff]
                %665 = vst [vmem:[%s629 + $0x88] sm:$0xff] %v664
                %v666 = vld [vmem:[%s628 + $0x120] sm:$0xff]
                %667 = vst [vmem:[%s629 + $0x90] sm:$0xff] %v666
                %v668 = vld [vmem:[%s628 + $0x130] sm:$0xff]
                %669 = vst [vmem:[%s629 + $0x98] sm:$0xff] %v668
                %v670 = vld [vmem:[%s628 + $0x140] sm:$0xff]
                %671 = vst [vmem:[%s629 + $0xa0] sm:$0xff] %v670
                %v672 = vld [vmem:[%s628 + $0x150] sm:$0xff]
                %673 = vst [vmem:[%s629 + $0xa8] sm:$0xff] %v672
                %v674 = vld [vmem:[%s628 + $0x160] sm:$0xff]
                %675 = vst [vmem:[%s629 + $0xb0] sm:$0xff] %v674
                %v676 = vld [vmem:[%s628 + $0x170] sm:$0xff]
                %677 = vst [vmem:[%s629 + $0xb8] sm:$0xff] %v676
                %v678 = vld [vmem:[%s628 + $0x180] sm:$0xff]
                %679 = vst [vmem:[%s629 + $0xc0] sm:$0xff] %v678
                %v680 = vld [vmem:[%s628 + $0x190] sm:$0xff]
                %681 = vst [vmem:[%s629 + $0xc8] sm:$0xff] %v680
                %v682 = vld [vmem:[%s628 + $0x1a0] sm:$0xff]
                %683 = vst [vmem:[%s629 + $0xd0] sm:$0xff] %v682
                %v684 = vld [vmem:[%s628 + $0x1b0] sm:$0xff]
                %685 = vst [vmem:[%s629 + $0xd8] sm:$0xff] %v684
                %v686 = vld [vmem:[%s628 + $0x1c0] sm:$0xff]
                %687 = vst [vmem:[%s629 + $0xe0] sm:$0xff] %v686
                %v688 = vld [vmem:[%s628 + $0x1d0] sm:$0xff]
                %689 = vst [vmem:[%s629 + $0xe8] sm:$0xff] %v688
                %v690 = vld [vmem:[%s628 + $0x1e0] sm:$0xff]
                %691 = vst [vmem:[%s629 + $0xf0] sm:$0xff] %v690
                %v692 = vld [vmem:[%s628 + $0x1f0] sm:$0xff]
                %693 = vst [vmem:[%s629 + $0xf8] sm:$0xff] %v692
                %v694 = vld [vmem:[%s628 + $0x200] sm:$0xff]
                %695 = vst [vmem:[%s629 + $0x100] sm:$0xff] %v694
                %v696 = vld [vmem:[%s628 + $0x210] sm:$0xff]
                %697 = vst [vmem:[%s629 + $0x108] sm:$0xff] %v696
                %v698 = vld [vmem:[%s628 + $0x220] sm:$0xff]
                %699 = vst [vmem:[%s629 + $0x110] sm:$0xff] %v698
                %v700 = vld [vmem:[%s628 + $0x230] sm:$0xff]
                %701 = vst [vmem:[%s629 + $0x118] sm:$0xff] %v700
                %v702 = vld [vmem:[%s628 + $0x240] sm:$0xff]
                %703 = vst [vmem:[%s629 + $0x120] sm:$0xff] %v702
                %v704 = vld [vmem:[%s628 + $0x250] sm:$0xff]
                %705 = vst [vmem:[%s629 + $0x128] sm:$0xff] %v704
                %v706 = vld [vmem:[%s628 + $0x260] sm:$0xff]
                %707 = vst [vmem:[%s629 + $0x130] sm:$0xff] %v706
                %v708 = vld [vmem:[%s628 + $0x270] sm:$0xff]
                %709 = vst [vmem:[%s629 + $0x138] sm:$0xff] %v708
                %v710 = vld [vmem:[%s628 + $0x280] sm:$0xff]
                %711 = vst [vmem:[%s629 + $0x140] sm:$0xff] %v710
                %v712 = vld [vmem:[%s628 + $0x290] sm:$0xff]
                %713 = vst [vmem:[%s629 + $0x148] sm:$0xff] %v712
                %v714 = vld [vmem:[%s628 + $0x2a0] sm:$0xff]
                %715 = vst [vmem:[%s629 + $0x150] sm:$0xff] %v714
                %v716 = vld [vmem:[%s628 + $0x2b0] sm:$0xff]
                %717 = vst [vmem:[%s629 + $0x158] sm:$0xff] %v716
                %v718 = vld [vmem:[%s628 + $0x2c0] sm:$0xff]
                %719 = vst [vmem:[%s629 + $0x160] sm:$0xff] %v718
                %v720 = vld [vmem:[%s628 + $0x2d0] sm:$0xff]
                %721 = vst [vmem:[%s629 + $0x168] sm:$0xff] %v720
                %v722 = vld [vmem:[%s628 + $0x2e0] sm:$0xff]
                %723 = vst [vmem:[%s629 + $0x170] sm:$0xff] %v722
                %v724 = vld [vmem:[%s628 + $0x2f0] sm:$0xff]
                %725 = vst [vmem:[%s629 + $0x178] sm:$0xff] %v724
                %v726 = vld [vmem:[%s628 + $0x300] sm:$0xff]
                %727 = vst [vmem:[%s629 + $0x180] sm:$0xff] %v726
                %v728 = vld [vmem:[%s628 + $0x310] sm:$0xff]
                %729 = vst [vmem:[%s629 + $0x188] sm:$0xff] %v728
                %v730 = vld [vmem:[%s628 + $0x320] sm:$0xff]
                %731 = vst [vmem:[%s629 + $0x190] sm:$0xff] %v730
                %v732 = vld [vmem:[%s628 + $0x330] sm:$0xff]
                %733 = vst [vmem:[%s629 + $0x198] sm:$0xff] %v732
                %v734 = vld [vmem:[%s628 + $0x340] sm:$0xff]
                %735 = vst [vmem:[%s629 + $0x1a0] sm:$0xff] %v734
                %v736 = vld [vmem:[%s628 + $0x350] sm:$0xff]
                %737 = vst [vmem:[%s629 + $0x1a8] sm:$0xff] %v736
                %v738 = vld [vmem:[%s628 + $0x360] sm:$0xff]
                %739 = vst [vmem:[%s629 + $0x1b0] sm:$0xff] %v738
                %v740 = vld [vmem:[%s628 + $0x370] sm:$0xff]
                %741 = vst [vmem:[%s629 + $0x1b8] sm:$0xff] %v740
                %v742 = vld [vmem:[%s628 + $0x380] sm:$0xff]
                %743 = vst [vmem:[%s629 + $0x1c0] sm:$0xff] %v742
                %v744 = vld [vmem:[%s628 + $0x390] sm:$0xff]
                %745 = vst [vmem:[%s629 + $0x1c8] sm:$0xff] %v744
                %v746 = vld [vmem:[%s628 + $0x3a0] sm:$0xff]
                %747 = vst [vmem:[%s629 + $0x1d0] sm:$0xff] %v746
                %v748 = vld [vmem:[%s628 + $0x3b0] sm:$0xff]
                %749 = vst [vmem:[%s629 + $0x1d8] sm:$0xff] %v748
                %v750 = vld [vmem:[%s628 + $0x3c0] sm:$0xff]
                %751 = vst [vmem:[%s629 + $0x1e0] sm:$0xff] %v750
                %v752 = vld [vmem:[%s628 + $0x3d0] sm:$0xff]
                %753 = vst [vmem:[%s629 + $0x1e8] sm:$0xff] %v752
                %v754 = vld [vmem:[%s628 + $0x3e0] sm:$0xff]
                %755 = vst [vmem:[%s629 + $0x1f0] sm:$0xff] %v754
                %v756 = vld [vmem:[%s628 + $0x3f0] sm:$0xff]
                %757 = vst [vmem:[%s629 + $0x1f8] sm:$0xff] %v756
                %v758 = vld [vmem:[%s628 + $0x400] sm:$0xff]
                %759 = vst [vmem:[%s629 + $0x200] sm:$0xff] %v758
                %v760 = vld [vmem:[%s628 + $0x410] sm:$0xff]
                %761 = vst [vmem:[%s629 + $0x208] sm:$0xff] %v760
                %v762 = vld [vmem:[%s628 + $0x420] sm:$0xff]
                %763 = vst [vmem:[%s629 + $0x210] sm:$0xff] %v762
                %v764 = vld [vmem:[%s628 + $0x430] sm:$0xff]
                %765 = vst [vmem:[%s629 + $0x218] sm:$0xff] %v764
                %v766 = vld [vmem:[%s628 + $0x440] sm:$0xff]
                %767 = vst [vmem:[%s629 + $0x220] sm:$0xff] %v766
                %v768 = vld [vmem:[%s628 + $0x450] sm:$0xff]
                %769 = vst [vmem:[%s629 + $0x228] sm:$0xff] %v768
                %v770 = vld [vmem:[%s628 + $0x460] sm:$0xff]
                %771 = vst [vmem:[%s629 + $0x230] sm:$0xff] %v770
                %v772 = vld [vmem:[%s628 + $0x470] sm:$0xff]
                %773 = vst [vmem:[%s629 + $0x238] sm:$0xff] %v772
                %v774 = vld [vmem:[%s628 + $0x480] sm:$0xff]
                %775 = vst [vmem:[%s629 + $0x240] sm:$0xff] %v774
                %v776 = vld [vmem:[%s628 + $0x490] sm:$0xff]
                %777 = vst [vmem:[%s629 + $0x248] sm:$0xff] %v776
                %v778 = vld [vmem:[%s628 + $0x4a0] sm:$0xff]
                %779 = vst [vmem:[%s629 + $0x250] sm:$0xff] %v778
                %v780 = vld [vmem:[%s628 + $0x4b0] sm:$0xff]
                %781 = vst [vmem:[%s629 + $0x258] sm:$0xff] %v780
                %v782 = vld [vmem:[%s628 + $0x4c0] sm:$0xff]
                %783 = vst [vmem:[%s629 + $0x260] sm:$0xff] %v782
                %v784 = vld [vmem:[%s628 + $0x4d0] sm:$0xff]
                %785 = vst [vmem:[%s629 + $0x268] sm:$0xff] %v784
                %v786 = vld [vmem:[%s628 + $0x4e0] sm:$0xff]
                %787 = vst [vmem:[%s629 + $0x270] sm:$0xff] %v786
                %v788 = vld [vmem:[%s628 + $0x4f0] sm:$0xff]
                %789 = vst [vmem:[%s629 + $0x278] sm:$0xff] %v788
                %v790 = vld [vmem:[%s628 + $0x500] sm:$0xff]
                %791 = vst [vmem:[%s629 + $0x280] sm:$0xff] %v790
                %v792 = vld [vmem:[%s628 + $0x510] sm:$0xff]
                %793 = vst [vmem:[%s629 + $0x288] sm:$0xff] %v792
                %v794 = vld [vmem:[%s628 + $0x520] sm:$0xff]
                %795 = vst [vmem:[%s629 + $0x290] sm:$0xff] %v794
                %v796 = vld [vmem:[%s628 + $0x530] sm:$0xff]
                %797 = vst [vmem:[%s629 + $0x298] sm:$0xff] %v796
                %v798 = vld [vmem:[%s628 + $0x540] sm:$0xff]
                %799 = vst [vmem:[%s629 + $0x2a0] sm:$0xff] %v798
                %v800 = vld [vmem:[%s628 + $0x550] sm:$0xff]
                %801 = vst [vmem:[%s629 + $0x2a8] sm:$0xff] %v800
                %v802 = vld [vmem:[%s628 + $0x560] sm:$0xff]
                %803 = vst [vmem:[%s629 + $0x2b0] sm:$0xff] %v802
                %v804 = vld [vmem:[%s628 + $0x570] sm:$0xff]
                %805 = vst [vmem:[%s629 + $0x2b8] sm:$0xff] %v804
                %v806 = vld [vmem:[%s628 + $0x580] sm:$0xff]
                %807 = vst [vmem:[%s629 + $0x2c0] sm:$0xff] %v806
                %v808 = vld [vmem:[%s628 + $0x590] sm:$0xff]
                %809 = vst [vmem:[%s629 + $0x2c8] sm:$0xff] %v808
                %v810 = vld [vmem:[%s628 + $0x5a0] sm:$0xff]
                %811 = vst [vmem:[%s629 + $0x2d0] sm:$0xff] %v810
                %v812 = vld [vmem:[%s628 + $0x5b0] sm:$0xff]
                %813 = vst [vmem:[%s629 + $0x2d8] sm:$0xff] %v812
                %v814 = vld [vmem:[%s628 + $0x5c0] sm:$0xff]
                %815 = vst [vmem:[%s629 + $0x2e0] sm:$0xff] %v814
                %v816 = vld [vmem:[%s628 + $0x5d0] sm:$0xff]
                %817 = vst [vmem:[%s629 + $0x2e8] sm:$0xff] %v816
                %v818 = vld [vmem:[%s628 + $0x5e0] sm:$0xff]
                %819 = vst [vmem:[%s629 + $0x2f0] sm:$0xff] %v818
                %v820 = vld [vmem:[%s628 + $0x5f0] sm:$0xff]
                %821 = vst [vmem:[%s629 + $0x2f8] sm:$0xff] %v820
                %v822 = vld [vmem:[%s628 + $0x600] sm:$0xff]
                %823 = vst [vmem:[%s629 + $0x300] sm:$0xff] %v822
                %v824 = vld [vmem:[%s628 + $0x610] sm:$0xff]
                %825 = vst [vmem:[%s629 + $0x308] sm:$0xff] %v824
                %v826 = vld [vmem:[%s628 + $0x620] sm:$0xff]
                %827 = vst [vmem:[%s629 + $0x310] sm:$0xff] %v826
                %v828 = vld [vmem:[%s628 + $0x630] sm:$0xff]
                %829 = vst [vmem:[%s629 + $0x318] sm:$0xff] %v828
                %v830 = vld [vmem:[%s628 + $0x640] sm:$0xff]
                %831 = vst [vmem:[%s629 + $0x320] sm:$0xff] %v830
                %v832 = vld [vmem:[%s628 + $0x650] sm:$0xff]
                %833 = vst [vmem:[%s629 + $0x328] sm:$0xff] %v832
                %v834 = vld [vmem:[%s628 + $0x660] sm:$0xff]
                %835 = vst [vmem:[%s629 + $0x330] sm:$0xff] %v834
                %v836 = vld [vmem:[%s628 + $0x670] sm:$0xff]
                %837 = vst [vmem:[%s629 + $0x338] sm:$0xff] %v836
                %v838 = vld [vmem:[%s628 + $0x680] sm:$0xff]
                %839 = vst [vmem:[%s629 + $0x340] sm:$0xff] %v838
                %v840 = vld [vmem:[%s628 + $0x690] sm:$0xff]
                %841 = vst [vmem:[%s629 + $0x348] sm:$0xff] %v840
                %v842 = vld [vmem:[%s628 + $0x6a0] sm:$0xff]
                %843 = vst [vmem:[%s629 + $0x350] sm:$0xff] %v842
                %v844 = vld [vmem:[%s628 + $0x6b0] sm:$0xff]
                %845 = vst [vmem:[%s629 + $0x358] sm:$0xff] %v844
                %v846 = vld [vmem:[%s628 + $0x6c0] sm:$0xff]
                %847 = vst [vmem:[%s629 + $0x360] sm:$0xff] %v846
                %v848 = vld [vmem:[%s628 + $0x6d0] sm:$0xff]
                %849 = vst [vmem:[%s629 + $0x368] sm:$0xff] %v848
                %v850 = vld [vmem:[%s628 + $0x6e0] sm:$0xff]
                %851 = vst [vmem:[%s629 + $0x370] sm:$0xff] %v850
                %v852 = vld [vmem:[%s628 + $0x6f0] sm:$0xff]
                %853 = vst [vmem:[%s629 + $0x378] sm:$0xff] %v852
                %v854 = vld [vmem:[%s628 + $0x700] sm:$0xff]
                %855 = vst [vmem:[%s629 + $0x380] sm:$0xff] %v854
                %v856 = vld [vmem:[%s628 + $0x710] sm:$0xff]
                %857 = vst [vmem:[%s629 + $0x388] sm:$0xff] %v856
                %v858 = vld [vmem:[%s628 + $0x720] sm:$0xff]
                %859 = vst [vmem:[%s629 + $0x390] sm:$0xff] %v858
                %v860 = vld [vmem:[%s628 + $0x730] sm:$0xff]
                %861 = vst [vmem:[%s629 + $0x398] sm:$0xff] %v860
                %v862 = vld [vmem:[%s628 + $0x740] sm:$0xff]
                %863 = vst [vmem:[%s629 + $0x3a0] sm:$0xff] %v862
                %v864 = vld [vmem:[%s628 + $0x750] sm:$0xff]
                %865 = vst [vmem:[%s629 + $0x3a8] sm:$0xff] %v864
                %v866 = vld [vmem:[%s628 + $0x760] sm:$0xff]
                %867 = vst [vmem:[%s629 + $0x3b0] sm:$0xff] %v866
                %v868 = vld [vmem:[%s628 + $0x770] sm:$0xff]
                %869 = vst [vmem:[%s629 + $0x3b8] sm:$0xff] %v868
                %v870 = vld [vmem:[%s628 + $0x780] sm:$0xff]
                %871 = vst [vmem:[%s629 + $0x3c0] sm:$0xff] %v870
                %v872 = vld [vmem:[%s628 + $0x790] sm:$0xff]
                %873 = vst [vmem:[%s629 + $0x3c8] sm:$0xff] %v872
                %v874 = vld [vmem:[%s628 + $0x7a0] sm:$0xff]
                %875 = vst [vmem:[%s629 + $0x3d0] sm:$0xff] %v874
                %v876 = vld [vmem:[%s628 + $0x7b0] sm:$0xff]
                %877 = vst [vmem:[%s629 + $0x3d8] sm:$0xff] %v876
                %v878 = vld [vmem:[%s628 + $0x7c0] sm:$0xff]
                %879 = vst [vmem:[%s629 + $0x3e0] sm:$0xff] %v878
                %v880 = vld [vmem:[%s628 + $0x7d0] sm:$0xff]
                %881 = vst [vmem:[%s629 + $0x3e8] sm:$0xff] %v880
                %v882 = vld [vmem:[%s628 + $0x7e0] sm:$0xff]
                %883 = vst [vmem:[%s629 + $0x3f0] sm:$0xff] %v882
                %v884 = vld [vmem:[%s628 + $0x7f0] sm:$0xff]
                %885 = vst [vmem:[%s629 + $0x3f8] sm:$0xff] %v884
                %v886 = vld [vmem:[%s628 + $0x800] sm:$0xff]
                %887 = vst [vmem:[%s629 + $0x400] sm:$0xff] %v886
                %v888 = vld [vmem:[%s628 + $0x810] sm:$0xff]
                %889 = vst [vmem:[%s629 + $0x408] sm:$0xff] %v888
                %v890 = vld [vmem:[%s628 + $0x820] sm:$0xff]
                %891 = vst [vmem:[%s629 + $0x410] sm:$0xff] %v890
                %v892 = vld [vmem:[%s628 + $0x830] sm:$0xff]
                %893 = vst [vmem:[%s629 + $0x418] sm:$0xff] %v892
                %v894 = vld [vmem:[%s628 + $0x840] sm:$0xff]
                %895 = vst [vmem:[%s629 + $0x420] sm:$0xff] %v894
                %v896 = vld [vmem:[%s628 + $0x850] sm:$0xff]
                %897 = vst [vmem:[%s629 + $0x428] sm:$0xff] %v896
                %v898 = vld [vmem:[%s628 + $0x860] sm:$0xff]
                %899 = vst [vmem:[%s629 + $0x430] sm:$0xff] %v898
                %v900 = vld [vmem:[%s628 + $0x870] sm:$0xff]
                %901 = vst [vmem:[%s629 + $0x438] sm:$0xff] %v900
                %v902 = vld [vmem:[%s628 + $0x880] sm:$0xff]
                %903 = vst [vmem:[%s629 + $0x440] sm:$0xff] %v902
                %v904 = vld [vmem:[%s628 + $0x890] sm:$0xff]
                %905 = vst [vmem:[%s629 + $0x448] sm:$0xff] %v904
                %v906 = vld [vmem:[%s628 + $0x8a0] sm:$0xff]
                %907 = vst [vmem:[%s629 + $0x450] sm:$0xff] %v906
                %v908 = vld [vmem:[%s628 + $0x8b0] sm:$0xff]
                %909 = vst [vmem:[%s629 + $0x458] sm:$0xff] %v908
                %v910 = vld [vmem:[%s628 + $0x8c0] sm:$0xff]
                %911 = vst [vmem:[%s629 + $0x460] sm:$0xff] %v910
                %v912 = vld [vmem:[%s628 + $0x8d0] sm:$0xff]
                %913 = vst [vmem:[%s629 + $0x468] sm:$0xff] %v912
                %v914 = vld [vmem:[%s628 + $0x8e0] sm:$0xff]
                %915 = vst [vmem:[%s629 + $0x470] sm:$0xff] %v914
                %v916 = vld [vmem:[%s628 + $0x8f0] sm:$0xff]
                %917 = vst [vmem:[%s629 + $0x478] sm:$0xff] %v916
                %v918 = vld [vmem:[%s628 + $0x900] sm:$0xff]
                %919 = vst [vmem:[%s629 + $0x480] sm:$0xff] %v918
                %v920 = vld [vmem:[%s628 + $0x910] sm:$0xff]
                %921 = vst [vmem:[%s629 + $0x488] sm:$0xff] %v920
                %v922 = vld [vmem:[%s628 + $0x920] sm:$0xff]
                %923 = vst [vmem:[%s629 + $0x490] sm:$0xff] %v922
                %v924 = vld [vmem:[%s628 + $0x930] sm:$0xff]
                %925 = vst [vmem:[%s629 + $0x498] sm:$0xff] %v924
                %v926 = vld [vmem:[%s628 + $0x940] sm:$0xff]
                %927 = vst [vmem:[%s629 + $0x4a0] sm:$0xff] %v926
                %v928 = vld [vmem:[%s628 + $0x950] sm:$0xff]
                %929 = vst [vmem:[%s629 + $0x4a8] sm:$0xff] %v928
                %v930 = vld [vmem:[%s628 + $0x960] sm:$0xff]
                %931 = vst [vmem:[%s629 + $0x4b0] sm:$0xff] %v930
                %v932 = vld [vmem:[%s628 + $0x970] sm:$0xff]
                %933 = vst [vmem:[%s629 + $0x4b8] sm:$0xff] %v932
                %v934 = vld [vmem:[%s628 + $0x980] sm:$0xff]
                %935 = vst [vmem:[%s629 + $0x4c0] sm:$0xff] %v934
                %v936 = vld [vmem:[%s628 + $0x990] sm:$0xff]
                %937 = vst [vmem:[%s629 + $0x4c8] sm:$0xff] %v936
                %v938 = vld [vmem:[%s628 + $0x9a0] sm:$0xff]
                %939 = vst [vmem:[%s629 + $0x4d0] sm:$0xff] %v938
                %v940 = vld [vmem:[%s628 + $0x9b0] sm:$0xff]
                %941 = vst [vmem:[%s629 + $0x4d8] sm:$0xff] %v940
                %v942 = vld [vmem:[%s628 + $0x9c0] sm:$0xff]
                %943 = vst [vmem:[%s629 + $0x4e0] sm:$0xff] %v942
                %v944 = vld [vmem:[%s628 + $0x9d0] sm:$0xff]
                %945 = vst [vmem:[%s629 + $0x4e8] sm:$0xff] %v944
                %v946 = vld [vmem:[%s628 + $0x9e0] sm:$0xff]
                %947 = vst [vmem:[%s629 + $0x4f0] sm:$0xff] %v946
                %v948 = vld [vmem:[%s628 + $0x9f0] sm:$0xff]
                %949 = vst [vmem:[%s629 + $0x4f8] sm:$0xff] %v948
                %v950 = vld [vmem:[%s628 + $0xa00] sm:$0xff]
                %951 = vst [vmem:[%s629 + $0x500] sm:$0xff] %v950
                %v952 = vld [vmem:[%s628 + $0xa10] sm:$0xff]
                %953 = vst [vmem:[%s629 + $0x508] sm:$0xff] %v952
                %v954 = vld [vmem:[%s628 + $0xa20] sm:$0xff]
                %955 = vst [vmem:[%s629 + $0x510] sm:$0xff] %v954
                %v956 = vld [vmem:[%s628 + $0xa30] sm:$0xff]
                %957 = vst [vmem:[%s629 + $0x518] sm:$0xff] %v956
                %v958 = vld [vmem:[%s628 + $0xa40] sm:$0xff]
                %959 = vst [vmem:[%s629 + $0x520] sm:$0xff] %v958
                %v960 = vld [vmem:[%s628 + $0xa50] sm:$0xff]
                %961 = vst [vmem:[%s629 + $0x528] sm:$0xff] %v960
                %v962 = vld [vmem:[%s628 + $0xa60] sm:$0xff]
                %963 = vst [vmem:[%s629 + $0x530] sm:$0xff] %v962
                %v964 = vld [vmem:[%s628 + $0xa70] sm:$0xff]
                %965 = vst [vmem:[%s629 + $0x538] sm:$0xff] %v964
                %v966 = vld [vmem:[%s628 + $0xa80] sm:$0xff]
                %967 = vst [vmem:[%s629 + $0x540] sm:$0xff] %v966
                %v968 = vld [vmem:[%s628 + $0xa90] sm:$0xff]
                %969 = vst [vmem:[%s629 + $0x548] sm:$0xff] %v968
                %v970 = vld [vmem:[%s628 + $0xaa0] sm:$0xff]
                %971 = vst [vmem:[%s629 + $0x550] sm:$0xff] %v970
                %v972 = vld [vmem:[%s628 + $0xab0] sm:$0xff]
                %973 = vst [vmem:[%s629 + $0x558] sm:$0xff] %v972
                %v974 = vld [vmem:[%s628 + $0xac0] sm:$0xff]
                %975 = vst [vmem:[%s629 + $0x560] sm:$0xff] %v974
                %v976 = vld [vmem:[%s628 + $0xad0] sm:$0xff]
                %977 = vst [vmem:[%s629 + $0x568] sm:$0xff] %v976
                %v978 = vld [vmem:[%s628 + $0xae0] sm:$0xff]
                %979 = vst [vmem:[%s629 + $0x570] sm:$0xff] %v978
                %v980 = vld [vmem:[%s628 + $0xaf0] sm:$0xff]
                %981 = vst [vmem:[%s629 + $0x578] sm:$0xff] %v980
                %v982 = vld [vmem:[%s628 + $0xb00] sm:$0xff]
                %983 = vst [vmem:[%s629 + $0x580] sm:$0xff] %v982
                %v984 = vld [vmem:[%s628 + $0xb10] sm:$0xff]
                %985 = vst [vmem:[%s629 + $0x588] sm:$0xff] %v984
                %v986 = vld [vmem:[%s628 + $0xb20] sm:$0xff]
                %987 = vst [vmem:[%s629 + $0x590] sm:$0xff] %v986
                %v988 = vld [vmem:[%s628 + $0xb30] sm:$0xff]
                %989 = vst [vmem:[%s629 + $0x598] sm:$0xff] %v988
                %v990 = vld [vmem:[%s628 + $0xb40] sm:$0xff]
                %991 = vst [vmem:[%s629 + $0x5a0] sm:$0xff] %v990
                %v992 = vld [vmem:[%s628 + $0xb50] sm:$0xff]
                %993 = vst [vmem:[%s629 + $0x5a8] sm:$0xff] %v992
                %v994 = vld [vmem:[%s628 + $0xb60] sm:$0xff]
                %995 = vst [vmem:[%s629 + $0x5b0] sm:$0xff] %v994
                %v996 = vld [vmem:[%s628 + $0xb70] sm:$0xff]
                %997 = vst [vmem:[%s629 + $0x5b8] sm:$0xff] %v996
                %v998 = vld [vmem:[%s628 + $0xb80] sm:$0xff]
                %999 = vst [vmem:[%s629 + $0x5c0] sm:$0xff] %v998
                %v1000 = vld [vmem:[%s628 + $0xb90] sm:$0xff]
                %1001 = vst [vmem:[%s629 + $0x5c8] sm:$0xff] %v1000
                %v1002 = vld [vmem:[%s628 + $0xba0] sm:$0xff]
                %1003 = vst [vmem:[%s629 + $0x5d0] sm:$0xff] %v1002
                %v1004 = vld [vmem:[%s628 + $0xbb0] sm:$0xff]
                %1005 = vst [vmem:[%s629 + $0x5d8] sm:$0xff] %v1004
                %v1006 = vld [vmem:[%s628 + $0xbc0] sm:$0xff]
                %1007 = vst [vmem:[%s629 + $0x5e0] sm:$0xff] %v1006
                %v1008 = vld [vmem:[%s628 + $0xbd0] sm:$0xff]
                %1009 = vst [vmem:[%s629 + $0x5e8] sm:$0xff] %v1008
                %v1010 = vld [vmem:[%s628 + $0xbe0] sm:$0xff]
                %1011 = vst [vmem:[%s629 + $0x5f0] sm:$0xff] %v1010
                %v1012 = vld [vmem:[%s628 + $0xbf0] sm:$0xff]
                %1013 = vst [vmem:[%s629 + $0x5f8] sm:$0xff] %v1012
                %v1014 = vld [vmem:[%s628 + $0xc00] sm:$0xff]
                %1015 = vst [vmem:[%s629 + $0x600] sm:$0xff] %v1014
                %v1016 = vld [vmem:[%s628 + $0xc10] sm:$0xff]
                %1017 = vst [vmem:[%s629 + $0x608] sm:$0xff] %v1016
                %v1018 = vld [vmem:[%s628 + $0xc20] sm:$0xff]
                %1019 = vst [vmem:[%s629 + $0x610] sm:$0xff] %v1018
                %v1020 = vld [vmem:[%s628 + $0xc30] sm:$0xff]
                %1021 = vst [vmem:[%s629 + $0x618] sm:$0xff] %v1020
                %v1022 = vld [vmem:[%s628 + $0xc40] sm:$0xff]
                %1023 = vst [vmem:[%s629 + $0x620] sm:$0xff] %v1022
                %v1024 = vld [vmem:[%s628 + $0xc50] sm:$0xff]
                %1025 = vst [vmem:[%s629 + $0x628] sm:$0xff] %v1024
                %v1026 = vld [vmem:[%s628 + $0xc60] sm:$0xff]
                %1027 = vst [vmem:[%s629 + $0x630] sm:$0xff] %v1026
                %v1028 = vld [vmem:[%s628 + $0xc70] sm:$0xff]
                %1029 = vst [vmem:[%s629 + $0x638] sm:$0xff] %v1028
                %v1030 = vld [vmem:[%s628 + $0xc80] sm:$0xff]
                %1031 = vst [vmem:[%s629 + $0x640] sm:$0xff] %v1030
                %v1032 = vld [vmem:[%s628 + $0xc90] sm:$0xff]
                %1033 = vst [vmem:[%s629 + $0x648] sm:$0xff] %v1032
                %v1034 = vld [vmem:[%s628 + $0xca0] sm:$0xff]
                %1035 = vst [vmem:[%s629 + $0x650] sm:$0xff] %v1034
                %v1036 = vld [vmem:[%s628 + $0xcb0] sm:$0xff]
                %1037 = vst [vmem:[%s629 + $0x658] sm:$0xff] %v1036
                %v1038 = vld [vmem:[%s628 + $0xcc0] sm:$0xff]
                %1039 = vst [vmem:[%s629 + $0x660] sm:$0xff] %v1038
                %v1040 = vld [vmem:[%s628 + $0xcd0] sm:$0xff]
                %1041 = vst [vmem:[%s629 + $0x668] sm:$0xff] %v1040
                %v1042 = vld [vmem:[%s628 + $0xce0] sm:$0xff]
                %1043 = vst [vmem:[%s629 + $0x670] sm:$0xff] %v1042
                %v1044 = vld [vmem:[%s628 + $0xcf0] sm:$0xff]
                %1045 = vst [vmem:[%s629 + $0x678] sm:$0xff] %v1044
                %v1046 = vld [vmem:[%s628 + $0xd00] sm:$0xff]
                %1047 = vst [vmem:[%s629 + $0x680] sm:$0xff] %v1046
                %v1048 = vld [vmem:[%s628 + $0xd10] sm:$0xff]
                %1049 = vst [vmem:[%s629 + $0x688] sm:$0xff] %v1048
                %v1050 = vld [vmem:[%s628 + $0xd20] sm:$0xff]
                %1051 = vst [vmem:[%s629 + $0x690] sm:$0xff] %v1050
                %v1052 = vld [vmem:[%s628 + $0xd30] sm:$0xff]
                %1053 = vst [vmem:[%s629 + $0x698] sm:$0xff] %v1052
                %v1054 = vld [vmem:[%s628 + $0xd40] sm:$0xff]
                %1055 = vst [vmem:[%s629 + $0x6a0] sm:$0xff] %v1054
                %v1056 = vld [vmem:[%s628 + $0xd50] sm:$0xff]
                %1057 = vst [vmem:[%s629 + $0x6a8] sm:$0xff] %v1056
                %v1058 = vld [vmem:[%s628 + $0xd60] sm:$0xff]
                %1059 = vst [vmem:[%s629 + $0x6b0] sm:$0xff] %v1058
                %v1060 = vld [vmem:[%s628 + $0xd70] sm:$0xff]
                %1061 = vst [vmem:[%s629 + $0x6b8] sm:$0xff] %v1060
                %v1062 = vld [vmem:[%s628 + $0xd80] sm:$0xff]
                %1063 = vst [vmem:[%s629 + $0x6c0] sm:$0xff] %v1062
                %v1064 = vld [vmem:[%s628 + $0xd90] sm:$0xff]
                %1065 = vst [vmem:[%s629 + $0x6c8] sm:$0xff] %v1064
                %v1066 = vld [vmem:[%s628 + $0xda0] sm:$0xff]
                %1067 = vst [vmem:[%s629 + $0x6d0] sm:$0xff] %v1066
                %v1068 = vld [vmem:[%s628 + $0xdb0] sm:$0xff]
                %1069 = vst [vmem:[%s629 + $0x6d8] sm:$0xff] %v1068
                %v1070 = vld [vmem:[%s628 + $0xdc0] sm:$0xff]
                %1071 = vst [vmem:[%s629 + $0x6e0] sm:$0xff] %v1070
                %v1072 = vld [vmem:[%s628 + $0xdd0] sm:$0xff]
                %1073 = vst [vmem:[%s629 + $0x6e8] sm:$0xff] %v1072
                %v1074 = vld [vmem:[%s628 + $0xde0] sm:$0xff]
                %1075 = vst [vmem:[%s629 + $0x6f0] sm:$0xff] %v1074
                %v1076 = vld [vmem:[%s628 + $0xdf0] sm:$0xff]
                %1077 = vst [vmem:[%s629 + $0x6f8] sm:$0xff] %v1076
                %v1078 = vld [vmem:[%s628 + $0xe00] sm:$0xff]
                %1079 = vst [vmem:[%s629 + $0x700] sm:$0xff] %v1078
                %v1080 = vld [vmem:[%s628 + $0xe10] sm:$0xff]
                %1081 = vst [vmem:[%s629 + $0x708] sm:$0xff] %v1080
                %v1082 = vld [vmem:[%s628 + $0xe20] sm:$0xff]
                %1083 = vst [vmem:[%s629 + $0x710] sm:$0xff] %v1082
                %v1084 = vld [vmem:[%s628 + $0xe30] sm:$0xff]
                %1085 = vst [vmem:[%s629 + $0x718] sm:$0xff] %v1084
                %v1086 = vld [vmem:[%s628 + $0xe40] sm:$0xff]
                %1087 = vst [vmem:[%s629 + $0x720] sm:$0xff] %v1086
                %v1088 = vld [vmem:[%s628 + $0xe50] sm:$0xff]
                %1089 = vst [vmem:[%s629 + $0x728] sm:$0xff] %v1088
                %v1090 = vld [vmem:[%s628 + $0xe60] sm:$0xff]
                %1091 = vst [vmem:[%s629 + $0x730] sm:$0xff] %v1090
                %v1092 = vld [vmem:[%s628 + $0xe70] sm:$0xff]
                %1093 = vst [vmem:[%s629 + $0x738] sm:$0xff] %v1092
                %v1094 = vld [vmem:[%s628 + $0xe80] sm:$0xff]
                %1095 = vst [vmem:[%s629 + $0x740] sm:$0xff] %v1094
                %v1096 = vld [vmem:[%s628 + $0xe90] sm:$0xff]
                %1097 = vst [vmem:[%s629 + $0x748] sm:$0xff] %v1096
                %v1098 = vld [vmem:[%s628 + $0xea0] sm:$0xff]
                %1099 = vst [vmem:[%s629 + $0x750] sm:$0xff] %v1098
                %v1100 = vld [vmem:[%s628 + $0xeb0] sm:$0xff]
                %1101 = vst [vmem:[%s629 + $0x758] sm:$0xff] %v1100
                %v1102 = vld [vmem:[%s628 + $0xec0] sm:$0xff]
                %1103 = vst [vmem:[%s629 + $0x760] sm:$0xff] %v1102
                %v1104 = vld [vmem:[%s628 + $0xed0] sm:$0xff]
                %1105 = vst [vmem:[%s629 + $0x768] sm:$0xff] %v1104
                %v1106 = vld [vmem:[%s628 + $0xee0] sm:$0xff]
                %1107 = vst [vmem:[%s629 + $0x770] sm:$0xff] %v1106
                %v1108 = vld [vmem:[%s628 + $0xef0] sm:$0xff]
                %1109 = vst [vmem:[%s629 + $0x778] sm:$0xff] %v1108
                %v1110 = vld [vmem:[%s628 + $0xf00] sm:$0xff]
                %1111 = vst [vmem:[%s629 + $0x780] sm:$0xff] %v1110
                %v1112 = vld [vmem:[%s628 + $0xf10] sm:$0xff]
                %1113 = vst [vmem:[%s629 + $0x788] sm:$0xff] %v1112
                %v1114 = vld [vmem:[%s628 + $0xf20] sm:$0xff]
                %1115 = vst [vmem:[%s629 + $0x790] sm:$0xff] %v1114
                %v1116 = vld [vmem:[%s628 + $0xf30] sm:$0xff]
                %1117 = vst [vmem:[%s629 + $0x798] sm:$0xff] %v1116
                %v1118 = vld [vmem:[%s628 + $0xf40] sm:$0xff]
                %1119 = vst [vmem:[%s629 + $0x7a0] sm:$0xff] %v1118
                %v1120 = vld [vmem:[%s628 + $0xf50] sm:$0xff]
                %1121 = vst [vmem:[%s629 + $0x7a8] sm:$0xff] %v1120
                %v1122 = vld [vmem:[%s628 + $0xf60] sm:$0xff]
                %1123 = vst [vmem:[%s629 + $0x7b0] sm:$0xff] %v1122
                %v1124 = vld [vmem:[%s628 + $0xf70] sm:$0xff]
                %1125 = vst [vmem:[%s629 + $0x7b8] sm:$0xff] %v1124
                %v1126 = vld [vmem:[%s628 + $0xf80] sm:$0xff]
                %1127 = vst [vmem:[%s629 + $0x7c0] sm:$0xff] %v1126
                %v1128 = vld [vmem:[%s628 + $0xf90] sm:$0xff]
                %1129 = vst [vmem:[%s629 + $0x7c8] sm:$0xff] %v1128
                %v1130 = vld [vmem:[%s628 + $0xfa0] sm:$0xff]
                %1131 = vst [vmem:[%s629 + $0x7d0] sm:$0xff] %v1130
                %v1132 = vld [vmem:[%s628 + $0xfb0] sm:$0xff]
                %1133 = vst [vmem:[%s629 + $0x7d8] sm:$0xff] %v1132
                %v1134 = vld [vmem:[%s628 + $0xfc0] sm:$0xff]
                %1135 = vst [vmem:[%s629 + $0x7e0] sm:$0xff] %v1134
                %v1136 = vld [vmem:[%s628 + $0xfd0] sm:$0xff]
                %1137 = vst [vmem:[%s629 + $0x7e8] sm:$0xff] %v1136
                %v1138 = vld [vmem:[%s628 + $0xfe0] sm:$0xff]
                %1139 = vst [vmem:[%s629 + $0x7f0] sm:$0xff] %v1138
                %v1140 = vld [vmem:[%s628 + $0xff0] sm:$0xff]
                %1141 = vst [vmem:[%s629 + $0x7f8] sm:$0xff] %v1140
              $region95: #{forward.8} parent=89 // loop_footer
                %s627 = sadd.s32 1, %s623
              $region96: #{forward.8} parent=89 // loop_footer_branch
                %622 = sbr.rel target = $region92
              $region97: #{forward.8} parent=89 // loop_exit
                _
            $region90: #{forward.8} parent=81 // pred_fallthru
              _
          $region82: #{forward.8} parent=77 // pred_fallthru
            _
          %1666 = vnop
        $region78: #{forward.8} parent=35 // pred_fallthru
          _
        // Predicated region
        $region113: #{forward.8} parent=35 // pred_check
          %p1667 = pneg %p211
        $region114: #{forward.8} parent=35 // pred_check_branch
          %1669 = sbr.rel (%p1667) target = $region116
        $region115: #{forward.8} parent=35 // pred_region
          %s1670 = sand.u32 %s201, 1
          %s1671 = sand.u32 %s201, 1
          %s1672 = smul.addr %s1671, 32
          %s1673 = scalar_lea.vmem [#allocation5], %s1672
          %s1674 = smul.u32 2, %s22
          %s1675 = smul.addr %s1674, 4
          %s1676 = scalar_lea.vmem %s7, %s1675
          // Predicated region
          $region117: #{forward.8} parent=115 // pred_check
            _
          $region118: #{forward.8} parent=115 // pred_check_branch
            %1678 = sbr.rel (0) target = $region120
          $region119: #{forward.8} parent=115 // pred_region
            // Predicated region
            $region121: #{forward.8} parent=119 // pred_check
              _
            $region122: #{forward.8} parent=119 // pred_check_branch
              %1680 = sbr.rel (0) target = $region124
            $region123: #{forward.8} parent=119 // pred_region
              // Predicated region
              $region136: #{forward.8} parent=123 // pred_check
                _
              $region137: #{forward.8} parent=123 // pred_check_branch
                %1701 = sbr.rel (0) target = $region139
              $region138: #{forward.8} parent=123 // pred_region
                loop: start=0, step=1, limit=1
                $region140: #{forward.8} parent=138 // loop_pre_header
                  _
                $region141: #{forward.8} parent=138 // loop_header
                  %s1703 = sphi 0, %s1707
                  %p1704 = scmp.ge.s32.totalorder %s1703, 1
                  %s1708 = sphi %s1676, %s1676
                  %s1709 = sphi %s1673, %s1673
                $region142: #{forward.8} parent=138 // loop_header_branch
                  %1706 = sbr.rel (%p1704) target = $region146
                $region143: #{forward.8} parent=138 // loop_body
                  %v1710 = vld [vmem:[%s1708] sm:$0xff]
                  %1711 = vst [vmem:[%s1709] sm:$0xff] %v1710
                  %v1712 = vld [vmem:[%s1708 + $0x10] sm:$0xff]
                  %1713 = vst [vmem:[%s1709 + $0x8] sm:$0xff] %v1712
                  %v1714 = vld [vmem:[%s1708 + $0x20] sm:$0xff]
                  %1715 = vst [vmem:[%s1709 + $0x10] sm:$0xff] %v1714
                  %v1716 = vld [vmem:[%s1708 + $0x30] sm:$0xff]
                  %1717 = vst [vmem:[%s1709 + $0x18] sm:$0xff] %v1716
                $region144: #{forward.8} parent=138 // loop_footer
                  %s1707 = sadd.s32 1, %s1703
                $region145: #{forward.8} parent=138 // loop_footer_branch
                  %1702 = sbr.rel target = $region141
                $region146: #{forward.8} parent=138 // loop_exit
                  _
              $region139: #{forward.8} parent=123 // pred_fallthru
                _
              // Predicated region
              $region147: #{forward.8} parent=123 // pred_check
                _
              $region148: #{forward.8} parent=123 // pred_check_branch
                %1719 = sbr.rel target = $region150
              $region149: #{forward.8} parent=123 // pred_region
                _
              $region150: #{forward.8} parent=123 // pred_fallthru
                _
            $region124: #{forward.8} parent=119 // pred_fallthru
              _
            // Predicated region
            $region125: #{forward.8} parent=119 // pred_check
              _
            $region126: #{forward.8} parent=119 // pred_check_branch
              %1682 = sbr.rel target = $region128
            $region127: #{forward.8} parent=119 // pred_region
              loop: start=0, step=1, limit=1
              $region129: #{forward.8} parent=127 // loop_pre_header
                _
              $region130: #{forward.8} parent=127 // loop_header
                %s1685 = sphi 0, %s1689
                %p1686 = scmp.ge.s32.totalorder %s1685, 1
                %s1690 = sphi %s1676, %s1676
                %s1691 = sphi %s1673, %s1673
              $region131: #{forward.8} parent=127 // loop_header_branch
                %1688 = sbr.rel (%p1686) target = $region135
              $region132: #{forward.8} parent=127 // loop_body
                %v1692 = vld [vmem:[%s1690] sm:$0xff]
                %1693 = vst [vmem:[%s1691] sm:$0xff] %v1692
                %v1694 = vld [vmem:[%s1690 + $0x10] sm:$0xff]
                %1695 = vst [vmem:[%s1691 + $0x8] sm:$0xff] %v1694
                %v1696 = vld [vmem:[%s1690 + $0x20] sm:$0xff]
                %1697 = vst [vmem:[%s1691 + $0x10] sm:$0xff] %v1696
                %v1698 = vld [vmem:[%s1690 + $0x30] sm:$0xff]
                %1699 = vst [vmem:[%s1691 + $0x18] sm:$0xff] %v1698
              $region133: #{forward.8} parent=127 // loop_footer
                %s1689 = sadd.s32 1, %s1685
              $region134: #{forward.8} parent=127 // loop_footer_branch
                %1684 = sbr.rel target = $region130
              $region135: #{forward.8} parent=127 // loop_exit
                _
            $region128: #{forward.8} parent=119 // pred_fallthru
              _
          $region120: #{forward.8} parent=115 // pred_fallthru
            _
          %1720 = vnop
        $region116: #{forward.8} parent=35 // pred_fallthru
          _
        // Predicated region
        $region151: #{forward.8} parent=35 // pred_check
          %p1721 = pneg %p237
        $region152: #{forward.8} parent=35 // pred_check_branch
          %1723 = sbr.rel (%p1721) target = $region154
        $region153: #{forward.8} parent=35 // pred_region
          %s1724 = smul.u32 2, %s22
          %p1725 = scmp.lt.s32.totalorder %s1724, 3
          %s1726 = scalar_select %p1725, %s1724, 3
          %s1727 = scalar_lea.vmem %s8, %s1726
          %s1728 = smul.u32 2, %s22
        $region154: #{forward.8} parent=35 // pred_fallthru
          _
      $region36: #{forward.8} parent=5 // pred_fallthru
        _
      %p1729 = scmp.le.s32.totalorder 1, %s15
      %p1730 = scmp.lt.s32.totalorder %s15, 3
      %p1731 = pnand %p1729, %p1730
      %p1732 = pneg %p1731
      // Predicated region
      $region155: #{forward.8} parent=5 // pred_check
        _
      $region156: #{forward.8} parent=5 // pred_check_branch
        %1734 = sbr.rel (%p1731) target = $region158
      $region157: #{forward.8} parent=5 // pred_region
        %s1735 = ssub.s32 %s15, 1
        %s1736 = sand.u32 %s150, 1
        %s1737 = sand.u32 %s150, 1
        %s1738 = smul.addr %s1737, 512
        %s1739 = scalar_lea.vmem [#allocation3], %s1738
        // Predicated region
        $region159: #{forward.8} parent=157 // pred_check
          %p1740 = pneg %p163
        $region160: #{forward.8} parent=157 // pred_check_branch
          %1742 = sbr.rel (%p1740) target = $region162
        $region161: #{forward.8} parent=157 // pred_region
          _
        $region162: #{forward.8} parent=157 // pred_fallthru
          _
        %s1743 = sand.u32 %s178, 1
        %s1744 = sand.u32 %s178, 1
        %s1745 = smul.addr %s1744, 2048
        %s1746 = scalar_lea.vmem [#allocation4], %s1745
        // Predicated region
        $region163: #{forward.8} parent=157 // pred_check
          %p1747 = pneg %p191
        $region164: #{forward.8} parent=157 // pred_check_branch
          %1749 = sbr.rel (%p1747) target = $region166
        $region165: #{forward.8} parent=157 // pred_region
          _
        $region166: #{forward.8} parent=157 // pred_fallthru
          _
        %s1750 = sand.u32 %s204, 1
        %s1751 = sand.u32 %s204, 1
        %s1752 = smul.addr %s1751, 32
        %s1753 = scalar_lea.vmem [#allocation5], %s1752
        // Predicated region
        $region167: #{forward.8} parent=157 // pred_check
          %p1754 = pneg %p217
        $region168: #{forward.8} parent=157 // pred_check_branch
          %1756 = sbr.rel (%p1754) target = $region170
        $region169: #{forward.8} parent=157 // pred_region
          _
        $region170: #{forward.8} parent=157 // pred_fallthru
          _
        %p1757 = pneg %p48
        %p1758 = pneg %p45
        %s1759 = smul.u32 16, %s25
        %p1760 = scmp.lt.s32.totalorder %s1759, 15
        %s1761 = scalar_select %p1760, %s1759, 15
        %s1762 = scalar_lea.vmem %s1, %s1761
        %p1763 = pneg %p74
        %p1764 = pneg %p71
        %p1765 = pneg %p95
        %p1766 = pneg %p92
        %p1767 = pneg %p116
        %p1768 = pneg %p113
        %p1769 = pneg %p137
        %p1770 = pneg %p134
        %s1771 = sand.u32 %s150, 1
        %s1772 = sand.u32 %s150, 1
        %s1773 = smul.addr %s1772, 512
        %s1774 = scalar_lea.vmem [#allocation3], %s1773
        %p1775 = pneg %p163
        %p1776 = pneg %p160
        %s1777 = sand.u32 %s178, 1
        %s1778 = sand.u32 %s178, 1
        %s1779 = smul.addr %s1778, 2048
        %s1780 = scalar_lea.vmem [#allocation4], %s1779
        %p1781 = pneg %p191
        %p1782 = pneg %p188
        %s1783 = sand.u32 %s204, 1
        %s1784 = sand.u32 %s204, 1
        %s1785 = smul.addr %s1784, 32
        %s1786 = scalar_lea.vmem [#allocation5], %s1785
        %p1787 = pneg %p217
        %p1788 = pneg %p214
        %s1789 = smul.u32 2, %s24
        %p1790 = scmp.lt.s32.totalorder %s1789, 3
        %s1791 = scalar_select %p1790, %s1789, 3
        %s1792 = scalar_lea.vmem %s8, %s1791
        %p1793 = pneg %p243
        %p1794 = pneg %p240
        %p1795 = pneg %p269
        %p1796 = pneg %p266
        %s1797 = smul.u32 2, %s24
        %p1798 = scmp.lt.s32.totalorder %s1797, 3
        %s1799 = scalar_select %p1798, %s1797, 3
        %s1800 = scalar_lea.vmem %s9, %s1799
        %s1801 = smul.u32 16, %s25
        %p1802 = scmp.lt.s32.totalorder %s1801, 15
        %s1803 = scalar_select %p1802, %s1801, 15
        %s1804 = scalar_lea.vmem %s1, %s1803
        %s1805 = smul.u32 16, %s25
        %s1806 = smul.u32 2, %s24
        %s1807 = smul.u32 256, %s25
        %s1808 = smul.u32 2, %s24
        %s1809 = smul.u32 2, %s24
        %s1810 = smul.u32 2, %s24
        %p1811 = scmp.lt.s32.totalorder %s1810, 3
        %s1812 = scalar_select %p1811, %s1810, 3
        %s1813 = scalar_lea.vmem %s8, %s1812
        %s1814 = smul.u32 2, %s24
        %s1815 = smul.u32 2, %s24
        %p1816 = scmp.lt.s32.totalorder %s1815, 3
        %s1817 = scalar_select %p1816, %s1815, 3
        %s1818 = scalar_lea.vmem %s9, %s1817
        %s1819 = smul.u32 2, %s24
        %p1821 = scmp.eq.s32.totalorder %s25, 0
        // Predicated region
        $region171: #{forward.8} parent=157 // pred_check
          %p1822 = pneg %p1821
        $region172: #{forward.8} parent=157 // pred_check_branch
          %1824 = sbr.rel (%p1822) target = $region174
        $region173: #{forward.8} parent=157 // pred_region
          %v1825 = vld [vmem:[%s2] sm:$0x1]
          %v1826 = vld [vmem:[%s3] sm:$0x1]
          %v1827 = vld [vmem:[%s4] sm:$0x1]
          %v1829 = vlaneseq
          %v1830 = vshrl.u32 %v1829, 7
          %v1831 = vsub.s32 0, %v1830
          %v1832 = vrot.slane %v1827, %v1831
          %vm1834 = vcmask 15360
          %v1836 = vsel %vm1834, %v1825, 0
          %vm1838 = vcmask 1040384
          %v1840 = vsel %vm1838, %v1826, 0
          %1842 = vmatprep.subr.bf16.mxu0 0
          %1843 = vmatpush1.bf16.msra.mxu0 %v1840
          %1844 = vmatprep.subr.bf16.mxu0 0
          %1845 = vmatpush1.bf16.msra.mxu0 0
          %1846 = vmatprep.subr.bf16.mxu0 0
          %1847 = vmatpush1.bf16.msra.mxu0 0
          %1848 = vmatprep.subr.bf16.mxu0 0
          %1849 = vmatpush1.bf16.msra.mxu0 0
          %1850 = vmatprep.subr.bf16.mxu0 0
          %1851 = vmatpush1.bf16.msra.mxu0 0
          %1852 = vmatprep.subr.bf16.mxu0 0
          %1853 = vmatpush1.bf16.msra.mxu0 0
          %1854 = vmatprep.subr.bf16.mxu0 0
          %1855 = vmatpush1.bf16.msra.mxu0 0
          %1856 = vmatprep.subr.bf16.mxu0 0
          %1857 = vmatpush1.bf16.msra.mxu0 0
          %1858 = vmatprep.subr.bf16.mxu0 0
          %1859 = vmatpush1.bf16.msra.mxu0 0
          %1860 = vmatprep.subr.bf16.mxu0 0
          %1861 = vmatpush1.bf16.msra.mxu0 0
          %1862 = vmatprep.subr.bf16.mxu0 0
          %1863 = vmatpush1.bf16.msra.mxu0 0
          %1864 = vmatprep.subr.bf16.mxu0 0
          %1865 = vmatpush1.bf16.msra.mxu0 0
          %1866 = vmatprep.subr.bf16.mxu0 0
          %1867 = vmatpush1.bf16.msra.mxu0 0
          %1868 = vmatprep.subr.bf16.mxu0 0
          %1869 = vmatpush1.bf16.msra.mxu0 0
          %1870 = vmatprep.subr.bf16.mxu0 0
          %1871 = vmatpush1.bf16.msra.mxu0 0
          %1872 = vmatprep.subr.bf16.mxu0 0
          %1873 = vmatpush1.bf16.msra.mxu0 0
          %1874 = vmatprep.mubr.bf16.mxu0 0
          %1875 = vmatmul.mubr.bf16.gmra.mrb[0].mxu0 %v1836
          %v1876 = vpop.f32.mrb[0].mxu0
          %v1877 = vadd.f32 %v1832, %v1876
          %v1878 = vpop.f32.mrb[0].mxu0
          %v1879 = vpop.f32.mrb[0].mxu0
          %v1880 = vpop.f32.mrb[0].mxu0
          %1881 = vdwg.mxu0
          %v1882 = vmax.f32 %v1877, 0.0
          %v1883 = vpack.c.bf16 %v1882, %v1882
          %v1884 = vld [vmem:[%s0] sm:$0xf]
          %v1885 = vld [vmem:[%s1739] sm:$0xff]
          %v1886 = vld [vmem:[%s1739 + $0x8] sm:$0xff]
          %v1887 = vld [vmem:[%s1739 + $0x10] sm:$0xff]
          %v1888 = vld [vmem:[%s1739 + $0x18] sm:$0xff]
          %v1889 = vld [vmem:[%s1739 + $0x20] sm:$0xff]
          %v1890 = vld [vmem:[%s1739 + $0x28] sm:$0xff]
          %v1891 = vld [vmem:[%s1739 + $0x30] sm:$0xff]
          %v1892 = vld [vmem:[%s1739 + $0x38] sm:$0xff]
          %v1893 = vld [vmem:[%s1739 + $0x40] sm:$0xff]
          %v1894 = vld [vmem:[%s1739 + $0x48] sm:$0xff]
          %v1895 = vld [vmem:[%s1739 + $0x50] sm:$0xff]
          %v1896 = vld [vmem:[%s1739 + $0x58] sm:$0xff]
          %v1897 = vld [vmem:[%s1739 + $0x60] sm:$0xff]
          %v1898 = vld [vmem:[%s1739 + $0x68] sm:$0xff]
          %v1899 = vld [vmem:[%s1739 + $0x70] sm:$0xff]
          %v1900 = vld [vmem:[%s1739 + $0x78] sm:$0xff]
          %v1901 = vld [vmem:[%s1739 + $0x80] sm:$0xff]
          %v1902 = vld [vmem:[%s1739 + $0x88] sm:$0xff]
          %v1903 = vld [vmem:[%s1739 + $0x90] sm:$0xff]
          %v1904 = vld [vmem:[%s1739 + $0x98] sm:$0xff]
          %v1905 = vld [vmem:[%s1739 + $0xa0] sm:$0xff]
          %v1906 = vld [vmem:[%s1739 + $0xa8] sm:$0xff]
          %v1907 = vld [vmem:[%s1739 + $0xb0] sm:$0xff]
          %v1908 = vld [vmem:[%s1739 + $0xb8] sm:$0xff]
          %v1909 = vld [vmem:[%s1739 + $0xc0] sm:$0xff]
          %v1910 = vld [vmem:[%s1739 + $0xc8] sm:$0xff]
          %v1911 = vld [vmem:[%s1739 + $0xd0] sm:$0xff]
          %v1912 = vld [vmem:[%s1739 + $0xd8] sm:$0xff]
          %v1913 = vld [vmem:[%s1739 + $0xe0] sm:$0xff]
          %v1914 = vld [vmem:[%s1739 + $0xe8] sm:$0xff]
          %v1915 = vld [vmem:[%s1739 + $0xf0] sm:$0xff]
          %v1916 = vld [vmem:[%s1739 + $0xf8] sm:$0xff]
          %v1917 = vld [vmem:[%s1739 + $0x100] sm:$0xff]
          %v1918 = vld [vmem:[%s1739 + $0x108] sm:$0xff]
          %v1919 = vld [vmem:[%s1739 + $0x110] sm:$0xff]
          %v1920 = vld [vmem:[%s1739 + $0x118] sm:$0xff]
          %v1921 = vld [vmem:[%s1739 + $0x120] sm:$0xff]
          %v1922 = vld [vmem:[%s1739 + $0x128] sm:$0xff]
          %v1923 = vld [vmem:[%s1739 + $0x130] sm:$0xff]
          %v1924 = vld [vmem:[%s1739 + $0x138] sm:$0xff]
          %v1925 = vld [vmem:[%s1739 + $0x140] sm:$0xff]
          %v1926 = vld [vmem:[%s1739 + $0x148] sm:$0xff]
          %v1927 = vld [vmem:[%s1739 + $0x150] sm:$0xff]
          %v1928 = vld [vmem:[%s1739 + $0x158] sm:$0xff]
          %v1929 = vld [vmem:[%s1739 + $0x160] sm:$0xff]
          %v1930 = vld [vmem:[%s1739 + $0x168] sm:$0xff]
          %v1931 = vld [vmem:[%s1739 + $0x170] sm:$0xff]
          %v1932 = vld [vmem:[%s1739 + $0x178] sm:$0xff]
          %v1933 = vld [vmem:[%s1739 + $0x180] sm:$0xff]
          %v1934 = vld [vmem:[%s1739 + $0x188] sm:$0xff]
          %v1935 = vld [vmem:[%s1739 + $0x190] sm:$0xff]
          %v1936 = vld [vmem:[%s1739 + $0x198] sm:$0xff]
          %v1937 = vld [vmem:[%s1739 + $0x1a0] sm:$0xff]
          %v1938 = vld [vmem:[%s1739 + $0x1a8] sm:$0xff]
          %v1939 = vld [vmem:[%s1739 + $0x1b0] sm:$0xff]
          %v1940 = vld [vmem:[%s1739 + $0x1b8] sm:$0xff]
          %v1941 = vld [vmem:[%s1739 + $0x1c0] sm:$0xff]
          %v1942 = vld [vmem:[%s1739 + $0x1c8] sm:$0xff]
          %v1943 = vld [vmem:[%s1739 + $0x1d0] sm:$0xff]
          %v1944 = vld [vmem:[%s1739 + $0x1d8] sm:$0xff]
          %v1945 = vld [vmem:[%s1739 + $0x1e0] sm:$0xff]
          %v1946 = vld [vmem:[%s1739 + $0x1e8] sm:$0xff]
          %v1947 = vld [vmem:[%s1739 + $0x1f0] sm:$0xff]
          %v1948 = vld [vmem:[%s1739 + $0x1f8] sm:$0xff]
          %v1949 = vld [vmem:[%s1753] sm:$0xff]
          %v1950 = vld [vmem:[%s1753 + $0x8] sm:$0xff]
          %v1951 = vld [vmem:[%s1753 + $0x10] sm:$0xff]
          %v1952 = vld [vmem:[%s1753 + $0x18] sm:$0xff]
          %v1957 = vunpack.c.l.b16 %v1949
          %v1958 = vunpack.c.h.b16 %v1949
          %v1959 = vunpack.c.l.b16 %v1950
          %v1960 = vunpack.c.h.b16 %v1950
          %v1961 = vunpack.c.l.b16 %v1951
          %v1962 = vunpack.c.h.b16 %v1951
          %v1963 = vunpack.c.l.b16 %v1952
          %v1964 = vunpack.c.h.b16 %v1952
          %v1965 = vpack.c.b16 %v1959, %v1957
          %v1966 = vpack.c.b16 %v1960, %v1958
          %v1967 = vpack.c.b16 %v1963, %v1961
          %v1968 = vpack.c.b16 %v1964, %v1962
          %vm1973 = vcmask 261120
          %v1975 = vsel %vm1973, %v1883, 0
          %1977 = vmatprep.subr.bf16.mxu0 %v1966
          %1978 = vmatpush1.bf16.msra.mxu0 %v1965
          %1979 = vmatprep.subr.bf16.mxu0 %v1968
          %1980 = vmatpush1.bf16.msra.mxu0 %v1967
          %1981 = vmatprep.subr.bf16.mxu0 0
          %1982 = vmatpush1.bf16.msra.mxu0 0
          %1983 = vmatprep.subr.bf16.mxu0 0
          %1984 = vmatpush1.bf16.msra.mxu0 0
          %1985 = vmatprep.subr.bf16.mxu0 0
          %1986 = vmatpush1.bf16.msra.mxu0 0
          %1987 = vmatprep.subr.bf16.mxu0 0
          %1988 = vmatpush1.bf16.msra.mxu0 0
          %1989 = vmatprep.subr.bf16.mxu0 0
          %1990 = vmatpush1.bf16.msra.mxu0 0
          %1991 = vmatprep.subr.bf16.mxu0 0
          %1992 = vmatpush1.bf16.msra.mxu0 0
          %1993 = vmatprep.subr.bf16.mxu0 0
          %1994 = vmatpush1.bf16.msra.mxu0 0
          %1995 = vmatprep.subr.bf16.mxu0 0
          %1996 = vmatpush1.bf16.msra.mxu0 0
          %1997 = vmatprep.subr.bf16.mxu0 0
          %1998 = vmatpush1.bf16.msra.mxu0 0
          %1999 = vmatprep.subr.bf16.mxu0 0
          %2000 = vmatpush1.bf16.msra.mxu0 0
          %2001 = vmatprep.subr.bf16.mxu0 0
          %2002 = vmatpush1.bf16.msra.mxu0 0
          %2003 = vmatprep.subr.bf16.mxu0 0
          %2004 = vmatpush1.bf16.msra.mxu0 0
          %2005 = vmatprep.subr.bf16.mxu0 0
          %2006 = vmatpush1.bf16.msra.mxu0 0
          %2007 = vmatprep.subr.bf16.mxu0 0
          %2008 = vmatpush1.bf16.msra.mxu0 0
          %2009 = vmatprep.mubr.bf16.mxu0 0
          %2010 = vmatmul.mubr.bf16.gmra.mrb[0].mxu0 %v1975
          %v2011 = vpop.f32.mrb[0].mxu0
          %v2012 = vadd.f32 0.0, %v2011
          %v2013 = vpop.f32.mrb[0].mxu0
          %v2014 = vadd.f32 0.0, %v2013
          %v2015 = vpop.f32.mrb[0].mxu0
          %v2016 = vpop.f32.mrb[0].mxu0
          %2017 = vdwg.mxu0
          %v2020 = vunpack.c.l.s4 1966171168
          %v2021 = vunpack.c.0.s8 %v2020
          %v2022 = vlaneseq
          %v2023 = vshrl.u32 %v2022, 7
          %v2024 = vsub.s32 %v2021, %v2023
          %v2025 = vrot.slane %v1884, %v2024
          %v2026 = vcombine.high %v2025, %v2025
          %v2028 = vunpack.c.l.s4 1966171168
          %v2029 = vunpack.c.0.s8 %v2028
          %v2030 = vlaneseq
          %v2031 = vshrl.u32 %v2030, 7
          %v2032 = vsub.s32 %v2029, %v2031
          %v2033 = vrot.slane %v2025, %v2032
          %v2035 = vunpack.c.l.s4 1966171168
          %v2036 = vunpack.c.0.s8 %v2035
          %v2037 = vlaneseq
          %v2038 = vshrl.u32 %v2037, 7
          %v2039 = vsub.s32 %v2036, %v2038
          %v2040 = vrot.slane %v2026, %v2039
          %v2041 = vcombine.high %v2033, %v2033
          %v2042 = vcombine.high %v2040, %v2040
          %v2111 = vunpack.c.l.b16 %v1885
          %v2112 = vunpack.c.h.b16 %v1885
          %v2113 = vunpack.c.l.b16 %v1886
          %v2114 = vunpack.c.h.b16 %v1886
          %v2115 = vunpack.c.l.b16 %v1887
          %v2116 = vunpack.c.h.b16 %v1887
          %v2117 = vunpack.c.l.b16 %v1888
          %v2118 = vunpack.c.h.b16 %v1888
          %v2119 = vunpack.c.l.b16 %v1889
          %v2120 = vunpack.c.h.b16 %v1889
          %v2121 = vunpack.c.l.b16 %v1890
          %v2122 = vunpack.c.h.b16 %v1890
          %v2123 = vunpack.c.l.b16 %v1891
          %v2124 = vunpack.c.h.b16 %v1891
          %v2125 = vunpack.c.l.b16 %v1892
          %v2126 = vunpack.c.h.b16 %v1892
          %v2127 = vunpack.c.l.b16 %v1893
          %v2128 = vunpack.c.h.b16 %v1893
          %v2129 = vunpack.c.l.b16 %v1894
          %v2130 = vunpack.c.h.b16 %v1894
          %v2131 = vunpack.c.l.b16 %v1895
          %v2132 = vunpack.c.h.b16 %v1895
          %v2133 = vunpack.c.l.b16 %v1896
          %v2134 = vunpack.c.h.b16 %v1896
          %v2135 = vunpack.c.l.b16 %v1897
          %v2136 = vunpack.c.h.b16 %v1897
          %v2137 = vunpack.c.l.b16 %v1898
          %v2138 = vunpack.c.h.b16 %v1898
          %v2139 = vunpack.c.l.b16 %v1899
          %v2140 = vunpack.c.h.b16 %v1899
          %v2141 = vunpack.c.l.b16 %v1900
          %v2142 = vunpack.c.h.b16 %v1900
          %v2143 = vunpack.c.l.b16 %v1901
          %v2144 = vunpack.c.h.b16 %v1901
          %v2145 = vunpack.c.l.b16 %v1902
          %v2146 = vunpack.c.h.b16 %v1902
          %v2147 = vunpack.c.l.b16 %v1903
          %v2148 = vunpack.c.h.b16 %v1903
          %v2149 = vunpack.c.l.b16 %v1904
          %v2150 = vunpack.c.h.b16 %v1904
          %v2151 = vunpack.c.l.b16 %v1905
          %v2152 = vunpack.c.h.b16 %v1905
          %v2153 = vunpack.c.l.b16 %v1906
          %v2154 = vunpack.c.h.b16 %v1906
          %v2155 = vunpack.c.l.b16 %v1907
          %v2156 = vunpack.c.h.b16 %v1907
          %v2157 = vunpack.c.l.b16 %v1908
          %v2158 = vunpack.c.h.b16 %v1908
          %v2159 = vunpack.c.l.b16 %v1909
          %v2160 = vunpack.c.h.b16 %v1909
          %v2161 = vunpack.c.l.b16 %v1910
          %v2162 = vunpack.c.h.b16 %v1910
          %v2163 = vunpack.c.l.b16 %v1911
          %v2164 = vunpack.c.h.b16 %v1911
          %v2165 = vunpack.c.l.b16 %v1912
          %v2166 = vunpack.c.h.b16 %v1912
          %v2167 = vunpack.c.l.b16 %v1913
          %v2168 = vunpack.c.h.b16 %v1913
          %v2169 = vunpack.c.l.b16 %v1914
          %v2170 = vunpack.c.h.b16 %v1914
          %v2171 = vunpack.c.l.b16 %v1915
          %v2172 = vunpack.c.h.b16 %v1915
          %v2173 = vunpack.c.l.b16 %v1916
          %v2174 = vunpack.c.h.b16 %v1916
          %v2175 = vunpack.c.l.b16 %v1917
          %v2176 = vunpack.c.h.b16 %v1917
          %v2177 = vunpack.c.l.b16 %v1918
          %v2178 = vunpack.c.h.b16 %v1918
          %v2179 = vunpack.c.l.b16 %v1919
          %v2180 = vunpack.c.h.b16 %v1919
          %v2181 = vunpack.c.l.b16 %v1920
          %v2182 = vunpack.c.h.b16 %v1920
          %v2183 = vunpack.c.l.b16 %v1921
          %v2184 = vunpack.c.h.b16 %v1921
          %v2185 = vunpack.c.l.b16 %v1922
          %v2186 = vunpack.c.h.b16 %v1922
          %v2187 = vunpack.c.l.b16 %v1923
          %v2188 = vunpack.c.h.b16 %v1923
          %v2189 = vunpack.c.l.b16 %v1924
          %v2190 = vunpack.c.h.b16 %v1924
          %v2191 = vunpack.c.l.b16 %v1925
          %v2192 = vunpack.c.h.b16 %v1925
          %v2193 = vunpack.c.l.b16 %v1926
          %v2194 = vunpack.c.h.b16 %v1926
          %v2195 = vunpack.c.l.b16 %v1927
          %v2196 = vunpack.c.h.b16 %v1927
          %v2197 = vunpack.c.l.b16 %v1928
          %v2198 = vunpack.c.h.b16 %v1928
          %v2199 = vunpack.c.l.b16 %v1929
          %v2200 = vunpack.c.h.b16 %v1929
          %v2201 = vunpack.c.l.b16 %v1930
          %v2202 = vunpack.c.h.b16 %v1930
          %v2203 = vunpack.c.l.b16 %v1931
          %v2204 = vunpack.c.h.b16 %v1931
          %v2205 = vunpack.c.l.b16 %v1932
          %v2206 = vunpack.c.h.b16 %v1932
          %v2207 = vunpack.c.l.b16 %v1933
          %v2208 = vunpack.c.h.b16 %v1933
          %v2209 = vunpack.c.l.b16 %v1934
          %v2210 = vunpack.c.h.b16 %v1934
          %v2211 = vunpack.c.l.b16 %v1935
          %v2212 = vunpack.c.h.b16 %v1935
          %v2213 = vunpack.c.l.b16 %v1936
          %v2214 = vunpack.c.h.b16 %v1936
          %v2215 = vunpack.c.l.b16 %v1937
          %v2216 = vunpack.c.h.b16 %v1937
          %v2217 = vunpack.c.l.b16 %v1938
          %v2218 = vunpack.c.h.b16 %v1938
          %v2219 = vunpack.c.l.b16 %v1939
          %v2220 = vunpack.c.h.b16 %v1939
          %v2221 = vunpack.c.l.b16 %v1940
          %v2222 = vunpack.c.h.b16 %v1940
          %v2223 = vunpack.c.l.b16 %v1941
          %v2224 = vunpack.c.h.b16 %v1941
          %v2225 = vunpack.c.l.b16 %v1942
          %v2226 = vunpack.c.h.b16 %v1942
          %v2227 = vunpack.c.l.b16 %v1943
          %v2228 = vunpack.c.h.b16 %v1943
          %v2229 = vunpack.c.l.b16 %v1944
          %v2230 = vunpack.c.h.b16 %v1944
          %v2231 = vunpack.c.l.b16 %v1945
          %v2232 = vunpack.c.h.b16 %v1945
          %v2233 = vunpack.c.l.b16 %v1946
          %v2234 = vunpack.c.h.b16 %v1946
          %v2235 = vunpack.c.l.b16 %v1947
          %v2236 = vunpack.c.h.b16 %v1947
          %v2237 = vunpack.c.l.b16 %v1948
          %v2238 = vunpack.c.h.b16 %v1948
          %v2239 = vpack.c.b16 %v2113, %v2111
          %v2240 = vpack.c.b16 %v2114, %v2112
          %v2241 = vpack.c.b16 %v2117, %v2115
          %v2242 = vpack.c.b16 %v2118, %v2116
          %v2243 = vpack.c.b16 %v2121, %v2119
          %v2244 = vpack.c.b16 %v2122, %v2120
          %v2245 = vpack.c.b16 %v2125, %v2123
          %v2246 = vpack.c.b16 %v2126, %v2124
          %v2247 = vpack.c.b16 %v2129, %v2127
          %v2248 = vpack.c.b16 %v2130, %v2128
          %v2249 = vpack.c.b16 %v2133, %v2131
          %v2250 = vpack.c.b16 %v2134, %v2132
          %v2251 = vpack.c.b16 %v2137, %v2135
          %v2252 = vpack.c.b16 %v2138, %v2136
          %v2253 = vpack.c.b16 %v2141, %v2139
          %v2254 = vpack.c.b16 %v2142, %v2140
          %v2255 = vpack.c.b16 %v2145, %v2143
          %v2256 = vpack.c.b16 %v2146, %v2144
          %v2257 = vpack.c.b16 %v2149, %v2147
          %v2258 = vpack.c.b16 %v2150, %v2148
          %v2259 = vpack.c.b16 %v2153, %v2151
          %v2260 = vpack.c.b16 %v2154, %v2152
          %v2261 = vpack.c.b16 %v2157, %v2155
          %v2262 = vpack.c.b16 %v2158, %v2156
          %v2263 = vpack.c.b16 %v2161, %v2159
          %v2264 = vpack.c.b16 %v2162, %v2160
          %v2265 = vpack.c.b16 %v2165, %v2163
          %v2266 = vpack.c.b16 %v2166, %v2164
          %v2267 = vpack.c.b16 %v2169, %v2167
          %v2268 = vpack.c.b16 %v2170, %v2168
          %v2269 = vpack.c.b16 %v2173, %v2171
          %v2270 = vpack.c.b16 %v2174, %v2172
          %v2271 = vpack.c.b16 %v2177, %v2175
          %v2272 = vpack.c.b16 %v2178, %v2176
          %v2273 = vpack.c.b16 %v2181, %v2179
          %v2274 = vpack.c.b16 %v2182, %v2180
          %v2275 = vpack.c.b16 %v2185, %v2183
          %v2276 = vpack.c.b16 %v2186, %v2184
          %v2277 = vpack.c.b16 %v2189, %v2187
          %v2278 = vpack.c.b16 %v2190, %v2188
          %v2279 = vpack.c.b16 %v2193, %v2191
          %v2280 = vpack.c.b16 %v2194, %v2192
          %v2281 = vpack.c.b16 %v2197, %v2195
          %v2282 = vpack.c.b16 %v2198, %v2196
          %v2283 = vpack.c.b16 %v2201, %v2199
          %v2284 = vpack.c.b16 %v2202, %v2200
          %v2285 = vpack.c.b16 %v2205, %v2203
          %v2286 = vpack.c.b16 %v2206, %v2204
          %v2287 = vpack.c.b16 %v2209, %v2207
          %v2288 = vpack.c.b16 %v2210, %v2208
          %v2289 = vpack.c.b16 %v2213, %v2211
          %v2290 = vpack.c.b16 %v2214, %v2212
          %v2291 = vpack.c.b16 %v2217, %v2215
          %v2292 = vpack.c.b16 %v2218, %v2216
          %v2293 = vpack.c.b16 %v2221, %v2219
          %v2294 = vpack.c.b16 %v2222, %v2220
          %v2295 = vpack.c.b16 %v2225, %v2223
          %v2296 = vpack.c.b16 %v2226, %v2224
          %v2297 = vpack.c.b16 %v2229, %v2227
          %v2298 = vpack.c.b16 %v2230, %v2228
          %v2299 = vpack.c.b16 %v2233, %v2231
          %v2300 = vpack.c.b16 %v2234, %v2232
          %v2301 = vpack.c.b16 %v2237, %v2235
          %v2302 = vpack.c.b16 %v2238, %v2236
          %2367 = vmatprep.subr.bf16.mxu0 %v2240
          %2368 = vmatpush1.bf16.msra.mxu0 %v2239
          %2369 = vmatprep.subr.bf16.mxu0 %v2242
          %2370 = vmatpush1.bf16.msra.mxu0 %v2241
          %2371 = vmatprep.subr.bf16.mxu0 %v2244
          %2372 = vmatpush1.bf16.msra.mxu0 %v2243
          %2373 = vmatprep.subr.bf16.mxu0 %v2246
          %2374 = vmatpush1.bf16.msra.mxu0 %v2245
          %2375 = vmatprep.subr.bf16.mxu0 %v2248
          %2376 = vmatpush1.bf16.msra.mxu0 %v2247
          %2377 = vmatprep.subr.bf16.mxu0 %v2250
          %2378 = vmatpush1.bf16.msra.mxu0 %v2249
          %2379 = vmatprep.subr.bf16.mxu0 %v2252
          %2380 = vmatpush1.bf16.msra.mxu0 %v2251
          %2381 = vmatprep.subr.bf16.mxu0 %v2254
          %2382 = vmatpush1.bf16.msra.mxu0 %v2253
          %2383 = vmatprep.subr.bf16.mxu0 %v2256
          %2384 = vmatpush1.bf16.msra.mxu0 %v2255
          %2385 = vmatprep.subr.bf16.mxu0 %v2258
          %2386 = vmatpush1.bf16.msra.mxu0 %v2257
          %2387 = vmatprep.subr.bf16.mxu0 %v2260
          %2388 = vmatpush1.bf16.msra.mxu0 %v2259
          %2389 = vmatprep.subr.bf16.mxu0 %v2262
          %2390 = vmatpush1.bf16.msra.mxu0 %v2261
          %2391 = vmatprep.subr.bf16.mxu0 %v2264
          %2392 = vmatpush1.bf16.msra.mxu0 %v2263
          %2393 = vmatprep.subr.bf16.mxu0 %v2266
          %2394 = vmatpush1.bf16.msra.mxu0 %v2265
          %2395 = vmatprep.subr.bf16.mxu0 %v2268
          %2396 = vmatpush1.bf16.msra.mxu0 %v2267
          %2397 = vmatprep.subr.bf16.mxu0 %v2270
          %2398 = vmatpush1.bf16.msra.mxu0 %v2269
          %2399 = vmatprep.mubr.bf16.mxu0 %v2040
          %2400 = vmatmul.mubr.bf16.gmra.mrb[0].mxu0 %v2033
          %v2401 = vpop.f32.mrb[0].mxu0
          %v2402 = vadd.f32 %v2012, %v2401
          %v2403 = vpop.f32.mrb[0].mxu0
          %v2404 = vadd.f32 %v2014, %v2403
          %v2405 = vpop.f32.mrb[0].mxu0
          %v2406 = vpop.f32.mrb[0].mxu0
          %2407 = vdwg.mxu0
          %2408 = vmatprep.subr.bf16.mxu0 %v2272
          %2409 = vmatpush1.bf16.msra.mxu0 %v2271
          %2410 = vmatprep.subr.bf16.mxu0 %v2274
          %2411 = vmatpush1.bf16.msra.mxu0 %v2273
          %2412 = vmatprep.subr.bf16.mxu0 %v2276
          %2413 = vmatpush1.bf16.msra.mxu0 %v2275
          %2414 = vmatprep.subr.bf16.mxu0 %v2278
          %2415 = vmatpush1.bf16.msra.mxu0 %v2277
          %2416 = vmatprep.subr.bf16.mxu0 %v2280
          %2417 = vmatpush1.bf16.msra.mxu0 %v2279
          %2418 = vmatprep.subr.bf16.mxu0 %v2282
          %2419 = vmatpush1.bf16.msra.mxu0 %v2281
          %2420 = vmatprep.subr.bf16.mxu0 %v2284
          %2421 = vmatpush1.bf16.msra.mxu0 %v2283
          %2422 = vmatprep.subr.bf16.mxu0 %v2286
          %2423 = vmatpush1.bf16.msra.mxu0 %v2285
          %2424 = vmatprep.subr.bf16.mxu0 %v2288
          %2425 = vmatpush1.bf16.msra.mxu0 %v2287
          %2426 = vmatprep.subr.bf16.mxu0 %v2290
          %2427 = vmatpush1.bf16.msra.mxu0 %v2289
          %2428 = vmatprep.subr.bf16.mxu0 %v2292
          %2429 = vmatpush1.bf16.msra.mxu0 %v2291
          %2430 = vmatprep.subr.bf16.mxu0 %v2294
          %2431 = vmatpush1.bf16.msra.mxu0 %v2293
          %2432 = vmatprep.subr.bf16.mxu0 %v2296
          %2433 = vmatpush1.bf16.msra.mxu0 %v2295
          %2434 = vmatprep.subr.bf16.mxu0 %v2298
          %2435 = vmatpush1.bf16.msra.mxu0 %v2297
          %2436 = vmatprep.subr.bf16.mxu0 %v2300
          %2437 = vmatpush1.bf16.msra.mxu0 %v2299
          %2438 = vmatprep.subr.bf16.mxu0 %v2302
          %2439 = vmatpush1.bf16.msra.mxu0 %v2301
          %2440 = vmatprep.mubr.bf16.mxu0 %v2042
          %2441 = vmatmul.mubr.bf16.gmra.mrb[0].mxu0 %v2041
          %v2442 = vpop.f32.mrb[0].mxu0
          %v2443 = vadd.f32 %v2402, %v2442
          %v2444 = vpop.f32.mrb[0].mxu0
          %v2445 = vadd.f32 %v2404, %v2444
          %v2446 = vpop.f32.mrb[0].mxu0
          %v2447 = vpop.f32.mrb[0].mxu0
          %2448 = vdwg.mxu0
          %v2449 = vld [vmem:[%s1813] sm:$0x3]
          %v2451 = vlaneseq
          %v2452 = vshrl.u32 %v2451, 7
          %v2453 = vsub.s32 0, %v2452
          %v2454 = vrot.slane %v2449, %v2453
          %v2455 = vlaneseq
          %v2456 = vshrl.u32 %v2455, 7
          %v2457 = vsub.s32 1, %v2456
          %v2458 = vrot.slane %v2449, %v2457
          %v2461 = vadd.f32 %v2443, %v2454
          %v2462 = vadd.f32 %v2445, %v2458
          %v2465 = vcombine.low %v2461, %v2462
          %v2467 = vunpack.c.l.s4 1983009808
          %v2468 = vunpack.c.0.s8 %v2467
          %v2469 = vlaneseq
          %v2470 = vshrl.u32 %v2469, 7
          %v2471 = vsub.s32 %v2468, %v2470
          %v2472 = vrot.slane %v2465, %v2471
          %2474 = vst [vmem:[#allocation2] sm:$0xf] %v2472
        $region174: #{forward.8} parent=157 // pred_fallthru
          _
        %v2475 = vld [vmem:[#allocation2] sm:$0xf]
        %v2476 = vld [vmem:[%s1804] sm:$0xff]
        %v2477 = vld [vmem:[%s1804 + $0x8] sm:$0xff]
        %v2478 = vld [vmem:[%s1746] sm:$0xff]
        %v2479 = vld [vmem:[%s1746 + $0x8] sm:$0xff]
        %v2480 = vld [vmem:[%s1746 + $0x10] sm:$0xff]
        %v2481 = vld [vmem:[%s1746 + $0x18] sm:$0xff]
        %v2482 = vld [vmem:[%s1746 + $0x20] sm:$0xff]
        %v2483 = vld [vmem:[%s1746 + $0x28] sm:$0xff]
        %v2484 = vld [vmem:[%s1746 + $0x30] sm:$0xff]
        %v2485 = vld [vmem:[%s1746 + $0x38] sm:$0xff]
        %v2486 = vld [vmem:[%s1746 + $0x40] sm:$0xff]
        %v2487 = vld [vmem:[%s1746 + $0x48] sm:$0xff]
        %v2488 = vld [vmem:[%s1746 + $0x50] sm:$0xff]
        %v2489 = vld [vmem:[%s1746 + $0x58] sm:$0xff]
        %v2490 = vld [vmem:[%s1746 + $0x60] sm:$0xff]
        %v2491 = vld [vmem:[%s1746 + $0x68] sm:$0xff]
        %v2492 = vld [vmem:[%s1746 + $0x70] sm:$0xff]
        %v2493 = vld [vmem:[%s1746 + $0x78] sm:$0xff]
        %v2494 = vld [vmem:[%s1746 + $0x80] sm:$0xff]
        %v2495 = vld [vmem:[%s1746 + $0x88] sm:$0xff]
        %v2496 = vld [vmem:[%s1746 + $0x90] sm:$0xff]
        %v2497 = vld [vmem:[%s1746 + $0x98] sm:$0xff]
        %v2498 = vld [vmem:[%s1746 + $0xa0] sm:$0xff]
        %v2499 = vld [vmem:[%s1746 + $0xa8] sm:$0xff]
        %v2500 = vld [vmem:[%s1746 + $0xb0] sm:$0xff]
        %v2501 = vld [vmem:[%s1746 + $0xb8] sm:$0xff]
        %v2502 = vld [vmem:[%s1746 + $0xc0] sm:$0xff]
        %v2503 = vld [vmem:[%s1746 + $0xc8] sm:$0xff]
        %v2504 = vld [vmem:[%s1746 + $0xd0] sm:$0xff]
        %v2505 = vld [vmem:[%s1746 + $0xd8] sm:$0xff]
        %v2506 = vld [vmem:[%s1746 + $0xe0] sm:$0xff]
        %v2507 = vld [vmem:[%s1746 + $0xe8] sm:$0xff]
        %v2508 = vld [vmem:[%s1746 + $0xf0] sm:$0xff]
        %v2509 = vld [vmem:[%s1746 + $0xf8] sm:$0xff]
        %v2510 = vld [vmem:[%s1746 + $0x100] sm:$0xff]
        %v2511 = vld [vmem:[%s1746 + $0x108] sm:$0xff]
        %v2512 = vld [vmem:[%s1746 + $0x110] sm:$0xff]
        %v2513 = vld [vmem:[%s1746 + $0x118] sm:$0xff]
        %v2514 = vld [vmem:[%s1746 + $0x120] sm:$0xff]
        %v2515 = vld [vmem:[%s1746 + $0x128] sm:$0xff]
        %v2516 = vld [vmem:[%s1746 + $0x130] sm:$0xff]
        %v2517 = vld [vmem:[%s1746 + $0x138] sm:$0xff]
        %v2518 = vld [vmem:[%s1746 + $0x140] sm:$0xff]
        %v2519 = vld [vmem:[%s1746 + $0x148] sm:$0xff]
        %v2520 = vld [vmem:[%s1746 + $0x150] sm:$0xff]
        %v2521 = vld [vmem:[%s1746 + $0x158] sm:$0xff]
        %v2522 = vld [vmem:[%s1746 + $0x160] sm:$0xff]
        %v2523 = vld [vmem:[%s1746 + $0x168] sm:$0xff]
        %v2524 = vld [vmem:[%s1746 + $0x170] sm:$0xff]
        %v2525 = vld [vmem:[%s1746 + $0x178] sm:$0xff]
        %v2526 = vld [vmem:[%s1746 + $0x180] sm:$0xff]
        %v2527 = vld [vmem:[%s1746 + $0x188] sm:$0xff]
        %v2528 = vld [vmem:[%s1746 + $0x190] sm:$0xff]
        %v2529 = vld [vmem:[%s1746 + $0x198] sm:$0xff]
        %v2530 = vld [vmem:[%s1746 + $0x1a0] sm:$0xff]
        %v2531 = vld [vmem:[%s1746 + $0x1a8] sm:$0xff]
        %v2532 = vld [vmem:[%s1746 + $0x1b0] sm:$0xff]
        %v2533 = vld [vmem:[%s1746 + $0x1b8] sm:$0xff]
        %v2534 = vld [vmem:[%s1746 + $0x1c0] sm:$0xff]
        %v2535 = vld [vmem:[%s1746 + $0x1c8] sm:$0xff]
        %v2536 = vld [vmem:[%s1746 + $0x1d0] sm:$0xff]
        %v2537 = vld [vmem:[%s1746 + $0x1d8] sm:$0xff]
        %v2538 = vld [vmem:[%s1746 + $0x1e0] sm:$0xff]
        %v2539 = vld [vmem:[%s1746 + $0x1e8] sm:$0xff]
        %v2540 = vld [vmem:[%s1746 + $0x1f0] sm:$0xff]
        %v2541 = vld [vmem:[%s1746 + $0x1f8] sm:$0xff]
        %v2542 = vld [vmem:[%s1746 + $0x200] sm:$0xff]
        %v2543 = vld [vmem:[%s1746 + $0x208] sm:$0xff]
        %v2544 = vld [vmem:[%s1746 + $0x210] sm:$0xff]
        %v2545 = vld [vmem:[%s1746 + $0x218] sm:$0xff]
        %v2546 = vld [vmem:[%s1746 + $0x220] sm:$0xff]
        %v2547 = vld [vmem:[%s1746 + $0x228] sm:$0xff]
        %v2548 = vld [vmem:[%s1746 + $0x230] sm:$0xff]
        %v2549 = vld [vmem:[%s1746 + $0x238] sm:$0xff]
        %v2550 = vld [vmem:[%s1746 + $0x240] sm:$0xff]
        %v2551 = vld [vmem:[%s1746 + $0x248] sm:$0xff]
        %v2552 = vld [vmem:[%s1746 + $0x250] sm:$0xff]
        %v2553 = vld [vmem:[%s1746 + $0x258] sm:$0xff]
        %v2554 = vld [vmem:[%s1746 + $0x260] sm:$0xff]
        %v2555 = vld [vmem:[%s1746 + $0x268] sm:$0xff]
        %v2556 = vld [vmem:[%s1746 + $0x270] sm:$0xff]
        %v2557 = vld [vmem:[%s1746 + $0x278] sm:$0xff]
        %v2558 = vld [vmem:[%s1746 + $0x280] sm:$0xff]
        %v2559 = vld [vmem:[%s1746 + $0x288] sm:$0xff]
        %v2560 = vld [vmem:[%s1746 + $0x290] sm:$0xff]
        %v2561 = vld [vmem:[%s1746 + $0x298] sm:$0xff]
        %v2562 = vld [vmem:[%s1746 + $0x2a0] sm:$0xff]
        %v2563 = vld [vmem:[%s1746 + $0x2a8] sm:$0xff]
        %v2564 = vld [vmem:[%s1746 + $0x2b0] sm:$0xff]
        %v2565 = vld [vmem:[%s1746 + $0x2b8] sm:$0xff]
        %v2566 = vld [vmem:[%s1746 + $0x2c0] sm:$0xff]
        %v2567 = vld [vmem:[%s1746 + $0x2c8] sm:$0xff]
        %v2568 = vld [vmem:[%s1746 + $0x2d0] sm:$0xff]
        %v2569 = vld [vmem:[%s1746 + $0x2d8] sm:$0xff]
        %v2570 = vld [vmem:[%s1746 + $0x2e0] sm:$0xff]
        %v2571 = vld [vmem:[%s1746 + $0x2e8] sm:$0xff]
        %v2572 = vld [vmem:[%s1746 + $0x2f0] sm:$0xff]
        %v2573 = vld [vmem:[%s1746 + $0x2f8] sm:$0xff]
        %v2574 = vld [vmem:[%s1746 + $0x300] sm:$0xff]
        %v2575 = vld [vmem:[%s1746 + $0x308] sm:$0xff]
        %v2576 = vld [vmem:[%s1746 + $0x310] sm:$0xff]
        %v2577 = vld [vmem:[%s1746 + $0x318] sm:$0xff]
        %v2578 = vld [vmem:[%s1746 + $0x320] sm:$0xff]
        %v2579 = vld [vmem:[%s1746 + $0x328] sm:$0xff]
        %v2580 = vld [vmem:[%s1746 + $0x330] sm:$0xff]
        %v2581 = vld [vmem:[%s1746 + $0x338] sm:$0xff]
        %v2582 = vld [vmem:[%s1746 + $0x340] sm:$0xff]
        %v2583 = vld [vmem:[%s1746 + $0x348] sm:$0xff]
        %v2584 = vld [vmem:[%s1746 + $0x350] sm:$0xff]
        %v2585 = vld [vmem:[%s1746 + $0x358] sm:$0xff]
        %v2586 = vld [vmem:[%s1746 + $0x360] sm:$0xff]
        %v2587 = vld [vmem:[%s1746 + $0x368] sm:$0xff]
        %v2588 = vld [vmem:[%s1746 + $0x370] sm:$0xff]
        %v2589 = vld [vmem:[%s1746 + $0x378] sm:$0xff]
        %v2590 = vld [vmem:[%s1746 + $0x380] sm:$0xff]
        %v2591 = vld [vmem:[%s1746 + $0x388] sm:$0xff]
        %v2592 = vld [vmem:[%s1746 + $0x390] sm:$0xff]
        %v2593 = vld [vmem:[%s1746 + $0x398] sm:$0xff]
        %v2594 = vld [vmem:[%s1746 + $0x3a0] sm:$0xff]
        %v2595 = vld [vmem:[%s1746 + $0x3a8] sm:$0xff]
        %v2596 = vld [vmem:[%s1746 + $0x3b0] sm:$0xff]
        %v2597 = vld [vmem:[%s1746 + $0x3b8] sm:$0xff]
        %v2598 = vld [vmem:[%s1746 + $0x3c0] sm:$0xff]
        %v2599 = vld [vmem:[%s1746 + $0x3c8] sm:$0xff]
        %v2600 = vld [vmem:[%s1746 + $0x3d0] sm:$0xff]
        %v2601 = vld [vmem:[%s1746 + $0x3d8] sm:$0xff]
        %v2602 = vld [vmem:[%s1746 + $0x3e0] sm:$0xff]
        %v2603 = vld [vmem:[%s1746 + $0x3e8] sm:$0xff]
        %v2604 = vld [vmem:[%s1746 + $0x3f0] sm:$0xff]
        %v2605 = vld [vmem:[%s1746 + $0x3f8] sm:$0xff]
        %v2606 = vld [vmem:[%s1746 + $0x400] sm:$0xff]
        %v2607 = vld [vmem:[%s1746 + $0x408] sm:$0xff]
        %v2608 = vld [vmem:[%s1746 + $0x410] sm:$0xff]
        %v2609 = vld [vmem:[%s1746 + $0x418] sm:$0xff]
        %v2610 = vld [vmem:[%s1746 + $0x420] sm:$0xff]
        %v2611 = vld [vmem:[%s1746 + $0x428] sm:$0xff]
        %v2612 = vld [vmem:[%s1746 + $0x430] sm:$0xff]
        %v2613 = vld [vmem:[%s1746 + $0x438] sm:$0xff]
        %v2614 = vld [vmem:[%s1746 + $0x440] sm:$0xff]
        %v2615 = vld [vmem:[%s1746 + $0x448] sm:$0xff]
        %v2616 = vld [vmem:[%s1746 + $0x450] sm:$0xff]
        %v2617 = vld [vmem:[%s1746 + $0x458] sm:$0xff]
        %v2618 = vld [vmem:[%s1746 + $0x460] sm:$0xff]
        %v2619 = vld [vmem:[%s1746 + $0x468] sm:$0xff]
        %v2620 = vld [vmem:[%s1746 + $0x470] sm:$0xff]
        %v2621 = vld [vmem:[%s1746 + $0x478] sm:$0xff]
        %v2622 = vld [vmem:[%s1746 + $0x480] sm:$0xff]
        %v2623 = vld [vmem:[%s1746 + $0x488] sm:$0xff]
        %v2624 = vld [vmem:[%s1746 + $0x490] sm:$0xff]
        %v2625 = vld [vmem:[%s1746 + $0x498] sm:$0xff]
        %v2626 = vld [vmem:[%s1746 + $0x4a0] sm:$0xff]
        %v2627 = vld [vmem:[%s1746 + $0x4a8] sm:$0xff]
        %v2628 = vld [vmem:[%s1746 + $0x4b0] sm:$0xff]
        %v2629 = vld [vmem:[%s1746 + $0x4b8] sm:$0xff]
        %v2630 = vld [vmem:[%s1746 + $0x4c0] sm:$0xff]
        %v2631 = vld [vmem:[%s1746 + $0x4c8] sm:$0xff]
        %v2632 = vld [vmem:[%s1746 + $0x4d0] sm:$0xff]
        %v2633 = vld [vmem:[%s1746 + $0x4d8] sm:$0xff]
        %v2634 = vld [vmem:[%s1746 + $0x4e0] sm:$0xff]
        %v2635 = vld [vmem:[%s1746 + $0x4e8] sm:$0xff]
        %v2636 = vld [vmem:[%s1746 + $0x4f0] sm:$0xff]
        %v2637 = vld [vmem:[%s1746 + $0x4f8] sm:$0xff]
        %v2638 = vld [vmem:[%s1746 + $0x500] sm:$0xff]
        %v2639 = vld [vmem:[%s1746 + $0x508] sm:$0xff]
        %v2640 = vld [vmem:[%s1746 + $0x510] sm:$0xff]
        %v2641 = vld [vmem:[%s1746 + $0x518] sm:$0xff]
        %v2642 = vld [vmem:[%s1746 + $0x520] sm:$0xff]
        %v2643 = vld [vmem:[%s1746 + $0x528] sm:$0xff]
        %v2644 = vld [vmem:[%s1746 + $0x530] sm:$0xff]
        %v2645 = vld [vmem:[%s1746 + $0x538] sm:$0xff]
        %v2646 = vld [vmem:[%s1746 + $0x540] sm:$0xff]
        %v2647 = vld [vmem:[%s1746 + $0x548] sm:$0xff]
        %v2648 = vld [vmem:[%s1746 + $0x550] sm:$0xff]
        %v2649 = vld [vmem:[%s1746 + $0x558] sm:$0xff]
        %v2650 = vld [vmem:[%s1746 + $0x560] sm:$0xff]
        %v2651 = vld [vmem:[%s1746 + $0x568] sm:$0xff]
        %v2652 = vld [vmem:[%s1746 + $0x570] sm:$0xff]
        %v2653 = vld [vmem:[%s1746 + $0x578] sm:$0xff]
        %v2654 = vld [vmem:[%s1746 + $0x580] sm:$0xff]
        %v2655 = vld [vmem:[%s1746 + $0x588] sm:$0xff]
        %v2656 = vld [vmem:[%s1746 + $0x590] sm:$0xff]
        %v2657 = vld [vmem:[%s1746 + $0x598] sm:$0xff]
        %v2658 = vld [vmem:[%s1746 + $0x5a0] sm:$0xff]
        %v2659 = vld [vmem:[%s1746 + $0x5a8] sm:$0xff]
        %v2660 = vld [vmem:[%s1746 + $0x5b0] sm:$0xff]
        %v2661 = vld [vmem:[%s1746 + $0x5b8] sm:$0xff]
        %v2662 = vld [vmem:[%s1746 + $0x5c0] sm:$0xff]
        %v2663 = vld [vmem:[%s1746 + $0x5c8] sm:$0xff]
        %v2664 = vld [vmem:[%s1746 + $0x5d0] sm:$0xff]
        %v2665 = vld [vmem:[%s1746 + $0x5d8] sm:$0xff]
        %v2666 = vld [vmem:[%s1746 + $0x5e0] sm:$0xff]
        %v2667 = vld [vmem:[%s1746 + $0x5e8] sm:$0xff]
        %v2668 = vld [vmem:[%s1746 + $0x5f0] sm:$0xff]
        %v2669 = vld [vmem:[%s1746 + $0x5f8] sm:$0xff]
        %v2670 = vld [vmem:[%s1746 + $0x600] sm:$0xff]
        %v2671 = vld [vmem:[%s1746 + $0x608] sm:$0xff]
        %v2672 = vld [vmem:[%s1746 + $0x610] sm:$0xff]
        %v2673 = vld [vmem:[%s1746 + $0x618] sm:$0xff]
        %v2674 = vld [vmem:[%s1746 + $0x620] sm:$0xff]
        %v2675 = vld [vmem:[%s1746 + $0x628] sm:$0xff]
        %v2676 = vld [vmem:[%s1746 + $0x630] sm:$0xff]
        %v2677 = vld [vmem:[%s1746 + $0x638] sm:$0xff]
        %v2678 = vld [vmem:[%s1746 + $0x640] sm:$0xff]
        %v2679 = vld [vmem:[%s1746 + $0x648] sm:$0xff]
        %v2680 = vld [vmem:[%s1746 + $0x650] sm:$0xff]
        %v2681 = vld [vmem:[%s1746 + $0x658] sm:$0xff]
        %v2682 = vld [vmem:[%s1746 + $0x660] sm:$0xff]
        %v2683 = vld [vmem:[%s1746 + $0x668] sm:$0xff]
        %v2684 = vld [vmem:[%s1746 + $0x670] sm:$0xff]
        %v2685 = vld [vmem:[%s1746 + $0x678] sm:$0xff]
        %v2686 = vld [vmem:[%s1746 + $0x680] sm:$0xff]
        %v2687 = vld [vmem:[%s1746 + $0x688] sm:$0xff]
        %v2688 = vld [vmem:[%s1746 + $0x690] sm:$0xff]
        %v2689 = vld [vmem:[%s1746 + $0x698] sm:$0xff]
        %v2690 = vld [vmem:[%s1746 + $0x6a0] sm:$0xff]
        %v2691 = vld [vmem:[%s1746 + $0x6a8] sm:$0xff]
        %v2692 = vld [vmem:[%s1746 + $0x6b0] sm:$0xff]
        %v2693 = vld [vmem:[%s1746 + $0x6b8] sm:$0xff]
        %v2694 = vld [vmem:[%s1746 + $0x6c0] sm:$0xff]
        %v2695 = vld [vmem:[%s1746 + $0x6c8] sm:$0xff]
        %v2696 = vld [vmem:[%s1746 + $0x6d0] sm:$0xff]
        %v2697 = vld [vmem:[%s1746 + $0x6d8] sm:$0xff]
        %v2698 = vld [vmem:[%s1746 + $0x6e0] sm:$0xff]
        %v2699 = vld [vmem:[%s1746 + $0x6e8] sm:$0xff]
        %v2700 = vld [vmem:[%s1746 + $0x6f0] sm:$0xff]
        %v2701 = vld [vmem:[%s1746 + $0x6f8] sm:$0xff]
        %v2702 = vld [vmem:[%s1746 + $0x700] sm:$0xff]
        %v2703 = vld [vmem:[%s1746 + $0x708] sm:$0xff]
        %v2704 = vld [vmem:[%s1746 + $0x710] sm:$0xff]
        %v2705 = vld [vmem:[%s1746 + $0x718] sm:$0xff]
        %v2706 = vld [vmem:[%s1746 + $0x720] sm:$0xff]
        %v2707 = vld [vmem:[%s1746 + $0x728] sm:$0xff]
        %v2708 = vld [vmem:[%s1746 + $0x730] sm:$0xff]
        %v2709 = vld [vmem:[%s1746 + $0x738] sm:$0xff]
        %v2710 = vld [vmem:[%s1746 + $0x740] sm:$0xff]
        %v2711 = vld [vmem:[%s1746 + $0x748] sm:$0xff]
        %v2712 = vld [vmem:[%s1746 + $0x750] sm:$0xff]
        %v2713 = vld [vmem:[%s1746 + $0x758] sm:$0xff]
        %v2714 = vld [vmem:[%s1746 + $0x760] sm:$0xff]
        %v2715 = vld [vmem:[%s1746 + $0x768] sm:$0xff]
        %v2716 = vld [vmem:[%s1746 + $0x770] sm:$0xff]
        %v2717 = vld [vmem:[%s1746 + $0x778] sm:$0xff]
        %v2718 = vld [vmem:[%s1746 + $0x780] sm:$0xff]
        %v2719 = vld [vmem:[%s1746 + $0x788] sm:$0xff]
        %v2720 = vld [vmem:[%s1746 + $0x790] sm:$0xff]
        %v2721 = vld [vmem:[%s1746 + $0x798] sm:$0xff]
        %v2722 = vld [vmem:[%s1746 + $0x7a0] sm:$0xff]
        %v2723 = vld [vmem:[%s1746 + $0x7a8] sm:$0xff]
        %v2724 = vld [vmem:[%s1746 + $0x7b0] sm:$0xff]
        %v2725 = vld [vmem:[%s1746 + $0x7b8] sm:$0xff]
        %v2726 = vld [vmem:[%s1746 + $0x7c0] sm:$0xff]
        %v2727 = vld [vmem:[%s1746 + $0x7c8] sm:$0xff]
        %v2728 = vld [vmem:[%s1746 + $0x7d0] sm:$0xff]
        %v2729 = vld [vmem:[%s1746 + $0x7d8] sm:$0xff]
        %v2730 = vld [vmem:[%s1746 + $0x7e0] sm:$0xff]
        %v2731 = vld [vmem:[%s1746 + $0x7e8] sm:$0xff]
        %v2732 = vld [vmem:[%s1746 + $0x7f0] sm:$0xff]
        %v2733 = vld [vmem:[%s1746 + $0x7f8] sm:$0xff]
        %v2736 = vcombine.high %v2476, %v2476
        %v2738 = vunpack.c.l.s4 1966171168
        %v2739 = vunpack.c.0.s8 %v2738
        %v2740 = vlaneseq
        %v2741 = vshrl.u32 %v2740, 7
        %v2742 = vsub.s32 %v2739, %v2741
        %v2743 = vrot.slane %v2476, %v2742
        %v2745 = vunpack.c.l.s4 1966171168
        %v2746 = vunpack.c.0.s8 %v2745
        %v2747 = vlaneseq
        %v2748 = vshrl.u32 %v2747, 7
        %v2749 = vsub.s32 %v2746, %v2748
        %v2750 = vrot.slane %v2736, %v2749
        %v2751 = vcombine.high %v2743, %v2743
        %v2752 = vcombine.high %v2750, %v2750
        %v2754 = vunpack.c.l.s4 1966171168
        %v2755 = vunpack.c.0.s8 %v2754
        %v2756 = vlaneseq
        %v2757 = vshrl.u32 %v2756, 7
        %v2758 = vsub.s32 %v2755, %v2757
        %v2759 = vrot.slane %v2743, %v2758
        %v2761 = vunpack.c.l.s4 1966171168
        %v2762 = vunpack.c.0.s8 %v2761
        %v2763 = vlaneseq
        %v2764 = vshrl.u32 %v2763, 7
        %v2765 = vsub.s32 %v2762, %v2764
        %v2766 = vrot.slane %v2750, %v2765
        %v2768 = vunpack.c.l.s4 1966171168
        %v2769 = vunpack.c.0.s8 %v2768
        %v2770 = vlaneseq
        %v2771 = vshrl.u32 %v2770, 7
        %v2772 = vsub.s32 %v2769, %v2771
        %v2773 = vrot.slane %v2751, %v2772
        %v2775 = vunpack.c.l.s4 1966171168
        %v2776 = vunpack.c.0.s8 %v2775
        %v2777 = vlaneseq
        %v2778 = vshrl.u32 %v2777, 7
        %v2779 = vsub.s32 %v2776, %v2778
        %v2780 = vrot.slane %v2752, %v2779
        %v2781 = vcombine.high %v2759, %v2759
        %v2782 = vcombine.high %v2766, %v2766
        %v2783 = vcombine.high %v2773, %v2773
        %v2784 = vcombine.high %v2780, %v2780
        %v2785 = vcombine.high %v2477, %v2477
        %v2787 = vunpack.c.l.s4 1966171168
        %v2788 = vunpack.c.0.s8 %v2787
        %v2789 = vlaneseq
        %v2790 = vshrl.u32 %v2789, 7
        %v2791 = vsub.s32 %v2788, %v2790
        %v2792 = vrot.slane %v2477, %v2791
        %v2794 = vunpack.c.l.s4 1966171168
        %v2795 = vunpack.c.0.s8 %v2794
        %v2796 = vlaneseq
        %v2797 = vshrl.u32 %v2796, 7
        %v2798 = vsub.s32 %v2795, %v2797
        %v2799 = vrot.slane %v2785, %v2798
        %v2800 = vcombine.high %v2792, %v2792
        %v2801 = vcombine.high %v2799, %v2799
        %v2803 = vunpack.c.l.s4 1966171168
        %v2804 = vunpack.c.0.s8 %v2803
        %v2805 = vlaneseq
        %v2806 = vshrl.u32 %v2805, 7
        %v2807 = vsub.s32 %v2804, %v2806
        %v2808 = vrot.slane %v2792, %v2807
        %v2810 = vunpack.c.l.s4 1966171168
        %v2811 = vunpack.c.0.s8 %v2810
        %v2812 = vlaneseq
        %v2813 = vshrl.u32 %v2812, 7
        %v2814 = vsub.s32 %v2811, %v2813
        %v2815 = vrot.slane %v2799, %v2814
        %v2817 = vunpack.c.l.s4 1966171168
        %v2818 = vunpack.c.0.s8 %v2817
        %v2819 = vlaneseq
        %v2820 = vshrl.u32 %v2819, 7
        %v2821 = vsub.s32 %v2818, %v2820
        %v2822 = vrot.slane %v2800, %v2821
        %v2824 = vunpack.c.l.s4 1966171168
        %v2825 = vunpack.c.0.s8 %v2824
        %v2826 = vlaneseq
        %v2827 = vshrl.u32 %v2826, 7
        %v2828 = vsub.s32 %v2825, %v2827
        %v2829 = vrot.slane %v2801, %v2828
        %v2830 = vcombine.high %v2808, %v2808
        %v2831 = vcombine.high %v2815, %v2815
        %v2832 = vcombine.high %v2822, %v2822
        %v2833 = vcombine.high %v2829, %v2829
        %v3106 = vunpack.c.l.b16 %v2478
        %v3107 = vunpack.c.h.b16 %v2478
        %v3108 = vunpack.c.l.b16 %v2479
        %v3109 = vunpack.c.h.b16 %v2479
        %v3110 = vunpack.c.l.b16 %v2480
        %v3111 = vunpack.c.h.b16 %v2480
        %v3112 = vunpack.c.l.b16 %v2481
        %v3113 = vunpack.c.h.b16 %v2481
        %v3114 = vunpack.c.l.b16 %v2482
        %v3115 = vunpack.c.h.b16 %v2482
        %v3116 = vunpack.c.l.b16 %v2483
        %v3117 = vunpack.c.h.b16 %v2483
        %v3118 = vunpack.c.l.b16 %v2484
        %v3119 = vunpack.c.h.b16 %v2484
        %v3120 = vunpack.c.l.b16 %v2485
        %v3121 = vunpack.c.h.b16 %v2485
        %v3122 = vunpack.c.l.b16 %v2486
        %v3123 = vunpack.c.h.b16 %v2486
        %v3124 = vunpack.c.l.b16 %v2487
        %v3125 = vunpack.c.h.b16 %v2487
        %v3126 = vunpack.c.l.b16 %v2488
        %v3127 = vunpack.c.h.b16 %v2488
        %v3128 = vunpack.c.l.b16 %v2489
        %v3129 = vunpack.c.h.b16 %v2489
        %v3130 = vunpack.c.l.b16 %v2490
        %v3131 = vunpack.c.h.b16 %v2490
        %v3132 = vunpack.c.l.b16 %v2491
        %v3133 = vunpack.c.h.b16 %v2491
        %v3134 = vunpack.c.l.b16 %v2492
        %v3135 = vunpack.c.h.b16 %v2492
        %v3136 = vunpack.c.l.b16 %v2493
        %v3137 = vunpack.c.h.b16 %v2493
        %v3138 = vunpack.c.l.b16 %v2494
        %v3139 = vunpack.c.h.b16 %v2494
        %v3140 = vunpack.c.l.b16 %v2495
        %v3141 = vunpack.c.h.b16 %v2495
        %v3142 = vunpack.c.l.b16 %v2496
        %v3143 = vunpack.c.h.b16 %v2496
        %v3144 = vunpack.c.l.b16 %v2497
        %v3145 = vunpack.c.h.b16 %v2497
        %v3146 = vunpack.c.l.b16 %v2498
        %v3147 = vunpack.c.h.b16 %v2498
        %v3148 = vunpack.c.l.b16 %v2499
        %v3149 = vunpack.c.h.b16 %v2499
        %v3150 = vunpack.c.l.b16 %v2500
        %v3151 = vunpack.c.h.b16 %v2500
        %v3152 = vunpack.c.l.b16 %v2501
        %v3153 = vunpack.c.h.b16 %v2501
        %v3154 = vunpack.c.l.b16 %v2502
        %v3155 = vunpack.c.h.b16 %v2502
        %v3156 = vunpack.c.l.b16 %v2503
        %v3157 = vunpack.c.h.b16 %v2503
        %v3158 = vunpack.c.l.b16 %v2504
        %v3159 = vunpack.c.h.b16 %v2504
        %v3160 = vunpack.c.l.b16 %v2505
        %v3161 = vunpack.c.h.b16 %v2505
        %v3162 = vunpack.c.l.b16 %v2506
        %v3163 = vunpack.c.h.b16 %v2506
        %v3164 = vunpack.c.l.b16 %v2507
        %v3165 = vunpack.c.h.b16 %v2507
        %v3166 = vunpack.c.l.b16 %v2508
        %v3167 = vunpack.c.h.b16 %v2508
        %v3168 = vunpack.c.l.b16 %v2509
        %v3169 = vunpack.c.h.b16 %v2509
        %v3170 = vunpack.c.l.b16 %v2510
        %v3171 = vunpack.c.h.b16 %v2510
        %v3172 = vunpack.c.l.b16 %v2511
        %v3173 = vunpack.c.h.b16 %v2511
        %v3174 = vunpack.c.l.b16 %v2512
        %v3175 = vunpack.c.h.b16 %v2512
        %v3176 = vunpack.c.l.b16 %v2513
        %v3177 = vunpack.c.h.b16 %v2513
        %v3178 = vunpack.c.l.b16 %v2514
        %v3179 = vunpack.c.h.b16 %v2514
        %v3180 = vunpack.c.l.b16 %v2515
        %v3181 = vunpack.c.h.b16 %v2515
        %v3182 = vunpack.c.l.b16 %v2516
        %v3183 = vunpack.c.h.b16 %v2516
        %v3184 = vunpack.c.l.b16 %v2517
        %v3185 = vunpack.c.h.b16 %v2517
        %v3186 = vunpack.c.l.b16 %v2518
        %v3187 = vunpack.c.h.b16 %v2518
        %v3188 = vunpack.c.l.b16 %v2519
        %v3189 = vunpack.c.h.b16 %v2519
        %v3190 = vunpack.c.l.b16 %v2520
        %v3191 = vunpack.c.h.b16 %v2520
        %v3192 = vunpack.c.l.b16 %v2521
        %v3193 = vunpack.c.h.b16 %v2521
        %v3194 = vunpack.c.l.b16 %v2522
        %v3195 = vunpack.c.h.b16 %v2522
        %v3196 = vunpack.c.l.b16 %v2523
        %v3197 = vunpack.c.h.b16 %v2523
        %v3198 = vunpack.c.l.b16 %v2524
        %v3199 = vunpack.c.h.b16 %v2524
        %v3200 = vunpack.c.l.b16 %v2525
        %v3201 = vunpack.c.h.b16 %v2525
        %v3202 = vunpack.c.l.b16 %v2526
        %v3203 = vunpack.c.h.b16 %v2526
        %v3204 = vunpack.c.l.b16 %v2527
        %v3205 = vunpack.c.h.b16 %v2527
        %v3206 = vunpack.c.l.b16 %v2528
        %v3207 = vunpack.c.h.b16 %v2528
        %v3208 = vunpack.c.l.b16 %v2529
        %v3209 = vunpack.c.h.b16 %v2529
        %v3210 = vunpack.c.l.b16 %v2530
        %v3211 = vunpack.c.h.b16 %v2530
        %v3212 = vunpack.c.l.b16 %v2531
        %v3213 = vunpack.c.h.b16 %v2531
        %v3214 = vunpack.c.l.b16 %v2532
        %v3215 = vunpack.c.h.b16 %v2532
        %v3216 = vunpack.c.l.b16 %v2533
        %v3217 = vunpack.c.h.b16 %v2533
        %v3218 = vunpack.c.l.b16 %v2534
        %v3219 = vunpack.c.h.b16 %v2534
        %v3220 = vunpack.c.l.b16 %v2535
        %v3221 = vunpack.c.h.b16 %v2535
        %v3222 = vunpack.c.l.b16 %v2536
        %v3223 = vunpack.c.h.b16 %v2536
        %v3224 = vunpack.c.l.b16 %v2537
        %v3225 = vunpack.c.h.b16 %v2537
        %v3226 = vunpack.c.l.b16 %v2538
        %v3227 = vunpack.c.h.b16 %v2538
        %v3228 = vunpack.c.l.b16 %v2539
        %v3229 = vunpack.c.h.b16 %v2539
        %v3230 = vunpack.c.l.b16 %v2540
        %v3231 = vunpack.c.h.b16 %v2540
        %v3232 = vunpack.c.l.b16 %v2541
        %v3233 = vunpack.c.h.b16 %v2541
        %v3234 = vunpack.c.l.b16 %v2542
        %v3235 = vunpack.c.h.b16 %v2542
        %v3236 = vunpack.c.l.b16 %v2543
        %v3237 = vunpack.c.h.b16 %v2543
        %v3238 = vunpack.c.l.b16 %v2544
        %v3239 = vunpack.c.h.b16 %v2544
        %v3240 = vunpack.c.l.b16 %v2545
        %v3241 = vunpack.c.h.b16 %v2545
        %v3242 = vunpack.c.l.b16 %v2546
        %v3243 = vunpack.c.h.b16 %v2546
        %v3244 = vunpack.c.l.b16 %v2547
        %v3245 = vunpack.c.h.b16 %v2547
        %v3246 = vunpack.c.l.b16 %v2548
        %v3247 = vunpack.c.h.b16 %v2548
        %v3248 = vunpack.c.l.b16 %v2549
        %v3249 = vunpack.c.h.b16 %v2549
        %v3250 = vunpack.c.l.b16 %v2550
        %v3251 = vunpack.c.h.b16 %v2550
        %v3252 = vunpack.c.l.b16 %v2551
        %v3253 = vunpack.c.h.b16 %v2551
        %v3254 = vunpack.c.l.b16 %v2552
        %v3255 = vunpack.c.h.b16 %v2552
        %v3256 = vunpack.c.l.b16 %v2553
        %v3257 = vunpack.c.h.b16 %v2553
        %v3258 = vunpack.c.l.b16 %v2554
        %v3259 = vunpack.c.h.b16 %v2554
        %v3260 = vunpack.c.l.b16 %v2555
        %v3261 = vunpack.c.h.b16 %v2555
        %v3262 = vunpack.c.l.b16 %v2556
        %v3263 = vunpack.c.h.b16 %v2556
        %v3264 = vunpack.c.l.b16 %v2557
        %v3265 = vunpack.c.h.b16 %v2557
        %v3266 = vunpack.c.l.b16 %v2558
        %v3267 = vunpack.c.h.b16 %v2558
        %v3268 = vunpack.c.l.b16 %v2559
        %v3269 = vunpack.c.h.b16 %v2559
        %v3270 = vunpack.c.l.b16 %v2560
        %v3271 = vunpack.c.h.b16 %v2560
        %v3272 = vunpack.c.l.b16 %v2561
        %v3273 = vunpack.c.h.b16 %v2561
        %v3274 = vunpack.c.l.b16 %v2562
        %v3275 = vunpack.c.h.b16 %v2562
        %v3276 = vunpack.c.l.b16 %v2563
        %v3277 = vunpack.c.h.b16 %v2563
        %v3278 = vunpack.c.l.b16 %v2564
        %v3279 = vunpack.c.h.b16 %v2564
        %v3280 = vunpack.c.l.b16 %v2565
        %v3281 = vunpack.c.h.b16 %v2565
        %v3282 = vunpack.c.l.b16 %v2566
        %v3283 = vunpack.c.h.b16 %v2566
        %v3284 = vunpack.c.l.b16 %v2567
        %v3285 = vunpack.c.h.b16 %v2567
        %v3286 = vunpack.c.l.b16 %v2568
        %v3287 = vunpack.c.h.b16 %v2568
        %v3288 = vunpack.c.l.b16 %v2569
        %v3289 = vunpack.c.h.b16 %v2569
        %v3290 = vunpack.c.l.b16 %v2570
        %v3291 = vunpack.c.h.b16 %v2570
        %v3292 = vunpack.c.l.b16 %v2571
        %v3293 = vunpack.c.h.b16 %v2571
        %v3294 = vunpack.c.l.b16 %v2572
        %v3295 = vunpack.c.h.b16 %v2572
        %v3296 = vunpack.c.l.b16 %v2573
        %v3297 = vunpack.c.h.b16 %v2573
        %v3298 = vunpack.c.l.b16 %v2574
        %v3299 = vunpack.c.h.b16 %v2574
        %v3300 = vunpack.c.l.b16 %v2575
        %v3301 = vunpack.c.h.b16 %v2575
        %v3302 = vunpack.c.l.b16 %v2576
        %v3303 = vunpack.c.h.b16 %v2576
        %v3304 = vunpack.c.l.b16 %v2577
        %v3305 = vunpack.c.h.b16 %v2577
        %v3306 = vunpack.c.l.b16 %v2578
        %v3307 = vunpack.c.h.b16 %v2578
        %v3308 = vunpack.c.l.b16 %v2579
        %v3309 = vunpack.c.h.b16 %v2579
        %v3310 = vunpack.c.l.b16 %v2580
        %v3311 = vunpack.c.h.b16 %v2580
        %v3312 = vunpack.c.l.b16 %v2581
        %v3313 = vunpack.c.h.b16 %v2581
        %v3314 = vunpack.c.l.b16 %v2582
        %v3315 = vunpack.c.h.b16 %v2582
        %v3316 = vunpack.c.l.b16 %v2583
        %v3317 = vunpack.c.h.b16 %v2583
        %v3318 = vunpack.c.l.b16 %v2584
        %v3319 = vunpack.c.h.b16 %v2584
        %v3320 = vunpack.c.l.b16 %v2585
        %v3321 = vunpack.c.h.b16 %v2585
        %v3322 = vunpack.c.l.b16 %v2586
        %v3323 = vunpack.c.h.b16 %v2586
        %v3324 = vunpack.c.l.b16 %v2587
        %v3325 = vunpack.c.h.b16 %v2587
        %v3326 = vunpack.c.l.b16 %v2588
        %v3327 = vunpack.c.h.b16 %v2588
        %v3328 = vunpack.c.l.b16 %v2589
        %v3329 = vunpack.c.h.b16 %v2589
        %v3330 = vunpack.c.l.b16 %v2590
        %v3331 = vunpack.c.h.b16 %v2590
        %v3332 = vunpack.c.l.b16 %v2591
        %v3333 = vunpack.c.h.b16 %v2591
        %v3334 = vunpack.c.l.b16 %v2592
        %v3335 = vunpack.c.h.b16 %v2592
        %v3336 = vunpack.c.l.b16 %v2593
        %v3337 = vunpack.c.h.b16 %v2593
        %v3338 = vunpack.c.l.b16 %v2594
        %v3339 = vunpack.c.h.b16 %v2594
        %v3340 = vunpack.c.l.b16 %v2595
        %v3341 = vunpack.c.h.b16 %v2595
        %v3342 = vunpack.c.l.b16 %v2596
        %v3343 = vunpack.c.h.b16 %v2596
        %v3344 = vunpack.c.l.b16 %v2597
        %v3345 = vunpack.c.h.b16 %v2597
        %v3346 = vunpack.c.l.b16 %v2598
        %v3347 = vunpack.c.h.b16 %v2598
        %v3348 = vunpack.c.l.b16 %v2599
        %v3349 = vunpack.c.h.b16 %v2599
        %v3350 = vunpack.c.l.b16 %v2600
        %v3351 = vunpack.c.h.b16 %v2600
        %v3352 = vunpack.c.l.b16 %v2601
        %v3353 = vunpack.c.h.b16 %v2601
        %v3354 = vunpack.c.l.b16 %v2602
        %v3355 = vunpack.c.h.b16 %v2602
        %v3356 = vunpack.c.l.b16 %v2603
        %v3357 = vunpack.c.h.b16 %v2603
        %v3358 = vunpack.c.l.b16 %v2604
        %v3359 = vunpack.c.h.b16 %v2604
        %v3360 = vunpack.c.l.b16 %v2605
        %v3361 = vunpack.c.h.b16 %v2605
        %v3362 = vunpack.c.l.b16 %v2606
        %v3363 = vunpack.c.h.b16 %v2606
        %v3364 = vunpack.c.l.b16 %v2607
        %v3365 = vunpack.c.h.b16 %v2607
        %v3366 = vunpack.c.l.b16 %v2608
        %v3367 = vunpack.c.h.b16 %v2608
        %v3368 = vunpack.c.l.b16 %v2609
        %v3369 = vunpack.c.h.b16 %v2609
        %v3370 = vunpack.c.l.b16 %v2610
        %v3371 = vunpack.c.h.b16 %v2610
        %v3372 = vunpack.c.l.b16 %v2611
        %v3373 = vunpack.c.h.b16 %v2611
        %v3374 = vunpack.c.l.b16 %v2612
        %v3375 = vunpack.c.h.b16 %v2612
        %v3376 = vunpack.c.l.b16 %v2613
        %v3377 = vunpack.c.h.b16 %v2613
        %v3378 = vunpack.c.l.b16 %v2614
        %v3379 = vunpack.c.h.b16 %v2614
        %v3380 = vunpack.c.l.b16 %v2615
        %v3381 = vunpack.c.h.b16 %v2615
        %v3382 = vunpack.c.l.b16 %v2616
        %v3383 = vunpack.c.h.b16 %v2616
        %v3384 = vunpack.c.l.b16 %v2617
        %v3385 = vunpack.c.h.b16 %v2617
        %v3386 = vunpack.c.l.b16 %v2618
        %v3387 = vunpack.c.h.b16 %v2618
        %v3388 = vunpack.c.l.b16 %v2619
        %v3389 = vunpack.c.h.b16 %v2619
        %v3390 = vunpack.c.l.b16 %v2620
        %v3391 = vunpack.c.h.b16 %v2620
        %v3392 = vunpack.c.l.b16 %v2621
        %v3393 = vunpack.c.h.b16 %v2621
        %v3394 = vunpack.c.l.b16 %v2622
        %v3395 = vunpack.c.h.b16 %v2622
        %v3396 = vunpack.c.l.b16 %v2623
        %v3397 = vunpack.c.h.b16 %v2623
        %v3398 = vunpack.c.l.b16 %v2624
        %v3399 = vunpack.c.h.b16 %v2624
        %v3400 = vunpack.c.l.b16 %v2625
        %v3401 = vunpack.c.h.b16 %v2625
        %v3402 = vunpack.c.l.b16 %v2626
        %v3403 = vunpack.c.h.b16 %v2626
        %v3404 = vunpack.c.l.b16 %v2627
        %v3405 = vunpack.c.h.b16 %v2627
        %v3406 = vunpack.c.l.b16 %v2628
        %v3407 = vunpack.c.h.b16 %v2628
        %v3408 = vunpack.c.l.b16 %v2629
        %v3409 = vunpack.c.h.b16 %v2629
        %v3410 = vunpack.c.l.b16 %v2630
        %v3411 = vunpack.c.h.b16 %v2630
        %v3412 = vunpack.c.l.b16 %v2631
        %v3413 = vunpack.c.h.b16 %v2631
        %v3414 = vunpack.c.l.b16 %v2632
        %v3415 = vunpack.c.h.b16 %v2632
        %v3416 = vunpack.c.l.b16 %v2633
        %v3417 = vunpack.c.h.b16 %v2633
        %v3418 = vunpack.c.l.b16 %v2634
        %v3419 = vunpack.c.h.b16 %v2634
        %v3420 = vunpack.c.l.b16 %v2635
        %v3421 = vunpack.c.h.b16 %v2635
        %v3422 = vunpack.c.l.b16 %v2636
        %v3423 = vunpack.c.h.b16 %v2636
        %v3424 = vunpack.c.l.b16 %v2637
        %v3425 = vunpack.c.h.b16 %v2637
        %v3426 = vunpack.c.l.b16 %v2638
        %v3427 = vunpack.c.h.b16 %v2638
        %v3428 = vunpack.c.l.b16 %v2639
        %v3429 = vunpack.c.h.b16 %v2639
        %v3430 = vunpack.c.l.b16 %v2640
        %v3431 = vunpack.c.h.b16 %v2640
        %v3432 = vunpack.c.l.b16 %v2641
        %v3433 = vunpack.c.h.b16 %v2641
        %v3434 = vunpack.c.l.b16 %v2642
        %v3435 = vunpack.c.h.b16 %v2642
        %v3436 = vunpack.c.l.b16 %v2643
        %v3437 = vunpack.c.h.b16 %v2643
        %v3438 = vunpack.c.l.b16 %v2644
        %v3439 = vunpack.c.h.b16 %v2644
        %v3440 = vunpack.c.l.b16 %v2645
        %v3441 = vunpack.c.h.b16 %v2645
        %v3442 = vunpack.c.l.b16 %v2646
        %v3443 = vunpack.c.h.b16 %v2646
        %v3444 = vunpack.c.l.b16 %v2647
        %v3445 = vunpack.c.h.b16 %v2647
        %v3446 = vunpack.c.l.b16 %v2648
        %v3447 = vunpack.c.h.b16 %v2648
        %v3448 = vunpack.c.l.b16 %v2649
        %v3449 = vunpack.c.h.b16 %v2649
        %v3450 = vunpack.c.l.b16 %v2650
        %v3451 = vunpack.c.h.b16 %v2650
        %v3452 = vunpack.c.l.b16 %v2651
        %v3453 = vunpack.c.h.b16 %v2651
        %v3454 = vunpack.c.l.b16 %v2652
        %v3455 = vunpack.c.h.b16 %v2652
        %v3456 = vunpack.c.l.b16 %v2653
        %v3457 = vunpack.c.h.b16 %v2653
        %v3458 = vunpack.c.l.b16 %v2654
        %v3459 = vunpack.c.h.b16 %v2654
        %v3460 = vunpack.c.l.b16 %v2655
        %v3461 = vunpack.c.h.b16 %v2655
        %v3462 = vunpack.c.l.b16 %v2656
        %v3463 = vunpack.c.h.b16 %v2656
        %v3464 = vunpack.c.l.b16 %v2657
        %v3465 = vunpack.c.h.b16 %v2657
        %v3466 = vunpack.c.l.b16 %v2658
        %v3467 = vunpack.c.h.b16 %v2658
        %v3468 = vunpack.c.l.b16 %v2659
        %v3469 = vunpack.c.h.b16 %v2659
        %v3470 = vunpack.c.l.b16 %v2660
        %v3471 = vunpack.c.h.b16 %v2660
        %v3472 = vunpack.c.l.b16 %v2661
        %v3473 = vunpack.c.h.b16 %v2661
        %v3474 = vunpack.c.l.b16 %v2662
        %v3475 = vunpack.c.h.b16 %v2662
        %v3476 = vunpack.c.l.b16 %v2663
        %v3477 = vunpack.c.h.b16 %v2663
        %v3478 = vunpack.c.l.b16 %v2664
        %v3479 = vunpack.c.h.b16 %v2664
        %v3480 = vunpack.c.l.b16 %v2665
        %v3481 = vunpack.c.h.b16 %v2665
        %v3482 = vunpack.c.l.b16 %v2666
        %v3483 = vunpack.c.h.b16 %v2666
        %v3484 = vunpack.c.l.b16 %v2667
        %v3485 = vunpack.c.h.b16 %v2667
        %v3486 = vunpack.c.l.b16 %v2668
        %v3487 = vunpack.c.h.b16 %v2668
        %v3488 = vunpack.c.l.b16 %v2669
        %v3489 = vunpack.c.h.b16 %v2669
        %v3490 = vunpack.c.l.b16 %v2670
        %v3491 = vunpack.c.h.b16 %v2670
        %v3492 = vunpack.c.l.b16 %v2671
        %v3493 = vunpack.c.h.b16 %v2671
        %v3494 = vunpack.c.l.b16 %v2672
        %v3495 = vunpack.c.h.b16 %v2672
        %v3496 = vunpack.c.l.b16 %v2673
        %v3497 = vunpack.c.h.b16 %v2673
        %v3498 = vunpack.c.l.b16 %v2674
        %v3499 = vunpack.c.h.b16 %v2674
        %v3500 = vunpack.c.l.b16 %v2675
        %v3501 = vunpack.c.h.b16 %v2675
        %v3502 = vunpack.c.l.b16 %v2676
        %v3503 = vunpack.c.h.b16 %v2676
        %v3504 = vunpack.c.l.b16 %v2677
        %v3505 = vunpack.c.h.b16 %v2677
        %v3506 = vunpack.c.l.b16 %v2678
        %v3507 = vunpack.c.h.b16 %v2678
        %v3508 = vunpack.c.l.b16 %v2679
        %v3509 = vunpack.c.h.b16 %v2679
        %v3510 = vunpack.c.l.b16 %v2680
        %v3511 = vunpack.c.h.b16 %v2680
        %v3512 = vunpack.c.l.b16 %v2681
        %v3513 = vunpack.c.h.b16 %v2681
        %v3514 = vunpack.c.l.b16 %v2682
        %v3515 = vunpack.c.h.b16 %v2682
        %v3516 = vunpack.c.l.b16 %v2683
        %v3517 = vunpack.c.h.b16 %v2683
        %v3518 = vunpack.c.l.b16 %v2684
        %v3519 = vunpack.c.h.b16 %v2684
        %v3520 = vunpack.c.l.b16 %v2685
        %v3521 = vunpack.c.h.b16 %v2685
        %v3522 = vunpack.c.l.b16 %v2686
        %v3523 = vunpack.c.h.b16 %v2686
        %v3524 = vunpack.c.l.b16 %v2687
        %v3525 = vunpack.c.h.b16 %v2687
        %v3526 = vunpack.c.l.b16 %v2688
        %v3527 = vunpack.c.h.b16 %v2688
        %v3528 = vunpack.c.l.b16 %v2689
        %v3529 = vunpack.c.h.b16 %v2689
        %v3530 = vunpack.c.l.b16 %v2690
        %v3531 = vunpack.c.h.b16 %v2690
        %v3532 = vunpack.c.l.b16 %v2691
        %v3533 = vunpack.c.h.b16 %v2691
        %v3534 = vunpack.c.l.b16 %v2692
        %v3535 = vunpack.c.h.b16 %v2692
        %v3536 = vunpack.c.l.b16 %v2693
        %v3537 = vunpack.c.h.b16 %v2693
        %v3538 = vunpack.c.l.b16 %v2694
        %v3539 = vunpack.c.h.b16 %v2694
        %v3540 = vunpack.c.l.b16 %v2695
        %v3541 = vunpack.c.h.b16 %v2695
        %v3542 = vunpack.c.l.b16 %v2696
        %v3543 = vunpack.c.h.b16 %v2696
        %v3544 = vunpack.c.l.b16 %v2697
        %v3545 = vunpack.c.h.b16 %v2697
        %v3546 = vunpack.c.l.b16 %v2698
        %v3547 = vunpack.c.h.b16 %v2698
        %v3548 = vunpack.c.l.b16 %v2699
        %v3549 = vunpack.c.h.b16 %v2699
        %v3550 = vunpack.c.l.b16 %v2700
        %v3551 = vunpack.c.h.b16 %v2700
        %v3552 = vunpack.c.l.b16 %v2701
        %v3553 = vunpack.c.h.b16 %v2701
        %v3554 = vunpack.c.l.b16 %v2702
        %v3555 = vunpack.c.h.b16 %v2702
        %v3556 = vunpack.c.l.b16 %v2703
        %v3557 = vunpack.c.h.b16 %v2703
        %v3558 = vunpack.c.l.b16 %v2704
        %v3559 = vunpack.c.h.b16 %v2704
        %v3560 = vunpack.c.l.b16 %v2705
        %v3561 = vunpack.c.h.b16 %v2705
        %v3562 = vunpack.c.l.b16 %v2706
        %v3563 = vunpack.c.h.b16 %v2706
        %v3564 = vunpack.c.l.b16 %v2707
        %v3565 = vunpack.c.h.b16 %v2707
        %v3566 = vunpack.c.l.b16 %v2708
        %v3567 = vunpack.c.h.b16 %v2708
        %v3568 = vunpack.c.l.b16 %v2709
        %v3569 = vunpack.c.h.b16 %v2709
        %v3570 = vunpack.c.l.b16 %v2710
        %v3571 = vunpack.c.h.b16 %v2710
        %v3572 = vunpack.c.l.b16 %v2711
        %v3573 = vunpack.c.h.b16 %v2711
        %v3574 = vunpack.c.l.b16 %v2712
        %v3575 = vunpack.c.h.b16 %v2712
        %v3576 = vunpack.c.l.b16 %v2713
        %v3577 = vunpack.c.h.b16 %v2713
        %v3578 = vunpack.c.l.b16 %v2714
        %v3579 = vunpack.c.h.b16 %v2714
        %v3580 = vunpack.c.l.b16 %v2715
        %v3581 = vunpack.c.h.b16 %v2715
        %v3582 = vunpack.c.l.b16 %v2716
        %v3583 = vunpack.c.h.b16 %v2716
        %v3584 = vunpack.c.l.b16 %v2717
        %v3585 = vunpack.c.h.b16 %v2717
        %v3586 = vunpack.c.l.b16 %v2718
        %v3587 = vunpack.c.h.b16 %v2718
        %v3588 = vunpack.c.l.b16 %v2719
        %v3589 = vunpack.c.h.b16 %v2719
        %v3590 = vunpack.c.l.b16 %v2720
        %v3591 = vunpack.c.h.b16 %v2720
        %v3592 = vunpack.c.l.b16 %v2721
        %v3593 = vunpack.c.h.b16 %v2721
        %v3594 = vunpack.c.l.b16 %v2722
        %v3595 = vunpack.c.h.b16 %v2722
        %v3596 = vunpack.c.l.b16 %v2723
        %v3597 = vunpack.c.h.b16 %v2723
        %v3598 = vunpack.c.l.b16 %v2724
        %v3599 = vunpack.c.h.b16 %v2724
        %v3600 = vunpack.c.l.b16 %v2725
        %v3601 = vunpack.c.h.b16 %v2725
        %v3602 = vunpack.c.l.b16 %v2726
        %v3603 = vunpack.c.h.b16 %v2726
        %v3604 = vunpack.c.l.b16 %v2727
        %v3605 = vunpack.c.h.b16 %v2727
        %v3606 = vunpack.c.l.b16 %v2728
        %v3607 = vunpack.c.h.b16 %v2728
        %v3608 = vunpack.c.l.b16 %v2729
        %v3609 = vunpack.c.h.b16 %v2729
        %v3610 = vunpack.c.l.b16 %v2730
        %v3611 = vunpack.c.h.b16 %v2730
        %v3612 = vunpack.c.l.b16 %v2731
        %v3613 = vunpack.c.h.b16 %v2731
        %v3614 = vunpack.c.l.b16 %v2732
        %v3615 = vunpack.c.h.b16 %v2732
        %v3616 = vunpack.c.l.b16 %v2733
        %v3617 = vunpack.c.h.b16 %v2733
        %v3618 = vpack.c.b16 %v3108, %v3106
        %v3619 = vpack.c.b16 %v3109, %v3107
        %v3620 = vpack.c.b16 %v3112, %v3110
        %v3621 = vpack.c.b16 %v3113, %v3111
        %v3622 = vpack.c.b16 %v3116, %v3114
        %v3623 = vpack.c.b16 %v3117, %v3115
        %v3624 = vpack.c.b16 %v3120, %v3118
        %v3625 = vpack.c.b16 %v3121, %v3119
        %v3626 = vpack.c.b16 %v3124, %v3122
        %v3627 = vpack.c.b16 %v3125, %v3123
        %v3628 = vpack.c.b16 %v3128, %v3126
        %v3629 = vpack.c.b16 %v3129, %v3127
        %v3630 = vpack.c.b16 %v3132, %v3130
        %v3631 = vpack.c.b16 %v3133, %v3131
        %v3632 = vpack.c.b16 %v3136, %v3134
        %v3633 = vpack.c.b16 %v3137, %v3135
        %v3634 = vpack.c.b16 %v3140, %v3138
        %v3635 = vpack.c.b16 %v3141, %v3139
        %v3636 = vpack.c.b16 %v3144, %v3142
        %v3637 = vpack.c.b16 %v3145, %v3143
        %v3638 = vpack.c.b16 %v3148, %v3146
        %v3639 = vpack.c.b16 %v3149, %v3147
        %v3640 = vpack.c.b16 %v3152, %v3150
        %v3641 = vpack.c.b16 %v3153, %v3151
        %v3642 = vpack.c.b16 %v3156, %v3154
        %v3643 = vpack.c.b16 %v3157, %v3155
        %v3644 = vpack.c.b16 %v3160, %v3158
        %v3645 = vpack.c.b16 %v3161, %v3159
        %v3646 = vpack.c.b16 %v3164, %v3162
        %v3647 = vpack.c.b16 %v3165, %v3163
        %v3648 = vpack.c.b16 %v3168, %v3166
        %v3649 = vpack.c.b16 %v3169, %v3167
        %v3650 = vpack.c.b16 %v3172, %v3170
        %v3651 = vpack.c.b16 %v3173, %v3171
        %v3652 = vpack.c.b16 %v3176, %v3174
        %v3653 = vpack.c.b16 %v3177, %v3175
        %v3654 = vpack.c.b16 %v3180, %v3178
        %v3655 = vpack.c.b16 %v3181, %v3179
        %v3656 = vpack.c.b16 %v3184, %v3182
        %v3657 = vpack.c.b16 %v3185, %v3183
        %v3658 = vpack.c.b16 %v3188, %v3186
        %v3659 = vpack.c.b16 %v3189, %v3187
        %v3660 = vpack.c.b16 %v3192, %v3190
        %v3661 = vpack.c.b16 %v3193, %v3191
        %v3662 = vpack.c.b16 %v3196, %v3194
        %v3663 = vpack.c.b16 %v3197, %v3195
        %v3664 = vpack.c.b16 %v3200, %v3198
        %v3665 = vpack.c.b16 %v3201, %v3199
        %v3666 = vpack.c.b16 %v3204, %v3202
        %v3667 = vpack.c.b16 %v3205, %v3203
        %v3668 = vpack.c.b16 %v3208, %v3206
        %v3669 = vpack.c.b16 %v3209, %v3207
        %v3670 = vpack.c.b16 %v3212, %v3210
        %v3671 = vpack.c.b16 %v3213, %v3211
        %v3672 = vpack.c.b16 %v3216, %v3214
        %v3673 = vpack.c.b16 %v3217, %v3215
        %v3674 = vpack.c.b16 %v3220, %v3218
        %v3675 = vpack.c.b16 %v3221, %v3219
        %v3676 = vpack.c.b16 %v3224, %v3222
        %v3677 = vpack.c.b16 %v3225, %v3223
        %v3678 = vpack.c.b16 %v3228, %v3226
        %v3679 = vpack.c.b16 %v3229, %v3227
        %v3680 = vpack.c.b16 %v3232, %v3230
        %v3681 = vpack.c.b16 %v3233, %v3231
        %v3682 = vpack.c.b16 %v3236, %v3234
        %v3683 = vpack.c.b16 %v3237, %v3235
        %v3684 = vpack.c.b16 %v3240, %v3238
        %v3685 = vpack.c.b16 %v3241, %v3239
        %v3686 = vpack.c.b16 %v3244, %v3242
        %v3687 = vpack.c.b16 %v3245, %v3243
        %v3688 = vpack.c.b16 %v3248, %v3246
        %v3689 = vpack.c.b16 %v3249, %v3247
        %v3690 = vpack.c.b16 %v3252, %v3250
        %v3691 = vpack.c.b16 %v3253, %v3251
        %v3692 = vpack.c.b16 %v3256, %v3254
        %v3693 = vpack.c.b16 %v3257, %v3255
        %v3694 = vpack.c.b16 %v3260, %v3258
        %v3695 = vpack.c.b16 %v3261, %v3259
        %v3696 = vpack.c.b16 %v3264, %v3262
        %v3697 = vpack.c.b16 %v3265, %v3263
        %v3698 = vpack.c.b16 %v3268, %v3266
        %v3699 = vpack.c.b16 %v3269, %v3267
        %v3700 = vpack.c.b16 %v3272, %v3270
        %v3701 = vpack.c.b16 %v3273, %v3271
        %v3702 = vpack.c.b16 %v3276, %v3274
        %v3703 = vpack.c.b16 %v3277, %v3275
        %v3704 = vpack.c.b16 %v3280, %v3278
        %v3705 = vpack.c.b16 %v3281, %v3279
        %v3706 = vpack.c.b16 %v3284, %v3282
        %v3707 = vpack.c.b16 %v3285, %v3283
        %v3708 = vpack.c.b16 %v3288, %v3286
        %v3709 = vpack.c.b16 %v3289, %v3287
        %v3710 = vpack.c.b16 %v3292, %v3290
        %v3711 = vpack.c.b16 %v3293, %v3291
        %v3712 = vpack.c.b16 %v3296, %v3294
        %v3713 = vpack.c.b16 %v3297, %v3295
        %v3714 = vpack.c.b16 %v3300, %v3298
        %v3715 = vpack.c.b16 %v3301, %v3299
        %v3716 = vpack.c.b16 %v3304, %v3302
        %v3717 = vpack.c.b16 %v3305, %v3303
        %v3718 = vpack.c.b16 %v3308, %v3306
        %v3719 = vpack.c.b16 %v3309, %v3307
        %v3720 = vpack.c.b16 %v3312, %v3310
        %v3721 = vpack.c.b16 %v3313, %v3311
        %v3722 = vpack.c.b16 %v3316, %v3314
        %v3723 = vpack.c.b16 %v3317, %v3315
        %v3724 = vpack.c.b16 %v3320, %v3318
        %v3725 = vpack.c.b16 %v3321, %v3319
        %v3726 = vpack.c.b16 %v3324, %v3322
        %v3727 = vpack.c.b16 %v3325, %v3323
        %v3728 = vpack.c.b16 %v3328, %v3326
        %v3729 = vpack.c.b16 %v3329, %v3327
        %v3730 = vpack.c.b16 %v3332, %v3330
        %v3731 = vpack.c.b16 %v3333, %v3331
        %v3732 = vpack.c.b16 %v3336, %v3334
        %v3733 = vpack.c.b16 %v3337, %v3335
        %v3734 = vpack.c.b16 %v3340, %v3338
        %v3735 = vpack.c.b16 %v3341, %v3339
        %v3736 = vpack.c.b16 %v3344, %v3342
        %v3737 = vpack.c.b16 %v3345, %v3343
        %v3738 = vpack.c.b16 %v3348, %v3346
        %v3739 = vpack.c.b16 %v3349, %v3347
        %v3740 = vpack.c.b16 %v3352, %v3350
        %v3741 = vpack.c.b16 %v3353, %v3351
        %v3742 = vpack.c.b16 %v3356, %v3354
        %v3743 = vpack.c.b16 %v3357, %v3355
        %v3744 = vpack.c.b16 %v3360, %v3358
        %v3745 = vpack.c.b16 %v3361, %v3359
        %v3746 = vpack.c.b16 %v3364, %v3362
        %v3747 = vpack.c.b16 %v3365, %v3363
        %v3748 = vpack.c.b16 %v3368, %v3366
        %v3749 = vpack.c.b16 %v3369, %v3367
        %v3750 = vpack.c.b16 %v3372, %v3370
        %v3751 = vpack.c.b16 %v3373, %v3371
        %v3752 = vpack.c.b16 %v3376, %v3374
        %v3753 = vpack.c.b16 %v3377, %v3375
        %v3754 = vpack.c.b16 %v3380, %v3378
        %v3755 = vpack.c.b16 %v3381, %v3379
        %v3756 = vpack.c.b16 %v3384, %v3382
        %v3757 = vpack.c.b16 %v3385, %v3383
        %v3758 = vpack.c.b16 %v3388, %v3386
        %v3759 = vpack.c.b16 %v3389, %v3387
        %v3760 = vpack.c.b16 %v3392, %v3390
        %v3761 = vpack.c.b16 %v3393, %v3391
        %v3762 = vpack.c.b16 %v3396, %v3394
        %v3763 = vpack.c.b16 %v3397, %v3395
        %v3764 = vpack.c.b16 %v3400, %v3398
        %v3765 = vpack.c.b16 %v3401, %v3399
        %v3766 = vpack.c.b16 %v3404, %v3402
        %v3767 = vpack.c.b16 %v3405, %v3403
        %v3768 = vpack.c.b16 %v3408, %v3406
        %v3769 = vpack.c.b16 %v3409, %v3407
        %v3770 = vpack.c.b16 %v3412, %v3410
        %v3771 = vpack.c.b16 %v3413, %v3411
        %v3772 = vpack.c.b16 %v3416, %v3414
        %v3773 = vpack.c.b16 %v3417, %v3415
        %v3774 = vpack.c.b16 %v3420, %v3418
        %v3775 = vpack.c.b16 %v3421, %v3419
        %v3776 = vpack.c.b16 %v3424, %v3422
        %v3777 = vpack.c.b16 %v3425, %v3423
        %v3778 = vpack.c.b16 %v3428, %v3426
        %v3779 = vpack.c.b16 %v3429, %v3427
        %v3780 = vpack.c.b16 %v3432, %v3430
        %v3781 = vpack.c.b16 %v3433, %v3431
        %v3782 = vpack.c.b16 %v3436, %v3434
        %v3783 = vpack.c.b16 %v3437, %v3435
        %v3784 = vpack.c.b16 %v3440, %v3438
        %v3785 = vpack.c.b16 %v3441, %v3439
        %v3786 = vpack.c.b16 %v3444, %v3442
        %v3787 = vpack.c.b16 %v3445, %v3443
        %v3788 = vpack.c.b16 %v3448, %v3446
        %v3789 = vpack.c.b16 %v3449, %v3447
        %v3790 = vpack.c.b16 %v3452, %v3450
        %v3791 = vpack.c.b16 %v3453, %v3451
        %v3792 = vpack.c.b16 %v3456, %v3454
        %v3793 = vpack.c.b16 %v3457, %v3455
        %v3794 = vpack.c.b16 %v3460, %v3458
        %v3795 = vpack.c.b16 %v3461, %v3459
        %v3796 = vpack.c.b16 %v3464, %v3462
        %v3797 = vpack.c.b16 %v3465, %v3463
        %v3798 = vpack.c.b16 %v3468, %v3466
        %v3799 = vpack.c.b16 %v3469, %v3467
        %v3800 = vpack.c.b16 %v3472, %v3470
        %v3801 = vpack.c.b16 %v3473, %v3471
        %v3802 = vpack.c.b16 %v3476, %v3474
        %v3803 = vpack.c.b16 %v3477, %v3475
        %v3804 = vpack.c.b16 %v3480, %v3478
        %v3805 = vpack.c.b16 %v3481, %v3479
        %v3806 = vpack.c.b16 %v3484, %v3482
        %v3807 = vpack.c.b16 %v3485, %v3483
        %v3808 = vpack.c.b16 %v3488, %v3486
        %v3809 = vpack.c.b16 %v3489, %v3487
        %v3810 = vpack.c.b16 %v3492, %v3490
        %v3811 = vpack.c.b16 %v3493, %v3491
        %v3812 = vpack.c.b16 %v3496, %v3494
        %v3813 = vpack.c.b16 %v3497, %v3495
        %v3814 = vpack.c.b16 %v3500, %v3498
        %v3815 = vpack.c.b16 %v3501, %v3499
        %v3816 = vpack.c.b16 %v3504, %v3502
        %v3817 = vpack.c.b16 %v3505, %v3503
        %v3818 = vpack.c.b16 %v3508, %v3506
        %v3819 = vpack.c.b16 %v3509, %v3507
        %v3820 = vpack.c.b16 %v3512, %v3510
        %v3821 = vpack.c.b16 %v3513, %v3511
        %v3822 = vpack.c.b16 %v3516, %v3514
        %v3823 = vpack.c.b16 %v3517, %v3515
        %v3824 = vpack.c.b16 %v3520, %v3518
        %v3825 = vpack.c.b16 %v3521, %v3519
        %v3826 = vpack.c.b16 %v3524, %v3522
        %v3827 = vpack.c.b16 %v3525, %v3523
        %v3828 = vpack.c.b16 %v3528, %v3526
        %v3829 = vpack.c.b16 %v3529, %v3527
        %v3830 = vpack.c.b16 %v3532, %v3530
        %v3831 = vpack.c.b16 %v3533, %v3531
        %v3832 = vpack.c.b16 %v3536, %v3534
        %v3833 = vpack.c.b16 %v3537, %v3535
        %v3834 = vpack.c.b16 %v3540, %v3538
        %v3835 = vpack.c.b16 %v3541, %v3539
        %v3836 = vpack.c.b16 %v3544, %v3542
        %v3837 = vpack.c.b16 %v3545, %v3543
        %v3838 = vpack.c.b16 %v3548, %v3546
        %v3839 = vpack.c.b16 %v3549, %v3547
        %v3840 = vpack.c.b16 %v3552, %v3550
        %v3841 = vpack.c.b16 %v3553, %v3551
        %v3842 = vpack.c.b16 %v3556, %v3554
        %v3843 = vpack.c.b16 %v3557, %v3555
        %v3844 = vpack.c.b16 %v3560, %v3558
        %v3845 = vpack.c.b16 %v3561, %v3559
        %v3846 = vpack.c.b16 %v3564, %v3562
        %v3847 = vpack.c.b16 %v3565, %v3563
        %v3848 = vpack.c.b16 %v3568, %v3566
        %v3849 = vpack.c.b16 %v3569, %v3567
        %v3850 = vpack.c.b16 %v3572, %v3570
        %v3851 = vpack.c.b16 %v3573, %v3571
        %v3852 = vpack.c.b16 %v3576, %v3574
        %v3853 = vpack.c.b16 %v3577, %v3575
        %v3854 = vpack.c.b16 %v3580, %v3578
        %v3855 = vpack.c.b16 %v3581, %v3579
        %v3856 = vpack.c.b16 %v3584, %v3582
        %v3857 = vpack.c.b16 %v3585, %v3583
        %v3858 = vpack.c.b16 %v3588, %v3586
        %v3859 = vpack.c.b16 %v3589, %v3587
        %v3860 = vpack.c.b16 %v3592, %v3590
        %v3861 = vpack.c.b16 %v3593, %v3591
        %v3862 = vpack.c.b16 %v3596, %v3594
        %v3863 = vpack.c.b16 %v3597, %v3595
        %v3864 = vpack.c.b16 %v3600, %v3598
        %v3865 = vpack.c.b16 %v3601, %v3599
        %v3866 = vpack.c.b16 %v3604, %v3602
        %v3867 = vpack.c.b16 %v3605, %v3603
        %v3868 = vpack.c.b16 %v3608, %v3606
        %v3869 = vpack.c.b16 %v3609, %v3607
        %v3870 = vpack.c.b16 %v3612, %v3610
        %v3871 = vpack.c.b16 %v3613, %v3611
        %v3872 = vpack.c.b16 %v3616, %v3614
        %v3873 = vpack.c.b16 %v3617, %v3615
        %4130 = vmatprep.subr.bf16.mxu0 %v3619
        %4131 = vmatpush1.bf16.msra.mxu0 %v3618
        %4132 = vmatprep.subr.bf16.mxu0 %v3621
        %4133 = vmatpush1.bf16.msra.mxu0 %v3620
        %4134 = vmatprep.subr.bf16.mxu0 %v3623
        %4135 = vmatpush1.bf16.msra.mxu0 %v3622
        %4136 = vmatprep.subr.bf16.mxu0 %v3625
        %4137 = vmatpush1.bf16.msra.mxu0 %v3624
        %4138 = vmatprep.subr.bf16.mxu0 %v3627
        %4139 = vmatpush1.bf16.msra.mxu0 %v3626
        %4140 = vmatprep.subr.bf16.mxu0 %v3629
        %4141 = vmatpush1.bf16.msra.mxu0 %v3628
        %4142 = vmatprep.subr.bf16.mxu0 %v3631
        %4143 = vmatpush1.bf16.msra.mxu0 %v3630
        %4144 = vmatprep.subr.bf16.mxu0 %v3633
        %4145 = vmatpush1.bf16.msra.mxu0 %v3632
        %4146 = vmatprep.subr.bf16.mxu0 %v3635
        %4147 = vmatpush1.bf16.msra.mxu0 %v3634
        %4148 = vmatprep.subr.bf16.mxu0 %v3637
        %4149 = vmatpush1.bf16.msra.mxu0 %v3636
        %4150 = vmatprep.subr.bf16.mxu0 %v3639
        %4151 = vmatpush1.bf16.msra.mxu0 %v3638
        %4152 = vmatprep.subr.bf16.mxu0 %v3641
        %4153 = vmatpush1.bf16.msra.mxu0 %v3640
        %4154 = vmatprep.subr.bf16.mxu0 %v3643
        %4155 = vmatpush1.bf16.msra.mxu0 %v3642
        %4156 = vmatprep.subr.bf16.mxu0 %v3645
        %4157 = vmatpush1.bf16.msra.mxu0 %v3644
        %4158 = vmatprep.subr.bf16.mxu0 %v3647
        %4159 = vmatpush1.bf16.msra.mxu0 %v3646
        %4160 = vmatprep.subr.bf16.mxu0 %v3649
        %4161 = vmatpush1.bf16.msra.mxu0 %v3648
        %4162 = vmatprep.mubr.bf16.mxu0 %v2773
        %4163 = vmatmul.mubr.bf16.gmra.mrb[0].mxu0 %v2759
        %v4164 = vpop.f32.mrb[0].mxu0
        %v4165 = vadd.f32 0.0, %v4164
        %v4166 = vpop.f32.mrb[0].mxu0
        %v4167 = vadd.f32 0.0, %v4166
        %v4168 = vpop.f32.mrb[0].mxu0
        %v4169 = vpop.f32.mrb[0].mxu0
        %4170 = vdwg.mxu0
        %4171 = vmatprep.subr.bf16.mxu0 %v3651
        %4172 = vmatpush1.bf16.msra.mxu0 %v3650
        %4173 = vmatprep.subr.bf16.mxu0 %v3653
        %4174 = vmatpush1.bf16.msra.mxu0 %v3652
        %4175 = vmatprep.subr.bf16.mxu0 %v3655
        %4176 = vmatpush1.bf16.msra.mxu0 %v3654
        %4177 = vmatprep.subr.bf16.mxu0 %v3657
        %4178 = vmatpush1.bf16.msra.mxu0 %v3656
        %4179 = vmatprep.subr.bf16.mxu0 %v3659
        %4180 = vmatpush1.bf16.msra.mxu0 %v3658
        %4181 = vmatprep.subr.bf16.mxu0 %v3661
        %4182 = vmatpush1.bf16.msra.mxu0 %v3660
        %4183 = vmatprep.subr.bf16.mxu0 %v3663
        %4184 = vmatpush1.bf16.msra.mxu0 %v3662
        %4185 = vmatprep.subr.bf16.mxu0 %v3665
        %4186 = vmatpush1.bf16.msra.mxu0 %v3664
        %4187 = vmatprep.subr.bf16.mxu0 %v3667
        %4188 = vmatpush1.bf16.msra.mxu0 %v3666
        %4189 = vmatprep.subr.bf16.mxu0 %v3669
        %4190 = vmatpush1.bf16.msra.mxu0 %v3668
        %4191 = vmatprep.subr.bf16.mxu0 %v3671
        %4192 = vmatpush1.bf16.msra.mxu0 %v3670
        %4193 = vmatprep.subr.bf16.mxu0 %v3673
        %4194 = vmatpush1.bf16.msra.mxu0 %v3672
        %4195 = vmatprep.subr.bf16.mxu0 %v3675
        %4196 = vmatpush1.bf16.msra.mxu0 %v3674
        %4197 = vmatprep.subr.bf16.mxu0 %v3677
        %4198 = vmatpush1.bf16.msra.mxu0 %v3676
        %4199 = vmatprep.subr.bf16.mxu0 %v3679
        %4200 = vmatpush1.bf16.msra.mxu0 %v3678
        %4201 = vmatprep.subr.bf16.mxu0 %v3681
        %4202 = vmatpush1.bf16.msra.mxu0 %v3680
        %4203 = vmatprep.mubr.bf16.mxu0 %v2783
        %4204 = vmatmul.mubr.bf16.gmra.mrb[0].mxu0 %v2781
        %v4205 = vpop.f32.mrb[0].mxu0
        %v4206 = vadd.f32 %v4165, %v4205
        %v4207 = vpop.f32.mrb[0].mxu0
        %v4208 = vadd.f32 %v4167, %v4207
        %v4209 = vpop.f32.mrb[0].mxu0
        %v4210 = vpop.f32.mrb[0].mxu0
        %4211 = vdwg.mxu0
        %4212 = vmatprep.subr.bf16.mxu0 %v3683
        %4213 = vmatpush1.bf16.msra.mxu0 %v3682
        %4214 = vmatprep.subr.bf16.mxu0 %v3685
        %4215 = vmatpush1.bf16.msra.mxu0 %v3684
        %4216 = vmatprep.subr.bf16.mxu0 %v3687
        %4217 = vmatpush1.bf16.msra.mxu0 %v3686
        %4218 = vmatprep.subr.bf16.mxu0 %v3689
        %4219 = vmatpush1.bf16.msra.mxu0 %v3688
        %4220 = vmatprep.subr.bf16.mxu0 %v3691
        %4221 = vmatpush1.bf16.msra.mxu0 %v3690
        %4222 = vmatprep.subr.bf16.mxu0 %v3693
        %4223 = vmatpush1.bf16.msra.mxu0 %v3692
        %4224 = vmatprep.subr.bf16.mxu0 %v3695
        %4225 = vmatpush1.bf16.msra.mxu0 %v3694
        %4226 = vmatprep.subr.bf16.mxu0 %v3697
        %4227 = vmatpush1.bf16.msra.mxu0 %v3696
        %4228 = vmatprep.subr.bf16.mxu0 %v3699
        %4229 = vmatpush1.bf16.msra.mxu0 %v3698
        %4230 = vmatprep.subr.bf16.mxu0 %v3701
        %4231 = vmatpush1.bf16.msra.mxu0 %v3700
        %4232 = vmatprep.subr.bf16.mxu0 %v3703
        %4233 = vmatpush1.bf16.msra.mxu0 %v3702
        %4234 = vmatprep.subr.bf16.mxu0 %v3705
        %4235 = vmatpush1.bf16.msra.mxu0 %v3704
        %4236 = vmatprep.subr.bf16.mxu0 %v3707
        %4237 = vmatpush1.bf16.msra.mxu0 %v3706
        %4238 = vmatprep.subr.bf16.mxu0 %v3709
        %4239 = vmatpush1.bf16.msra.mxu0 %v3708
        %4240 = vmatprep.subr.bf16.mxu0 %v3711
        %4241 = vmatpush1.bf16.msra.mxu0 %v3710
        %4242 = vmatprep.subr.bf16.mxu0 %v3713
        %4243 = vmatpush1.bf16.msra.mxu0 %v3712
        %4244 = vmatprep.mubr.bf16.mxu0 %v2780
        %4245 = vmatmul.mubr.bf16.gmra.mrb[0].mxu0 %v2766
        %v4246 = vpop.f32.mrb[0].mxu0
        %v4247 = vadd.f32 %v4206, %v4246
        %v4248 = vpop.f32.mrb[0].mxu0
        %v4249 = vadd.f32 %v4208, %v4248
        %v4250 = vpop.f32.mrb[0].mxu0
        %v4251 = vpop.f32.mrb[0].mxu0
        %4252 = vdwg.mxu0
        %4253 = vmatprep.subr.bf16.mxu0 %v3715
        %4254 = vmatpush1.bf16.msra.mxu0 %v3714
        %4255 = vmatprep.subr.bf16.mxu0 %v3717
        %4256 = vmatpush1.bf16.msra.mxu0 %v3716
        %4257 = vmatprep.subr.bf16.mxu0 %v3719
        %4258 = vmatpush1.bf16.msra.mxu0 %v3718
        %4259 = vmatprep.subr.bf16.mxu0 %v3721
        %4260 = vmatpush1.bf16.msra.mxu0 %v3720
        %4261 = vmatprep.subr.bf16.mxu0 %v3723
        %4262 = vmatpush1.bf16.msra.mxu0 %v3722
        %4263 = vmatprep.subr.bf16.mxu0 %v3725
        %4264 = vmatpush1.bf16.msra.mxu0 %v3724
        %4265 = vmatprep.subr.bf16.mxu0 %v3727
        %4266 = vmatpush1.bf16.msra.mxu0 %v3726
        %4267 = vmatprep.subr.bf16.mxu0 %v3729
        %4268 = vmatpush1.bf16.msra.mxu0 %v3728
        %4269 = vmatprep.subr.bf16.mxu0 %v3731
        %4270 = vmatpush1.bf16.msra.mxu0 %v3730
        %4271 = vmatprep.subr.bf16.mxu0 %v3733
        %4272 = vmatpush1.bf16.msra.mxu0 %v3732
        %4273 = vmatprep.subr.bf16.mxu0 %v3735
        %4274 = vmatpush1.bf16.msra.mxu0 %v3734
        %4275 = vmatprep.subr.bf16.mxu0 %v3737
        %4276 = vmatpush1.bf16.msra.mxu0 %v3736
        %4277 = vmatprep.subr.bf16.mxu0 %v3739
        %4278 = vmatpush1.bf16.msra.mxu0 %v3738
        %4279 = vmatprep.subr.bf16.mxu0 %v3741
        %4280 = vmatpush1.bf16.msra.mxu0 %v3740
        %4281 = vmatprep.subr.bf16.mxu0 %v3743
        %4282 = vmatpush1.bf16.msra.mxu0 %v3742
        %4283 = vmatprep.subr.bf16.mxu0 %v3745
        %4284 = vmatpush1.bf16.msra.mxu0 %v3744
        %4285 = vmatprep.mubr.bf16.mxu0 %v2784
        %4286 = vmatmul.mubr.bf16.gmra.mrb[0].mxu0 %v2782
        %v4287 = vpop.f32.mrb[0].mxu0
        %v4288 = vadd.f32 %v4247, %v4287
        %v4289 = vpop.f32.mrb[0].mxu0
        %v4290 = vadd.f32 %v4249, %v4289
        %v4291 = vpop.f32.mrb[0].mxu0
        %v4292 = vpop.f32.mrb[0].mxu0
        %4293 = vdwg.mxu0
        %4294 = vmatprep.subr.bf16.mxu0 %v3747
        %4295 = vmatpush1.bf16.msra.mxu0 %v3746
        %4296 = vmatprep.subr.bf16.mxu0 %v3749
        %4297 = vmatpush1.bf16.msra.mxu0 %v3748
        %4298 = vmatprep.subr.bf16.mxu0 %v3751
        %4299 = vmatpush1.bf16.msra.mxu0 %v3750
        %4300 = vmatprep.subr.bf16.mxu0 %v3753
        %4301 = vmatpush1.bf16.msra.mxu0 %v3752
        %4302 = vmatprep.subr.bf16.mxu0 %v3755
        %4303 = vmatpush1.bf16.msra.mxu0 %v3754
        %4304 = vmatprep.subr.bf16.mxu0 %v3757
        %4305 = vmatpush1.bf16.msra.mxu0 %v3756
        %4306 = vmatprep.subr.bf16.mxu0 %v3759
        %4307 = vmatpush1.bf16.msra.mxu0 %v3758
        %4308 = vmatprep.subr.bf16.mxu0 %v3761
        %4309 = vmatpush1.bf16.msra.mxu0 %v3760
        %4310 = vmatprep.subr.bf16.mxu0 %v3763
        %4311 = vmatpush1.bf16.msra.mxu0 %v3762
        %4312 = vmatprep.subr.bf16.mxu0 %v3765
        %4313 = vmatpush1.bf16.msra.mxu0 %v3764
        %4314 = vmatprep.subr.bf16.mxu0 %v3767
        %4315 = vmatpush1.bf16.msra.mxu0 %v3766
        %4316 = vmatprep.subr.bf16.mxu0 %v3769
        %4317 = vmatpush1.bf16.msra.mxu0 %v3768
        %4318 = vmatprep.subr.bf16.mxu0 %v3771
        %4319 = vmatpush1.bf16.msra.mxu0 %v3770
        %4320 = vmatprep.subr.bf16.mxu0 %v3773
        %4321 = vmatpush1.bf16.msra.mxu0 %v3772
        %4322 = vmatprep.subr.bf16.mxu0 %v3775
        %4323 = vmatpush1.bf16.msra.mxu0 %v3774
        %4324 = vmatprep.subr.bf16.mxu0 %v3777
        %4325 = vmatpush1.bf16.msra.mxu0 %v3776
        %4326 = vmatprep.mubr.bf16.mxu0 %v2822
        %4327 = vmatmul.mubr.bf16.gmra.mrb[0].mxu0 %v2808
        %v4328 = vpop.f32.mrb[0].mxu0
        %v4329 = vadd.f32 %v4288, %v4328
        %v4330 = vpop.f32.mrb[0].mxu0
        %v4331 = vadd.f32 %v4290, %v4330
        %v4332 = vpop.f32.mrb[0].mxu0
        %v4333 = vpop.f32.mrb[0].mxu0
        %4334 = vdwg.mxu0
        %4335 = vmatprep.subr.bf16.mxu0 %v3779
        %4336 = vmatpush1.bf16.msra.mxu0 %v3778
        %4337 = vmatprep.subr.bf16.mxu0 %v3781
        %4338 = vmatpush1.bf16.msra.mxu0 %v3780
        %4339 = vmatprep.subr.bf16.mxu0 %v3783
        %4340 = vmatpush1.bf16.msra.mxu0 %v3782
        %4341 = vmatprep.subr.bf16.mxu0 %v3785
        %4342 = vmatpush1.bf16.msra.mxu0 %v3784
        %4343 = vmatprep.subr.bf16.mxu0 %v3787
        %4344 = vmatpush1.bf16.msra.mxu0 %v3786
        %4345 = vmatprep.subr.bf16.mxu0 %v3789
        %4346 = vmatpush1.bf16.msra.mxu0 %v3788
        %4347 = vmatprep.subr.bf16.mxu0 %v3791
        %4348 = vmatpush1.bf16.msra.mxu0 %v3790
        %4349 = vmatprep.subr.bf16.mxu0 %v3793
        %4350 = vmatpush1.bf16.msra.mxu0 %v3792
        %4351 = vmatprep.subr.bf16.mxu0 %v3795
        %4352 = vmatpush1.bf16.msra.mxu0 %v3794
        %4353 = vmatprep.subr.bf16.mxu0 %v3797
        %4354 = vmatpush1.bf16.msra.mxu0 %v3796
        %4355 = vmatprep.subr.bf16.mxu0 %v3799
        %4356 = vmatpush1.bf16.msra.mxu0 %v3798
        %4357 = vmatprep.subr.bf16.mxu0 %v3801
        %4358 = vmatpush1.bf16.msra.mxu0 %v3800
        %4359 = vmatprep.subr.bf16.mxu0 %v3803
        %4360 = vmatpush1.bf16.msra.mxu0 %v3802
        %4361 = vmatprep.subr.bf16.mxu0 %v3805
        %4362 = vmatpush1.bf16.msra.mxu0 %v3804
        %4363 = vmatprep.subr.bf16.mxu0 %v3807
        %4364 = vmatpush1.bf16.msra.mxu0 %v3806
        %4365 = vmatprep.subr.bf16.mxu0 %v3809
        %4366 = vmatpush1.bf16.msra.mxu0 %v3808
        %4367 = vmatprep.mubr.bf16.mxu0 %v2832
        %4368 = vmatmul.mubr.bf16.gmra.mrb[0].mxu0 %v2830
        %v4369 = vpop.f32.mrb[0].mxu0
        %v4370 = vadd.f32 %v4329, %v4369
        %v4371 = vpop.f32.mrb[0].mxu0
        %v4372 = vadd.f32 %v4331, %v4371
        %v4373 = vpop.f32.mrb[0].mxu0
        %v4374 = vpop.f32.mrb[0].mxu0
        %4375 = vdwg.mxu0
        %4376 = vmatprep.subr.bf16.mxu0 %v3811
        %4377 = vmatpush1.bf16.msra.mxu0 %v3810
        %4378 = vmatprep.subr.bf16.mxu0 %v3813
        %4379 = vmatpush1.bf16.msra.mxu0 %v3812
        %4380 = vmatprep.subr.bf16.mxu0 %v3815
        %4381 = vmatpush1.bf16.msra.mxu0 %v3814
        %4382 = vmatprep.subr.bf16.mxu0 %v3817
        %4383 = vmatpush1.bf16.msra.mxu0 %v3816
        %4384 = vmatprep.subr.bf16.mxu0 %v3819
        %4385 = vmatpush1.bf16.msra.mxu0 %v3818
        %4386 = vmatprep.subr.bf16.mxu0 %v3821
        %4387 = vmatpush1.bf16.msra.mxu0 %v3820
        %4388 = vmatprep.subr.bf16.mxu0 %v3823
        %4389 = vmatpush1.bf16.msra.mxu0 %v3822
        %4390 = vmatprep.subr.bf16.mxu0 %v3825
        %4391 = vmatpush1.bf16.msra.mxu0 %v3824
        %4392 = vmatprep.subr.bf16.mxu0 %v3827
        %4393 = vmatpush1.bf16.msra.mxu0 %v3826
        %4394 = vmatprep.subr.bf16.mxu0 %v3829
        %4395 = vmatpush1.bf16.msra.mxu0 %v3828
        %4396 = vmatprep.subr.bf16.mxu0 %v3831
        %4397 = vmatpush1.bf16.msra.mxu0 %v3830
        %4398 = vmatprep.subr.bf16.mxu0 %v3833
        %4399 = vmatpush1.bf16.msra.mxu0 %v3832
        %4400 = vmatprep.subr.bf16.mxu0 %v3835
        %4401 = vmatpush1.bf16.msra.mxu0 %v3834
        %4402 = vmatprep.subr.bf16.mxu0 %v3837
        %4403 = vmatpush1.bf16.msra.mxu0 %v3836
        %4404 = vmatprep.subr.bf16.mxu0 %v3839
        %4405 = vmatpush1.bf16.msra.mxu0 %v3838
        %4406 = vmatprep.subr.bf16.mxu0 %v3841
        %4407 = vmatpush1.bf16.msra.mxu0 %v3840
        %4408 = vmatprep.mubr.bf16.mxu0 %v2829
        %4409 = vmatmul.mubr.bf16.gmra.mrb[0].mxu0 %v2815
        %v4410 = vpop.f32.mrb[0].mxu0
        %v4411 = vadd.f32 %v4370, %v4410
        %v4412 = vpop.f32.mrb[0].mxu0
        %v4413 = vadd.f32 %v4372, %v4412
        %v4414 = vpop.f32.mrb[0].mxu0
        %v4415 = vpop.f32.mrb[0].mxu0
        %4416 = vdwg.mxu0
        %4417 = vmatprep.subr.bf16.mxu0 %v3843
        %4418 = vmatpush1.bf16.msra.mxu0 %v3842
        %4419 = vmatprep.subr.bf16.mxu0 %v3845
        %4420 = vmatpush1.bf16.msra.mxu0 %v3844
        %4421 = vmatprep.subr.bf16.mxu0 %v3847
        %4422 = vmatpush1.bf16.msra.mxu0 %v3846
        %4423 = vmatprep.subr.bf16.mxu0 %v3849
        %4424 = vmatpush1.bf16.msra.mxu0 %v3848
        %4425 = vmatprep.subr.bf16.mxu0 %v3851
        %4426 = vmatpush1.bf16.msra.mxu0 %v3850
        %4427 = vmatprep.subr.bf16.mxu0 %v3853
        %4428 = vmatpush1.bf16.msra.mxu0 %v3852
        %4429 = vmatprep.subr.bf16.mxu0 %v3855
        %4430 = vmatpush1.bf16.msra.mxu0 %v3854
        %4431 = vmatprep.subr.bf16.mxu0 %v3857
        %4432 = vmatpush1.bf16.msra.mxu0 %v3856
        %4433 = vmatprep.subr.bf16.mxu0 %v3859
        %4434 = vmatpush1.bf16.msra.mxu0 %v3858
        %4435 = vmatprep.subr.bf16.mxu0 %v3861
        %4436 = vmatpush1.bf16.msra.mxu0 %v3860
        %4437 = vmatprep.subr.bf16.mxu0 %v3863
        %4438 = vmatpush1.bf16.msra.mxu0 %v3862
        %4439 = vmatprep.subr.bf16.mxu0 %v3865
        %4440 = vmatpush1.bf16.msra.mxu0 %v3864
        %4441 = vmatprep.subr.bf16.mxu0 %v3867
        %4442 = vmatpush1.bf16.msra.mxu0 %v3866
        %4443 = vmatprep.subr.bf16.mxu0 %v3869
        %4444 = vmatpush1.bf16.msra.mxu0 %v3868
        %4445 = vmatprep.subr.bf16.mxu0 %v3871
        %4446 = vmatpush1.bf16.msra.mxu0 %v3870
        %4447 = vmatprep.subr.bf16.mxu0 %v3873
        %4448 = vmatpush1.bf16.msra.mxu0 %v3872
        %4449 = vmatprep.mubr.bf16.mxu0 %v2833
        %4450 = vmatmul.mubr.bf16.gmra.mrb[0].mxu0 %v2831
        %v4451 = vpop.f32.mrb[0].mxu0
        %v4452 = vadd.f32 %v4411, %v4451
        %v4453 = vpop.f32.mrb[0].mxu0
        %v4454 = vadd.f32 %v4413, %v4453
        %v4455 = vpop.f32.mrb[0].mxu0
        %v4456 = vpop.f32.mrb[0].mxu0
        %4457 = vdwg.mxu0
        %v4460 = vcombine.low %v4452, %v4454
        %v4462 = vunpack.c.l.s4 1983009808
        %v4463 = vunpack.c.0.s8 %v4462
        %v4464 = vlaneseq
        %v4465 = vshrl.u32 %v4464, 7
        %v4466 = vsub.s32 %v4463, %v4465
        %v4467 = vrot.slane %v4460, %v4466
        %v4469 = vadd.f32 %v2475, %v4467
        %4470 = vst [vmem:[#allocation2] sm:$0xf] %v4469
        // Predicated region
        $region175: #{forward.8} parent=157 // pred_check
          %p4471 = pneg %p1821
        $region176: #{forward.8} parent=157 // pred_check_branch
          %4473 = sbr.rel (%p4471) target = $region178
        $region177: #{forward.8} parent=157 // pred_region
          %v4474 = vld [vmem:[#allocation2] sm:$0xf]
          %v4475 = vmax.f32 %v4474, 0.0
          %v4478 = vunpack.c.l.s4 1983009808
          %v4479 = vunpack.c.0.s8 %v4478
          %v4480 = vlaneseq
          %v4481 = vshrl.u32 %v4480, 7
          %v4482 = vsub.s32 %v4479, %v4481
          %v4483 = vrot.slane %v4475, %v4482
          %v4484 = vcombine.high %v4483, %v4483
          %v4487 = vpack.c.bf16 %v4483, %v4483
          %v4488 = vpack.c.bf16 %v4484, %v4484
          %v4491 = vcombine.low %v4487, %v4488
          %v4493 = vunpack.c.l.s4 1966171168
          %v4494 = vunpack.c.0.s8 %v4493
          %v4495 = vlaneseq
          %v4496 = vshrl.u32 %v4495, 7
          %v4497 = vsub.s32 %v4494, %v4496
          %v4498 = vrot.slane %v4491, %v4497
          %v4500 = vunpack.c.l.s4 1966171168
          %v4501 = vunpack.c.0.s8 %v4500
          %v4502 = vlaneseq
          %v4503 = vshrl.u32 %v4502, 7
          %v4504 = vsub.s32 %v4501, %v4503
          %v4505 = vrot.slane %v4498, %v4504
          %4507 = vst [vmem:[%s1818] sm:$0x3] %v4505
        $region178: #{forward.8} parent=157 // pred_fallthru
          _
        %s4508 = smul.u32 2, %s24
        %p4509 = scmp.lt.s32.totalorder %s4508, 3
        %s4510 = scalar_select %p4509, %s4508, 3
        %s4511 = scalar_lea.vmem %s9, %s4510
        // Predicated region
        $region179: #{forward.8} parent=157 // pred_check
          %p4512 = pneg %p266
        $region180: #{forward.8} parent=157 // pred_check_branch
          %4514 = sbr.rel (%p4512) target = $region182
        $region181: #{forward.8} parent=157 // pred_region
          %s4515 = smul.u32 2, %s24
        $region182: #{forward.8} parent=157 // pred_fallthru
          _
      $region158: #{forward.8} parent=5 // pred_fallthru
        _
      %p4516 = scmp.le.s32.totalorder 2, %s15
      // Predicated region
      $region183: #{forward.8} parent=5 // pred_check
        %p4517 = pneg %p4516
      $region184: #{forward.8} parent=5 // pred_check_branch
        %4519 = sbr.rel (%p4517) target = $region186
      $region185: #{forward.8} parent=5 // pred_region
        %s4520 = ssub.s32 %s15, 2
        // Predicated region
        $region187: #{forward.8} parent=185 // pred_check
          %p4521 = pneg %p272
        $region188: #{forward.8} parent=185 // pred_check_branch
          %4523 = sbr.rel (%p4521) target = $region190
        $region189: #{forward.8} parent=185 // pred_region
          %s4524 = smul.u32 2, %s26
          %p4525 = scmp.lt.s32.totalorder %s4524, 3
          %s4526 = scalar_select %p4525, %s4524, 3
          %s4527 = scalar_lea.vmem %s9, %s4526
        $region190: #{forward.8} parent=185 // pred_fallthru
          _
      $region186: #{forward.8} parent=5 // pred_fallthru
        _
    $region6: #{forward.8} parent=1 // loop_footer
      %s19 = sadd.s32 1, %s15
    $region7: #{forward.8} parent=1 // loop_footer_branch
      %14 = sbr.rel target = $region3
    $region8: #{forward.8} parent=1 // loop_exit
      _

</llo_original>
